<compile_context>
chip_gen: v6e
topology: v6e:2x2x1
jax: 0.10.0
libtpu: 0.0.40
codegen_flags: <defaults>
</compile_context>

<pallas_src>
import functools

import jax
import jax.numpy as jnp
from jax.experimental import pallas as pl
from jax.experimental.pallas import tpu as pltpu

CPAD = 128                       # every channel dim padded to one lane-width
_VMEM_LIMIT = 32 * 1024 * 1024   # explicit scoped-VMEM budget (safe on v5e/v6e/v7x)


# ----------------------------------------------------------------------------
# Fused Conv1d kernel: stride-1 taps over a spatially prepared input
# ----------------------------------------------------------------------------

def _conv_taps_kernel(x_ref, w_ref, b_ref, o_ref, *, taps, relu):
    lout, cout = o_ref.shape
    acc = jnp.zeros((lout, cout), jnp.float32)
    for t in range(taps):            # fused "im2col": K shifted bf16 matmuls
        acc = acc + jnp.dot(x_ref[pl.ds(t, lout), :], w_ref[t],
                            preferred_element_type=jnp.float32)
    acc = acc + b_ref[...]
    if relu:
        acc = jnp.maximum(acc, 0.0)
    o_ref[...] = acc.astype(o_ref.dtype)


def _conv_taps(x, w, b, *, relu, out_dtype=jnp.bfloat16):
    """x:(N,Lin,Cin) spatially prepared, w:(T,Cin,Cout) bf16, b:(1,Cout) f32."""
    n, lin, cin = x.shape
    taps, _, cout = w.shape
    lout = lin - taps + 1
    return pl.pallas_call(
        functools.partial(_conv_taps_kernel, taps=taps, relu=relu),
        out_shape=jax.ShapeDtypeStruct((n, lout, cout), out_dtype),
        grid=(n,),
        in_specs=[
            pl.BlockSpec((None, lin, cin), lambda i: (i, 0, 0)),
            pl.BlockSpec((taps, cin, cout), lambda i: (0, 0, 0)),
            pl.BlockSpec((1, cout), lambda i: (0, 0)),
        ],
        out_specs=pl.BlockSpec((None, lout, cout), lambda i: (i, 0, 0)),
        compiler_params=pltpu.CompilerParams(
            dimension_semantics=("parallel",),
            vmem_limit_bytes=_VMEM_LIMIT),
    )(x, w, b)


def conv_plain(x, w, b, *, relu, out_dtype=jnp.bfloat16):
    """Conv1d k=3, stride=1, pad=1 (channels-last, lane-dense)."""
    xp = jnp.pad(x, ((0, 0), (1, 1), (0, 0)))
    return _conv_taps(xp, w, b, relu=relu, out_dtype=out_dtype)


def conv_down(x, w_eff, b, stride, *, relu):
    """Strided Conv1d (k=2*stride, pad=stride//2) expressed as a stride-1 conv
    over the channel-folded view (L,C)->(L/S, S*C) with weights pre-assembled
    at init (no strided loads, no im2col)."""
    n, l, c = x.shape
    taps = w_eff.shape[0]
    p = stride // 2
    lout = (l + 2 * p - 2 * stride) // stride + 1
    rows = lout + taps - 1
    right = rows * stride - l - p
    assert right >= 0
    xp = jnp.pad(x, ((0, 0), (p, right), (0, 0)))
    x2 = xp.reshape(n, rows, stride * c)          # free row-major reshape
    return _conv_taps(x2, w_eff, b, relu=relu)


def conv_upsample(x, w_up, b_up, stride, *, relu):
    """Nearest-upsample(x, stride) + Conv1d(k=3, pad=1), fused: the kernel
    emits `stride` phase outputs per source row (out channels stride*C) and a
    free reshape interleaves them; the upsampled activation never hits HBM."""
    n, l, c = x.shape
    xp = jnp.pad(x, ((0, 0), (1, 1), (0, 0)))
    cout = w_up.shape[-1] // stride
    y = _conv_taps(xp, w_up, b_up, relu=relu)     # (n, l, stride*cout)
    return y.reshape(n, l * stride, cout)


# ----------------------------------------------------------------------------
# VQ codebook lookup (tiled over rows, resident SMEM loss accumulator)
# ----------------------------------------------------------------------------

def _vq_kernel(z_ref, cb_ref, cbT_ref, e2_ref, q_ref, loss_ref, acc_ref, *, m_true):
    step = pl.program_id(0)

    @pl.when(step == 0)
    def _init():
        acc_ref[0, 0] = 0.0

    z = z_ref[...].astype(jnp.float32)                                # (tm, Dp)
    # argmin_j ||z - e_j||^2 == argmin_j (|e_j|^2 - 2 z.e_j)
    d = e2_ref[...] - 2.0 * jnp.dot(z, cbT_ref[...],
                                    preferred_element_type=jnp.float32)
    idx = jnp.argmin(d, axis=-1, keepdims=True)                       # (tm, 1)
    iota = jax.lax.broadcasted_iota(jnp.int32, d.shape, 1)
    onehot = (idx == iota).astype(jnp.float32)                        # NCp <= 128 -> keep one-hot gather
    q = jnp.dot(onehot, cb_ref[...], preferred_element_type=jnp.float32)
    q_ref[...] = q.astype(q_ref.dtype)

    tm = z.shape[0]
    row = step * tm + jax.lax.broadcasted_iota(jnp.int32, (tm, 1), 0)
    valid = (row < m_true).astype(jnp.float32)                        # mask tail block
    diff = (z - q) * valid
    acc_ref[0, 0] += jnp.sum(diff * diff)
    loss_ref[0, 0] = acc_ref[0, 0]


def vq_quantize(z_flat, cb, cbT, e2):
    """Nearest-codebook lookup; returns (quantized bf16, sum((z - q)^2))."""
    m, dp = z_flat.shape
    ncp = cb.shape[0]
    tm = m if m <= 512 else 512
    q, loss = pl.pallas_call(
        functools.partial(_vq_kernel, m_true=m),
        out_shape=(jax.ShapeDtypeStruct((m, dp), jnp.bfloat16),
                   jax.ShapeDtypeStruct((1, 1), jnp.float32)),
        grid=(pl.cdiv(m, tm),),
        in_specs=[
            pl.BlockSpec((tm, dp), lambda i: (i, 0)),
            pl.BlockSpec((ncp, dp), lambda i: (0, 0)),
            pl.BlockSpec((dp, ncp), lambda i: (0, 0)),
            pl.BlockSpec((1, ncp), lambda i: (0, 0)),
        ],
        out_specs=(
            pl.BlockSpec((tm, dp), lambda i: (i, 0)),
            pl.BlockSpec((1, 1), lambda i: (0, 0),
                         memory_space=pltpu.MemorySpace.SMEM),
        ),
        scratch_shapes=[pltpu.SMEM((1, 1), jnp.float32)],
        compiler_params=pltpu.CompilerParams(
            dimension_semantics=("arbitrary",),
            vmem_limit_bytes=_VMEM_LIMIT),
    )(z_flat, cb, cbT, e2)
    return q, loss[0, 0]


# ----------------------------------------------------------------------------
# MSE (lane-dense streaming reduction)
# ----------------------------------------------------------------------------

def _mse_kernel(a_ref, b_ref, o_ref, acc_ref, *, rows_true):
    step = pl.program_id(0)

    @pl.when(step == 0)
    def _init():
        acc_ref[0, 0] = 0.0

    d = a_ref[...].astype(jnp.float32) - b_ref[...].astype(jnp.float32)
    tr = d.shape[0]
    row = step * tr + jax.lax.broadcasted_iota(jnp.int32, (tr, 1), 0)
    valid = (row < rows_true).astype(jnp.float32)
    d = d * valid
    acc_ref[0, 0] += jnp.sum(d * d)
    o_ref[0, 0] = acc_ref[0, 0]


def mse_sum(a, b):
    """sum((a-b)^2) over all elements; inputs are (N, T, 128) lane-dense."""
    rows = a.shape[0] * a.shape[1]
    cp = a.shape[-1]
    a2 = a.reshape(rows, cp)
    b2 = b.reshape(rows, cp)
    tr = rows if rows <= 1024 else 1024
    out = pl.pallas_call(
        functools.partial(_mse_kernel, rows_true=rows),
        out_shape=jax.ShapeDtypeStruct((1, 1), jnp.float32),
        grid=(pl.cdiv(rows, tr),),
        in_specs=[pl.BlockSpec((tr, cp), lambda i: (i, 0)),
                  pl.BlockSpec((tr, cp), lambda i: (i, 0))],
        out_specs=pl.BlockSpec((1, 1), lambda i: (0, 0),
                               memory_space=pltpu.MemorySpace.SMEM),
        scratch_shapes=[pltpu.SMEM((1, 1), jnp.float32)],
        compiler_params=pltpu.CompilerParams(
            dimension_semantics=("arbitrary",),
            vmem_limit_bytes=_VMEM_LIMIT),
    )(a2, b2)
    return out[0, 0]


# ----------------------------------------------------------------------------
# Parameter construction (deterministic, synthetic) — all padding / effective
# weight assembly hoisted out of the forward path.
# ----------------------------------------------------------------------------

def _round_up(v, m):
    return ((v + m - 1) // m) * m


def _init_w(key, k, cin, cout):
    return jax.random.normal(key, (k, cin, cout), jnp.float32) * ((k * cin) ** -0.5)


def _pad_w(w, cin_p=CPAD, cout_p=CPAD):
    k, cin, cout = w.shape
    return jnp.zeros((k, cin_p, cout_p), jnp.float32).at[:, :cin, :cout].set(w)


def _zero_b(cout_p=CPAD):
    return jnp.zeros((1, cout_p), jnp.float32)


def _down_weff(w_pad, stride):
    """(K=2S, C, C) f32 -> (ceil(K/S), S*C, C) bf16: weights for the
    channel-folded stride-1 formulation of a stride-S conv."""
    k, c, cout = w_pad.shape
    taps = -(-k // stride)
    w_eff = jnp.zeros((taps, stride * c, cout), jnp.float32)
    for j in range(taps):
        for s in range(stride):
            kk = stride * j + s
            if kk < k:
                w_eff = w_eff.at[j, s * c:(s + 1) * c, :].set(w_pad[kk])
    return w_eff.astype(jnp.bfloat16)


def _up_weff(w_pad, stride):
    """(3, C, Cout) f32 -> (3, C, S*Cout) bf16: per-phase weights of the fused
    nearest-upsample(S) + conv(k=3, pad=1)."""
    k, c, cout = w_pad.shape
    w_up = jnp.zeros((k, c, stride * cout), jnp.float32)
    for s in range(stride):
        for kk in range(k):
            t = (s + kk - 1) // stride + 1        # source shift d + 1 (pad offset)
            w_up = w_up.at[t, :, s * cout:(s + 1) * cout].add(w_pad[kk])
    return w_up.astype(jnp.bfloat16)


def init_level_params(key, nfeats, latent_dim, width, down_t, stride_t, nb_code):
    keys = jax.random.split(key, 5 + 2 * down_t)
    ki = iter(range(len(keys)))

    def plain(kidx, cin, cout):
        w = _init_w(keys[kidx], 3, cin, cout)
        return {"w": _pad_w(w).astype(jnp.bfloat16), "b": _zero_b()}

    enc = {"conv_in": plain(next(ki), nfeats, width)}
    downs = []
    for _ in range(down_t):
        kidx = next(ki)
        if stride_t == 1:
            downs.append(plain(kidx, width, width))
        else:
            w = _init_w(keys[kidx], 2 * stride_t, width, width)
            downs.append({"w": _down_weff(_pad_w(w), stride_t), "b": _zero_b()})
    enc["down"] = downs
    enc["conv_out"] = plain(next(ki), width, latent_dim)

    dec = {"conv_in": plain(next(ki), latent_dim, width)}
    ups = []
    for _ in range(down_t):
        kidx = next(ki)
        w = _init_w(keys[kidx], 3, width, width)
        ups.append({"w": _up_weff(_pad_w(w), stride_t),
                    "b": jnp.tile(_zero_b(), (1, stride_t))})
    dec["up"] = ups
    dec["conv_out"] = plain(next(ki), width, nfeats)

    # codebook: pad rows to a lane-width multiple with a huge constant so the
    # padded codes never win the argmin; padded feature dims are exact zeros.
    cb = jax.random.normal(keys[next(ki)], (nb_code, latent_dim), jnp.float32)
    ncp = _round_up(max(nb_code, CPAD), CPAD)
    cb_pad = jnp.full((ncp, CPAD), 1e4, jnp.float32)
    cb_pad = cb_pad.at[:nb_code, :].set(0.0).at[:nb_code, :latent_dim].set(cb)
    return {"enc": enc, "dec": dec,
            "cb": cb_pad, "cbT": cb_pad.T,
            "e2": jnp.sum(cb_pad * cb_pad, axis=-1)[None, :],
            "down_t": down_t, "stride_t": stride_t,
            "latent_dim": latent_dim, "nfeats": nfeats}


# ----------------------------------------------------------------------------
# SingleModalityVAE (vq, no vae) forward — one level
# ----------------------------------------------------------------------------

def single_vae_forward(params, x_bf16, x_f32, lambdas):
    down_t, stride = params["down_t"], params["stride_t"]
    enc, dec = params["enc"], params["dec"]
    nfeats, latent_dim = params["nfeats"], params["latent_dim"]

    # ------- encoder (Conv1DEncoder) -------
    h = conv_plain(x_bf16, enc["conv_in"]["w"], enc["conv_in"]["b"], relu=True)
    for lvl in range(down_t):
        c = enc["down"][lvl]
        if stride == 1:
            h = conv_plain(h, c["w"], c["b"], relu=True)
        else:
            h = conv_down(h, c["w"], c["b"], stride, relu=True)
    latent = conv_plain(h, enc["conv_out"]["w"], enc["conv_out"]["b"],
                        relu=False, out_dtype=jnp.float32)       # (N, T', 128)

    # ------- quantize -------
    n, tq, dp = latent.shape
    z_flat = latent.reshape(n * tq, dp)
    q_flat, commit_sum = vq_quantize(z_flat, params["cb"], params["cbT"],
                                     params["e2"])
    commit = commit_sum / (n * tq * latent_dim)   # mean over TRUE dims only
    quant = q_flat.reshape(n, tq, dp)
    # TODO(synk): straight-through estimator / QuantizeEMAReset EMA codebook
    # update omitted (training-only; forward values are identical).

    # ------- decoder (Conv1DDecoder) -------
    h = conv_plain(quant, dec["conv_in"]["w"], dec["conv_in"]["b"], relu=True)
    for lvl in range(down_t):
        c = dec["up"][lvl]
        h = conv_upsample(h, c["w"], c["b"], stride, relu=True)
    out = conv_plain(h, dec["conv_out"]["w"], dec["conv_out"]["b"],
                     relu=False, out_dtype=jnp.float32)          # (N, T, 128)

    # ------- losses (modality='motion': mean MSE) -------
    recons = mse_sum(x_f32, out) / (x_f32.shape[0] * x_f32.shape[1] * nfeats)
    loss = {"recons": recons, "commitment": commit}
    total = lambdas["recons"] * recons + lambdas["commitment"] * commit
    return out, total, loss


# ----------------------------------------------------------------------------
# MultiVQVAE forward
# ----------------------------------------------------------------------------

def multi_vqvae_forward(all_params, x_ncl, lambdas):
    # x_ncl: (N, nfeats, T) — PyTorch Conv1d layout.  Transpose to channels-
    # last once and zero-pad channels to the 128-lane width once; all Pallas
    # kernels stay channels-last until the final per-level boundary slice.
    n, nfeats, t = x_ncl.shape
    x_nlc = jnp.transpose(x_ncl, (0, 2, 1))
    x_f32 = jnp.pad(x_nlc, ((0, 0), (0, 0), (0, CPAD - nfeats)))
    x_bf16 = x_f32.astype(jnp.bfloat16)

    outs, losses, loss_dict_all = [], [], {}
    for level, params in enumerate(all_params):
        out, total, loss = single_vae_forward(params, x_bf16, x_f32, lambdas)
        outs.append(jnp.transpose(out[:, :, :nfeats], (0, 2, 1)))   # back to NCL
        losses.append(total)
        for k, v in loss.items():
            loss_dict_all[f"{level}_{k}"] = v
    return outs, sum(losses), loss_dict_all


# ----------------------------------------------------------------------------
# Main
# ----------------------------------------------------------------------------

if __name__ == "__main__":
    # small, module-consistent shapes
    N, nfeats, T = 2, 4, 16
    latent_dim, width = 8, 16
    downs_t = [2, 1]
    strides_t = [2, 2]
    nb_code = 32
    lambdas = {"recons": 1.0, "commitment": 0.02}

    key = jax.random.PRNGKey(0)
    kx, kp = jax.random.split(key)
    x = jax.random.normal(kx, (N, nfeats, T), jnp.float32)   # NCL like PyTorch

    level_keys = jax.random.split(kp, len(downs_t))
    all_params = [
        init_level_params(level_keys[i], nfeats, latent_dim, width,
                          downs_t[i], strides_t[i], nb_code)
        for i in range(len(downs_t))
    ]

    fwd = jax.jit(lambda xi: multi_vqvae_forward(all_params, xi, lambdas))
    outs, total_loss, loss_dict = fwd(x)
    jax.block_until_ready((outs, total_loss, loss_dict))

    assert outs[0].shape == (N, nfeats, T)
    assert outs[1].shape == (N, nfeats, T)
    assert total_loss.shape == ()
    print("KERNEL_OK")
</pallas_src>

<mosaic_0001>
module attributes {stable_mosaic.version = 11 : i64} {
  func.func @_conv_taps_kernel(%arg0: i32, %arg1: memref<1x6x128xbf16, #tpu.memory_space<vmem>>, %arg2: memref<3x128x128xbf16, #tpu.memory_space<vmem>>, %arg3: memref<1x128xf32, #tpu.memory_space<vmem>>, %arg4: memref<1x4x128xf32, #tpu.memory_space<vmem>>) attributes {dimension_semantics = [#tpu.dimension_semantics<parallel>], iteration_bounds = array<i64: 2>, scalar_prefetch = 0 : i64, scratch_operands = 0 : i64, tpu.core_type = #tpu.core_type<tc>, window_params = [{transform_indices = @transform_0, window_bounds = array<i64: 1, 6, 128>}, {pipeline_mode = #tpu.pipeline_mode<synchronous>, transform_indices = @transform_1, window_bounds = array<i64: 3, 128, 128>}, {pipeline_mode = #tpu.pipeline_mode<synchronous>, transform_indices = @transform_2, window_bounds = array<i64: 1, 128>}, {transform_indices = @transform_3, window_bounds = array<i64: 1, 4, 128>}]} {
    %cst = arith.constant 0.000000e+00 : f32
    %0 = vector.broadcast %cst : f32 to vector<4x128xf32>
    %c0 = arith.constant 0 : index
    %c0_0 = arith.constant 0 : index
    %c0_1 = arith.constant 0 : index
    %1 = vector.load %arg1[%c0, %c0_0, %c0_1] : memref<1x6x128xbf16, #tpu.memory_space<vmem>>, vector<1x4x128xbf16>
    %2 = vector.shape_cast %1 : vector<1x4x128xbf16> to vector<4x128xbf16>
    %c0_2 = arith.constant 0 : index
    %c0_3 = arith.constant 0 : index
    %c0_4 = arith.constant 0 : index
    %3 = vector.load %arg2[%c0_2, %c0_3, %c0_4] : memref<3x128x128xbf16, #tpu.memory_space<vmem>>, vector<1x128x128xbf16>
    %4 = vector.shape_cast %3 : vector<1x128x128xbf16> to vector<128x128xbf16>
    %cst_5 = arith.constant dense<0.000000e+00> : vector<4x128xf32>
    %5 = tpu.matmul %2, %4, %cst_5 {dimension_numbers = #tpu.dot_dimension_numbers<[1], [0], [0], [1], [0, 0, 1, 1], [], []>} : vector<4x128xbf16>, vector<128x128xbf16>, vector<4x128xf32> -> vector<4x128xf32>
    %6 = arith.addf %0, %5 : vector<4x128xf32>
    %c0_6 = arith.constant 0 : index
    %c1 = arith.constant 1 : index
    %c0_7 = arith.constant 0 : index
    %7 = vector.load %arg1[%c0_6, %c1, %c0_7] : memref<1x6x128xbf16, #tpu.memory_space<vmem>>, vector<1x4x128xbf16>
    %8 = vector.shape_cast %7 : vector<1x4x128xbf16> to vector<4x128xbf16>
    %c1_8 = arith.constant 1 : index
    %c0_9 = arith.constant 0 : index
    %c0_10 = arith.constant 0 : index
    %9 = vector.load %arg2[%c1_8, %c0_9, %c0_10] : memref<3x128x128xbf16, #tpu.memory_space<vmem>>, vector<1x128x128xbf16>
    %10 = vector.shape_cast %9 : vector<1x128x128xbf16> to vector<128x128xbf16>
    %cst_11 = arith.constant dense<0.000000e+00> : vector<4x128xf32>
    %11 = tpu.matmul %8, %10, %cst_11 {dimension_numbers = #tpu.dot_dimension_numbers<[1], [0], [0], [1], [0, 0, 1, 1], [], []>} : vector<4x128xbf16>, vector<128x128xbf16>, vector<4x128xf32> -> vector<4x128xf32>
    %12 = arith.addf %6, %11 : vector<4x128xf32>
    %c0_12 = arith.constant 0 : index
    %c2 = arith.constant 2 : index
    %c0_13 = arith.constant 0 : index
    %13 = vector.load %arg1[%c0_12, %c2, %c0_13] : memref<1x6x128xbf16, #tpu.memory_space<vmem>>, vector<1x4x128xbf16>
    %14 = vector.shape_cast %13 : vector<1x4x128xbf16> to vector<4x128xbf16>
    %c2_14 = arith.constant 2 : index
    %c0_15 = arith.constant 0 : index
    %c0_16 = arith.constant 0 : index
    %15 = vector.load %arg2[%c2_14, %c0_15, %c0_16] : memref<3x128x128xbf16, #tpu.memory_space<vmem>>, vector<1x128x128xbf16>
    %16 = vector.shape_cast %15 : vector<1x128x128xbf16> to vector<128x128xbf16>
    %cst_17 = arith.constant dense<0.000000e+00> : vector<4x128xf32>
    %17 = tpu.matmul %14, %16, %cst_17 {dimension_numbers = #tpu.dot_dimension_numbers<[1], [0], [0], [1], [0, 0, 1, 1], [], []>} : vector<4x128xbf16>, vector<128x128xbf16>, vector<4x128xf32> -> vector<4x128xf32>
    %18 = arith.addf %12, %17 : vector<4x128xf32>
    %c0_18 = arith.constant 0 : index
    %c0_19 = arith.constant 0 : index
    %19 = vector.load %arg3[%c0_18, %c0_19] : memref<1x128xf32, #tpu.memory_space<vmem>>, vector<1x128xf32>
    %20 = vector.broadcast %19 : vector<1x128xf32> to vector<4x128xf32>
    %21 = arith.addf %18, %20 : vector<4x128xf32>
    %c0_20 = arith.constant 0 : index
    %c0_21 = arith.constant 0 : index
    %c0_22 = arith.constant 0 : index
    %22 = vector.load %arg4[%c0_20, %c0_21, %c0_22] : memref<1x4x128xf32, #tpu.memory_space<vmem>>, vector<1x4x128xf32>
    %23 = vector.shape_cast %22 : vector<1x4x128xf32> to vector<4x128xf32>
    %24 = vector.shape_cast %21 : vector<4x128xf32> to vector<1x4x128xf32>
    tpu.vector_store %arg4[%c0_20, %c0_21, %c0_22], %24 {strides = array<i32>} : memref<1x4x128xf32, #tpu.memory_space<vmem>>, vector<1x4x128xf32>,
    return
  }
  func.func @transform_0(%arg0: i32) -> (i32, i32, i32) {
    %c0_i32 = arith.constant 0 : i32
    %c0_i32_0 = arith.constant 0 : i32
    %c0_i32_1 = arith.constant 0 : i32
    return %arg0, %c0_i32, %c0_i32_0 : i32, i32, i32
  }
  func.func @transform_1(%arg0: i32) -> (i32, i32, i32) {
    %c0_i32 = arith.constant 0 : i32
    %c0_i32_0 = arith.constant 0 : i32
    %c0_i32_1 = arith.constant 0 : i32
    %c0_i32_2 = arith.constant 0 : i32
    return %c0_i32, %c0_i32_0, %c0_i32_1 : i32, i32, i32
  }
  func.func @transform_2(%arg0: i32) -> (i32, i32) {
    %c0_i32 = arith.constant 0 : i32
    %c0_i32_0 = arith.constant 0 : i32
    %c0_i32_1 = arith.constant 0 : i32
    return %c0_i32, %c0_i32_0 : i32, i32
  }
  func.func @transform_3(%arg0: i32) -> (i32, i32, i32) {
    %c0_i32 = arith.constant 0 : i32
    %c0_i32_0 = arith.constant 0 : i32
    %c0_i32_1 = arith.constant 0 : i32
    return %arg0, %c0_i32, %c0_i32_0 : i32, i32, i32
  }
}

module attributes {stable_mosaic.version = 11 : i64} {
  func.func @_conv_taps_kernel(%arg0: i32, %arg1: memref<1x9x256xbf16, #tpu.memory_space<vmem>>, %arg2: memref<2x256x128xbf16, #tpu.memory_space<vmem>>, %arg3: memref<1x128xf32, #tpu.memory_space<vmem>>, %arg4: memref<1x8x128xbf16, #tpu.memory_space<vmem>>) attributes {dimension_semantics = [#tpu.dimension_semantics<parallel>], iteration_bounds = array<i64: 2>, scalar_prefetch = 0 : i64, scratch_operands = 0 : i64, tpu.core_type = #tpu.core_type<tc>, window_params = [{transform_indices = @transform_0, window_bounds = array<i64: 1, 9, 256>}, {pipeline_mode = #tpu.pipeline_mode<synchronous>, transform_indices = @transform_1, window_bounds = array<i64: 2, 256, 128>}, {pipeline_mode = #tpu.pipeline_mode<synchronous>, transform_indices = @transform_2, window_bounds = array<i64: 1, 128>}, {transform_indices = @transform_3, window_bounds = array<i64: 1, 8, 128>}]} {
    %cst = arith.constant 0.000000e+00 : f32
    %0 = vector.broadcast %cst : f32 to vector<8x128xf32>
    %c0 = arith.constant 0 : index
    %c0_0 = arith.constant 0 : index
    %c0_1 = arith.constant 0 : index
    %1 = vector.load %arg1[%c0, %c0_0, %c0_1] : memref<1x9x256xbf16, #tpu.memory_space<vmem>>, vector<1x8x256xbf16>
    %2 = vector.shape_cast %1 : vector<1x8x256xbf16> to vector<8x256xbf16>
    %c0_2 = arith.constant 0 : index
    %c0_3 = arith.constant 0 : index
    %c0_4 = arith.constant 0 : index
    %3 = vector.load %arg2[%c0_2, %c0_3, %c0_4] : memref<2x256x128xbf16, #tpu.memory_space<vmem>>, vector<1x256x128xbf16>
    %4 = vector.shape_cast %3 : vector<1x256x128xbf16> to vector<256x128xbf16>
    %cst_5 = arith.constant dense<0.000000e+00> : vector<8x128xf32>
    %5 = tpu.matmul %2, %4, %cst_5 {dimension_numbers = #tpu.dot_dimension_numbers<[1], [0], [0], [1], [0, 0, 1, 1], [], []>} : vector<8x256xbf16>, vector<256x128xbf16>, vector<8x128xf32> -> vector<8x128xf32>
    %6 = arith.addf %0, %5 : vector<8x128xf32>
    %c0_6 = arith.constant 0 : index
    %c1 = arith.constant 1 : index
    %c0_7 = arith.constant 0 : index
    %7 = vector.load %arg1[%c0_6, %c1, %c0_7] : memref<1x9x256xbf16, #tpu.memory_space<vmem>>, vector<1x8x256xbf16>
    %8 = vector.shape_cast %7 : vector<1x8x256xbf16> to vector<8x256xbf16>
    %c1_8 = arith.constant 1 : index
    %c0_9 = arith.constant 0 : index
    %c0_10 = arith.constant 0 : index
    %9 = vector.load %arg2[%c1_8, %c0_9, %c0_10] : memref<2x256x128xbf16, #tpu.memory_space<vmem>>, vector<1x256x128xbf16>
    %10 = vector.shape_cast %9 : vector<1x256x128xbf16> to vector<256x128xbf16>
    %cst_11 = arith.constant dense<0.000000e+00> : vector<8x128xf32>
    %11 = tpu.matmul %8, %10, %cst_11 {dimension_numbers = #tpu.dot_dimension_numbers<[1], [0], [0], [1], [0, 0, 1, 1], [], []>} : vector<8x256xbf16>, vector<256x128xbf16>, vector<8x128xf32> -> vector<8x128xf32>
    %12 = arith.addf %6, %11 : vector<8x128xf32>
    %c0_12 = arith.constant 0 : index
    %c0_13 = arith.constant 0 : index
    %13 = vector.load %arg3[%c0_12, %c0_13] : memref<1x128xf32, #tpu.memory_space<vmem>>, vector<1x128xf32>
    %14 = vector.broadcast %13 : vector<1x128xf32> to vector<8x128xf32>
    %15 = arith.addf %12, %14 : vector<8x128xf32>
    %cst_14 = arith.constant 0.000000e+00 : f32
    %16 = vector.broadcast %cst_14 : f32 to vector<8x128xf32>
    %17 = arith.maximumf %15, %16 : vector<8x128xf32>
    %18 = arith.truncf %17 : vector<8x128xf32> to vector<8x128xbf16>
    %c0_15 = arith.constant 0 : index
    %c0_16 = arith.constant 0 : index
    %c0_17 = arith.constant 0 : index
    %19 = vector.load %arg4[%c0_15, %c0_16, %c0_17] : memref<1x8x128xbf16, #tpu.memory_space<vmem>>, vector<1x8x128xbf16>
    %20 = vector.shape_cast %19 : vector<1x8x128xbf16> to vector<8x128xbf16>
    %21 = vector.shape_cast %18 : vector<8x128xbf16> to vector<1x8x128xbf16>
    tpu.vector_store %arg4[%c0_15, %c0_16, %c0_17], %21 {strides = array<i32>} : memref<1x8x128xbf16, #tpu.memory_space<vmem>>, vector<1x8x128xbf16>,
    return
  }
  func.func @transform_0(%arg0: i32) -> (i32, i32, i32) {
    %c0_i32 = arith.constant 0 : i32
    %c0_i32_0 = arith.constant 0 : i32
    %c0_i32_1 = arith.constant 0 : i32
    return %arg0, %c0_i32, %c0_i32_0 : i32, i32, i32
  }
  func.func @transform_1(%arg0: i32) -> (i32, i32, i32) {
    %c0_i32 = arith.constant 0 : i32
    %c0_i32_0 = arith.constant 0 : i32
    %c0_i32_1 = arith.constant 0 : i32
    %c0_i32_2 = arith.constant 0 : i32
    return %c0_i32, %c0_i32_0, %c0_i32_1 : i32, i32, i32
  }
  func.func @transform_2(%arg0: i32) -> (i32, i32) {
    %c0_i32 = arith.constant 0 : i32
    %c0_i32_0 = arith.constant 0 : i32
    %c0_i32_1 = arith.constant 0 : i32
    return %c0_i32, %c0_i32_0 : i32, i32
  }
  func.func @transform_3(%arg0: i32) -> (i32, i32, i32) {
    %c0_i32 = arith.constant 0 : i32
    %c0_i32_0 = arith.constant 0 : i32
    %c0_i32_1 = arith.constant 0 : i32
    return %arg0, %c0_i32, %c0_i32_0 : i32, i32, i32
  }
}

module attributes {stable_mosaic.version = 11 : i64} {
  func.func @_conv_taps_kernel(%arg0: i32, %arg1: memref<1x18x128xbf16, #tpu.memory_space<vmem>>, %arg2: memref<3x128x128xbf16, #tpu.memory_space<vmem>>, %arg3: memref<1x128xf32, #tpu.memory_space<vmem>>, %arg4: memref<1x16x128xbf16, #tpu.memory_space<vmem>>) attributes {dimension_semantics = [#tpu.dimension_semantics<parallel>], iteration_bounds = array<i64: 2>, scalar_prefetch = 0 : i64, scratch_operands = 0 : i64, tpu.core_type = #tpu.core_type<tc>, window_params = [{transform_indices = @transform_0, window_bounds = array<i64: 1, 18, 128>}, {pipeline_mode = #tpu.pipeline_mode<synchronous>, transform_indices = @transform_1, window_bounds = array<i64: 3, 128, 128>}, {pipeline_mode = #tpu.pipeline_mode<synchronous>, transform_indices = @transform_2, window_bounds = array<i64: 1, 128>}, {transform_indices = @transform_3, window_bounds = array<i64: 1, 16, 128>}]} {
    %cst = arith.constant 0.000000e+00 : f32
    %0 = vector.broadcast %cst : f32 to vector<16x128xf32>
    %c0 = arith.constant 0 : index
    %c0_0 = arith.constant 0 : index
    %c0_1 = arith.constant 0 : index
    %1 = vector.load %arg1[%c0, %c0_0, %c0_1] : memref<1x18x128xbf16, #tpu.memory_space<vmem>>, vector<1x16x128xbf16>
    %2 = vector.shape_cast %1 : vector<1x16x128xbf16> to vector<16x128xbf16>
    %c0_2 = arith.constant 0 : index
    %c0_3 = arith.constant 0 : index
    %c0_4 = arith.constant 0 : index
    %3 = vector.load %arg2[%c0_2, %c0_3, %c0_4] : memref<3x128x128xbf16, #tpu.memory_space<vmem>>, vector<1x128x128xbf16>
    %4 = vector.shape_cast %3 : vector<1x128x128xbf16> to vector<128x128xbf16>
    %cst_5 = arith.constant dense<0.000000e+00> : vector<16x128xf32>
    %5 = tpu.matmul %2, %4, %cst_5 {dimension_numbers = #tpu.dot_dimension_numbers<[1], [0], [0], [1], [0, 0, 1, 1], [], []>} : vector<16x128xbf16>, vector<128x128xbf16>, vector<16x128xf32> -> vector<16x128xf32>
    %6 = arith.addf %0, %5 : vector<16x128xf32>
    %c0_6 = arith.constant 0 : index
    %c1 = arith.constant 1 : index
    %c0_7 = arith.constant 0 : index
    %7 = vector.load %arg1[%c0_6, %c1, %c0_7] : memref<1x18x128xbf16, #tpu.memory_space<vmem>>, vector<1x16x128xbf16>
    %8 = vector.shape_cast %7 : vector<1x16x128xbf16> to vector<16x128xbf16>
    %c1_8 = arith.constant 1 : index
    %c0_9 = arith.constant 0 : index
    %c0_10 = arith.constant 0 : index
    %9 = vector.load %arg2[%c1_8, %c0_9, %c0_10] : memref<3x128x128xbf16, #tpu.memory_space<vmem>>, vector<1x128x128xbf16>
    %10 = vector.shape_cast %9 : vector<1x128x128xbf16> to vector<128x128xbf16>
    %cst_11 = arith.constant dense<0.000000e+00> : vector<16x128xf32>
    %11 = tpu.matmul %8, %10, %cst_11 {dimension_numbers = #tpu.dot_dimension_numbers<[1], [0], [0], [1], [0, 0, 1, 1], [], []>} : vector<16x128xbf16>, vector<128x128xbf16>, vector<16x128xf32> -> vector<16x128xf32>
    %12 = arith.addf %6, %11 : vector<16x128xf32>
    %c0_12 = arith.constant 0 : index
    %c2 = arith.constant 2 : index
    %c0_13 = arith.constant 0 : index
    %13 = vector.load %arg1[%c0_12, %c2, %c0_13] : memref<1x18x128xbf16, #tpu.memory_space<vmem>>, vector<1x16x128xbf16>
    %14 = vector.shape_cast %13 : vector<1x16x128xbf16> to vector<16x128xbf16>
    %c2_14 = arith.constant 2 : index
    %c0_15 = arith.constant 0 : index
    %c0_16 = arith.constant 0 : index
    %15 = vector.load %arg2[%c2_14, %c0_15, %c0_16] : memref<3x128x128xbf16, #tpu.memory_space<vmem>>, vector<1x128x128xbf16>
    %16 = vector.shape_cast %15 : vector<1x128x128xbf16> to vector<128x128xbf16>
    %cst_17 = arith.constant dense<0.000000e+00> : vector<16x128xf32>
    %17 = tpu.matmul %14, %16, %cst_17 {dimension_numbers = #tpu.dot_dimension_numbers<[1], [0], [0], [1], [0, 0, 1, 1], [], []>} : vector<16x128xbf16>, vector<128x128xbf16>, vector<16x128xf32> -> vector<16x128xf32>
    %18 = arith.addf %12, %17 : vector<16x128xf32>
    %c0_18 = arith.constant 0 : index
    %c0_19 = arith.constant 0 : index
    %19 = vector.load %arg3[%c0_18, %c0_19] : memref<1x128xf32, #tpu.memory_space<vmem>>, vector<1x128xf32>
    %20 = vector.broadcast %19 : vector<1x128xf32> to vector<16x128xf32>
    %21 = arith.addf %18, %20 : vector<16x128xf32>
    %cst_20 = arith.constant 0.000000e+00 : f32
    %22 = vector.broadcast %cst_20 : f32 to vector<16x128xf32>
    %23 = arith.maximumf %21, %22 : vector<16x128xf32>
    %24 = arith.truncf %23 : vector<16x128xf32> to vector<16x128xbf16>
    %c0_21 = arith.constant 0 : index
    %c0_22 = arith.constant 0 : index
    %c0_23 = arith.constant 0 : index
    %25 = vector.load %arg4[%c0_21, %c0_22, %c0_23] : memref<1x16x128xbf16, #tpu.memory_space<vmem>>, vector<1x16x128xbf16>
    %26 = vector.shape_cast %25 : vector<1x16x128xbf16> to vector<16x128xbf16>
    %27 = vector.shape_cast %24 : vector<16x128xbf16> to vector<1x16x128xbf16>
    tpu.vector_store %arg4[%c0_21, %c0_22, %c0_23], %27 {strides = array<i32>} : memref<1x16x128xbf16, #tpu.memory_space<vmem>>, vector<1x16x128xbf16>,
    return
  }
  func.func @transform_0(%arg0: i32) -> (i32, i32, i32) {
    %c0_i32 = arith.constant 0 : i32
    %c0_i32_0 = arith.constant 0 : i32
    %c0_i32_1 = arith.constant 0 : i32
    return %arg0, %c0_i32, %c0_i32_0 : i32, i32, i32
  }
  func.func @transform_1(%arg0: i32) -> (i32, i32, i32) {
    %c0_i32 = arith.constant 0 : i32
    %c0_i32_0 = arith.constant 0 : i32
    %c0_i32_1 = arith.constant 0 : i32
    %c0_i32_2 = arith.constant 0 : i32
    return %c0_i32, %c0_i32_0, %c0_i32_1 : i32, i32, i32
  }
  func.func @transform_2(%arg0: i32) -> (i32, i32) {
    %c0_i32 = arith.constant 0 : i32
    %c0_i32_0 = arith.constant 0 : i32
    %c0_i32_1 = arith.constant 0 : i32
    return %c0_i32, %c0_i32_0 : i32, i32
  }
  func.func @transform_3(%arg0: i32) -> (i32, i32, i32) {
    %c0_i32 = arith.constant 0 : i32
    %c0_i32_0 = arith.constant 0 : i32
    %c0_i32_1 = arith.constant 0 : i32
    return %arg0, %c0_i32, %c0_i32_0 : i32, i32, i32
  }
}

module attributes {stable_mosaic.version = 11 : i64} {
  func.func @_conv_taps_kernel(%arg0: i32, %arg1: memref<1x5x256xbf16, #tpu.memory_space<vmem>>, %arg2: memref<2x256x128xbf16, #tpu.memory_space<vmem>>, %arg3: memref<1x128xf32, #tpu.memory_space<vmem>>, %arg4: memref<1x4x128xbf16, #tpu.memory_space<vmem>>) attributes {dimension_semantics = [#tpu.dimension_semantics<parallel>], iteration_bounds = array<i64: 2>, scalar_prefetch = 0 : i64, scratch_operands = 0 : i64, tpu.core_type = #tpu.core_type<tc>, window_params = [{transform_indices = @transform_0, window_bounds = array<i64: 1, 5, 256>}, {pipeline_mode = #tpu.pipeline_mode<synchronous>, transform_indices = @transform_1, window_bounds = array<i64: 2, 256, 128>}, {pipeline_mode = #tpu.pipeline_mode<synchronous>, transform_indices = @transform_2, window_bounds = array<i64: 1, 128>}, {transform_indices = @transform_3, window_bounds = array<i64: 1, 4, 128>}]} {
    %cst = arith.constant 0.000000e+00 : f32
    %0 = vector.broadcast %cst : f32 to vector<4x128xf32>
    %c0 = arith.constant 0 : index
    %c0_0 = arith.constant 0 : index
    %c0_1 = arith.constant 0 : index
    %1 = vector.load %arg1[%c0, %c0_0, %c0_1] : memref<1x5x256xbf16, #tpu.memory_space<vmem>>, vector<1x4x256xbf16>
    %2 = vector.shape_cast %1 : vector<1x4x256xbf16> to vector<4x256xbf16>
    %c0_2 = arith.constant 0 : index
    %c0_3 = arith.constant 0 : index
    %c0_4 = arith.constant 0 : index
    %3 = vector.load %arg2[%c0_2, %c0_3, %c0_4] : memref<2x256x128xbf16, #tpu.memory_space<vmem>>, vector<1x256x128xbf16>
    %4 = vector.shape_cast %3 : vector<1x256x128xbf16> to vector<256x128xbf16>
    %cst_5 = arith.constant dense<0.000000e+00> : vector<4x128xf32>
    %5 = tpu.matmul %2, %4, %cst_5 {dimension_numbers = #tpu.dot_dimension_numbers<[1], [0], [0], [1], [0, 0, 1, 1], [], []>} : vector<4x256xbf16>, vector<256x128xbf16>, vector<4x128xf32> -> vector<4x128xf32>
    %6 = arith.addf %0, %5 : vector<4x128xf32>
    %c0_6 = arith.constant 0 : index
    %c1 = arith.constant 1 : index
    %c0_7 = arith.constant 0 : index
    %7 = vector.load %arg1[%c0_6, %c1, %c0_7] : memref<1x5x256xbf16, #tpu.memory_space<vmem>>, vector<1x4x256xbf16>
    %8 = vector.shape_cast %7 : vector<1x4x256xbf16> to vector<4x256xbf16>
    %c1_8 = arith.constant 1 : index
    %c0_9 = arith.constant 0 : index
    %c0_10 = arith.constant 0 : index
    %9 = vector.load %arg2[%c1_8, %c0_9, %c0_10] : memref<2x256x128xbf16, #tpu.memory_space<vmem>>, vector<1x256x128xbf16>
    %10 = vector.shape_cast %9 : vector<1x256x128xbf16> to vector<256x128xbf16>
    %cst_11 = arith.constant dense<0.000000e+00> : vector<4x128xf32>
    %11 = tpu.matmul %8, %10, %cst_11 {dimension_numbers = #tpu.dot_dimension_numbers<[1], [0], [0], [1], [0, 0, 1, 1], [], []>} : vector<4x256xbf16>, vector<256x128xbf16>, vector<4x128xf32> -> vector<4x128xf32>
    %12 = arith.addf %6, %11 : vector<4x128xf32>
    %c0_12 = arith.constant 0 : index
    %c0_13 = arith.constant 0 : index
    %13 = vector.load %arg3[%c0_12, %c0_13] : memref<1x128xf32, #tpu.memory_space<vmem>>, vector<1x128xf32>
    %14 = vector.broadcast %13 : vector<1x128xf32> to vector<4x128xf32>
    %15 = arith.addf %12, %14 : vector<4x128xf32>
    %cst_14 = arith.constant 0.000000e+00 : f32
    %16 = vector.broadcast %cst_14 : f32 to vector<4x128xf32>
    %17 = arith.maximumf %15, %16 : vector<4x128xf32>
    %18 = arith.truncf %17 : vector<4x128xf32> to vector<4x128xbf16>
    %c0_15 = arith.constant 0 : index
    %c0_16 = arith.constant 0 : index
    %c0_17 = arith.constant 0 : index
    %19 = vector.load %arg4[%c0_15, %c0_16, %c0_17] : memref<1x4x128xbf16, #tpu.memory_space<vmem>>, vector<1x4x128xbf16>
    %20 = vector.shape_cast %19 : vector<1x4x128xbf16> to vector<4x128xbf16>
    %21 = vector.shape_cast %18 : vector<4x128xbf16> to vector<1x4x128xbf16>
    tpu.vector_store %arg4[%c0_15, %c0_16, %c0_17], %21 {strides = array<i32>} : memref<1x4x128xbf16, #tpu.memory_space<vmem>>, vector<1x4x128xbf16>,
    return
  }
  func.func @transform_0(%arg0: i32) -> (i32, i32, i32) {
    %c0_i32 = arith.constant 0 : i32
    %c0_i32_0 = arith.constant 0 : i32
    %c0_i32_1 = arith.constant 0 : i32
    return %arg0, %c0_i32, %c0_i32_0 : i32, i32, i32
  }
  func.func @transform_1(%arg0: i32) -> (i32, i32, i32) {
    %c0_i32 = arith.constant 0 : i32
    %c0_i32_0 = arith.constant 0 : i32
    %c0_i32_1 = arith.constant 0 : i32
    %c0_i32_2 = arith.constant 0 : i32
    return %c0_i32, %c0_i32_0, %c0_i32_1 : i32, i32, i32
  }
  func.func @transform_2(%arg0: i32) -> (i32, i32) {
    %c0_i32 = arith.constant 0 : i32
    %c0_i32_0 = arith.constant 0 : i32
    %c0_i32_1 = arith.constant 0 : i32
    return %c0_i32, %c0_i32_0 : i32, i32
  }
  func.func @transform_3(%arg0: i32) -> (i32, i32, i32) {
    %c0_i32 = arith.constant 0 : i32
    %c0_i32_0 = arith.constant 0 : i32
    %c0_i32_1 = arith.constant 0 : i32
    return %arg0, %c0_i32, %c0_i32_0 : i32, i32, i32
  }
}

module attributes {stable_mosaic.version = 11 : i64} {
  func.func @_vq_kernel(%arg0: i32, %arg1: memref<8x128xf32, #tpu.memory_space<vmem>>, %arg2: memref<128x128xf32, #tpu.memory_space<vmem>>, %arg3: memref<128x128xf32, #tpu.memory_space<vmem>>, %arg4: memref<1x128xf32, #tpu.memory_space<vmem>>, %arg5: memref<8x128xbf16, #tpu.memory_space<vmem>>, %arg6: memref<1x1xf32, #tpu.memory_space<smem>>, %arg7: memref<1x1xf32, #tpu.memory_space<smem>>) attributes {dimension_semantics = [#tpu.dimension_semantics<arbitrary>], iteration_bounds = array<i64: 1>, scalar_prefetch = 0 : i64, scratch_operands = 1 : i64, tpu.core_type = #tpu.core_type<tc>, window_params = [{transform_indices = @transform_0, window_bounds = array<i64: 8, 128>}, {pipeline_mode = #tpu.pipeline_mode<synchronous>, transform_indices = @transform_1, window_bounds = array<i64: 128, 128>}, {pipeline_mode = #tpu.pipeline_mode<synchronous>, transform_indices = @transform_2, window_bounds = array<i64: 128, 128>}, {pipeline_mode = #tpu.pipeline_mode<synchronous>, transform_indices = @transform_3, window_bounds = array<i64: 1, 128>}, {transform_indices = @transform_4, window_bounds = array<i64: 8, 128>}, {transform_indices = @transform_5, window_bounds = array<i64: 1, 1>}]} {
    %c0_i32 = arith.constant 0 : i32
    %0 = arith.cmpi eq, %arg0, %c0_i32 : i32
    %1 = arith.extui %0 : i1 to i32
    %c0_i32_0 = arith.constant 0 : i32
    %2 = arith.cmpi ne, %1, %c0_i32_0 : i32
    scf.if %2 {
      %cst_22 = arith.constant 0.000000e+00 : f32
      %c0_23 = arith.constant 0 : index
      %c0_24 = arith.constant 0 : index
      %43 = memref.load %arg7[%c0_23, %c0_24] : memref<1x1xf32, #tpu.memory_space<smem>>
      memref.store %cst_22, %arg7[%c0_23, %c0_24] : memref<1x1xf32, #tpu.memory_space<smem>>
    } else {
    }
    %c0 = arith.constant 0 : index
    %c0_1 = arith.constant 0 : index
    %3 = vector.load %arg1[%c0, %c0_1] : memref<8x128xf32, #tpu.memory_space<vmem>>, vector<8x128xf32>
    %c0_2 = arith.constant 0 : index
    %c0_3 = arith.constant 0 : index
    %4 = vector.load %arg4[%c0_2, %c0_3] : memref<1x128xf32, #tpu.memory_space<vmem>>, vector<1x128xf32>
    %c0_4 = arith.constant 0 : index
    %c0_5 = arith.constant 0 : index
    %5 = vector.load %arg3[%c0_4, %c0_5] : memref<128x128xf32, #tpu.memory_space<vmem>>, vector<128x128xf32>
    %cst = arith.constant dense<0.000000e+00> : vector<8x128xf32>
    %6 = tpu.matmul %3, %5, %cst {dimension_numbers = #tpu.dot_dimension_numbers<[1], [0], [0], [1], [0, 0, 1, 1], [], []>} : vector<8x128xf32>, vector<128x128xf32>, vector<8x128xf32> -> vector<8x128xf32>
    %cst_6 = arith.constant 2.000000e+00 : f32
    %7 = vector.broadcast %cst_6 : f32 to vector<8x128xf32>
    %8 = arith.mulf %7, %6 : vector<8x128xf32>
    %9 = vector.broadcast %4 : vector<1x128xf32> to vector<8x128xf32>
    %10 = arith.subf %9, %8 : vector<8x128xf32>
    %11 = tpu.reduce_index %10 {axis = 1 : i32, kind = #tpu.reduction_kind<arg_min>} : vector<8x128xf32> -> vector<8xi32>
    %12 = vector.shape_cast %11 : vector<8xi32> to vector<8x1xi32>
    %13 = tpu.iota {dimensions = array<i32: 1>} : vector<8x128xi32>
    %14 = vector.broadcast %12 : vector<8x1xi32> to vector<8x128xi32>
    %15 = arith.cmpi eq, %14, %13 : vector<8x128xi32>
    %16 = arith.extui %15 : vector<8x128xi1> to vector<8x128xi32>
    %17 = arith.sitofp %16 : vector<8x128xi32> to vector<8x128xf32>
    %c0_7 = arith.constant 0 : index
    %c0_8 = arith.constant 0 : index
    %18 = vector.load %arg2[%c0_7, %c0_8] : memref<128x128xf32, #tpu.memory_space<vmem>>, vector<128x128xf32>
    %cst_9 = arith.constant dense<0.000000e+00> : vector<8x128xf32>
    %19 = tpu.matmul %17, %18, %cst_9 {dimension_numbers = #tpu.dot_dimension_numbers<[1], [0], [0], [1], [0, 0, 1, 1], [], []>} : vector<8x128xf32>, vector<128x128xf32>, vector<8x128xf32> -> vector<8x128xf32>
    %20 = arith.truncf %19 : vector<8x128xf32> to vector<8x128xbf16>
    %c0_10 = arith.constant 0 : index
    %c0_11 = arith.constant 0 : index
    %21 = vector.load %arg5[%c0_10, %c0_11] : memref<8x128xbf16, #tpu.memory_space<vmem>>, vector<8x128xbf16>
    tpu.vector_store %arg5[%c0_10, %c0_11], %20 {strides = array<i32>} : memref<8x128xbf16, #tpu.memory_space<vmem>>, vector<8x128xbf16>,
    %c8_i32 = arith.constant 8 : i32
    %22 = arith.muli %arg0, %c8_i32 : i32
    %23 = tpu.iota {dimensions = array<i32: 0>} : vector<8x1xi32>
    %24 = vector.broadcast %22 : i32 to vector<8x1xi32>
    %25 = arith.addi %24, %23 : vector<8x1xi32>
    %c8_i32_12 = arith.constant 8 : i32
    %26 = vector.broadcast %c8_i32_12 : i32 to vector<8x1xi32>
    %27 = arith.cmpi slt, %25, %26 : vector<8x1xi32>
    %28 = arith.extui %27 : vector<8x1xi1> to vector<8x1xi32>
    %29 = arith.sitofp %28 : vector<8x1xi32> to vector<8x1xf32>
    %30 = arith.subf %3, %19 : vector<8x128xf32>
    %31 = vector.broadcast %29 : vector<8x1xf32> to vector<8x128xf32>
    %32 = arith.mulf %30, %31 : vector<8x128xf32>
    %c0_13 = arith.constant 0 : index
    %c0_14 = arith.constant 0 : index
    %33 = memref.load %arg7[%c0_13, %c0_14] : memref<1x1xf32, #tpu.memory_space<smem>>
    %34 = arith.mulf %32, %32 : vector<8x128xf32>
    %35 = vector.shape_cast %34 : vector<8x128xf32> to vector<1x8x128xf32>
    %cst_15 = arith.constant dense<0.000000e+00> : vector<1xf32>
    %36 = vector.multi_reduction <add>, %35, %cst_15 [1, 2] : vector<1x8x128xf32> to vector<1xf32>
    %37 = vector.shape_cast %36 : vector<1xf32> to vector<1x1x1xf32>
    %38 = vector.extract %37[0, 0, 0] : f32 from vector<1x1x1xf32>
    %39 = arith.addf %33, %38 : f32
    %c0_16 = arith.constant 0 : index
    %c0_17 = arith.constant 0 : index
    %40 = memref.load %arg7[%c0_16, %c0_17] : memref<1x1xf32, #tpu.memory_space<smem>>
    memref.store %39, %arg7[%c0_16, %c0_17] : memref<1x1xf32, #tpu.memory_space<smem>>
    %c0_18 = arith.constant 0 : index
    %c0_19 = arith.constant 0 : index
    %41 = memref.load %arg7[%c0_18, %c0_19] : memref<1x1xf32, #tpu.memory_space<smem>>
    %c0_20 = arith.constant 0 : index
    %c0_21 = arith.constant 0 : index
    %42 = memref.load %arg6[%c0_20, %c0_21] : memref<1x1xf32, #tpu.memory_space<smem>>
    memref.store %41, %arg6[%c0_20, %c0_21] : memref<1x1xf32, #tpu.memory_space<smem>>
    return
  }
  func.func @transform_0(%arg0: i32) -> (i32, i32) {
    %c0_i32 = arith.constant 0 : i32
    %c0_i32_0 = arith.constant 0 : i32
    return %arg0, %c0_i32 : i32, i32
  }
  func.func @transform_1(%arg0: i32) -> (i32, i32) {
    %c0_i32 = arith.constant 0 : i32
    %c0_i32_0 = arith.constant 0 : i32
    %c0_i32_1 = arith.constant 0 : i32
    return %c0_i32, %c0_i32_0 : i32, i32
  }
  func.func @transform_2(%arg0: i32) -> (i32, i32) {
    %c0_i32 = arith.constant 0 : i32
    %c0_i32_0 = arith.constant 0 : i32
    %c0_i32_1 = arith.constant 0 : i32
    return %c0_i32, %c0_i32_0 : i32, i32
  }
  func.func @transform_3(%arg0: i32) -> (i32, i32) {
    %c0_i32 = arith.constant 0 : i32
    %c0_i32_0 = arith.constant 0 : i32
    %c0_i32_1 = arith.constant 0 : i32
    return %c0_i32, %c0_i32_0 : i32, i32
  }
  func.func @transform_4(%arg0: i32) -> (i32, i32) {
    %c0_i32 = arith.constant 0 : i32
    %c0_i32_0 = arith.constant 0 : i32
    return %arg0, %c0_i32 : i32, i32
  }
  func.func @transform_5(%arg0: i32) -> (i32, i32) {
    %c0_i32 = arith.constant 0 : i32
    %c0_i32_0 = arith.constant 0 : i32
    %c0_i32_1 = arith.constant 0 : i32
    return %c0_i32, %c0_i32_0 : i32, i32
  }
}

module attributes {stable_mosaic.version = 11 : i64} {
  func.func @_conv_taps_kernel(%arg0: i32, %arg1: memref<1x6x128xbf16, #tpu.memory_space<vmem>>, %arg2: memref<3x128x128xbf16, #tpu.memory_space<vmem>>, %arg3: memref<1x128xf32, #tpu.memory_space<vmem>>, %arg4: memref<1x4x128xbf16, #tpu.memory_space<vmem>>) attributes {dimension_semantics = [#tpu.dimension_semantics<parallel>], iteration_bounds = array<i64: 2>, scalar_prefetch = 0 : i64, scratch_operands = 0 : i64, tpu.core_type = #tpu.core_type<tc>, window_params = [{transform_indices = @transform_0, window_bounds = array<i64: 1, 6, 128>}, {pipeline_mode = #tpu.pipeline_mode<synchronous>, transform_indices = @transform_1, window_bounds = array<i64: 3, 128, 128>}, {pipeline_mode = #tpu.pipeline_mode<synchronous>, transform_indices = @transform_2, window_bounds = array<i64: 1, 128>}, {transform_indices = @transform_3, window_bounds = array<i64: 1, 4, 128>}]} {
    %cst = arith.constant 0.000000e+00 : f32
    %0 = vector.broadcast %cst : f32 to vector<4x128xf32>
    %c0 = arith.constant 0 : index
    %c0_0 = arith.constant 0 : index
    %c0_1 = arith.constant 0 : index
    %1 = vector.load %arg1[%c0, %c0_0, %c0_1] : memref<1x6x128xbf16, #tpu.memory_space<vmem>>, vector<1x4x128xbf16>
    %2 = vector.shape_cast %1 : vector<1x4x128xbf16> to vector<4x128xbf16>
    %c0_2 = arith.constant 0 : index
    %c0_3 = arith.constant 0 : index
    %c0_4 = arith.constant 0 : index
    %3 = vector.load %arg2[%c0_2, %c0_3, %c0_4] : memref<3x128x128xbf16, #tpu.memory_space<vmem>>, vector<1x128x128xbf16>
    %4 = vector.shape_cast %3 : vector<1x128x128xbf16> to vector<128x128xbf16>
    %cst_5 = arith.constant dense<0.000000e+00> : vector<4x128xf32>
    %5 = tpu.matmul %2, %4, %cst_5 {dimension_numbers = #tpu.dot_dimension_numbers<[1], [0], [0], [1], [0, 0, 1, 1], [], []>} : vector<4x128xbf16>, vector<128x128xbf16>, vector<4x128xf32> -> vector<4x128xf32>
    %6 = arith.addf %0, %5 : vector<4x128xf32>
    %c0_6 = arith.constant 0 : index
    %c1 = arith.constant 1 : index
    %c0_7 = arith.constant 0 : index
    %7 = vector.load %arg1[%c0_6, %c1, %c0_7] : memref<1x6x128xbf16, #tpu.memory_space<vmem>>, vector<1x4x128xbf16>
    %8 = vector.shape_cast %7 : vector<1x4x128xbf16> to vector<4x128xbf16>
    %c1_8 = arith.constant 1 : index
    %c0_9 = arith.constant 0 : index
    %c0_10 = arith.constant 0 : index
    %9 = vector.load %arg2[%c1_8, %c0_9, %c0_10] : memref<3x128x128xbf16, #tpu.memory_space<vmem>>, vector<1x128x128xbf16>
    %10 = vector.shape_cast %9 : vector<1x128x128xbf16> to vector<128x128xbf16>
    %cst_11 = arith.constant dense<0.000000e+00> : vector<4x128xf32>
    %11 = tpu.matmul %8, %10, %cst_11 {dimension_numbers = #tpu.dot_dimension_numbers<[1], [0], [0], [1], [0, 0, 1, 1], [], []>} : vector<4x128xbf16>, vector<128x128xbf16>, vector<4x128xf32> -> vector<4x128xf32>
    %12 = arith.addf %6, %11 : vector<4x128xf32>
    %c0_12 = arith.constant 0 : index
    %c2 = arith.constant 2 : index
    %c0_13 = arith.constant 0 : index
    %13 = vector.load %arg1[%c0_12, %c2, %c0_13] : memref<1x6x128xbf16, #tpu.memory_space<vmem>>, vector<1x4x128xbf16>
    %14 = vector.shape_cast %13 : vector<1x4x128xbf16> to vector<4x128xbf16>
    %c2_14 = arith.constant 2 : index
    %c0_15 = arith.constant 0 : index
    %c0_16 = arith.constant 0 : index
    %15 = vector.load %arg2[%c2_14, %c0_15, %c0_16] : memref<3x128x128xbf16, #tpu.memory_space<vmem>>, vector<1x128x128xbf16>
    %16 = vector.shape_cast %15 : vector<1x128x128xbf16> to vector<128x128xbf16>
    %cst_17 = arith.constant dense<0.000000e+00> : vector<4x128xf32>
    %17 = tpu.matmul %14, %16, %cst_17 {dimension_numbers = #tpu.dot_dimension_numbers<[1], [0], [0], [1], [0, 0, 1, 1], [], []>} : vector<4x128xbf16>, vector<128x128xbf16>, vector<4x128xf32> -> vector<4x128xf32>
    %18 = arith.addf %12, %17 : vector<4x128xf32>
    %c0_18 = arith.constant 0 : index
    %c0_19 = arith.constant 0 : index
    %19 = vector.load %arg3[%c0_18, %c0_19] : memref<1x128xf32, #tpu.memory_space<vmem>>, vector<1x128xf32>
    %20 = vector.broadcast %19 : vector<1x128xf32> to vector<4x128xf32>
    %21 = arith.addf %18, %20 : vector<4x128xf32>
    %cst_20 = arith.constant 0.000000e+00 : f32
    %22 = vector.broadcast %cst_20 : f32 to vector<4x128xf32>
    %23 = arith.maximumf %21, %22 : vector<4x128xf32>
    %24 = arith.truncf %23 : vector<4x128xf32> to vector<4x128xbf16>
    %c0_21 = arith.constant 0 : index
    %c0_22 = arith.constant 0 : index
    %c0_23 = arith.constant 0 : index
    %25 = vector.load %arg4[%c0_21, %c0_22, %c0_23] : memref<1x4x128xbf16, #tpu.memory_space<vmem>>, vector<1x4x128xbf16>
    %26 = vector.shape_cast %25 : vector<1x4x128xbf16> to vector<4x128xbf16>
    %27 = vector.shape_cast %24 : vector<4x128xbf16> to vector<1x4x128xbf16>
    tpu.vector_store %arg4[%c0_21, %c0_22, %c0_23], %27 {strides = array<i32>} : memref<1x4x128xbf16, #tpu.memory_space<vmem>>, vector<1x4x128xbf16>,
    return
  }
  func.func @transform_0(%arg0: i32) -> (i32, i32, i32) {
    %c0_i32 = arith.constant 0 : i32
    %c0_i32_0 = arith.constant 0 : i32
    %c0_i32_1 = arith.constant 0 : i32
    return %arg0, %c0_i32, %c0_i32_0 : i32, i32, i32
  }
  func.func @transform_1(%arg0: i32) -> (i32, i32, i32) {
    %c0_i32 = arith.constant 0 : i32
    %c0_i32_0 = arith.constant 0 : i32
    %c0_i32_1 = arith.constant 0 : i32
    %c0_i32_2 = arith.constant 0 : i32
    return %c0_i32, %c0_i32_0, %c0_i32_1 : i32, i32, i32
  }
  func.func @transform_2(%arg0: i32) -> (i32, i32) {
    %c0_i32 = arith.constant 0 : i32
    %c0_i32_0 = arith.constant 0 : i32
    %c0_i32_1 = arith.constant 0 : i32
    return %c0_i32, %c0_i32_0 : i32, i32
  }
  func.func @transform_3(%arg0: i32) -> (i32, i32, i32) {
    %c0_i32 = arith.constant 0 : i32
    %c0_i32_0 = arith.constant 0 : i32
    %c0_i32_1 = arith.constant 0 : i32
    return %arg0, %c0_i32, %c0_i32_0 : i32, i32, i32
  }
}

module attributes {stable_mosaic.version = 11 : i64} {
  func.func @_conv_taps_kernel(%arg0: i32, %arg1: memref<1x6x128xbf16, #tpu.memory_space<vmem>>, %arg2: memref<3x128x256xbf16, #tpu.memory_space<vmem>>, %arg3: memref<1x256xf32, #tpu.memory_space<vmem>>, %arg4: memref<1x4x256xbf16, #tpu.memory_space<vmem>>) attributes {dimension_semantics = [#tpu.dimension_semantics<parallel>], iteration_bounds = array<i64: 2>, scalar_prefetch = 0 : i64, scratch_operands = 0 : i64, tpu.core_type = #tpu.core_type<tc>, window_params = [{transform_indices = @transform_0, window_bounds = array<i64: 1, 6, 128>}, {pipeline_mode = #tpu.pipeline_mode<synchronous>, transform_indices = @transform_1, window_bounds = array<i64: 3, 128, 256>}, {pipeline_mode = #tpu.pipeline_mode<synchronous>, transform_indices = @transform_2, window_bounds = array<i64: 1, 256>}, {transform_indices = @transform_3, window_bounds = array<i64: 1, 4, 256>}]} {
    %cst = arith.constant 0.000000e+00 : f32
    %0 = vector.broadcast %cst : f32 to vector<4x256xf32>
    %c0 = arith.constant 0 : index
    %c0_0 = arith.constant 0 : index
    %c0_1 = arith.constant 0 : index
    %1 = vector.load %arg1[%c0, %c0_0, %c0_1] : memref<1x6x128xbf16, #tpu.memory_space<vmem>>, vector<1x4x128xbf16>
    %2 = vector.shape_cast %1 : vector<1x4x128xbf16> to vector<4x128xbf16>
    %c0_2 = arith.constant 0 : index
    %c0_3 = arith.constant 0 : index
    %c0_4 = arith.constant 0 : index
    %3 = vector.load %arg2[%c0_2, %c0_3, %c0_4] : memref<3x128x256xbf16, #tpu.memory_space<vmem>>, vector<1x128x256xbf16>
    %4 = vector.shape_cast %3 : vector<1x128x256xbf16> to vector<128x256xbf16>
    %cst_5 = arith.constant dense<0.000000e+00> : vector<4x256xf32>
    %5 = tpu.matmul %2, %4, %cst_5 {dimension_numbers = #tpu.dot_dimension_numbers<[1], [0], [0], [1], [0, 0, 1, 1], [], []>} : vector<4x128xbf16>, vector<128x256xbf16>, vector<4x256xf32> -> vector<4x256xf32>
    %6 = arith.addf %0, %5 : vector<4x256xf32>
    %c0_6 = arith.constant 0 : index
    %c1 = arith.constant 1 : index
    %c0_7 = arith.constant 0 : index
    %7 = vector.load %arg1[%c0_6, %c1, %c0_7] : memref<1x6x128xbf16, #tpu.memory_space<vmem>>, vector<1x4x128xbf16>
    %8 = vector.shape_cast %7 : vector<1x4x128xbf16> to vector<4x128xbf16>
    %c1_8 = arith.constant 1 : index
    %c0_9 = arith.constant 0 : index
    %c0_10 = arith.constant 0 : index
    %9 = vector.load %arg2[%c1_8, %c0_9, %c0_10] : memref<3x128x256xbf16, #tpu.memory_space<vmem>>, vector<1x128x256xbf16>
    %10 = vector.shape_cast %9 : vector<1x128x256xbf16> to vector<128x256xbf16>
    %cst_11 = arith.constant dense<0.000000e+00> : vector<4x256xf32>
    %11 = tpu.matmul %8, %10, %cst_11 {dimension_numbers = #tpu.dot_dimension_numbers<[1], [0], [0], [1], [0, 0, 1, 1], [], []>} : vector<4x128xbf16>, vector<128x256xbf16>, vector<4x256xf32> -> vector<4x256xf32>
    %12 = arith.addf %6, %11 : vector<4x256xf32>
    %c0_12 = arith.constant 0 : index
    %c2 = arith.constant 2 : index
    %c0_13 = arith.constant 0 : index
    %13 = vector.load %arg1[%c0_12, %c2, %c0_13] : memref<1x6x128xbf16, #tpu.memory_space<vmem>>, vector<1x4x128xbf16>
    %14 = vector.shape_cast %13 : vector<1x4x128xbf16> to vector<4x128xbf16>
    %c2_14 = arith.constant 2 : index
    %c0_15 = arith.constant 0 : index
    %c0_16 = arith.constant 0 : index
    %15 = vector.load %arg2[%c2_14, %c0_15, %c0_16] : memref<3x128x256xbf16, #tpu.memory_space<vmem>>, vector<1x128x256xbf16>
    %16 = vector.shape_cast %15 : vector<1x128x256xbf16> to vector<128x256xbf16>
    %cst_17 = arith.constant dense<0.000000e+00> : vector<4x256xf32>
    %17 = tpu.matmul %14, %16, %cst_17 {dimension_numbers = #tpu.dot_dimension_numbers<[1], [0], [0], [1], [0, 0, 1, 1], [], []>} : vector<4x128xbf16>, vector<128x256xbf16>, vector<4x256xf32> -> vector<4x256xf32>
    %18 = arith.addf %12, %17 : vector<4x256xf32>
    %c0_18 = arith.constant 0 : index
    %c0_19 = arith.constant 0 : index
    %19 = vector.load %arg3[%c0_18, %c0_19] : memref<1x256xf32, #tpu.memory_space<vmem>>, vector<1x256xf32>
    %20 = vector.broadcast %19 : vector<1x256xf32> to vector<4x256xf32>
    %21 = arith.addf %18, %20 : vector<4x256xf32>
    %cst_20 = arith.constant 0.000000e+00 : f32
    %22 = vector.broadcast %cst_20 : f32 to vector<4x256xf32>
    %23 = arith.maximumf %21, %22 : vector<4x256xf32>
    %24 = arith.truncf %23 : vector<4x256xf32> to vector<4x256xbf16>
    %c0_21 = arith.constant 0 : index
    %c0_22 = arith.constant 0 : index
    %c0_23 = arith.constant 0 : index
    %25 = vector.load %arg4[%c0_21, %c0_22, %c0_23] : memref<1x4x256xbf16, #tpu.memory_space<vmem>>, vector<1x4x256xbf16>
    %26 = vector.shape_cast %25 : vector<1x4x256xbf16> to vector<4x256xbf16>
    %27 = vector.shape_cast %24 : vector<4x256xbf16> to vector<1x4x256xbf16>
    tpu.vector_store %arg4[%c0_21, %c0_22, %c0_23], %27 {strides = array<i32>} : memref<1x4x256xbf16, #tpu.memory_space<vmem>>, vector<1x4x256xbf16>,
    return
  }
  func.func @transform_0(%arg0: i32) -> (i32, i32, i32) {
    %c0_i32 = arith.constant 0 : i32
    %c0_i32_0 = arith.constant 0 : i32
    %c0_i32_1 = arith.constant 0 : i32
    return %arg0, %c0_i32, %c0_i32_0 : i32, i32, i32
  }
  func.func @transform_1(%arg0: i32) -> (i32, i32, i32) {
    %c0_i32 = arith.constant 0 : i32
    %c0_i32_0 = arith.constant 0 : i32
    %c0_i32_1 = arith.constant 0 : i32
    %c0_i32_2 = arith.constant 0 : i32
    return %c0_i32, %c0_i32_0, %c0_i32_1 : i32, i32, i32
  }
  func.func @transform_2(%arg0: i32) -> (i32, i32) {
    %c0_i32 = arith.constant 0 : i32
    %c0_i32_0 = arith.constant 0 : i32
    %c0_i32_1 = arith.constant 0 : i32
    return %c0_i32, %c0_i32_0 : i32, i32
  }
  func.func @transform_3(%arg0: i32) -> (i32, i32, i32) {
    %c0_i32 = arith.constant 0 : i32
    %c0_i32_0 = arith.constant 0 : i32
    %c0_i32_1 = arith.constant 0 : i32
    return %arg0, %c0_i32, %c0_i32_0 : i32, i32, i32
  }
}

module attributes {stable_mosaic.version = 11 : i64} {
  func.func @_conv_taps_kernel(%arg0: i32, %arg1: memref<1x10x128xbf16, #tpu.memory_space<vmem>>, %arg2: memref<3x128x256xbf16, #tpu.memory_space<vmem>>, %arg3: memref<1x256xf32, #tpu.memory_space<vmem>>, %arg4: memref<1x8x256xbf16, #tpu.memory_space<vmem>>) attributes {dimension_semantics = [#tpu.dimension_semantics<parallel>], iteration_bounds = array<i64: 2>, scalar_prefetch = 0 : i64, scratch_operands = 0 : i64, tpu.core_type = #tpu.core_type<tc>, window_params = [{transform_indices = @transform_0, window_bounds = array<i64: 1, 10, 128>}, {pipeline_mode = #tpu.pipeline_mode<synchronous>, transform_indices = @transform_1, window_bounds = array<i64: 3, 128, 256>}, {pipeline_mode = #tpu.pipeline_mode<synchronous>, transform_indices = @transform_2, window_bounds = array<i64: 1, 256>}, {transform_indices = @transform_3, window_bounds = array<i64: 1, 8, 256>}]} {
    %cst = arith.constant 0.000000e+00 : f32
    %0 = vector.broadcast %cst : f32 to vector<8x256xf32>
    %c0 = arith.constant 0 : index
    %c0_0 = arith.constant 0 : index
    %c0_1 = arith.constant 0 : index
    %1 = vector.load %arg1[%c0, %c0_0, %c0_1] : memref<1x10x128xbf16, #tpu.memory_space<vmem>>, vector<1x8x128xbf16>
    %2 = vector.shape_cast %1 : vector<1x8x128xbf16> to vector<8x128xbf16>
    %c0_2 = arith.constant 0 : index
    %c0_3 = arith.constant 0 : index
    %c0_4 = arith.constant 0 : index
    %3 = vector.load %arg2[%c0_2, %c0_3, %c0_4] : memref<3x128x256xbf16, #tpu.memory_space<vmem>>, vector<1x128x256xbf16>
    %4 = vector.shape_cast %3 : vector<1x128x256xbf16> to vector<128x256xbf16>
    %cst_5 = arith.constant dense<0.000000e+00> : vector<8x256xf32>
    %5 = tpu.matmul %2, %4, %cst_5 {dimension_numbers = #tpu.dot_dimension_numbers<[1], [0], [0], [1], [0, 0, 1, 1], [], []>} : vector<8x128xbf16>, vector<128x256xbf16>, vector<8x256xf32> -> vector<8x256xf32>
    %6 = arith.addf %0, %5 : vector<8x256xf32>
    %c0_6 = arith.constant 0 : index
    %c1 = arith.constant 1 : index
    %c0_7 = arith.constant 0 : index
    %7 = vector.load %arg1[%c0_6, %c1, %c0_7] : memref<1x10x128xbf16, #tpu.memory_space<vmem>>, vector<1x8x128xbf16>
    %8 = vector.shape_cast %7 : vector<1x8x128xbf16> to vector<8x128xbf16>
    %c1_8 = arith.constant 1 : index
    %c0_9 = arith.constant 0 : index
    %c0_10 = arith.constant 0 : index
    %9 = vector.load %arg2[%c1_8, %c0_9, %c0_10] : memref<3x128x256xbf16, #tpu.memory_space<vmem>>, vector<1x128x256xbf16>
    %10 = vector.shape_cast %9 : vector<1x128x256xbf16> to vector<128x256xbf16>
    %cst_11 = arith.constant dense<0.000000e+00> : vector<8x256xf32>
    %11 = tpu.matmul %8, %10, %cst_11 {dimension_numbers = #tpu.dot_dimension_numbers<[1], [0], [0], [1], [0, 0, 1, 1], [], []>} : vector<8x128xbf16>, vector<128x256xbf16>, vector<8x256xf32> -> vector<8x256xf32>
    %12 = arith.addf %6, %11 : vector<8x256xf32>
    %c0_12 = arith.constant 0 : index
    %c2 = arith.constant 2 : index
    %c0_13 = arith.constant 0 : index
    %13 = vector.load %arg1[%c0_12, %c2, %c0_13] : memref<1x10x128xbf16, #tpu.memory_space<vmem>>, vector<1x8x128xbf16>
    %14 = vector.shape_cast %13 : vector<1x8x128xbf16> to vector<8x128xbf16>
    %c2_14 = arith.constant 2 : index
    %c0_15 = arith.constant 0 : index
    %c0_16 = arith.constant 0 : index
    %15 = vector.load %arg2[%c2_14, %c0_15, %c0_16] : memref<3x128x256xbf16, #tpu.memory_space<vmem>>, vector<1x128x256xbf16>
    %16 = vector.shape_cast %15 : vector<1x128x256xbf16> to vector<128x256xbf16>
    %cst_17 = arith.constant dense<0.000000e+00> : vector<8x256xf32>
    %17 = tpu.matmul %14, %16, %cst_17 {dimension_numbers = #tpu.dot_dimension_numbers<[1], [0], [0], [1], [0, 0, 1, 1], [], []>} : vector<8x128xbf16>, vector<128x256xbf16>, vector<8x256xf32> -> vector<8x256xf32>
    %18 = arith.addf %12, %17 : vector<8x256xf32>
    %c0_18 = arith.constant 0 : index
    %c0_19 = arith.constant 0 : index
    %19 = vector.load %arg3[%c0_18, %c0_19] : memref<1x256xf32, #tpu.memory_space<vmem>>, vector<1x256xf32>
    %20 = vector.broadcast %19 : vector<1x256xf32> to vector<8x256xf32>
    %21 = arith.addf %18, %20 : vector<8x256xf32>
    %cst_20 = arith.constant 0.000000e+00 : f32
    %22 = vector.broadcast %cst_20 : f32 to vector<8x256xf32>
    %23 = arith.maximumf %21, %22 : vector<8x256xf32>
    %24 = arith.truncf %23 : vector<8x256xf32> to vector<8x256xbf16>
    %c0_21 = arith.constant 0 : index
    %c0_22 = arith.constant 0 : index
    %c0_23 = arith.constant 0 : index
    %25 = vector.load %arg4[%c0_21, %c0_22, %c0_23] : memref<1x8x256xbf16, #tpu.memory_space<vmem>>, vector<1x8x256xbf16>
    %26 = vector.shape_cast %25 : vector<1x8x256xbf16> to vector<8x256xbf16>
    %27 = vector.shape_cast %24 : vector<8x256xbf16> to vector<1x8x256xbf16>
    tpu.vector_store %arg4[%c0_21, %c0_22, %c0_23], %27 {strides = array<i32>} : memref<1x8x256xbf16, #tpu.memory_space<vmem>>, vector<1x8x256xbf16>,
    return
  }
  func.func @transform_0(%arg0: i32) -> (i32, i32, i32) {
    %c0_i32 = arith.constant 0 : i32
    %c0_i32_0 = arith.constant 0 : i32
    %c0_i32_1 = arith.constant 0 : i32
    return %arg0, %c0_i32, %c0_i32_0 : i32, i32, i32
  }
  func.func @transform_1(%arg0: i32) -> (i32, i32, i32) {
    %c0_i32 = arith.constant 0 : i32
    %c0_i32_0 = arith.constant 0 : i32
    %c0_i32_1 = arith.constant 0 : i32
    %c0_i32_2 = arith.constant 0 : i32
    return %c0_i32, %c0_i32_0, %c0_i32_1 : i32, i32, i32
  }
  func.func @transform_2(%arg0: i32) -> (i32, i32) {
    %c0_i32 = arith.constant 0 : i32
    %c0_i32_0 = arith.constant 0 : i32
    %c0_i32_1 = arith.constant 0 : i32
    return %c0_i32, %c0_i32_0 : i32, i32
  }
  func.func @transform_3(%arg0: i32) -> (i32, i32, i32) {
    %c0_i32 = arith.constant 0 : i32
    %c0_i32_0 = arith.constant 0 : i32
    %c0_i32_1 = arith.constant 0 : i32
    return %arg0, %c0_i32, %c0_i32_0 : i32, i32, i32
  }
}

module attributes {stable_mosaic.version = 11 : i64} {
  func.func @_conv_taps_kernel(%arg0: i32, %arg1: memref<1x18x128xbf16, #tpu.memory_space<vmem>>, %arg2: memref<3x128x128xbf16, #tpu.memory_space<vmem>>, %arg3: memref<1x128xf32, #tpu.memory_space<vmem>>, %arg4: memref<1x16x128xf32, #tpu.memory_space<vmem>>) attributes {dimension_semantics = [#tpu.dimension_semantics<parallel>], iteration_bounds = array<i64: 2>, scalar_prefetch = 0 : i64, scratch_operands = 0 : i64, tpu.core_type = #tpu.core_type<tc>, window_params = [{transform_indices = @transform_0, window_bounds = array<i64: 1, 18, 128>}, {pipeline_mode = #tpu.pipeline_mode<synchronous>, transform_indices = @transform_1, window_bounds = array<i64: 3, 128, 128>}, {pipeline_mode = #tpu.pipeline_mode<synchronous>, transform_indices = @transform_2, window_bounds = array<i64: 1, 128>}, {transform_indices = @transform_3, window_bounds = array<i64: 1, 16, 128>}]} {
    %cst = arith.constant 0.000000e+00 : f32
    %0 = vector.broadcast %cst : f32 to vector<16x128xf32>
    %c0 = arith.constant 0 : index
    %c0_0 = arith.constant 0 : index
    %c0_1 = arith.constant 0 : index
    %1 = vector.load %arg1[%c0, %c0_0, %c0_1] : memref<1x18x128xbf16, #tpu.memory_space<vmem>>, vector<1x16x128xbf16>
    %2 = vector.shape_cast %1 : vector<1x16x128xbf16> to vector<16x128xbf16>
    %c0_2 = arith.constant 0 : index
    %c0_3 = arith.constant 0 : index
    %c0_4 = arith.constant 0 : index
    %3 = vector.load %arg2[%c0_2, %c0_3, %c0_4] : memref<3x128x128xbf16, #tpu.memory_space<vmem>>, vector<1x128x128xbf16>
    %4 = vector.shape_cast %3 : vector<1x128x128xbf16> to vector<128x128xbf16>
    %cst_5 = arith.constant dense<0.000000e+00> : vector<16x128xf32>
    %5 = tpu.matmul %2, %4, %cst_5 {dimension_numbers = #tpu.dot_dimension_numbers<[1], [0], [0], [1], [0, 0, 1, 1], [], []>} : vector<16x128xbf16>, vector<128x128xbf16>, vector<16x128xf32> -> vector<16x128xf32>
    %6 = arith.addf %0, %5 : vector<16x128xf32>
    %c0_6 = arith.constant 0 : index
    %c1 = arith.constant 1 : index
    %c0_7 = arith.constant 0 : index
    %7 = vector.load %arg1[%c0_6, %c1, %c0_7] : memref<1x18x128xbf16, #tpu.memory_space<vmem>>, vector<1x16x128xbf16>
    %8 = vector.shape_cast %7 : vector<1x16x128xbf16> to vector<16x128xbf16>
    %c1_8 = arith.constant 1 : index
    %c0_9 = arith.constant 0 : index
    %c0_10 = arith.constant 0 : index
    %9 = vector.load %arg2[%c1_8, %c0_9, %c0_10] : memref<3x128x128xbf16, #tpu.memory_space<vmem>>, vector<1x128x128xbf16>
    %10 = vector.shape_cast %9 : vector<1x128x128xbf16> to vector<128x128xbf16>
    %cst_11 = arith.constant dense<0.000000e+00> : vector<16x128xf32>
    %11 = tpu.matmul %8, %10, %cst_11 {dimension_numbers = #tpu.dot_dimension_numbers<[1], [0], [0], [1], [0, 0, 1, 1], [], []>} : vector<16x128xbf16>, vector<128x128xbf16>, vector<16x128xf32> -> vector<16x128xf32>
    %12 = arith.addf %6, %11 : vector<16x128xf32>
    %c0_12 = arith.constant 0 : index
    %c2 = arith.constant 2 : index
    %c0_13 = arith.constant 0 : index
    %13 = vector.load %arg1[%c0_12, %c2, %c0_13] : memref<1x18x128xbf16, #tpu.memory_space<vmem>>, vector<1x16x128xbf16>
    %14 = vector.shape_cast %13 : vector<1x16x128xbf16> to vector<16x128xbf16>
    %c2_14 = arith.constant 2 : index
    %c0_15 = arith.constant 0 : index
    %c0_16 = arith.constant 0 : index
    %15 = vector.load %arg2[%c2_14, %c0_15, %c0_16] : memref<3x128x128xbf16, #tpu.memory_space<vmem>>, vector<1x128x128xbf16>
    %16 = vector.shape_cast %15 : vector<1x128x128xbf16> to vector<128x128xbf16>
    %cst_17 = arith.constant dense<0.000000e+00> : vector<16x128xf32>
    %17 = tpu.matmul %14, %16, %cst_17 {dimension_numbers = #tpu.dot_dimension_numbers<[1], [0], [0], [1], [0, 0, 1, 1], [], []>} : vector<16x128xbf16>, vector<128x128xbf16>, vector<16x128xf32> -> vector<16x128xf32>
    %18 = arith.addf %12, %17 : vector<16x128xf32>
    %c0_18 = arith.constant 0 : index
    %c0_19 = arith.constant 0 : index
    %19 = vector.load %arg3[%c0_18, %c0_19] : memref<1x128xf32, #tpu.memory_space<vmem>>, vector<1x128xf32>
    %20 = vector.broadcast %19 : vector<1x128xf32> to vector<16x128xf32>
    %21 = arith.addf %18, %20 : vector<16x128xf32>
    %c0_20 = arith.constant 0 : index
    %c0_21 = arith.constant 0 : index
    %c0_22 = arith.constant 0 : index
    %22 = vector.load %arg4[%c0_20, %c0_21, %c0_22] : memref<1x16x128xf32, #tpu.memory_space<vmem>>, vector<1x16x128xf32>
    %23 = vector.shape_cast %22 : vector<1x16x128xf32> to vector<16x128xf32>
    %24 = vector.shape_cast %21 : vector<16x128xf32> to vector<1x16x128xf32>
    tpu.vector_store %arg4[%c0_20, %c0_21, %c0_22], %24 {strides = array<i32>} : memref<1x16x128xf32, #tpu.memory_space<vmem>>, vector<1x16x128xf32>,
    return
  }
  func.func @transform_0(%arg0: i32) -> (i32, i32, i32) {
    %c0_i32 = arith.constant 0 : i32
    %c0_i32_0 = arith.constant 0 : i32
    %c0_i32_1 = arith.constant 0 : i32
    return %arg0, %c0_i32, %c0_i32_0 : i32, i32, i32
  }
  func.func @transform_1(%arg0: i32) -> (i32, i32, i32) {
    %c0_i32 = arith.constant 0 : i32
    %c0_i32_0 = arith.constant 0 : i32
    %c0_i32_1 = arith.constant 0 : i32
    %c0_i32_2 = arith.constant 0 : i32
    return %c0_i32, %c0_i32_0, %c0_i32_1 : i32, i32, i32
  }
  func.func @transform_2(%arg0: i32) -> (i32, i32) {
    %c0_i32 = arith.constant 0 : i32
    %c0_i32_0 = arith.constant 0 : i32
    %c0_i32_1 = arith.constant 0 : i32
    return %c0_i32, %c0_i32_0 : i32, i32
  }
  func.func @transform_3(%arg0: i32) -> (i32, i32, i32) {
    %c0_i32 = arith.constant 0 : i32
    %c0_i32_0 = arith.constant 0 : i32
    %c0_i32_1 = arith.constant 0 : i32
    return %arg0, %c0_i32, %c0_i32_0 : i32, i32, i32
  }
}

module attributes {stable_mosaic.version = 11 : i64} {
  func.func @_mse_kernel(%arg0: i32, %arg1: memref<32x128xf32, #tpu.memory_space<vmem>>, %arg2: memref<32x128xf32, #tpu.memory_space<vmem>>, %arg3: memref<1x1xf32, #tpu.memory_space<smem>>, %arg4: memref<1x1xf32, #tpu.memory_space<smem>>) attributes {dimension_semantics = [#tpu.dimension_semantics<arbitrary>], iteration_bounds = array<i64: 1>, scalar_prefetch = 0 : i64, scratch_operands = 1 : i64, tpu.core_type = #tpu.core_type<tc>, window_params = [{transform_indices = @transform_0, window_bounds = array<i64: 32, 128>}, {transform_indices = @transform_1, window_bounds = array<i64: 32, 128>}, {transform_indices = @transform_2, window_bounds = array<i64: 1, 1>}]} {
    %c0_i32 = arith.constant 0 : i32
    %0 = arith.cmpi eq, %arg0, %c0_i32 : i32
    %1 = arith.extui %0 : i1 to i32
    %c0_i32_0 = arith.constant 0 : i32
    %2 = arith.cmpi ne, %1, %c0_i32_0 : i32
    scf.if %2 {
      %cst_13 = arith.constant 0.000000e+00 : f32
      %c0_14 = arith.constant 0 : index
      %c0_15 = arith.constant 0 : index
      %26 = memref.load %arg4[%c0_14, %c0_15] : memref<1x1xf32, #tpu.memory_space<smem>>
      memref.store %cst_13, %arg4[%c0_14, %c0_15] : memref<1x1xf32, #tpu.memory_space<smem>>
    } else {
    }
    %c0 = arith.constant 0 : index
    %c0_1 = arith.constant 0 : index
    %3 = vector.load %arg1[%c0, %c0_1] : memref<32x128xf32, #tpu.memory_space<vmem>>, vector<32x128xf32>
    %c0_2 = arith.constant 0 : index
    %c0_3 = arith.constant 0 : index
    %4 = vector.load %arg2[%c0_2, %c0_3] : memref<32x128xf32, #tpu.memory_space<vmem>>, vector<32x128xf32>
    %5 = arith.subf %3, %4 : vector<32x128xf32>
    %c32_i32 = arith.constant 32 : i32
    %6 = arith.muli %arg0, %c32_i32 : i32
    %7 = tpu.iota {dimensions = array<i32: 0>} : vector<32x1xi32>
    %8 = vector.broadcast %6 : i32 to vector<32x1xi32>
    %9 = arith.addi %8, %7 : vector<32x1xi32>
    %c32_i32_4 = arith.constant 32 : i32
    %10 = vector.broadcast %c32_i32_4 : i32 to vector<32x1xi32>
    %11 = arith.cmpi slt, %9, %10 : vector<32x1xi32>
    %12 = arith.extui %11 : vector<32x1xi1> to vector<32x1xi32>
    %13 = arith.sitofp %12 : vector<32x1xi32> to vector<32x1xf32>
    %14 = vector.broadcast %13 : vector<32x1xf32> to vector<32x128xf32>
    %15 = arith.mulf %5, %14 : vector<32x128xf32>
    %c0_5 = arith.constant 0 : index
    %c0_6 = arith.constant 0 : index
    %16 = memref.load %arg4[%c0_5, %c0_6] : memref<1x1xf32, #tpu.memory_space<smem>>
    %17 = arith.mulf %15, %15 : vector<32x128xf32>
    %18 = vector.shape_cast %17 : vector<32x128xf32> to vector<1x32x128xf32>
    %cst = arith.constant dense<0.000000e+00> : vector<1xf32>
    %19 = vector.multi_reduction <add>, %18, %cst [1, 2] : vector<1x32x128xf32> to vector<1xf32>
    %20 = vector.shape_cast %19 : vector<1xf32> to vector<1x1x1xf32>
    %21 = vector.extract %20[0, 0, 0] : f32 from vector<1x1x1xf32>
    %22 = arith.addf %16, %21 : f32
    %c0_7 = arith.constant 0 : index
    %c0_8 = arith.constant 0 : index
    %23 = memref.load %arg4[%c0_7, %c0_8] : memref<1x1xf32, #tpu.memory_space<smem>>
    memref.store %22, %arg4[%c0_7, %c0_8] : memref<1x1xf32, #tpu.memory_space<smem>>
    %c0_9 = arith.constant 0 : index
    %c0_10 = arith.constant 0 : index
    %24 = memref.load %arg4[%c0_9, %c0_10] : memref<1x1xf32, #tpu.memory_space<smem>>
    %c0_11 = arith.constant 0 : index
    %c0_12 = arith.constant 0 : index
    %25 = memref.load %arg3[%c0_11, %c0_12] : memref<1x1xf32, #tpu.memory_space<smem>>
    memref.store %24, %arg3[%c0_11, %c0_12] : memref<1x1xf32, #tpu.memory_space<smem>>
    return
  }
  func.func @transform_0(%arg0: i32) -> (i32, i32) {
    %c0_i32 = arith.constant 0 : i32
    %c0_i32_0 = arith.constant 0 : i32
    return %arg0, %c0_i32 : i32, i32
  }
  func.func @transform_1(%arg0: i32) -> (i32, i32) {
    %c0_i32 = arith.constant 0 : i32
    %c0_i32_0 = arith.constant 0 : i32
    return %arg0, %c0_i32 : i32, i32
  }
  func.func @transform_2(%arg0: i32) -> (i32, i32) {
    %c0_i32 = arith.constant 0 : i32
    %c0_i32_0 = arith.constant 0 : i32
    %c0_i32_1 = arith.constant 0 : i32
    return %c0_i32, %c0_i32_0 : i32, i32
  }
}

module attributes {stable_mosaic.version = 11 : i64} {
  func.func @_conv_taps_kernel(%arg0: i32, %arg1: memref<1x10x128xbf16, #tpu.memory_space<vmem>>, %arg2: memref<3x128x128xbf16, #tpu.memory_space<vmem>>, %arg3: memref<1x128xf32, #tpu.memory_space<vmem>>, %arg4: memref<1x8x128xf32, #tpu.memory_space<vmem>>) attributes {dimension_semantics = [#tpu.dimension_semantics<parallel>], iteration_bounds = array<i64: 2>, scalar_prefetch = 0 : i64, scratch_operands = 0 : i64, tpu.core_type = #tpu.core_type<tc>, window_params = [{transform_indices = @transform_0, window_bounds = array<i64: 1, 10, 128>}, {pipeline_mode = #tpu.pipeline_mode<synchronous>, transform_indices = @transform_1, window_bounds = array<i64: 3, 128, 128>}, {pipeline_mode = #tpu.pipeline_mode<synchronous>, transform_indices = @transform_2, window_bounds = array<i64: 1, 128>}, {transform_indices = @transform_3, window_bounds = array<i64: 1, 8, 128>}]} {
    %cst = arith.constant 0.000000e+00 : f32
    %0 = vector.broadcast %cst : f32 to vector<8x128xf32>
    %c0 = arith.constant 0 : index
    %c0_0 = arith.constant 0 : index
    %c0_1 = arith.constant 0 : index
    %1 = vector.load %arg1[%c0, %c0_0, %c0_1] : memref<1x10x128xbf16, #tpu.memory_space<vmem>>, vector<1x8x128xbf16>
    %2 = vector.shape_cast %1 : vector<1x8x128xbf16> to vector<8x128xbf16>
    %c0_2 = arith.constant 0 : index
    %c0_3 = arith.constant 0 : index
    %c0_4 = arith.constant 0 : index
    %3 = vector.load %arg2[%c0_2, %c0_3, %c0_4] : memref<3x128x128xbf16, #tpu.memory_space<vmem>>, vector<1x128x128xbf16>
    %4 = vector.shape_cast %3 : vector<1x128x128xbf16> to vector<128x128xbf16>
    %cst_5 = arith.constant dense<0.000000e+00> : vector<8x128xf32>
    %5 = tpu.matmul %2, %4, %cst_5 {dimension_numbers = #tpu.dot_dimension_numbers<[1], [0], [0], [1], [0, 0, 1, 1], [], []>} : vector<8x128xbf16>, vector<128x128xbf16>, vector<8x128xf32> -> vector<8x128xf32>
    %6 = arith.addf %0, %5 : vector<8x128xf32>
    %c0_6 = arith.constant 0 : index
    %c1 = arith.constant 1 : index
    %c0_7 = arith.constant 0 : index
    %7 = vector.load %arg1[%c0_6, %c1, %c0_7] : memref<1x10x128xbf16, #tpu.memory_space<vmem>>, vector<1x8x128xbf16>
    %8 = vector.shape_cast %7 : vector<1x8x128xbf16> to vector<8x128xbf16>
    %c1_8 = arith.constant 1 : index
    %c0_9 = arith.constant 0 : index
    %c0_10 = arith.constant 0 : index
    %9 = vector.load %arg2[%c1_8, %c0_9, %c0_10] : memref<3x128x128xbf16, #tpu.memory_space<vmem>>, vector<1x128x128xbf16>
    %10 = vector.shape_cast %9 : vector<1x128x128xbf16> to vector<128x128xbf16>
    %cst_11 = arith.constant dense<0.000000e+00> : vector<8x128xf32>
    %11 = tpu.matmul %8, %10, %cst_11 {dimension_numbers = #tpu.dot_dimension_numbers<[1], [0], [0], [1], [0, 0, 1, 1], [], []>} : vector<8x128xbf16>, vector<128x128xbf16>, vector<8x128xf32> -> vector<8x128xf32>
    %12 = arith.addf %6, %11 : vector<8x128xf32>
    %c0_12 = arith.constant 0 : index
    %c2 = arith.constant 2 : index
    %c0_13 = arith.constant 0 : index
    %13 = vector.load %arg1[%c0_12, %c2, %c0_13] : memref<1x10x128xbf16, #tpu.memory_space<vmem>>, vector<1x8x128xbf16>
    %14 = vector.shape_cast %13 : vector<1x8x128xbf16> to vector<8x128xbf16>
    %c2_14 = arith.constant 2 : index
    %c0_15 = arith.constant 0 : index
    %c0_16 = arith.constant 0 : index
    %15 = vector.load %arg2[%c2_14, %c0_15, %c0_16] : memref<3x128x128xbf16, #tpu.memory_space<vmem>>, vector<1x128x128xbf16>
    %16 = vector.shape_cast %15 : vector<1x128x128xbf16> to vector<128x128xbf16>
    %cst_17 = arith.constant dense<0.000000e+00> : vector<8x128xf32>
    %17 = tpu.matmul %14, %16, %cst_17 {dimension_numbers = #tpu.dot_dimension_numbers<[1], [0], [0], [1], [0, 0, 1, 1], [], []>} : vector<8x128xbf16>, vector<128x128xbf16>, vector<8x128xf32> -> vector<8x128xf32>
    %18 = arith.addf %12, %17 : vector<8x128xf32>
    %c0_18 = arith.constant 0 : index
    %c0_19 = arith.constant 0 : index
    %19 = vector.load %arg3[%c0_18, %c0_19] : memref<1x128xf32, #tpu.memory_space<vmem>>, vector<1x128xf32>
    %20 = vector.broadcast %19 : vector<1x128xf32> to vector<8x128xf32>
    %21 = arith.addf %18, %20 : vector<8x128xf32>
    %c0_20 = arith.constant 0 : index
    %c0_21 = arith.constant 0 : index
    %c0_22 = arith.constant 0 : index
    %22 = vector.load %arg4[%c0_20, %c0_21, %c0_22] : memref<1x8x128xf32, #tpu.memory_space<vmem>>, vector<1x8x128xf32>
    %23 = vector.shape_cast %22 : vector<1x8x128xf32> to vector<8x128xf32>
    %24 = vector.shape_cast %21 : vector<8x128xf32> to vector<1x8x128xf32>
    tpu.vector_store %arg4[%c0_20, %c0_21, %c0_22], %24 {strides = array<i32>} : memref<1x8x128xf32, #tpu.memory_space<vmem>>, vector<1x8x128xf32>,
    return
  }
  func.func @transform_0(%arg0: i32) -> (i32, i32, i32) {
    %c0_i32 = arith.constant 0 : i32
    %c0_i32_0 = arith.constant 0 : i32
    %c0_i32_1 = arith.constant 0 : i32
    return %arg0, %c0_i32, %c0_i32_0 : i32, i32, i32
  }
  func.func @transform_1(%arg0: i32) -> (i32, i32, i32) {
    %c0_i32 = arith.constant 0 : i32
    %c0_i32_0 = arith.constant 0 : i32
    %c0_i32_1 = arith.constant 0 : i32
    %c0_i32_2 = arith.constant 0 : i32
    return %c0_i32, %c0_i32_0, %c0_i32_1 : i32, i32, i32
  }
  func.func @transform_2(%arg0: i32) -> (i32, i32) {
    %c0_i32 = arith.constant 0 : i32
    %c0_i32_0 = arith.constant 0 : i32
    %c0_i32_1 = arith.constant 0 : i32
    return %c0_i32, %c0_i32_0 : i32, i32
  }
  func.func @transform_3(%arg0: i32) -> (i32, i32, i32) {
    %c0_i32 = arith.constant 0 : i32
    %c0_i32_0 = arith.constant 0 : i32
    %c0_i32_1 = arith.constant 0 : i32
    return %arg0, %c0_i32, %c0_i32_0 : i32, i32, i32
  }
}

module attributes {stable_mosaic.version = 11 : i64} {
  func.func @_vq_kernel(%arg0: i32, %arg1: memref<16x128xf32, #tpu.memory_space<vmem>>, %arg2: memref<128x128xf32, #tpu.memory_space<vmem>>, %arg3: memref<128x128xf32, #tpu.memory_space<vmem>>, %arg4: memref<1x128xf32, #tpu.memory_space<vmem>>, %arg5: memref<16x128xbf16, #tpu.memory_space<vmem>>, %arg6: memref<1x1xf32, #tpu.memory_space<smem>>, %arg7: memref<1x1xf32, #tpu.memory_space<smem>>) attributes {dimension_semantics = [#tpu.dimension_semantics<arbitrary>], iteration_bounds = array<i64: 1>, scalar_prefetch = 0 : i64, scratch_operands = 1 : i64, tpu.core_type = #tpu.core_type<tc>, window_params = [{transform_indices = @transform_0, window_bounds = array<i64: 16, 128>}, {pipeline_mode = #tpu.pipeline_mode<synchronous>, transform_indices = @transform_1, window_bounds = array<i64: 128, 128>}, {pipeline_mode = #tpu.pipeline_mode<synchronous>, transform_indices = @transform_2, window_bounds = array<i64: 128, 128>}, {pipeline_mode = #tpu.pipeline_mode<synchronous>, transform_indices = @transform_3, window_bounds = array<i64: 1, 128>}, {transform_indices = @transform_4, window_bounds = array<i64: 16, 128>}, {transform_indices = @transform_5, window_bounds = array<i64: 1, 1>}]} {
    %c0_i32 = arith.constant 0 : i32
    %0 = arith.cmpi eq, %arg0, %c0_i32 : i32
    %1 = arith.extui %0 : i1 to i32
    %c0_i32_0 = arith.constant 0 : i32
    %2 = arith.cmpi ne, %1, %c0_i32_0 : i32
    scf.if %2 {
      %cst_22 = arith.constant 0.000000e+00 : f32
      %c0_23 = arith.constant 0 : index
      %c0_24 = arith.constant 0 : index
      %43 = memref.load %arg7[%c0_23, %c0_24] : memref<1x1xf32, #tpu.memory_space<smem>>
      memref.store %cst_22, %arg7[%c0_23, %c0_24] : memref<1x1xf32, #tpu.memory_space<smem>>
    } else {
    }
    %c0 = arith.constant 0 : index
    %c0_1 = arith.constant 0 : index
    %3 = vector.load %arg1[%c0, %c0_1] : memref<16x128xf32, #tpu.memory_space<vmem>>, vector<16x128xf32>
    %c0_2 = arith.constant 0 : index
    %c0_3 = arith.constant 0 : index
    %4 = vector.load %arg4[%c0_2, %c0_3] : memref<1x128xf32, #tpu.memory_space<vmem>>, vector<1x128xf32>
    %c0_4 = arith.constant 0 : index
    %c0_5 = arith.constant 0 : index
    %5 = vector.load %arg3[%c0_4, %c0_5] : memref<128x128xf32, #tpu.memory_space<vmem>>, vector<128x128xf32>
    %cst = arith.constant dense<0.000000e+00> : vector<16x128xf32>
    %6 = tpu.matmul %3, %5, %cst {dimension_numbers = #tpu.dot_dimension_numbers<[1], [0], [0], [1], [0, 0, 1, 1], [], []>} : vector<16x128xf32>, vector<128x128xf32>, vector<16x128xf32> -> vector<16x128xf32>
    %cst_6 = arith.constant 2.000000e+00 : f32
    %7 = vector.broadcast %cst_6 : f32 to vector<16x128xf32>
    %8 = arith.mulf %7, %6 : vector<16x128xf32>
    %9 = vector.broadcast %4 : vector<1x128xf32> to vector<16x128xf32>
    %10 = arith.subf %9, %8 : vector<16x128xf32>
    %11 = tpu.reduce_index %10 {axis = 1 : i32, kind = #tpu.reduction_kind<arg_min>} : vector<16x128xf32> -> vector<16xi32>
    %12 = vector.shape_cast %11 : vector<16xi32> to vector<16x1xi32>
    %13 = tpu.iota {dimensions = array<i32: 1>} : vector<16x128xi32>
    %14 = vector.broadcast %12 : vector<16x1xi32> to vector<16x128xi32>
    %15 = arith.cmpi eq, %14, %13 : vector<16x128xi32>
    %16 = arith.extui %15 : vector<16x128xi1> to vector<16x128xi32>
    %17 = arith.sitofp %16 : vector<16x128xi32> to vector<16x128xf32>
    %c0_7 = arith.constant 0 : index
    %c0_8 = arith.constant 0 : index
    %18 = vector.load %arg2[%c0_7, %c0_8] : memref<128x128xf32, #tpu.memory_space<vmem>>, vector<128x128xf32>
    %cst_9 = arith.constant dense<0.000000e+00> : vector<16x128xf32>
    %19 = tpu.matmul %17, %18, %cst_9 {dimension_numbers = #tpu.dot_dimension_numbers<[1], [0], [0], [1], [0, 0, 1, 1], [], []>} : vector<16x128xf32>, vector<128x128xf32>, vector<16x128xf32> -> vector<16x128xf32>
    %20 = arith.truncf %19 : vector<16x128xf32> to vector<16x128xbf16>
    %c0_10 = arith.constant 0 : index
    %c0_11 = arith.constant 0 : index
    %21 = vector.load %arg5[%c0_10, %c0_11] : memref<16x128xbf16, #tpu.memory_space<vmem>>, vector<16x128xbf16>
    tpu.vector_store %arg5[%c0_10, %c0_11], %20 {strides = array<i32>} : memref<16x128xbf16, #tpu.memory_space<vmem>>, vector<16x128xbf16>,
    %c16_i32 = arith.constant 16 : i32
    %22 = arith.muli %arg0, %c16_i32 : i32
    %23 = tpu.iota {dimensions = array<i32: 0>} : vector<16x1xi32>
    %24 = vector.broadcast %22 : i32 to vector<16x1xi32>
    %25 = arith.addi %24, %23 : vector<16x1xi32>
    %c16_i32_12 = arith.constant 16 : i32
    %26 = vector.broadcast %c16_i32_12 : i32 to vector<16x1xi32>
    %27 = arith.cmpi slt, %25, %26 : vector<16x1xi32>
    %28 = arith.extui %27 : vector<16x1xi1> to vector<16x1xi32>
    %29 = arith.sitofp %28 : vector<16x1xi32> to vector<16x1xf32>
    %30 = arith.subf %3, %19 : vector<16x128xf32>
    %31 = vector.broadcast %29 : vector<16x1xf32> to vector<16x128xf32>
    %32 = arith.mulf %30, %31 : vector<16x128xf32>
    %c0_13 = arith.constant 0 : index
    %c0_14 = arith.constant 0 : index
    %33 = memref.load %arg7[%c0_13, %c0_14] : memref<1x1xf32, #tpu.memory_space<smem>>
    %34 = arith.mulf %32, %32 : vector<16x128xf32>
    %35 = vector.shape_cast %34 : vector<16x128xf32> to vector<1x16x128xf32>
    %cst_15 = arith.constant dense<0.000000e+00> : vector<1xf32>
    %36 = vector.multi_reduction <add>, %35, %cst_15 [1, 2] : vector<1x16x128xf32> to vector<1xf32>
    %37 = vector.shape_cast %36 : vector<1xf32> to vector<1x1x1xf32>
    %38 = vector.extract %37[0, 0, 0] : f32 from vector<1x1x1xf32>
    %39 = arith.addf %33, %38 : f32
    %c0_16 = arith.constant 0 : index
    %c0_17 = arith.constant 0 : index
    %40 = memref.load %arg7[%c0_16, %c0_17] : memref<1x1xf32, #tpu.memory_space<smem>>
    memref.store %39, %arg7[%c0_16, %c0_17] : memref<1x1xf32, #tpu.memory_space<smem>>
    %c0_18 = arith.constant 0 : index
    %c0_19 = arith.constant 0 : index
    %41 = memref.load %arg7[%c0_18, %c0_19] : memref<1x1xf32, #tpu.memory_space<smem>>
    %c0_20 = arith.constant 0 : index
    %c0_21 = arith.constant 0 : index
    %42 = memref.load %arg6[%c0_20, %c0_21] : memref<1x1xf32, #tpu.memory_space<smem>>
    memref.store %41, %arg6[%c0_20, %c0_21] : memref<1x1xf32, #tpu.memory_space<smem>>
    return
  }
  func.func @transform_0(%arg0: i32) -> (i32, i32) {
    %c0_i32 = arith.constant 0 : i32
    %c0_i32_0 = arith.constant 0 : i32
    return %arg0, %c0_i32 : i32, i32
  }
  func.func @transform_1(%arg0: i32) -> (i32, i32) {
    %c0_i32 = arith.constant 0 : i32
    %c0_i32_0 = arith.constant 0 : i32
    %c0_i32_1 = arith.constant 0 : i32
    return %c0_i32, %c0_i32_0 : i32, i32
  }
  func.func @transform_2(%arg0: i32) -> (i32, i32) {
    %c0_i32 = arith.constant 0 : i32
    %c0_i32_0 = arith.constant 0 : i32
    %c0_i32_1 = arith.constant 0 : i32
    return %c0_i32, %c0_i32_0 : i32, i32
  }
  func.func @transform_3(%arg0: i32) -> (i32, i32) {
    %c0_i32 = arith.constant 0 : i32
    %c0_i32_0 = arith.constant 0 : i32
    %c0_i32_1 = arith.constant 0 : i32
    return %c0_i32, %c0_i32_0 : i32, i32
  }
  func.func @transform_4(%arg0: i32) -> (i32, i32) {
    %c0_i32 = arith.constant 0 : i32
    %c0_i32_0 = arith.constant 0 : i32
    return %arg0, %c0_i32 : i32, i32
  }
  func.func @transform_5(%arg0: i32) -> (i32, i32) {
    %c0_i32 = arith.constant 0 : i32
    %c0_i32_0 = arith.constant 0 : i32
    %c0_i32_1 = arith.constant 0 : i32
    return %c0_i32, %c0_i32_0 : i32, i32
  }
}

module attributes {stable_mosaic.version = 11 : i64} {
  func.func @_conv_taps_kernel(%arg0: i32, %arg1: memref<1x10x128xbf16, #tpu.memory_space<vmem>>, %arg2: memref<3x128x128xbf16, #tpu.memory_space<vmem>>, %arg3: memref<1x128xf32, #tpu.memory_space<vmem>>, %arg4: memref<1x8x128xbf16, #tpu.memory_space<vmem>>) attributes {dimension_semantics = [#tpu.dimension_semantics<parallel>], iteration_bounds = array<i64: 2>, scalar_prefetch = 0 : i64, scratch_operands = 0 : i64, tpu.core_type = #tpu.core_type<tc>, window_params = [{transform_indices = @transform_0, window_bounds = array<i64: 1, 10, 128>}, {pipeline_mode = #tpu.pipeline_mode<synchronous>, transform_indices = @transform_1, window_bounds = array<i64: 3, 128, 128>}, {pipeline_mode = #tpu.pipeline_mode<synchronous>, transform_indices = @transform_2, window_bounds = array<i64: 1, 128>}, {transform_indices = @transform_3, window_bounds = array<i64: 1, 8, 128>}]} {
    %cst = arith.constant 0.000000e+00 : f32
    %0 = vector.broadcast %cst : f32 to vector<8x128xf32>
    %c0 = arith.constant 0 : index
    %c0_0 = arith.constant 0 : index
    %c0_1 = arith.constant 0 : index
    %1 = vector.load %arg1[%c0, %c0_0, %c0_1] : memref<1x10x128xbf16, #tpu.memory_space<vmem>>, vector<1x8x128xbf16>
    %2 = vector.shape_cast %1 : vector<1x8x128xbf16> to vector<8x128xbf16>
    %c0_2 = arith.constant 0 : index
    %c0_3 = arith.constant 0 : index
    %c0_4 = arith.constant 0 : index
    %3 = vector.load %arg2[%c0_2, %c0_3, %c0_4] : memref<3x128x128xbf16, #tpu.memory_space<vmem>>, vector<1x128x128xbf16>
    %4 = vector.shape_cast %3 : vector<1x128x128xbf16> to vector<128x128xbf16>
    %cst_5 = arith.constant dense<0.000000e+00> : vector<8x128xf32>
    %5 = tpu.matmul %2, %4, %cst_5 {dimension_numbers = #tpu.dot_dimension_numbers<[1], [0], [0], [1], [0, 0, 1, 1], [], []>} : vector<8x128xbf16>, vector<128x128xbf16>, vector<8x128xf32> -> vector<8x128xf32>
    %6 = arith.addf %0, %5 : vector<8x128xf32>
    %c0_6 = arith.constant 0 : index
    %c1 = arith.constant 1 : index
    %c0_7 = arith.constant 0 : index
    %7 = vector.load %arg1[%c0_6, %c1, %c0_7] : memref<1x10x128xbf16, #tpu.memory_space<vmem>>, vector<1x8x128xbf16>
    %8 = vector.shape_cast %7 : vector<1x8x128xbf16> to vector<8x128xbf16>
    %c1_8 = arith.constant 1 : index
    %c0_9 = arith.constant 0 : index
    %c0_10 = arith.constant 0 : index
    %9 = vector.load %arg2[%c1_8, %c0_9, %c0_10] : memref<3x128x128xbf16, #tpu.memory_space<vmem>>, vector<1x128x128xbf16>
    %10 = vector.shape_cast %9 : vector<1x128x128xbf16> to vector<128x128xbf16>
    %cst_11 = arith.constant dense<0.000000e+00> : vector<8x128xf32>
    %11 = tpu.matmul %8, %10, %cst_11 {dimension_numbers = #tpu.dot_dimension_numbers<[1], [0], [0], [1], [0, 0, 1, 1], [], []>} : vector<8x128xbf16>, vector<128x128xbf16>, vector<8x128xf32> -> vector<8x128xf32>
    %12 = arith.addf %6, %11 : vector<8x128xf32>
    %c0_12 = arith.constant 0 : index
    %c2 = arith.constant 2 : index
    %c0_13 = arith.constant 0 : index
    %13 = vector.load %arg1[%c0_12, %c2, %c0_13] : memref<1x10x128xbf16, #tpu.memory_space<vmem>>, vector<1x8x128xbf16>
    %14 = vector.shape_cast %13 : vector<1x8x128xbf16> to vector<8x128xbf16>
    %c2_14 = arith.constant 2 : index
    %c0_15 = arith.constant 0 : index
    %c0_16 = arith.constant 0 : index
    %15 = vector.load %arg2[%c2_14, %c0_15, %c0_16] : memref<3x128x128xbf16, #tpu.memory_space<vmem>>, vector<1x128x128xbf16>
    %16 = vector.shape_cast %15 : vector<1x128x128xbf16> to vector<128x128xbf16>
    %cst_17 = arith.constant dense<0.000000e+00> : vector<8x128xf32>
    %17 = tpu.matmul %14, %16, %cst_17 {dimension_numbers = #tpu.dot_dimension_numbers<[1], [0], [0], [1], [0, 0, 1, 1], [], []>} : vector<8x128xbf16>, vector<128x128xbf16>, vector<8x128xf32> -> vector<8x128xf32>
    %18 = arith.addf %12, %17 : vector<8x128xf32>
    %c0_18 = arith.constant 0 : index
    %c0_19 = arith.constant 0 : index
    %19 = vector.load %arg3[%c0_18, %c0_19] : memref<1x128xf32, #tpu.memory_space<vmem>>, vector<1x128xf32>
    %20 = vector.broadcast %19 : vector<1x128xf32> to vector<8x128xf32>
    %21 = arith.addf %18, %20 : vector<8x128xf32>
    %cst_20 = arith.constant 0.000000e+00 : f32
    %22 = vector.broadcast %cst_20 : f32 to vector<8x128xf32>
    %23 = arith.maximumf %21, %22 : vector<8x128xf32>
    %24 = arith.truncf %23 : vector<8x128xf32> to vector<8x128xbf16>
    %c0_21 = arith.constant 0 : index
    %c0_22 = arith.constant 0 : index
    %c0_23 = arith.constant 0 : index
    %25 = vector.load %arg4[%c0_21, %c0_22, %c0_23] : memref<1x8x128xbf16, #tpu.memory_space<vmem>>, vector<1x8x128xbf16>
    %26 = vector.shape_cast %25 : vector<1x8x128xbf16> to vector<8x128xbf16>
    %27 = vector.shape_cast %24 : vector<8x128xbf16> to vector<1x8x128xbf16>
    tpu.vector_store %arg4[%c0_21, %c0_22, %c0_23], %27 {strides = array<i32>} : memref<1x8x128xbf16, #tpu.memory_space<vmem>>, vector<1x8x128xbf16>,
    return
  }
  func.func @transform_0(%arg0: i32) -> (i32, i32, i32) {
    %c0_i32 = arith.constant 0 : i32
    %c0_i32_0 = arith.constant 0 : i32
    %c0_i32_1 = arith.constant 0 : i32
    return %arg0, %c0_i32, %c0_i32_0 : i32, i32, i32
  }
  func.func @transform_1(%arg0: i32) -> (i32, i32, i32) {
    %c0_i32 = arith.constant 0 : i32
    %c0_i32_0 = arith.constant 0 : i32
    %c0_i32_1 = arith.constant 0 : i32
    %c0_i32_2 = arith.constant 0 : i32
    return %c0_i32, %c0_i32_0, %c0_i32_1 : i32, i32, i32
  }
  func.func @transform_2(%arg0: i32) -> (i32, i32) {
    %c0_i32 = arith.constant 0 : i32
    %c0_i32_0 = arith.constant 0 : i32
    %c0_i32_1 = arith.constant 0 : i32
    return %c0_i32, %c0_i32_0 : i32, i32
  }
  func.func @transform_3(%arg0: i32) -> (i32, i32, i32) {
    %c0_i32 = arith.constant 0 : i32
    %c0_i32_0 = arith.constant 0 : i32
    %c0_i32_1 = arith.constant 0 : i32
    return %arg0, %c0_i32, %c0_i32_0 : i32, i32, i32
  }
}

</mosaic_0001>

<llo_original>
// kernel: _lambda_.28
$region0: #{_lambda_.28}
  #allocation0 [shape = 'u32[]', space=smem, size = 0x4, offset = 0x4, fixed_abs, tag = 'smem constant byte address 0x4 - core index']
  #allocation1 [shape = 'u32[144,128]{1,0:T(1,128)}', space=vmem, size = 0x12000, scoped, tag = 'internal scratch']
  %s0 = inlined_call_operand.vmem [shape: bf16[2,18,128], index: 0, kind: input, shape index: {}]
  %s1 = inlined_call_operand.vmem [shape: bf16[3,128,128], index: 1, kind: input, shape index: {}]
  %s2 = inlined_call_operand.vmem [shape: f32[1,128], index: 2, kind: input, shape index: {}]
  %s3 = inlined_call_operand.vmem [shape: bf16[2,16,128], index: 3, kind: output, shape index: {}]
  %s4 = sld [smem:[#allocation0]]
  $region45: #{_lambda_.28} parent=0
    _
  %s6 = ssub.s32 1, %s4
  %s7 = scalar_select 0, %s6, %s4
  loop: start=0, step=1, limit=4
  $region2: #{_lambda_.28} parent=0 // loop_pre_header
    _
  $region3: #{_lambda_.28} parent=0 // loop_header
    %s9 = sphi 0, %s13
    %p10 = scmp.ge.s32.totalorder %s9, 4
    %s19 = sphi 0, %s21
    %s22 = sphi 0, %s19
    %s23 = sphi 0, %s22
    %s39 = sphi 0, %s23
    %s43 = sphi 0, %s43
    %s45 = sphi 0, %s43
    %s46 = sphi 0, %s45
    %s60 = sphi 0, %s46
    %s64 = sphi 0, %s64
    %s66 = sphi 0, %s64
    %s67 = sphi 0, %s66
    %s81 = sphi 0, %s67
    %s87 = sphi 0, %s89
    %s90 = sphi 0, %s87
    %s91 = sphi 0, %s90
    %s107 = sphi 0, %s91
  $region4: #{_lambda_.28} parent=0 // loop_header_branch
    %12 = sbr.rel (%p10) target = $region8
  $region5: #{_lambda_.28} parent=0 // loop_body
    %s14 = ssub.s32 %s9, 1
    %s15 = ssub.s32 %s9, 2
    %s16 = sadd.s32 %s9, 1
    %s17 = ssub.s32 %s9, %s16
    %p18 = scmp.eq.s32.totalorder %s17, 0
    %s20 = sadd.s32 %s19, 1
    %s21 = scalar_select %p18, %s19, %s20
    %p24 = pneg %p18
    %p25 = scmp.eq.s32.totalorder %s9, 1
    %p26 = por %p24, %p25
    %p27 = scmp.ne.s32.totalorder %s19, %s22
    %p28 = scmp.eq.s32.totalorder %s9, 0
    %p29 = por %p27, %p28
    %p30 = scmp.ne.s32.totalorder %s19, %s22
    %p31 = scmp.eq.s32.totalorder %s14, 1
    %p32 = por %p30, %p31
    %p33 = scmp.ne.s32.totalorder %s22, %s23
    %p34 = scmp.eq.s32.totalorder %s14, 0
    %p35 = por %p33, %p34
    %p36 = scmp.ne.s32.totalorder %s22, %s23
    %p37 = scmp.eq.s32.totalorder %s15, 1
    %p38 = por %p36, %p37
    %p40 = scmp.ne.s32.totalorder %s23, %s39
    %p41 = scmp.eq.s32.totalorder %s15, 0
    %p42 = por %p40, %p41
    %s44 = sadd.s32 %s43, 1
    %p47 = scmp.eq.s32.totalorder %s9, 1
    %p48 = scmp.ne.s32.totalorder %s43, %s45
    %p49 = scmp.eq.s32.totalorder %s9, 0
    %p50 = por %p48, %p49
    %p51 = scmp.ne.s32.totalorder %s43, %s45
    %p52 = scmp.eq.s32.totalorder %s14, 1
    %p53 = por %p51, %p52
    %p54 = scmp.ne.s32.totalorder %s45, %s46
    %p55 = scmp.eq.s32.totalorder %s14, 0
    %p56 = por %p54, %p55
    %p57 = scmp.ne.s32.totalorder %s45, %s46
    %p58 = scmp.eq.s32.totalorder %s15, 1
    %p59 = por %p57, %p58
    %p61 = scmp.ne.s32.totalorder %s46, %s60
    %p62 = scmp.eq.s32.totalorder %s15, 0
    %p63 = por %p61, %p62
    %s65 = sadd.s32 %s64, 1
    %p68 = scmp.eq.s32.totalorder %s9, 1
    %p69 = scmp.ne.s32.totalorder %s64, %s66
    %p70 = scmp.eq.s32.totalorder %s9, 0
    %p71 = por %p69, %p70
    %p72 = scmp.ne.s32.totalorder %s64, %s66
    %p73 = scmp.eq.s32.totalorder %s14, 1
    %p74 = por %p72, %p73
    %p75 = scmp.ne.s32.totalorder %s66, %s67
    %p76 = scmp.eq.s32.totalorder %s14, 0
    %p77 = por %p75, %p76
    %p78 = scmp.ne.s32.totalorder %s66, %s67
    %p79 = scmp.eq.s32.totalorder %s15, 1
    %p80 = por %p78, %p79
    %p82 = scmp.ne.s32.totalorder %s67, %s81
    %p83 = scmp.eq.s32.totalorder %s15, 0
    %p84 = por %p82, %p83
    %s85 = ssub.s32 %s9, %s16
    %p86 = scmp.eq.s32.totalorder %s85, 0
    %s88 = sadd.s32 %s87, 1
    %s89 = scalar_select %p86, %s87, %s88
    %p92 = pneg %p86
    %p93 = scmp.eq.s32.totalorder %s9, 1
    %p94 = por %p92, %p93
    %p95 = scmp.ne.s32.totalorder %s87, %s90
    %p96 = scmp.eq.s32.totalorder %s9, 0
    %p97 = por %p95, %p96
    %p98 = scmp.ne.s32.totalorder %s87, %s90
    %p99 = scmp.eq.s32.totalorder %s14, 1
    %p100 = por %p98, %p99
    %p101 = scmp.ne.s32.totalorder %s90, %s91
    %p102 = scmp.eq.s32.totalorder %s14, 0
    %p103 = por %p101, %p102
    %p104 = scmp.ne.s32.totalorder %s90, %s91
    %p105 = scmp.eq.s32.totalorder %s15, 1
    %p106 = por %p104, %p105
    %p108 = scmp.ne.s32.totalorder %s91, %s107
    %p109 = scmp.eq.s32.totalorder %s15, 0
    %p110 = por %p108, %p109
    %p111 = scmp.le.s32.totalorder 1, %s9
    %p112 = scmp.lt.s32.totalorder %s9, 3
    %p113 = pnand %p111, %p112
    %p114 = pneg %p113
    // Predicated region
    $region9: #{_lambda_.28} parent=5 // pred_check
      _
    $region10: #{_lambda_.28} parent=5 // pred_check_branch
      %116 = sbr.rel (%p113) target = $region12
    $region11: #{_lambda_.28} parent=5 // pred_region
      %s117 = ssub.s32 %s9, 1
      // Predicated region
      $region13: #{_lambda_.28} parent=11 // pred_check
        %p118 = pneg %p56
      $region14: #{_lambda_.28} parent=11 // pred_check_branch
        %120 = sbr.rel (%p118) target = $region16
      $region15: #{_lambda_.28} parent=11 // pred_region
        _
      $region16: #{_lambda_.28} parent=11 // pred_fallthru
        _
      // Predicated region
      $region17: #{_lambda_.28} parent=11 // pred_check
        %p121 = pneg %p77
      $region18: #{_lambda_.28} parent=11 // pred_check_branch
        %123 = sbr.rel (%p121) target = $region20
      $region19: #{_lambda_.28} parent=11 // pred_region
        _
      $region20: #{_lambda_.28} parent=11 // pred_fallthru
        _
    $region12: #{_lambda_.28} parent=5 // pred_fallthru
      _
    %p124 = scmp.lt.s32.totalorder %s9, 2
    // Predicated region
    $region21: #{_lambda_.28} parent=5 // pred_check
      %p125 = pneg %p124
    $region22: #{_lambda_.28} parent=5 // pred_check_branch
      %127 = sbr.rel (%p125) target = $region24
    $region23: #{_lambda_.28} parent=5 // pred_region
      // Predicated region
      $region25: #{_lambda_.28} parent=23 // pred_check
        %p128 = pneg %p29
      $region26: #{_lambda_.28} parent=23 // pred_check_branch
        %130 = sbr.rel (%p128) target = $region28
      $region27: #{_lambda_.28} parent=23 // pred_region
        %p131 = scmp.lt.s32.totalorder %s9, 1
        %s132 = scalar_select %p131, %s9, 1
        %s133 = smul.addr %s132, 3
        %s134 = smul.addr %s133, 4
        %s135 = scalar_lea.vmem %s0, %s134
      $region28: #{_lambda_.28} parent=23 // pred_fallthru
        _
    $region24: #{_lambda_.28} parent=5 // pred_fallthru
      _
    %p136 = scmp.le.s32.totalorder 1, %s9
    %p137 = scmp.lt.s32.totalorder %s9, 3
    %p138 = pnand %p136, %p137
    %p139 = pneg %p138
    // Predicated region
    $region29: #{_lambda_.28} parent=5 // pred_check
      _
    $region30: #{_lambda_.28} parent=5 // pred_check_branch
      %141 = sbr.rel (%p138) target = $region32
    $region31: #{_lambda_.28} parent=5 // pred_region
      %s142 = ssub.s32 %s9, 1
      %p143 = scmp.lt.s32.totalorder %s14, 1
      %s144 = scalar_select %p143, %s14, 1
      %s145 = smul.addr %s144, 3
      %s146 = smul.addr %s145, 4
      %s147 = scalar_lea.vmem %s0, %s146
      %p148 = pneg %p35
      %p149 = pneg %p32
      %p150 = pneg %p56
      %p151 = pneg %p53
      %p152 = pneg %p77
      %p153 = pneg %p74
      %p154 = pneg %p103
      %p155 = pneg %p100
      %p156 = scmp.lt.s32.totalorder %s14, 1
      %s157 = scalar_select %p156, %s14, 1
      %s158 = smul.addr %s157, 2
      %s159 = smul.addr %s158, 4
      %s160 = scalar_lea.vmem %s3, %s159
      %p161 = scmp.lt.s32.totalorder %s14, 1
      %s162 = scalar_select %p161, %s14, 1
      %s163 = smul.addr %s162, 3
      %s164 = smul.addr %s163, 4
      %s165 = scalar_lea.vmem %s0, %s164
      %p166 = scmp.lt.s32.totalorder %s14, 1
      %s167 = scalar_select %p166, %s14, 1
      %s168 = smul.addr %s167, 2
      %s169 = smul.addr %s168, 4
      %s170 = scalar_lea.vmem %s3, %s169
      %v172 = vld [vmem:[%s165] sm:$0xf]
      %v173 = vld [vmem:[%s165 + $0x4] sm:$0xf]
      %v174 = vld [vmem:[%s1] sm:$0xf]
      %v175 = vld [vmem:[%s1 + $0x4] sm:$0xf]
      %v176 = vld [vmem:[%s1 + $0x8] sm:$0xf]
      %v177 = vld [vmem:[%s1 + $0xc] sm:$0xf]
      %v178 = vld [vmem:[%s1 + $0x10] sm:$0xf]
      %v179 = vld [vmem:[%s1 + $0x14] sm:$0xf]
      %v180 = vld [vmem:[%s1 + $0x18] sm:$0xf]
      %v181 = vld [vmem:[%s1 + $0x1c] sm:$0xf]
      %v182 = vld [vmem:[%s1 + $0x20] sm:$0xf]
      %v183 = vld [vmem:[%s1 + $0x24] sm:$0xf]
      %v184 = vld [vmem:[%s1 + $0x28] sm:$0xf]
      %v185 = vld [vmem:[%s1 + $0x2c] sm:$0xf]
      %v186 = vld [vmem:[%s1 + $0x30] sm:$0xf]
      %v187 = vld [vmem:[%s1 + $0x34] sm:$0xf]
      %v188 = vld [vmem:[%s1 + $0x38] sm:$0xf]
      %v189 = vld [vmem:[%s1 + $0x3c] sm:$0xf]
      %v190 = vld [vmem:[%s165 + $0x8] sm:$0x1]
      %s191 = scalar_lea.vmem %s1, 64
      %v192 = vld [vmem:[%s191] sm:$0xf]
      %v193 = vld [vmem:[%s191 + $0x4] sm:$0xf]
      %v194 = vld [vmem:[%s191 + $0x8] sm:$0xf]
      %v195 = vld [vmem:[%s191 + $0xc] sm:$0xf]
      %v196 = vld [vmem:[%s191 + $0x10] sm:$0xf]
      %v197 = vld [vmem:[%s191 + $0x14] sm:$0xf]
      %v198 = vld [vmem:[%s191 + $0x18] sm:$0xf]
      %v199 = vld [vmem:[%s191 + $0x1c] sm:$0xf]
      %v200 = vld [vmem:[%s191 + $0x20] sm:$0xf]
      %v201 = vld [vmem:[%s191 + $0x24] sm:$0xf]
      %v202 = vld [vmem:[%s191 + $0x28] sm:$0xf]
      %v203 = vld [vmem:[%s191 + $0x2c] sm:$0xf]
      %v204 = vld [vmem:[%s191 + $0x30] sm:$0xf]
      %v205 = vld [vmem:[%s191 + $0x34] sm:$0xf]
      %v206 = vld [vmem:[%s191 + $0x38] sm:$0xf]
      %v207 = vld [vmem:[%s191 + $0x3c] sm:$0xf]
      %v211 = vunpack.c.l.b16 %v172
      %v212 = vunpack.c.l.b16 %v173
      %v213 = vunpack.c.l.b16 %v190
      %v214 = vpack.c.b16 %v212, %v211
      %v215 = vpack.c.b16 %v213, %v213
      %vm216 = vsmask.f32 7424
      %v218 = vshrl.u32 %v214, 16
      %v220 = vshll.u32 %v214, 16
      %v222 = vrot.slane %v220, 1
      %v223 = vor.u32 %v218, %v222
      %v225 = vshll.u32 %v215, 16
      %v227 = vrot.slane %v225, 1
      %v228 = vsel %vm216, %v223, %v227
      %v246 = vunpack.c.l.b16 %v192
      %v247 = vunpack.c.l.b16 %v193
      %v248 = vunpack.c.l.b16 %v194
      %v249 = vunpack.c.l.b16 %v195
      %v250 = vunpack.c.l.b16 %v196
      %v251 = vunpack.c.l.b16 %v197
      %v252 = vunpack.c.l.b16 %v198
      %v253 = vunpack.c.l.b16 %v199
      %v254 = vunpack.c.l.b16 %v200
      %v255 = vunpack.c.l.b16 %v201
      %v256 = vunpack.c.l.b16 %v202
      %v257 = vunpack.c.l.b16 %v203
      %v258 = vunpack.c.l.b16 %v204
      %v259 = vunpack.c.l.b16 %v205
      %v260 = vunpack.c.l.b16 %v206
      %v261 = vunpack.c.l.b16 %v207
      %v262 = vpack.c.b16 %v247, %v246
      %v263 = vpack.c.b16 %v249, %v248
      %v264 = vpack.c.b16 %v251, %v250
      %v265 = vpack.c.b16 %v253, %v252
      %v266 = vpack.c.b16 %v255, %v254
      %v267 = vpack.c.b16 %v257, %v256
      %v268 = vpack.c.b16 %v259, %v258
      %v269 = vpack.c.b16 %v261, %v260
      %278 = vmatprep.subr.bf16.mxu0 0
      %279 = vmatpush1.bf16.msra.mxu0 %v269
      %280 = vmatprep.subr.bf16.mxu0 0
      %281 = vmatpush1.bf16.msra.mxu0 %v268
      %282 = vmatprep.subr.bf16.mxu0 0
      %283 = vmatpush1.bf16.msra.mxu0 %v267
      %284 = vmatprep.subr.bf16.mxu0 0
      %285 = vmatpush1.bf16.msra.mxu0 %v266
      %286 = vmatprep.subr.bf16.mxu0 0
      %287 = vmatpush1.bf16.msra.mxu0 %v265
      %288 = vmatprep.subr.bf16.mxu0 0
      %289 = vmatpush1.bf16.msra.mxu0 %v264
      %290 = vmatprep.subr.bf16.mxu0 0
      %291 = vmatpush1.bf16.msra.mxu0 %v263
      %292 = vmatprep.subr.bf16.mxu0 0
      %293 = vmatpush1.bf16.msra.mxu0 %v262
      %294 = vmatprep.subr.bf16.mxu0 0
      %295 = vmatpush2.bf16.msra.mxu0 0
      %296 = vmatprep.subr.bf16.mxu0 0
      %297 = vmatpush2.bf16.msra.mxu0 0
      %298 = vmatprep.subr.bf16.mxu0 0
      %299 = vmatpush2.bf16.msra.mxu0 0
      %300 = vmatprep.subr.bf16.mxu0 0
      %301 = vmatpush2.bf16.msra.mxu0 0
      %302 = vmatprep.subr.bf16.mxu0 0
      %303 = vmatpush2.bf16.msra.mxu0 0
      %304 = vmatprep.subr.bf16.mxu0 0
      %305 = vmatpush2.bf16.msra.mxu0 0
      %306 = vmatprep.subr.bf16.mxu0 0
      %307 = vmatpush2.bf16.msra.mxu0 0
      %308 = vmatprep.subr.bf16.mxu0 0
      %309 = vmatpush2.bf16.msra.mxu0 0
      %310 = vmatprep.mubr.bf16.mxu0 0
      %311 = vmatmul.mubr.bf16.gmra.mxu0 %v228
      %v312 = vpop.f32.mrf.mxu0
      %v313 = vadd.f32 0.0, %v312
      %v314 = vpop.f32.mrf.mxu0
      %v315 = vpop.f32.mrf.mxu0
      %v316 = vadd.f32 0.0, %v315
      %v317 = vpop.f32.mrf.mxu0
      %318 = vdwg.mxu0
      %v336 = vunpack.c.l.b16 %v174
      %v337 = vunpack.c.l.b16 %v175
      %v338 = vunpack.c.l.b16 %v176
      %v339 = vunpack.c.l.b16 %v177
      %v340 = vunpack.c.l.b16 %v178
      %v341 = vunpack.c.l.b16 %v179
      %v342 = vunpack.c.l.b16 %v180
      %v343 = vunpack.c.l.b16 %v181
      %v344 = vunpack.c.l.b16 %v182
      %v345 = vunpack.c.l.b16 %v183
      %v346 = vunpack.c.l.b16 %v184
      %v347 = vunpack.c.l.b16 %v185
      %v348 = vunpack.c.l.b16 %v186
      %v349 = vunpack.c.l.b16 %v187
      %v350 = vunpack.c.l.b16 %v188
      %v351 = vunpack.c.l.b16 %v189
      %v352 = vpack.c.b16 %v337, %v336
      %v353 = vpack.c.b16 %v339, %v338
      %v354 = vpack.c.b16 %v341, %v340
      %v355 = vpack.c.b16 %v343, %v342
      %v356 = vpack.c.b16 %v345, %v344
      %v357 = vpack.c.b16 %v347, %v346
      %v358 = vpack.c.b16 %v349, %v348
      %v359 = vpack.c.b16 %v351, %v350
      %368 = vmatprep.subr.bf16.mxu0 0
      %369 = vmatpush1.bf16.msra.mxu0 %v359
      %370 = vmatprep.subr.bf16.mxu0 0
      %371 = vmatpush1.bf16.msra.mxu0 %v358
      %372 = vmatprep.subr.bf16.mxu0 0
      %373 = vmatpush1.bf16.msra.mxu0 %v357
      %374 = vmatprep.subr.bf16.mxu0 0
      %375 = vmatpush1.bf16.msra.mxu0 %v356
      %376 = vmatprep.subr.bf16.mxu0 0
      %377 = vmatpush1.bf16.msra.mxu0 %v355
      %378 = vmatprep.subr.bf16.mxu0 0
      %379 = vmatpush1.bf16.msra.mxu0 %v354
      %380 = vmatprep.subr.bf16.mxu0 0
      %381 = vmatpush1.bf16.msra.mxu0 %v353
      %382 = vmatprep.subr.bf16.mxu0 0
      %383 = vmatpush1.bf16.msra.mxu0 %v352
      %384 = vmatprep.subr.bf16.mxu0 0
      %385 = vmatpush2.bf16.msra.mxu0 0
      %386 = vmatprep.subr.bf16.mxu0 0
      %387 = vmatpush2.bf16.msra.mxu0 0
      %388 = vmatprep.subr.bf16.mxu0 0
      %389 = vmatpush2.bf16.msra.mxu0 0
      %390 = vmatprep.subr.bf16.mxu0 0
      %391 = vmatpush2.bf16.msra.mxu0 0
      %392 = vmatprep.subr.bf16.mxu0 0
      %393 = vmatpush2.bf16.msra.mxu0 0
      %394 = vmatprep.subr.bf16.mxu0 0
      %395 = vmatpush2.bf16.msra.mxu0 0
      %396 = vmatprep.subr.bf16.mxu0 0
      %397 = vmatpush2.bf16.msra.mxu0 0
      %398 = vmatprep.subr.bf16.mxu0 0
      %399 = vmatpush2.bf16.msra.mxu0 0
      %400 = vmatprep.mubr.bf16.mxu0 0
      %401 = vmatmul.mubr.bf16.gmra.mxu0 %v214
      %v402 = vpop.f32.mrf.mxu0
      %v403 = vadd.f32 %v313, %v402
      %v404 = vpop.f32.mrf.mxu0
      %v405 = vpop.f32.mrf.mxu0
      %v406 = vadd.f32 %v316, %v405
      %v407 = vpop.f32.mrf.mxu0
      %408 = vdwg.mxu0
      %v409 = vld [vmem:[%s165] sm:$0xe]
      %s410 = scalar_lea.vmem %s1, 128
      %v411 = vld [vmem:[%s410] sm:$0xf]
      %v412 = vld [vmem:[%s410 + $0x4] sm:$0xf]
      %v413 = vld [vmem:[%s410 + $0x8] sm:$0xf]
      %v414 = vld [vmem:[%s410 + $0xc] sm:$0xf]
      %v415 = vld [vmem:[%s410 + $0x10] sm:$0xf]
      %v416 = vld [vmem:[%s410 + $0x14] sm:$0xf]
      %v417 = vld [vmem:[%s410 + $0x18] sm:$0xf]
      %v418 = vld [vmem:[%s410 + $0x1c] sm:$0xf]
      %v419 = vld [vmem:[%s410 + $0x20] sm:$0xf]
      %v420 = vld [vmem:[%s410 + $0x24] sm:$0xf]
      %v421 = vld [vmem:[%s410 + $0x28] sm:$0xf]
      %v422 = vld [vmem:[%s410 + $0x2c] sm:$0xf]
      %v423 = vld [vmem:[%s410 + $0x30] sm:$0xf]
      %v424 = vld [vmem:[%s410 + $0x34] sm:$0xf]
      %v425 = vld [vmem:[%s410 + $0x38] sm:$0xf]
      %v426 = vld [vmem:[%s410 + $0x3c] sm:$0xf]
      %v428 = vunpack.c.l.b16 %v409
      %v429 = vpack.c.b16 %v212, %v428
      %vm430 = vcmask 1046528
      %v431 = vrot.slane %v429, 1
      %v432 = vrot.slane %v215, 1
      %v433 = vsel %vm430, %v431, %v432
      %v451 = vunpack.c.l.b16 %v411
      %v452 = vunpack.c.l.b16 %v412
      %v453 = vunpack.c.l.b16 %v413
      %v454 = vunpack.c.l.b16 %v414
      %v455 = vunpack.c.l.b16 %v415
      %v456 = vunpack.c.l.b16 %v416
      %v457 = vunpack.c.l.b16 %v417
      %v458 = vunpack.c.l.b16 %v418
      %v459 = vunpack.c.l.b16 %v419
      %v460 = vunpack.c.l.b16 %v420
      %v461 = vunpack.c.l.b16 %v421
      %v462 = vunpack.c.l.b16 %v422
      %v463 = vunpack.c.l.b16 %v423
      %v464 = vunpack.c.l.b16 %v424
      %v465 = vunpack.c.l.b16 %v425
      %v466 = vunpack.c.l.b16 %v426
      %v467 = vpack.c.b16 %v452, %v451
      %v468 = vpack.c.b16 %v454, %v453
      %v469 = vpack.c.b16 %v456, %v455
      %v470 = vpack.c.b16 %v458, %v457
      %v471 = vpack.c.b16 %v460, %v459
      %v472 = vpack.c.b16 %v462, %v461
      %v473 = vpack.c.b16 %v464, %v463
      %v474 = vpack.c.b16 %v466, %v465
      %483 = vmatprep.subr.bf16.mxu0 0
      %484 = vmatpush1.bf16.msra.mxu0 %v474
      %485 = vmatprep.subr.bf16.mxu0 0
      %486 = vmatpush1.bf16.msra.mxu0 %v473
      %487 = vmatprep.subr.bf16.mxu0 0
      %488 = vmatpush1.bf16.msra.mxu0 %v472
      %489 = vmatprep.subr.bf16.mxu0 0
      %490 = vmatpush1.bf16.msra.mxu0 %v471
      %491 = vmatprep.subr.bf16.mxu0 0
      %492 = vmatpush1.bf16.msra.mxu0 %v470
      %493 = vmatprep.subr.bf16.mxu0 0
      %494 = vmatpush1.bf16.msra.mxu0 %v469
      %495 = vmatprep.subr.bf16.mxu0 0
      %496 = vmatpush1.bf16.msra.mxu0 %v468
      %497 = vmatprep.subr.bf16.mxu0 0
      %498 = vmatpush1.bf16.msra.mxu0 %v467
      %499 = vmatprep.subr.bf16.mxu0 0
      %500 = vmatpush2.bf16.msra.mxu0 0
      %501 = vmatprep.subr.bf16.mxu0 0
      %502 = vmatpush2.bf16.msra.mxu0 0
      %503 = vmatprep.subr.bf16.mxu0 0
      %504 = vmatpush2.bf16.msra.mxu0 0
      %505 = vmatprep.subr.bf16.mxu0 0
      %506 = vmatpush2.bf16.msra.mxu0 0
      %507 = vmatprep.subr.bf16.mxu0 0
      %508 = vmatpush2.bf16.msra.mxu0 0
      %509 = vmatprep.subr.bf16.mxu0 0
      %510 = vmatpush2.bf16.msra.mxu0 0
      %511 = vmatprep.subr.bf16.mxu0 0
      %512 = vmatpush2.bf16.msra.mxu0 0
      %513 = vmatprep.subr.bf16.mxu0 0
      %514 = vmatpush2.bf16.msra.mxu0 0
      %515 = vmatprep.mubr.bf16.mxu0 0
      %516 = vmatmul.mubr.bf16.gmra.mxu0 %v433
      %v517 = vpop.f32.mrf.mxu0
      %v518 = vadd.f32 0.0, %v517
      %v519 = vpop.f32.mrf.mxu0
      %v520 = vpop.f32.mrf.mxu0
      %v521 = vadd.f32 0.0, %v520
      %v522 = vpop.f32.mrf.mxu0
      %523 = vdwg.mxu0
      %v524 = vadd.f32 %v403, %v518
      %v525 = vadd.f32 %v406, %v521
      %v526 = vld [vmem:[%s2] sm:$0x1]
      %v528 = vlaneseq
      %v529 = vshrl.u32 %v528, 7
      %v530 = vsub.s32 0, %v529
      %v531 = vrot.slane %v526, %v530
      %v533 = vadd.f32 %v524, %v531
      %v534 = vadd.f32 %v525, %v531
      %v535 = vmax.f32 %v533, 0.0
      %v536 = vmax.f32 %v534, 0.0
      %v537 = vpack.c.bf16 %v536, %v535
      %v539 = vunpack.c.l.b16 %v537
      %v540 = vunpack.c.h.b16 %v537
      %v541 = vpack.c.b16 %v539, %v539
      %v542 = vpack.c.b16 %v540, %v540
      %545 = vst [vmem:[%s170] sm:$0xf] %v541
      %546 = vst [vmem:[%s170 + $0x4] sm:$0xf] %v542
      %p547 = scmp.lt.s32.totalorder %s14, 1
      %s548 = scalar_select %p547, %s14, 1
      %s549 = smul.addr %s548, 2
      %s550 = smul.addr %s549, 4
      %s551 = scalar_lea.vmem %s3, %s550
      // Predicated region
      $region33: #{_lambda_.28} parent=31 // pred_check
        %p552 = pneg %p100
      $region34: #{_lambda_.28} parent=31 // pred_check_branch
        %554 = sbr.rel (%p552) target = $region36
      $region35: #{_lambda_.28} parent=31 // pred_region
        _
      $region36: #{_lambda_.28} parent=31 // pred_fallthru
        _
    $region32: #{_lambda_.28} parent=5 // pred_fallthru
      _
    %p555 = scmp.le.s32.totalorder 2, %s9
    // Predicated region
    $region37: #{_lambda_.28} parent=5 // pred_check
      %p556 = pneg %p555
    $region38: #{_lambda_.28} parent=5 // pred_check_branch
      %558 = sbr.rel (%p556) target = $region40
    $region39: #{_lambda_.28} parent=5 // pred_region
      %s559 = ssub.s32 %s9, 2
      // Predicated region
      $region41: #{_lambda_.28} parent=39 // pred_check
        %p560 = pneg %p106
      $region42: #{_lambda_.28} parent=39 // pred_check_branch
        %562 = sbr.rel (%p560) target = $region44
      $region43: #{_lambda_.28} parent=39 // pred_region
        %p563 = scmp.lt.s32.totalorder %s15, 1
        %s564 = scalar_select %p563, %s15, 1
        %s565 = smul.addr %s564, 2
        %s566 = smul.addr %s565, 4
        %s567 = scalar_lea.vmem %s3, %s566
      $region44: #{_lambda_.28} parent=39 // pred_fallthru
        _
    $region40: #{_lambda_.28} parent=5 // pred_fallthru
      _
  $region6: #{_lambda_.28} parent=0 // loop_footer
    %s13 = sadd.s32 1, %s9
  $region7: #{_lambda_.28} parent=0 // loop_footer_branch
    %8 = sbr.rel target = $region3
  $region8: #{_lambda_.28} parent=0 // loop_exit
    _

// kernel: _lambda_.19
$region0: #{_lambda_.19}
  #allocation0 [shape = 'u32[]', space=smem, size = 0x4, offset = 0x4, fixed_abs, tag = 'smem constant byte address 0x4 - core index']
  #allocation1 [shape = 'u32[144,128]{1,0:T(1,128)}', space=vmem, size = 0x12000, scoped, tag = 'internal scratch']
  %s0 = inlined_call_operand.vmem [shape: bf16[2,9,256], index: 0, kind: input, shape index: {}]
  %s1 = inlined_call_operand.vmem [shape: bf16[2,256,128], index: 1, kind: input, shape index: {}]
  %s2 = inlined_call_operand.vmem [shape: f32[1,128], index: 2, kind: input, shape index: {}]
  %s3 = inlined_call_operand.vmem [shape: bf16[2,8,128], index: 3, kind: output, shape index: {}]
  %s4 = sld [smem:[#allocation0]]
  $region45: #{_lambda_.19} parent=0
    _
  %s6 = ssub.s32 1, %s4
  %s7 = scalar_select 0, %s6, %s4
  loop: start=0, step=1, limit=4
  $region2: #{_lambda_.19} parent=0 // loop_pre_header
    _
  $region3: #{_lambda_.19} parent=0 // loop_header
    %s9 = sphi 0, %s13
    %p10 = scmp.ge.s32.totalorder %s9, 4
    %s19 = sphi 0, %s21
    %s22 = sphi 0, %s19
    %s23 = sphi 0, %s22
    %s39 = sphi 0, %s23
    %s43 = sphi 0, %s43
    %s45 = sphi 0, %s43
    %s46 = sphi 0, %s45
    %s60 = sphi 0, %s46
    %s64 = sphi 0, %s64
    %s66 = sphi 0, %s64
    %s67 = sphi 0, %s66
    %s81 = sphi 0, %s67
    %s87 = sphi 0, %s89
    %s90 = sphi 0, %s87
    %s91 = sphi 0, %s90
    %s107 = sphi 0, %s91
  $region4: #{_lambda_.19} parent=0 // loop_header_branch
    %12 = sbr.rel (%p10) target = $region8
  $region5: #{_lambda_.19} parent=0 // loop_body
    %s14 = ssub.s32 %s9, 1
    %s15 = ssub.s32 %s9, 2
    %s16 = sadd.s32 %s9, 1
    %s17 = ssub.s32 %s9, %s16
    %p18 = scmp.eq.s32.totalorder %s17, 0
    %s20 = sadd.s32 %s19, 1
    %s21 = scalar_select %p18, %s19, %s20
    %p24 = pneg %p18
    %p25 = scmp.eq.s32.totalorder %s9, 1
    %p26 = por %p24, %p25
    %p27 = scmp.ne.s32.totalorder %s19, %s22
    %p28 = scmp.eq.s32.totalorder %s9, 0
    %p29 = por %p27, %p28
    %p30 = scmp.ne.s32.totalorder %s19, %s22
    %p31 = scmp.eq.s32.totalorder %s14, 1
    %p32 = por %p30, %p31
    %p33 = scmp.ne.s32.totalorder %s22, %s23
    %p34 = scmp.eq.s32.totalorder %s14, 0
    %p35 = por %p33, %p34
    %p36 = scmp.ne.s32.totalorder %s22, %s23
    %p37 = scmp.eq.s32.totalorder %s15, 1
    %p38 = por %p36, %p37
    %p40 = scmp.ne.s32.totalorder %s23, %s39
    %p41 = scmp.eq.s32.totalorder %s15, 0
    %p42 = por %p40, %p41
    %s44 = sadd.s32 %s43, 1
    %p47 = scmp.eq.s32.totalorder %s9, 1
    %p48 = scmp.ne.s32.totalorder %s43, %s45
    %p49 = scmp.eq.s32.totalorder %s9, 0
    %p50 = por %p48, %p49
    %p51 = scmp.ne.s32.totalorder %s43, %s45
    %p52 = scmp.eq.s32.totalorder %s14, 1
    %p53 = por %p51, %p52
    %p54 = scmp.ne.s32.totalorder %s45, %s46
    %p55 = scmp.eq.s32.totalorder %s14, 0
    %p56 = por %p54, %p55
    %p57 = scmp.ne.s32.totalorder %s45, %s46
    %p58 = scmp.eq.s32.totalorder %s15, 1
    %p59 = por %p57, %p58
    %p61 = scmp.ne.s32.totalorder %s46, %s60
    %p62 = scmp.eq.s32.totalorder %s15, 0
    %p63 = por %p61, %p62
    %s65 = sadd.s32 %s64, 1
    %p68 = scmp.eq.s32.totalorder %s9, 1
    %p69 = scmp.ne.s32.totalorder %s64, %s66
    %p70 = scmp.eq.s32.totalorder %s9, 0
    %p71 = por %p69, %p70
    %p72 = scmp.ne.s32.totalorder %s64, %s66
    %p73 = scmp.eq.s32.totalorder %s14, 1
    %p74 = por %p72, %p73
    %p75 = scmp.ne.s32.totalorder %s66, %s67
    %p76 = scmp.eq.s32.totalorder %s14, 0
    %p77 = por %p75, %p76
    %p78 = scmp.ne.s32.totalorder %s66, %s67
    %p79 = scmp.eq.s32.totalorder %s15, 1
    %p80 = por %p78, %p79
    %p82 = scmp.ne.s32.totalorder %s67, %s81
    %p83 = scmp.eq.s32.totalorder %s15, 0
    %p84 = por %p82, %p83
    %s85 = ssub.s32 %s9, %s16
    %p86 = scmp.eq.s32.totalorder %s85, 0
    %s88 = sadd.s32 %s87, 1
    %s89 = scalar_select %p86, %s87, %s88
    %p92 = pneg %p86
    %p93 = scmp.eq.s32.totalorder %s9, 1
    %p94 = por %p92, %p93
    %p95 = scmp.ne.s32.totalorder %s87, %s90
    %p96 = scmp.eq.s32.totalorder %s9, 0
    %p97 = por %p95, %p96
    %p98 = scmp.ne.s32.totalorder %s87, %s90
    %p99 = scmp.eq.s32.totalorder %s14, 1
    %p100 = por %p98, %p99
    %p101 = scmp.ne.s32.totalorder %s90, %s91
    %p102 = scmp.eq.s32.totalorder %s14, 0
    %p103 = por %p101, %p102
    %p104 = scmp.ne.s32.totalorder %s90, %s91
    %p105 = scmp.eq.s32.totalorder %s15, 1
    %p106 = por %p104, %p105
    %p108 = scmp.ne.s32.totalorder %s91, %s107
    %p109 = scmp.eq.s32.totalorder %s15, 0
    %p110 = por %p108, %p109
    %p111 = scmp.le.s32.totalorder 1, %s9
    %p112 = scmp.lt.s32.totalorder %s9, 3
    %p113 = pnand %p111, %p112
    %p114 = pneg %p113
    // Predicated region
    $region9: #{_lambda_.19} parent=5 // pred_check
      _
    $region10: #{_lambda_.19} parent=5 // pred_check_branch
      %116 = sbr.rel (%p113) target = $region12
    $region11: #{_lambda_.19} parent=5 // pred_region
      %s117 = ssub.s32 %s9, 1
      // Predicated region
      $region13: #{_lambda_.19} parent=11 // pred_check
        %p118 = pneg %p56
      $region14: #{_lambda_.19} parent=11 // pred_check_branch
        %120 = sbr.rel (%p118) target = $region16
      $region15: #{_lambda_.19} parent=11 // pred_region
        _
      $region16: #{_lambda_.19} parent=11 // pred_fallthru
        _
      // Predicated region
      $region17: #{_lambda_.19} parent=11 // pred_check
        %p121 = pneg %p77
      $region18: #{_lambda_.19} parent=11 // pred_check_branch
        %123 = sbr.rel (%p121) target = $region20
      $region19: #{_lambda_.19} parent=11 // pred_region
        _
      $region20: #{_lambda_.19} parent=11 // pred_fallthru
        _
    $region12: #{_lambda_.19} parent=5 // pred_fallthru
      _
    %p124 = scmp.lt.s32.totalorder %s9, 2
    // Predicated region
    $region21: #{_lambda_.19} parent=5 // pred_check
      %p125 = pneg %p124
    $region22: #{_lambda_.19} parent=5 // pred_check_branch
      %127 = sbr.rel (%p125) target = $region24
    $region23: #{_lambda_.19} parent=5 // pred_region
      // Predicated region
      $region25: #{_lambda_.19} parent=23 // pred_check
        %p128 = pneg %p29
      $region26: #{_lambda_.19} parent=23 // pred_check_branch
        %130 = sbr.rel (%p128) target = $region28
      $region27: #{_lambda_.19} parent=23 // pred_region
        %p131 = scmp.lt.s32.totalorder %s9, 1
        %s132 = scalar_select %p131, %s9, 1
        %s133 = smul.addr %s132, 4
        %s134 = smul.addr %s133, 4
        %s135 = scalar_lea.vmem %s0, %s134
      $region28: #{_lambda_.19} parent=23 // pred_fallthru
        _
    $region24: #{_lambda_.19} parent=5 // pred_fallthru
      _
    %p136 = scmp.le.s32.totalorder 1, %s9
    %p137 = scmp.lt.s32.totalorder %s9, 3
    %p138 = pnand %p136, %p137
    %p139 = pneg %p138
    // Predicated region
    $region29: #{_lambda_.19} parent=5 // pred_check
      _
    $region30: #{_lambda_.19} parent=5 // pred_check_branch
      %141 = sbr.rel (%p138) target = $region32
    $region31: #{_lambda_.19} parent=5 // pred_region
      %s142 = ssub.s32 %s9, 1
      %p143 = scmp.lt.s32.totalorder %s14, 1
      %s144 = scalar_select %p143, %s14, 1
      %s145 = smul.addr %s144, 4
      %s146 = smul.addr %s145, 4
      %s147 = scalar_lea.vmem %s0, %s146
      %p148 = pneg %p35
      %p149 = pneg %p32
      %p150 = pneg %p56
      %p151 = pneg %p53
      %p152 = pneg %p77
      %p153 = pneg %p74
      %p154 = pneg %p103
      %p155 = pneg %p100
      %p156 = scmp.lt.s32.totalorder %s14, 1
      %s157 = scalar_select %p156, %s14, 1
      %s158 = smul.addr %s157, 4
      %s159 = scalar_lea.vmem %s3, %s158
      %p160 = scmp.lt.s32.totalorder %s14, 1
      %s161 = scalar_select %p160, %s14, 1
      %s162 = smul.addr %s161, 4
      %s163 = smul.addr %s162, 4
      %s164 = scalar_lea.vmem %s0, %s163
      %p165 = scmp.lt.s32.totalorder %s14, 1
      %s166 = scalar_select %p165, %s14, 1
      %s167 = smul.addr %s166, 4
      %s168 = scalar_lea.vmem %s3, %s167
      %v170 = vld [vmem:[%s164] sm:$0xff]
      %v171 = vld [vmem:[%s1] sm:$0xf]
      %v172 = vld [vmem:[%s1 + $0x4] sm:$0xf]
      %v173 = vld [vmem:[%s1 + $0x8] sm:$0xf]
      %v174 = vld [vmem:[%s1 + $0xc] sm:$0xf]
      %v175 = vld [vmem:[%s1 + $0x10] sm:$0xf]
      %v176 = vld [vmem:[%s1 + $0x14] sm:$0xf]
      %v177 = vld [vmem:[%s1 + $0x18] sm:$0xf]
      %v178 = vld [vmem:[%s1 + $0x1c] sm:$0xf]
      %v179 = vld [vmem:[%s1 + $0x20] sm:$0xf]
      %v180 = vld [vmem:[%s1 + $0x24] sm:$0xf]
      %v181 = vld [vmem:[%s1 + $0x28] sm:$0xf]
      %v182 = vld [vmem:[%s1 + $0x2c] sm:$0xf]
      %v183 = vld [vmem:[%s1 + $0x30] sm:$0xf]
      %v184 = vld [vmem:[%s1 + $0x34] sm:$0xf]
      %v185 = vld [vmem:[%s1 + $0x38] sm:$0xf]
      %v186 = vld [vmem:[%s1 + $0x3c] sm:$0xf]
      %v187 = vld [vmem:[%s1 + $0x40] sm:$0xf]
      %v188 = vld [vmem:[%s1 + $0x44] sm:$0xf]
      %v189 = vld [vmem:[%s1 + $0x48] sm:$0xf]
      %v190 = vld [vmem:[%s1 + $0x4c] sm:$0xf]
      %v191 = vld [vmem:[%s1 + $0x50] sm:$0xf]
      %v192 = vld [vmem:[%s1 + $0x54] sm:$0xf]
      %v193 = vld [vmem:[%s1 + $0x58] sm:$0xf]
      %v194 = vld [vmem:[%s1 + $0x5c] sm:$0xf]
      %v195 = vld [vmem:[%s1 + $0x60] sm:$0xf]
      %v196 = vld [vmem:[%s1 + $0x64] sm:$0xf]
      %v197 = vld [vmem:[%s1 + $0x68] sm:$0xf]
      %v198 = vld [vmem:[%s1 + $0x6c] sm:$0xf]
      %v199 = vld [vmem:[%s1 + $0x70] sm:$0xf]
      %v200 = vld [vmem:[%s1 + $0x74] sm:$0xf]
      %v201 = vld [vmem:[%s1 + $0x78] sm:$0xf]
      %v202 = vld [vmem:[%s1 + $0x7c] sm:$0xf]
      %v203 = vld [vmem:[%s164 + $0x8] sm:$0x11]
      %s204 = scalar_lea.vmem %s1, 128
      %v205 = vld [vmem:[%s204] sm:$0xf]
      %v206 = vld [vmem:[%s204 + $0x4] sm:$0xf]
      %v207 = vld [vmem:[%s204 + $0x8] sm:$0xf]
      %v208 = vld [vmem:[%s204 + $0xc] sm:$0xf]
      %v209 = vld [vmem:[%s204 + $0x10] sm:$0xf]
      %v210 = vld [vmem:[%s204 + $0x14] sm:$0xf]
      %v211 = vld [vmem:[%s204 + $0x18] sm:$0xf]
      %v212 = vld [vmem:[%s204 + $0x1c] sm:$0xf]
      %v213 = vld [vmem:[%s204 + $0x20] sm:$0xf]
      %v214 = vld [vmem:[%s204 + $0x24] sm:$0xf]
      %v215 = vld [vmem:[%s204 + $0x28] sm:$0xf]
      %v216 = vld [vmem:[%s204 + $0x2c] sm:$0xf]
      %v217 = vld [vmem:[%s204 + $0x30] sm:$0xf]
      %v218 = vld [vmem:[%s204 + $0x34] sm:$0xf]
      %v219 = vld [vmem:[%s204 + $0x38] sm:$0xf]
      %v220 = vld [vmem:[%s204 + $0x3c] sm:$0xf]
      %v221 = vld [vmem:[%s204 + $0x40] sm:$0xf]
      %v222 = vld [vmem:[%s204 + $0x44] sm:$0xf]
      %v223 = vld [vmem:[%s204 + $0x48] sm:$0xf]
      %v224 = vld [vmem:[%s204 + $0x4c] sm:$0xf]
      %v225 = vld [vmem:[%s204 + $0x50] sm:$0xf]
      %v226 = vld [vmem:[%s204 + $0x54] sm:$0xf]
      %v227 = vld [vmem:[%s204 + $0x58] sm:$0xf]
      %v228 = vld [vmem:[%s204 + $0x5c] sm:$0xf]
      %v229 = vld [vmem:[%s204 + $0x60] sm:$0xf]
      %v230 = vld [vmem:[%s204 + $0x64] sm:$0xf]
      %v231 = vld [vmem:[%s204 + $0x68] sm:$0xf]
      %v232 = vld [vmem:[%s204 + $0x6c] sm:$0xf]
      %v233 = vld [vmem:[%s204 + $0x70] sm:$0xf]
      %v234 = vld [vmem:[%s204 + $0x74] sm:$0xf]
      %v235 = vld [vmem:[%s204 + $0x78] sm:$0xf]
      %v236 = vld [vmem:[%s204 + $0x7c] sm:$0xf]
      %v239 = vunpack.c.l.b16 %v170
      %v240 = vunpack.c.h.b16 %v170
      %v241 = vunpack.c.l.b16 %v203
      %v242 = vunpack.c.h.b16 %v203
      %v243 = vpack.c.b16 %v241, %v239
      %v244 = vpack.c.b16 %v242, %v240
      %v246 = vshrl.u32 %v243, 16
      %v248 = vshll.u32 %v243, 16
      %v250 = vrot.slane %v248, 1
      %v251 = vor.u32 %v246, %v250
      %v253 = vshrl.u32 %v244, 16
      %v255 = vshll.u32 %v244, 16
      %v257 = vrot.slane %v255, 1
      %v258 = vor.u32 %v253, %v257
      %v293 = vunpack.c.l.b16 %v205
      %v294 = vunpack.c.l.b16 %v206
      %v295 = vunpack.c.l.b16 %v207
      %v296 = vunpack.c.l.b16 %v208
      %v297 = vunpack.c.l.b16 %v209
      %v298 = vunpack.c.l.b16 %v210
      %v299 = vunpack.c.l.b16 %v211
      %v300 = vunpack.c.l.b16 %v212
      %v301 = vunpack.c.l.b16 %v213
      %v302 = vunpack.c.l.b16 %v214
      %v303 = vunpack.c.l.b16 %v215
      %v304 = vunpack.c.l.b16 %v216
      %v305 = vunpack.c.l.b16 %v217
      %v306 = vunpack.c.l.b16 %v218
      %v307 = vunpack.c.l.b16 %v219
      %v308 = vunpack.c.l.b16 %v220
      %v309 = vunpack.c.l.b16 %v221
      %v310 = vunpack.c.l.b16 %v222
      %v311 = vunpack.c.l.b16 %v223
      %v312 = vunpack.c.l.b16 %v224
      %v313 = vunpack.c.l.b16 %v225
      %v314 = vunpack.c.l.b16 %v226
      %v315 = vunpack.c.l.b16 %v227
      %v316 = vunpack.c.l.b16 %v228
      %v317 = vunpack.c.l.b16 %v229
      %v318 = vunpack.c.l.b16 %v230
      %v319 = vunpack.c.l.b16 %v231
      %v320 = vunpack.c.l.b16 %v232
      %v321 = vunpack.c.l.b16 %v233
      %v322 = vunpack.c.l.b16 %v234
      %v323 = vunpack.c.l.b16 %v235
      %v324 = vunpack.c.l.b16 %v236
      %v325 = vpack.c.b16 %v294, %v293
      %v326 = vpack.c.b16 %v296, %v295
      %v327 = vpack.c.b16 %v298, %v297
      %v328 = vpack.c.b16 %v300, %v299
      %v329 = vpack.c.b16 %v302, %v301
      %v330 = vpack.c.b16 %v304, %v303
      %v331 = vpack.c.b16 %v306, %v305
      %v332 = vpack.c.b16 %v308, %v307
      %v333 = vpack.c.b16 %v310, %v309
      %v334 = vpack.c.b16 %v312, %v311
      %v335 = vpack.c.b16 %v314, %v313
      %v336 = vpack.c.b16 %v316, %v315
      %v337 = vpack.c.b16 %v318, %v317
      %v338 = vpack.c.b16 %v320, %v319
      %v339 = vpack.c.b16 %v322, %v321
      %v340 = vpack.c.b16 %v324, %v323
      %357 = vmatprep.subr.bf16.mxu0 0
      %358 = vmatpush1.bf16.msra.mxu0 %v332
      %359 = vmatprep.subr.bf16.mxu0 0
      %360 = vmatpush1.bf16.msra.mxu0 %v331
      %361 = vmatprep.subr.bf16.mxu0 0
      %362 = vmatpush1.bf16.msra.mxu0 %v330
      %363 = vmatprep.subr.bf16.mxu0 0
      %364 = vmatpush1.bf16.msra.mxu0 %v329
      %365 = vmatprep.subr.bf16.mxu0 0
      %366 = vmatpush1.bf16.msra.mxu0 %v328
      %367 = vmatprep.subr.bf16.mxu0 0
      %368 = vmatpush1.bf16.msra.mxu0 %v327
      %369 = vmatprep.subr.bf16.mxu0 0
      %370 = vmatpush1.bf16.msra.mxu0 %v326
      %371 = vmatprep.subr.bf16.mxu0 0
      %372 = vmatpush1.bf16.msra.mxu0 %v325
      %373 = vmatprep.subr.bf16.mxu0 0
      %374 = vmatpush2.bf16.msra.mxu0 %v340
      %375 = vmatprep.subr.bf16.mxu0 0
      %376 = vmatpush2.bf16.msra.mxu0 %v339
      %377 = vmatprep.subr.bf16.mxu0 0
      %378 = vmatpush2.bf16.msra.mxu0 %v338
      %379 = vmatprep.subr.bf16.mxu0 0
      %380 = vmatpush2.bf16.msra.mxu0 %v337
      %381 = vmatprep.subr.bf16.mxu0 0
      %382 = vmatpush2.bf16.msra.mxu0 %v336
      %383 = vmatprep.subr.bf16.mxu0 0
      %384 = vmatpush2.bf16.msra.mxu0 %v335
      %385 = vmatprep.subr.bf16.mxu0 0
      %386 = vmatpush2.bf16.msra.mxu0 %v334
      %387 = vmatprep.subr.bf16.mxu0 0
      %388 = vmatpush2.bf16.msra.mxu0 %v333
      %389 = vmatprep.mubr.bf16.mxu0 %v258
      %390 = vmatmul.mubr.bf16.gmra.mxu0 %v251
      %v391 = vpop.f32.mrf.mxu0
      %v392 = vadd.f32 0.0, %v391
      %v393 = vpop.f32.mrf.mxu0
      %v394 = vpop.f32.mrf.mxu0
      %v395 = vpop.f32.mrf.mxu0
      %396 = vdwg.mxu0
      %v397 = vpack.c.b16 %v239, %v239
      %v398 = vpack.c.b16 %v240, %v240
      %v433 = vunpack.c.l.b16 %v171
      %v434 = vunpack.c.l.b16 %v172
      %v435 = vunpack.c.l.b16 %v173
      %v436 = vunpack.c.l.b16 %v174
      %v437 = vunpack.c.l.b16 %v175
      %v438 = vunpack.c.l.b16 %v176
      %v439 = vunpack.c.l.b16 %v177
      %v440 = vunpack.c.l.b16 %v178
      %v441 = vunpack.c.l.b16 %v179
      %v442 = vunpack.c.l.b16 %v180
      %v443 = vunpack.c.l.b16 %v181
      %v444 = vunpack.c.l.b16 %v182
      %v445 = vunpack.c.l.b16 %v183
      %v446 = vunpack.c.l.b16 %v184
      %v447 = vunpack.c.l.b16 %v185
      %v448 = vunpack.c.l.b16 %v186
      %v449 = vunpack.c.l.b16 %v187
      %v450 = vunpack.c.l.b16 %v188
      %v451 = vunpack.c.l.b16 %v189
      %v452 = vunpack.c.l.b16 %v190
      %v453 = vunpack.c.l.b16 %v191
      %v454 = vunpack.c.l.b16 %v192
      %v455 = vunpack.c.l.b16 %v193
      %v456 = vunpack.c.l.b16 %v194
      %v457 = vunpack.c.l.b16 %v195
      %v458 = vunpack.c.l.b16 %v196
      %v459 = vunpack.c.l.b16 %v197
      %v460 = vunpack.c.l.b16 %v198
      %v461 = vunpack.c.l.b16 %v199
      %v462 = vunpack.c.l.b16 %v200
      %v463 = vunpack.c.l.b16 %v201
      %v464 = vunpack.c.l.b16 %v202
      %v465 = vpack.c.b16 %v434, %v433
      %v466 = vpack.c.b16 %v436, %v435
      %v467 = vpack.c.b16 %v438, %v437
      %v468 = vpack.c.b16 %v440, %v439
      %v469 = vpack.c.b16 %v442, %v441
      %v470 = vpack.c.b16 %v444, %v443
      %v471 = vpack.c.b16 %v446, %v445
      %v472 = vpack.c.b16 %v448, %v447
      %v473 = vpack.c.b16 %v450, %v449
      %v474 = vpack.c.b16 %v452, %v451
      %v475 = vpack.c.b16 %v454, %v453
      %v476 = vpack.c.b16 %v456, %v455
      %v477 = vpack.c.b16 %v458, %v457
      %v478 = vpack.c.b16 %v460, %v459
      %v479 = vpack.c.b16 %v462, %v461
      %v480 = vpack.c.b16 %v464, %v463
      %497 = vmatprep.subr.bf16.mxu0 0
      %498 = vmatpush1.bf16.msra.mxu0 %v472
      %499 = vmatprep.subr.bf16.mxu0 0
      %500 = vmatpush1.bf16.msra.mxu0 %v471
      %501 = vmatprep.subr.bf16.mxu0 0
      %502 = vmatpush1.bf16.msra.mxu0 %v470
      %503 = vmatprep.subr.bf16.mxu0 0
      %504 = vmatpush1.bf16.msra.mxu0 %v469
      %505 = vmatprep.subr.bf16.mxu0 0
      %506 = vmatpush1.bf16.msra.mxu0 %v468
      %507 = vmatprep.subr.bf16.mxu0 0
      %508 = vmatpush1.bf16.msra.mxu0 %v467
      %509 = vmatprep.subr.bf16.mxu0 0
      %510 = vmatpush1.bf16.msra.mxu0 %v466
      %511 = vmatprep.subr.bf16.mxu0 0
      %512 = vmatpush1.bf16.msra.mxu0 %v465
      %513 = vmatprep.subr.bf16.mxu0 0
      %514 = vmatpush2.bf16.msra.mxu0 %v480
      %515 = vmatprep.subr.bf16.mxu0 0
      %516 = vmatpush2.bf16.msra.mxu0 %v479
      %517 = vmatprep.subr.bf16.mxu0 0
      %518 = vmatpush2.bf16.msra.mxu0 %v478
      %519 = vmatprep.subr.bf16.mxu0 0
      %520 = vmatpush2.bf16.msra.mxu0 %v477
      %521 = vmatprep.subr.bf16.mxu0 0
      %522 = vmatpush2.bf16.msra.mxu0 %v476
      %523 = vmatprep.subr.bf16.mxu0 0
      %524 = vmatpush2.bf16.msra.mxu0 %v475
      %525 = vmatprep.subr.bf16.mxu0 0
      %526 = vmatpush2.bf16.msra.mxu0 %v474
      %527 = vmatprep.subr.bf16.mxu0 0
      %528 = vmatpush2.bf16.msra.mxu0 %v473
      %529 = vmatprep.mubr.bf16.mxu0 %v398
      %530 = vmatmul.mubr.bf16.gmra.mxu0 %v397
      %v531 = vpop.f32.mrf.mxu0
      %v532 = vadd.f32 %v392, %v531
      %v533 = vpop.f32.mrf.mxu0
      %v534 = vpop.f32.mrf.mxu0
      %v535 = vpop.f32.mrf.mxu0
      %536 = vdwg.mxu0
      %v537 = vld [vmem:[%s2] sm:$0x1]
      %v539 = vlaneseq
      %v540 = vshrl.u32 %v539, 7
      %v541 = vsub.s32 0, %v540
      %v542 = vrot.slane %v537, %v541
      %v544 = vadd.f32 %v532, %v542
      %v545 = vmax.f32 %v544, 0.0
      %v546 = vpack.c.bf16 %v545, %v545
      %547 = vst [vmem:[%s168] sm:$0xf] %v546
      %p548 = scmp.lt.s32.totalorder %s14, 1
      %s549 = scalar_select %p548, %s14, 1
      %s550 = smul.addr %s549, 4
      %s551 = scalar_lea.vmem %s3, %s550
      // Predicated region
      $region33: #{_lambda_.19} parent=31 // pred_check
        %p552 = pneg %p100
      $region34: #{_lambda_.19} parent=31 // pred_check_branch
        %554 = sbr.rel (%p552) target = $region36
      $region35: #{_lambda_.19} parent=31 // pred_region
        _
      $region36: #{_lambda_.19} parent=31 // pred_fallthru
        _
    $region32: #{_lambda_.19} parent=5 // pred_fallthru
      _
    %p555 = scmp.le.s32.totalorder 2, %s9
    // Predicated region
    $region37: #{_lambda_.19} parent=5 // pred_check
      %p556 = pneg %p555
    $region38: #{_lambda_.19} parent=5 // pred_check_branch
      %558 = sbr.rel (%p556) target = $region40
    $region39: #{_lambda_.19} parent=5 // pred_region
      %s559 = ssub.s32 %s9, 2
      // Predicated region
      $region41: #{_lambda_.19} parent=39 // pred_check
        %p560 = pneg %p106
      $region42: #{_lambda_.19} parent=39 // pred_check_branch
        %562 = sbr.rel (%p560) target = $region44
      $region43: #{_lambda_.19} parent=39 // pred_region
        %p563 = scmp.lt.s32.totalorder %s15, 1
        %s564 = scalar_select %p563, %s15, 1
        %s565 = smul.addr %s564, 4
        %s566 = scalar_lea.vmem %s3, %s565
      $region44: #{_lambda_.19} parent=39 // pred_fallthru
        _
    $region40: #{_lambda_.19} parent=5 // pred_fallthru
      _
  $region6: #{_lambda_.19} parent=0 // loop_footer
    %s13 = sadd.s32 1, %s9
  $region7: #{_lambda_.19} parent=0 // loop_footer_branch
    %8 = sbr.rel target = $region3
  $region8: #{_lambda_.19} parent=0 // loop_exit
    _

// kernel: _lambda_.20
$region0: #{_lambda_.20}
  #allocation0 [shape = 'u32[]', space=smem, size = 0x4, offset = 0x4, fixed_abs, tag = 'smem constant byte address 0x4 - core index']
  #allocation1 [shape = 'u32[144,128]{1,0:T(1,128)}', space=vmem, size = 0x12000, scoped, tag = 'internal scratch']
  %s0 = inlined_call_operand.vmem [shape: bf16[2,5,256], index: 0, kind: input, shape index: {}]
  %s1 = inlined_call_operand.vmem [shape: bf16[2,256,128], index: 1, kind: input, shape index: {}]
  %s2 = inlined_call_operand.vmem [shape: f32[1,128], index: 2, kind: input, shape index: {}]
  %s3 = inlined_call_operand.vmem [shape: bf16[2,4,128], index: 3, kind: output, shape index: {}]
  %s4 = sld [smem:[#allocation0]]
  $region45: #{_lambda_.20} parent=0
    _
  %s6 = ssub.s32 1, %s4
  %s7 = scalar_select 0, %s6, %s4
  loop: start=0, step=1, limit=4
  $region2: #{_lambda_.20} parent=0 // loop_pre_header
    _
  $region3: #{_lambda_.20} parent=0 // loop_header
    %s9 = sphi 0, %s13
    %p10 = scmp.ge.s32.totalorder %s9, 4
    %s19 = sphi 0, %s21
    %s22 = sphi 0, %s19
    %s23 = sphi 0, %s22
    %s39 = sphi 0, %s23
    %s43 = sphi 0, %s43
    %s45 = sphi 0, %s43
    %s46 = sphi 0, %s45
    %s60 = sphi 0, %s46
    %s64 = sphi 0, %s64
    %s66 = sphi 0, %s64
    %s67 = sphi 0, %s66
    %s81 = sphi 0, %s67
    %s87 = sphi 0, %s89
    %s90 = sphi 0, %s87
    %s91 = sphi 0, %s90
    %s107 = sphi 0, %s91
  $region4: #{_lambda_.20} parent=0 // loop_header_branch
    %12 = sbr.rel (%p10) target = $region8
  $region5: #{_lambda_.20} parent=0 // loop_body
    %s14 = ssub.s32 %s9, 1
    %s15 = ssub.s32 %s9, 2
    %s16 = sadd.s32 %s9, 1
    %s17 = ssub.s32 %s9, %s16
    %p18 = scmp.eq.s32.totalorder %s17, 0
    %s20 = sadd.s32 %s19, 1
    %s21 = scalar_select %p18, %s19, %s20
    %p24 = pneg %p18
    %p25 = scmp.eq.s32.totalorder %s9, 1
    %p26 = por %p24, %p25
    %p27 = scmp.ne.s32.totalorder %s19, %s22
    %p28 = scmp.eq.s32.totalorder %s9, 0
    %p29 = por %p27, %p28
    %p30 = scmp.ne.s32.totalorder %s19, %s22
    %p31 = scmp.eq.s32.totalorder %s14, 1
    %p32 = por %p30, %p31
    %p33 = scmp.ne.s32.totalorder %s22, %s23
    %p34 = scmp.eq.s32.totalorder %s14, 0
    %p35 = por %p33, %p34
    %p36 = scmp.ne.s32.totalorder %s22, %s23
    %p37 = scmp.eq.s32.totalorder %s15, 1
    %p38 = por %p36, %p37
    %p40 = scmp.ne.s32.totalorder %s23, %s39
    %p41 = scmp.eq.s32.totalorder %s15, 0
    %p42 = por %p40, %p41
    %s44 = sadd.s32 %s43, 1
    %p47 = scmp.eq.s32.totalorder %s9, 1
    %p48 = scmp.ne.s32.totalorder %s43, %s45
    %p49 = scmp.eq.s32.totalorder %s9, 0
    %p50 = por %p48, %p49
    %p51 = scmp.ne.s32.totalorder %s43, %s45
    %p52 = scmp.eq.s32.totalorder %s14, 1
    %p53 = por %p51, %p52
    %p54 = scmp.ne.s32.totalorder %s45, %s46
    %p55 = scmp.eq.s32.totalorder %s14, 0
    %p56 = por %p54, %p55
    %p57 = scmp.ne.s32.totalorder %s45, %s46
    %p58 = scmp.eq.s32.totalorder %s15, 1
    %p59 = por %p57, %p58
    %p61 = scmp.ne.s32.totalorder %s46, %s60
    %p62 = scmp.eq.s32.totalorder %s15, 0
    %p63 = por %p61, %p62
    %s65 = sadd.s32 %s64, 1
    %p68 = scmp.eq.s32.totalorder %s9, 1
    %p69 = scmp.ne.s32.totalorder %s64, %s66
    %p70 = scmp.eq.s32.totalorder %s9, 0
    %p71 = por %p69, %p70
    %p72 = scmp.ne.s32.totalorder %s64, %s66
    %p73 = scmp.eq.s32.totalorder %s14, 1
    %p74 = por %p72, %p73
    %p75 = scmp.ne.s32.totalorder %s66, %s67
    %p76 = scmp.eq.s32.totalorder %s14, 0
    %p77 = por %p75, %p76
    %p78 = scmp.ne.s32.totalorder %s66, %s67
    %p79 = scmp.eq.s32.totalorder %s15, 1
    %p80 = por %p78, %p79
    %p82 = scmp.ne.s32.totalorder %s67, %s81
    %p83 = scmp.eq.s32.totalorder %s15, 0
    %p84 = por %p82, %p83
    %s85 = ssub.s32 %s9, %s16
    %p86 = scmp.eq.s32.totalorder %s85, 0
    %s88 = sadd.s32 %s87, 1
    %s89 = scalar_select %p86, %s87, %s88
    %p92 = pneg %p86
    %p93 = scmp.eq.s32.totalorder %s9, 1
    %p94 = por %p92, %p93
    %p95 = scmp.ne.s32.totalorder %s87, %s90
    %p96 = scmp.eq.s32.totalorder %s9, 0
    %p97 = por %p95, %p96
    %p98 = scmp.ne.s32.totalorder %s87, %s90
    %p99 = scmp.eq.s32.totalorder %s14, 1
    %p100 = por %p98, %p99
    %p101 = scmp.ne.s32.totalorder %s90, %s91
    %p102 = scmp.eq.s32.totalorder %s14, 0
    %p103 = por %p101, %p102
    %p104 = scmp.ne.s32.totalorder %s90, %s91
    %p105 = scmp.eq.s32.totalorder %s15, 1
    %p106 = por %p104, %p105
    %p108 = scmp.ne.s32.totalorder %s91, %s107
    %p109 = scmp.eq.s32.totalorder %s15, 0
    %p110 = por %p108, %p109
    %p111 = scmp.le.s32.totalorder 1, %s9
    %p112 = scmp.lt.s32.totalorder %s9, 3
    %p113 = pnand %p111, %p112
    %p114 = pneg %p113
    // Predicated region
    $region9: #{_lambda_.20} parent=5 // pred_check
      _
    $region10: #{_lambda_.20} parent=5 // pred_check_branch
      %116 = sbr.rel (%p113) target = $region12
    $region11: #{_lambda_.20} parent=5 // pred_region
      %s117 = ssub.s32 %s9, 1
      // Predicated region
      $region13: #{_lambda_.20} parent=11 // pred_check
        %p118 = pneg %p56
      $region14: #{_lambda_.20} parent=11 // pred_check_branch
        %120 = sbr.rel (%p118) target = $region16
      $region15: #{_lambda_.20} parent=11 // pred_region
        _
      $region16: #{_lambda_.20} parent=11 // pred_fallthru
        _
      // Predicated region
      $region17: #{_lambda_.20} parent=11 // pred_check
        %p121 = pneg %p77
      $region18: #{_lambda_.20} parent=11 // pred_check_branch
        %123 = sbr.rel (%p121) target = $region20
      $region19: #{_lambda_.20} parent=11 // pred_region
        _
      $region20: #{_lambda_.20} parent=11 // pred_fallthru
        _
    $region12: #{_lambda_.20} parent=5 // pred_fallthru
      _
    %p124 = scmp.lt.s32.totalorder %s9, 2
    // Predicated region
    $region21: #{_lambda_.20} parent=5 // pred_check
      %p125 = pneg %p124
    $region22: #{_lambda_.20} parent=5 // pred_check_branch
      %127 = sbr.rel (%p125) target = $region24
    $region23: #{_lambda_.20} parent=5 // pred_region
      // Predicated region
      $region25: #{_lambda_.20} parent=23 // pred_check
        %p128 = pneg %p29
      $region26: #{_lambda_.20} parent=23 // pred_check_branch
        %130 = sbr.rel (%p128) target = $region28
      $region27: #{_lambda_.20} parent=23 // pred_region
        %p131 = scmp.lt.s32.totalorder %s9, 1
        %s132 = scalar_select %p131, %s9, 1
        %s133 = smul.addr %s132, 2
        %s134 = smul.addr %s133, 4
        %s135 = scalar_lea.vmem %s0, %s134
      $region28: #{_lambda_.20} parent=23 // pred_fallthru
        _
    $region24: #{_lambda_.20} parent=5 // pred_fallthru
      _
    %p136 = scmp.le.s32.totalorder 1, %s9
    %p137 = scmp.lt.s32.totalorder %s9, 3
    %p138 = pnand %p136, %p137
    %p139 = pneg %p138
    // Predicated region
    $region29: #{_lambda_.20} parent=5 // pred_check
      _
    $region30: #{_lambda_.20} parent=5 // pred_check_branch
      %141 = sbr.rel (%p138) target = $region32
    $region31: #{_lambda_.20} parent=5 // pred_region
      %s142 = ssub.s32 %s9, 1
      %p143 = scmp.lt.s32.totalorder %s14, 1
      %s144 = scalar_select %p143, %s14, 1
      %s145 = smul.addr %s144, 2
      %s146 = smul.addr %s145, 4
      %s147 = scalar_lea.vmem %s0, %s146
      %p148 = pneg %p35
      %p149 = pneg %p32
      %p150 = pneg %p56
      %p151 = pneg %p53
      %p152 = pneg %p77
      %p153 = pneg %p74
      %p154 = pneg %p103
      %p155 = pneg %p100
      %p156 = scmp.lt.s32.totalorder %s14, 1
      %s157 = scalar_select %p156, %s14, 1
      %s158 = smul.addr %s157, 2
      %s159 = scalar_lea.vmem %s3, %s158
      %p160 = scmp.lt.s32.totalorder %s14, 1
      %s161 = scalar_select %p160, %s14, 1
      %s162 = smul.addr %s161, 2
      %s163 = smul.addr %s162, 4
      %s164 = scalar_lea.vmem %s0, %s163
      %p165 = scmp.lt.s32.totalorder %s14, 1
      %s166 = scalar_select %p165, %s14, 1
      %s167 = smul.addr %s166, 2
      %s168 = scalar_lea.vmem %s3, %s167
      %v170 = vld [vmem:[%s164] sm:$0x33]
      %v171 = vld [vmem:[%s1] sm:$0xf]
      %v172 = vld [vmem:[%s1 + $0x4] sm:$0xf]
      %v173 = vld [vmem:[%s1 + $0x8] sm:$0xf]
      %v174 = vld [vmem:[%s1 + $0xc] sm:$0xf]
      %v175 = vld [vmem:[%s1 + $0x10] sm:$0xf]
      %v176 = vld [vmem:[%s1 + $0x14] sm:$0xf]
      %v177 = vld [vmem:[%s1 + $0x18] sm:$0xf]
      %v178 = vld [vmem:[%s1 + $0x1c] sm:$0xf]
      %v179 = vld [vmem:[%s1 + $0x20] sm:$0xf]
      %v180 = vld [vmem:[%s1 + $0x24] sm:$0xf]
      %v181 = vld [vmem:[%s1 + $0x28] sm:$0xf]
      %v182 = vld [vmem:[%s1 + $0x2c] sm:$0xf]
      %v183 = vld [vmem:[%s1 + $0x30] sm:$0xf]
      %v184 = vld [vmem:[%s1 + $0x34] sm:$0xf]
      %v185 = vld [vmem:[%s1 + $0x38] sm:$0xf]
      %v186 = vld [vmem:[%s1 + $0x3c] sm:$0xf]
      %v187 = vld [vmem:[%s1 + $0x40] sm:$0xf]
      %v188 = vld [vmem:[%s1 + $0x44] sm:$0xf]
      %v189 = vld [vmem:[%s1 + $0x48] sm:$0xf]
      %v190 = vld [vmem:[%s1 + $0x4c] sm:$0xf]
      %v191 = vld [vmem:[%s1 + $0x50] sm:$0xf]
      %v192 = vld [vmem:[%s1 + $0x54] sm:$0xf]
      %v193 = vld [vmem:[%s1 + $0x58] sm:$0xf]
      %v194 = vld [vmem:[%s1 + $0x5c] sm:$0xf]
      %v195 = vld [vmem:[%s1 + $0x60] sm:$0xf]
      %v196 = vld [vmem:[%s1 + $0x64] sm:$0xf]
      %v197 = vld [vmem:[%s1 + $0x68] sm:$0xf]
      %v198 = vld [vmem:[%s1 + $0x6c] sm:$0xf]
      %v199 = vld [vmem:[%s1 + $0x70] sm:$0xf]
      %v200 = vld [vmem:[%s1 + $0x74] sm:$0xf]
      %v201 = vld [vmem:[%s1 + $0x78] sm:$0xf]
      %v202 = vld [vmem:[%s1 + $0x7c] sm:$0xf]
      %v203 = vld [vmem:[%s164] sm:$0x77]
      %s204 = scalar_lea.vmem %s1, 128
      %v205 = vld [vmem:[%s204] sm:$0xf]
      %v206 = vld [vmem:[%s204 + $0x4] sm:$0xf]
      %v207 = vld [vmem:[%s204 + $0x8] sm:$0xf]
      %v208 = vld [vmem:[%s204 + $0xc] sm:$0xf]
      %v209 = vld [vmem:[%s204 + $0x10] sm:$0xf]
      %v210 = vld [vmem:[%s204 + $0x14] sm:$0xf]
      %v211 = vld [vmem:[%s204 + $0x18] sm:$0xf]
      %v212 = vld [vmem:[%s204 + $0x1c] sm:$0xf]
      %v213 = vld [vmem:[%s204 + $0x20] sm:$0xf]
      %v214 = vld [vmem:[%s204 + $0x24] sm:$0xf]
      %v215 = vld [vmem:[%s204 + $0x28] sm:$0xf]
      %v216 = vld [vmem:[%s204 + $0x2c] sm:$0xf]
      %v217 = vld [vmem:[%s204 + $0x30] sm:$0xf]
      %v218 = vld [vmem:[%s204 + $0x34] sm:$0xf]
      %v219 = vld [vmem:[%s204 + $0x38] sm:$0xf]
      %v220 = vld [vmem:[%s204 + $0x3c] sm:$0xf]
      %v221 = vld [vmem:[%s204 + $0x40] sm:$0xf]
      %v222 = vld [vmem:[%s204 + $0x44] sm:$0xf]
      %v223 = vld [vmem:[%s204 + $0x48] sm:$0xf]
      %v224 = vld [vmem:[%s204 + $0x4c] sm:$0xf]
      %v225 = vld [vmem:[%s204 + $0x50] sm:$0xf]
      %v226 = vld [vmem:[%s204 + $0x54] sm:$0xf]
      %v227 = vld [vmem:[%s204 + $0x58] sm:$0xf]
      %v228 = vld [vmem:[%s204 + $0x5c] sm:$0xf]
      %v229 = vld [vmem:[%s204 + $0x60] sm:$0xf]
      %v230 = vld [vmem:[%s204 + $0x64] sm:$0xf]
      %v231 = vld [vmem:[%s204 + $0x68] sm:$0xf]
      %v232 = vld [vmem:[%s204 + $0x6c] sm:$0xf]
      %v233 = vld [vmem:[%s204 + $0x70] sm:$0xf]
      %v234 = vld [vmem:[%s204 + $0x74] sm:$0xf]
      %v235 = vld [vmem:[%s204 + $0x78] sm:$0xf]
      %v236 = vld [vmem:[%s204 + $0x7c] sm:$0xf]
      %v238 = vunpack.c.l.b16 %v203
      %v239 = vunpack.c.h.b16 %v203
      %v240 = vpack.c.b16 %v238, %v238
      %v241 = vpack.c.b16 %v239, %v239
      %v243 = vshrl.u32 %v240, 16
      %v245 = vshll.u32 %v240, 16
      %v247 = vrot.slane %v245, 1
      %v248 = vor.u32 %v243, %v247
      %v250 = vshrl.u32 %v241, 16
      %v252 = vshll.u32 %v241, 16
      %v254 = vrot.slane %v252, 1
      %v255 = vor.u32 %v250, %v254
      %v290 = vunpack.c.l.b16 %v205
      %v291 = vunpack.c.l.b16 %v206
      %v292 = vunpack.c.l.b16 %v207
      %v293 = vunpack.c.l.b16 %v208
      %v294 = vunpack.c.l.b16 %v209
      %v295 = vunpack.c.l.b16 %v210
      %v296 = vunpack.c.l.b16 %v211
      %v297 = vunpack.c.l.b16 %v212
      %v298 = vunpack.c.l.b16 %v213
      %v299 = vunpack.c.l.b16 %v214
      %v300 = vunpack.c.l.b16 %v215
      %v301 = vunpack.c.l.b16 %v216
      %v302 = vunpack.c.l.b16 %v217
      %v303 = vunpack.c.l.b16 %v218
      %v304 = vunpack.c.l.b16 %v219
      %v305 = vunpack.c.l.b16 %v220
      %v306 = vunpack.c.l.b16 %v221
      %v307 = vunpack.c.l.b16 %v222
      %v308 = vunpack.c.l.b16 %v223
      %v309 = vunpack.c.l.b16 %v224
      %v310 = vunpack.c.l.b16 %v225
      %v311 = vunpack.c.l.b16 %v226
      %v312 = vunpack.c.l.b16 %v227
      %v313 = vunpack.c.l.b16 %v228
      %v314 = vunpack.c.l.b16 %v229
      %v315 = vunpack.c.l.b16 %v230
      %v316 = vunpack.c.l.b16 %v231
      %v317 = vunpack.c.l.b16 %v232
      %v318 = vunpack.c.l.b16 %v233
      %v319 = vunpack.c.l.b16 %v234
      %v320 = vunpack.c.l.b16 %v235
      %v321 = vunpack.c.l.b16 %v236
      %v322 = vpack.c.b16 %v291, %v290
      %v323 = vpack.c.b16 %v293, %v292
      %v324 = vpack.c.b16 %v295, %v294
      %v325 = vpack.c.b16 %v297, %v296
      %v326 = vpack.c.b16 %v299, %v298
      %v327 = vpack.c.b16 %v301, %v300
      %v328 = vpack.c.b16 %v303, %v302
      %v329 = vpack.c.b16 %v305, %v304
      %v330 = vpack.c.b16 %v307, %v306
      %v331 = vpack.c.b16 %v309, %v308
      %v332 = vpack.c.b16 %v311, %v310
      %v333 = vpack.c.b16 %v313, %v312
      %v334 = vpack.c.b16 %v315, %v314
      %v335 = vpack.c.b16 %v317, %v316
      %v336 = vpack.c.b16 %v319, %v318
      %v337 = vpack.c.b16 %v321, %v320
      %354 = vmatprep.subr.bf16.mxu0 0
      %355 = vmatpush1.bf16.msra.mxu0 %v329
      %356 = vmatprep.subr.bf16.mxu0 0
      %357 = vmatpush1.bf16.msra.mxu0 %v328
      %358 = vmatprep.subr.bf16.mxu0 0
      %359 = vmatpush1.bf16.msra.mxu0 %v327
      %360 = vmatprep.subr.bf16.mxu0 0
      %361 = vmatpush1.bf16.msra.mxu0 %v326
      %362 = vmatprep.subr.bf16.mxu0 0
      %363 = vmatpush1.bf16.msra.mxu0 %v325
      %364 = vmatprep.subr.bf16.mxu0 0
      %365 = vmatpush1.bf16.msra.mxu0 %v324
      %366 = vmatprep.subr.bf16.mxu0 0
      %367 = vmatpush1.bf16.msra.mxu0 %v323
      %368 = vmatprep.subr.bf16.mxu0 0
      %369 = vmatpush1.bf16.msra.mxu0 %v322
      %370 = vmatprep.subr.bf16.mxu0 0
      %371 = vmatpush2.bf16.msra.mxu0 %v337
      %372 = vmatprep.subr.bf16.mxu0 0
      %373 = vmatpush2.bf16.msra.mxu0 %v336
      %374 = vmatprep.subr.bf16.mxu0 0
      %375 = vmatpush2.bf16.msra.mxu0 %v335
      %376 = vmatprep.subr.bf16.mxu0 0
      %377 = vmatpush2.bf16.msra.mxu0 %v334
      %378 = vmatprep.subr.bf16.mxu0 0
      %379 = vmatpush2.bf16.msra.mxu0 %v333
      %380 = vmatprep.subr.bf16.mxu0 0
      %381 = vmatpush2.bf16.msra.mxu0 %v332
      %382 = vmatprep.subr.bf16.mxu0 0
      %383 = vmatpush2.bf16.msra.mxu0 %v331
      %384 = vmatprep.subr.bf16.mxu0 0
      %385 = vmatpush2.bf16.msra.mxu0 %v330
      %386 = vmatprep.mubr.bf16.mxu0 %v255
      %387 = vmatmul.mubr.bf16.gmra.mxu0 %v248
      %v388 = vpop.f32.mrf.mxu0
      %v389 = vadd.f32 0.0, %v388
      %v390 = vpop.f32.mrf.mxu0
      %v391 = vpop.f32.mrf.mxu0
      %v392 = vpop.f32.mrf.mxu0
      %393 = vdwg.mxu0
      %v395 = vunpack.c.l.b16 %v170
      %v396 = vunpack.c.h.b16 %v170
      %v397 = vpack.c.b16 %v395, %v395
      %v398 = vpack.c.b16 %v396, %v396
      %v433 = vunpack.c.l.b16 %v171
      %v434 = vunpack.c.l.b16 %v172
      %v435 = vunpack.c.l.b16 %v173
      %v436 = vunpack.c.l.b16 %v174
      %v437 = vunpack.c.l.b16 %v175
      %v438 = vunpack.c.l.b16 %v176
      %v439 = vunpack.c.l.b16 %v177
      %v440 = vunpack.c.l.b16 %v178
      %v441 = vunpack.c.l.b16 %v179
      %v442 = vunpack.c.l.b16 %v180
      %v443 = vunpack.c.l.b16 %v181
      %v444 = vunpack.c.l.b16 %v182
      %v445 = vunpack.c.l.b16 %v183
      %v446 = vunpack.c.l.b16 %v184
      %v447 = vunpack.c.l.b16 %v185
      %v448 = vunpack.c.l.b16 %v186
      %v449 = vunpack.c.l.b16 %v187
      %v450 = vunpack.c.l.b16 %v188
      %v451 = vunpack.c.l.b16 %v189
      %v452 = vunpack.c.l.b16 %v190
      %v453 = vunpack.c.l.b16 %v191
      %v454 = vunpack.c.l.b16 %v192
      %v455 = vunpack.c.l.b16 %v193
      %v456 = vunpack.c.l.b16 %v194
      %v457 = vunpack.c.l.b16 %v195
      %v458 = vunpack.c.l.b16 %v196
      %v459 = vunpack.c.l.b16 %v197
      %v460 = vunpack.c.l.b16 %v198
      %v461 = vunpack.c.l.b16 %v199
      %v462 = vunpack.c.l.b16 %v200
      %v463 = vunpack.c.l.b16 %v201
      %v464 = vunpack.c.l.b16 %v202
      %v465 = vpack.c.b16 %v434, %v433
      %v466 = vpack.c.b16 %v436, %v435
      %v467 = vpack.c.b16 %v438, %v437
      %v468 = vpack.c.b16 %v440, %v439
      %v469 = vpack.c.b16 %v442, %v441
      %v470 = vpack.c.b16 %v444, %v443
      %v471 = vpack.c.b16 %v446, %v445
      %v472 = vpack.c.b16 %v448, %v447
      %v473 = vpack.c.b16 %v450, %v449
      %v474 = vpack.c.b16 %v452, %v451
      %v475 = vpack.c.b16 %v454, %v453
      %v476 = vpack.c.b16 %v456, %v455
      %v477 = vpack.c.b16 %v458, %v457
      %v478 = vpack.c.b16 %v460, %v459
      %v479 = vpack.c.b16 %v462, %v461
      %v480 = vpack.c.b16 %v464, %v463
      %497 = vmatprep.subr.bf16.mxu0 0
      %498 = vmatpush1.bf16.msra.mxu0 %v472
      %499 = vmatprep.subr.bf16.mxu0 0
      %500 = vmatpush1.bf16.msra.mxu0 %v471
      %501 = vmatprep.subr.bf16.mxu0 0
      %502 = vmatpush1.bf16.msra.mxu0 %v470
      %503 = vmatprep.subr.bf16.mxu0 0
      %504 = vmatpush1.bf16.msra.mxu0 %v469
      %505 = vmatprep.subr.bf16.mxu0 0
      %506 = vmatpush1.bf16.msra.mxu0 %v468
      %507 = vmatprep.subr.bf16.mxu0 0
      %508 = vmatpush1.bf16.msra.mxu0 %v467
      %509 = vmatprep.subr.bf16.mxu0 0
      %510 = vmatpush1.bf16.msra.mxu0 %v466
      %511 = vmatprep.subr.bf16.mxu0 0
      %512 = vmatpush1.bf16.msra.mxu0 %v465
      %513 = vmatprep.subr.bf16.mxu0 0
      %514 = vmatpush2.bf16.msra.mxu0 %v480
      %515 = vmatprep.subr.bf16.mxu0 0
      %516 = vmatpush2.bf16.msra.mxu0 %v479
      %517 = vmatprep.subr.bf16.mxu0 0
      %518 = vmatpush2.bf16.msra.mxu0 %v478
      %519 = vmatprep.subr.bf16.mxu0 0
      %520 = vmatpush2.bf16.msra.mxu0 %v477
      %521 = vmatprep.subr.bf16.mxu0 0
      %522 = vmatpush2.bf16.msra.mxu0 %v476
      %523 = vmatprep.subr.bf16.mxu0 0
      %524 = vmatpush2.bf16.msra.mxu0 %v475
      %525 = vmatprep.subr.bf16.mxu0 0
      %526 = vmatpush2.bf16.msra.mxu0 %v474
      %527 = vmatprep.subr.bf16.mxu0 0
      %528 = vmatpush2.bf16.msra.mxu0 %v473
      %529 = vmatprep.mubr.bf16.mxu0 %v398
      %530 = vmatmul.mubr.bf16.gmra.mxu0 %v397
      %v531 = vpop.f32.mrf.mxu0
      %v532 = vadd.f32 %v389, %v531
      %v533 = vpop.f32.mrf.mxu0
      %v534 = vpop.f32.mrf.mxu0
      %v535 = vpop.f32.mrf.mxu0
      %536 = vdwg.mxu0
      %v537 = vld [vmem:[%s2] sm:$0x1]
      %v539 = vlaneseq
      %v540 = vshrl.u32 %v539, 7
      %v541 = vsub.s32 0, %v540
      %v542 = vrot.slane %v537, %v541
      %v544 = vadd.f32 %v532, %v542
      %v545 = vmax.f32 %v544, 0.0
      %v546 = vpack.c.bf16 %v545, %v545
      %547 = vst [vmem:[%s168] sm:$0x3] %v546
      %p548 = scmp.lt.s32.totalorder %s14, 1
      %s549 = scalar_select %p548, %s14, 1
      %s550 = smul.addr %s549, 2
      %s551 = scalar_lea.vmem %s3, %s550
      // Predicated region
      $region33: #{_lambda_.20} parent=31 // pred_check
        %p552 = pneg %p100
      $region34: #{_lambda_.20} parent=31 // pred_check_branch
        %554 = sbr.rel (%p552) target = $region36
      $region35: #{_lambda_.20} parent=31 // pred_region
        _
      $region36: #{_lambda_.20} parent=31 // pred_fallthru
        _
    $region32: #{_lambda_.20} parent=5 // pred_fallthru
      _
    %p555 = scmp.le.s32.totalorder 2, %s9
    // Predicated region
    $region37: #{_lambda_.20} parent=5 // pred_check
      %p556 = pneg %p555
    $region38: #{_lambda_.20} parent=5 // pred_check_branch
      %558 = sbr.rel (%p556) target = $region40
    $region39: #{_lambda_.20} parent=5 // pred_region
      %s559 = ssub.s32 %s9, 2
      // Predicated region
      $region41: #{_lambda_.20} parent=39 // pred_check
        %p560 = pneg %p106
      $region42: #{_lambda_.20} parent=39 // pred_check_branch
        %562 = sbr.rel (%p560) target = $region44
      $region43: #{_lambda_.20} parent=39 // pred_region
        %p563 = scmp.lt.s32.totalorder %s15, 1
        %s564 = scalar_select %p563, %s15, 1
        %s565 = smul.addr %s564, 2
        %s566 = scalar_lea.vmem %s3, %s565
      $region44: #{_lambda_.20} parent=39 // pred_fallthru
        _
    $region40: #{_lambda_.20} parent=5 // pred_fallthru
      _
  $region6: #{_lambda_.20} parent=0 // loop_footer
    %s13 = sadd.s32 1, %s9
  $region7: #{_lambda_.20} parent=0 // loop_footer_branch
    %8 = sbr.rel target = $region3
  $region8: #{_lambda_.20} parent=0 // loop_exit
    _

// kernel: _lambda_.21
$region0: #{_lambda_.21}
  #allocation0 [shape = 'u32[]', space=smem, size = 0x4, offset = 0x4, fixed_abs, tag = 'smem constant byte address 0x4 - core index']
  #allocation1 [shape = 'u32[144,128]{1,0:T(1,128)}', space=vmem, size = 0x12000, scoped, tag = 'internal scratch']
  %s0 = inlined_call_operand.vmem [shape: bf16[2,6,128], index: 0, kind: input, shape index: {}]
  %s1 = inlined_call_operand.vmem [shape: bf16[3,128,128], index: 1, kind: input, shape index: {}]
  %s2 = inlined_call_operand.vmem [shape: f32[1,128], index: 2, kind: input, shape index: {}]
  %s3 = inlined_call_operand.vmem [shape: f32[2,4,128], index: 3, kind: output, shape index: {}]
  %s4 = sld [smem:[#allocation0]]
  $region45: #{_lambda_.21} parent=0
    _
  %s6 = ssub.s32 1, %s4
  %s7 = scalar_select 0, %s6, %s4
  loop: start=0, step=1, limit=4
  $region2: #{_lambda_.21} parent=0 // loop_pre_header
    _
  $region3: #{_lambda_.21} parent=0 // loop_header
    %s9 = sphi 0, %s13
    %p10 = scmp.ge.s32.totalorder %s9, 4
    %s19 = sphi 0, %s21
    %s22 = sphi 0, %s19
    %s23 = sphi 0, %s22
    %s39 = sphi 0, %s23
    %s43 = sphi 0, %s43
    %s45 = sphi 0, %s43
    %s46 = sphi 0, %s45
    %s60 = sphi 0, %s46
    %s64 = sphi 0, %s64
    %s66 = sphi 0, %s64
    %s67 = sphi 0, %s66
    %s81 = sphi 0, %s67
    %s87 = sphi 0, %s89
    %s90 = sphi 0, %s87
    %s91 = sphi 0, %s90
    %s107 = sphi 0, %s91
  $region4: #{_lambda_.21} parent=0 // loop_header_branch
    %12 = sbr.rel (%p10) target = $region8
  $region5: #{_lambda_.21} parent=0 // loop_body
    %s14 = ssub.s32 %s9, 1
    %s15 = ssub.s32 %s9, 2
    %s16 = sadd.s32 %s9, 1
    %s17 = ssub.s32 %s9, %s16
    %p18 = scmp.eq.s32.totalorder %s17, 0
    %s20 = sadd.s32 %s19, 1
    %s21 = scalar_select %p18, %s19, %s20
    %p24 = pneg %p18
    %p25 = scmp.eq.s32.totalorder %s9, 1
    %p26 = por %p24, %p25
    %p27 = scmp.ne.s32.totalorder %s19, %s22
    %p28 = scmp.eq.s32.totalorder %s9, 0
    %p29 = por %p27, %p28
    %p30 = scmp.ne.s32.totalorder %s19, %s22
    %p31 = scmp.eq.s32.totalorder %s14, 1
    %p32 = por %p30, %p31
    %p33 = scmp.ne.s32.totalorder %s22, %s23
    %p34 = scmp.eq.s32.totalorder %s14, 0
    %p35 = por %p33, %p34
    %p36 = scmp.ne.s32.totalorder %s22, %s23
    %p37 = scmp.eq.s32.totalorder %s15, 1
    %p38 = por %p36, %p37
    %p40 = scmp.ne.s32.totalorder %s23, %s39
    %p41 = scmp.eq.s32.totalorder %s15, 0
    %p42 = por %p40, %p41
    %s44 = sadd.s32 %s43, 1
    %p47 = scmp.eq.s32.totalorder %s9, 1
    %p48 = scmp.ne.s32.totalorder %s43, %s45
    %p49 = scmp.eq.s32.totalorder %s9, 0
    %p50 = por %p48, %p49
    %p51 = scmp.ne.s32.totalorder %s43, %s45
    %p52 = scmp.eq.s32.totalorder %s14, 1
    %p53 = por %p51, %p52
    %p54 = scmp.ne.s32.totalorder %s45, %s46
    %p55 = scmp.eq.s32.totalorder %s14, 0
    %p56 = por %p54, %p55
    %p57 = scmp.ne.s32.totalorder %s45, %s46
    %p58 = scmp.eq.s32.totalorder %s15, 1
    %p59 = por %p57, %p58
    %p61 = scmp.ne.s32.totalorder %s46, %s60
    %p62 = scmp.eq.s32.totalorder %s15, 0
    %p63 = por %p61, %p62
    %s65 = sadd.s32 %s64, 1
    %p68 = scmp.eq.s32.totalorder %s9, 1
    %p69 = scmp.ne.s32.totalorder %s64, %s66
    %p70 = scmp.eq.s32.totalorder %s9, 0
    %p71 = por %p69, %p70
    %p72 = scmp.ne.s32.totalorder %s64, %s66
    %p73 = scmp.eq.s32.totalorder %s14, 1
    %p74 = por %p72, %p73
    %p75 = scmp.ne.s32.totalorder %s66, %s67
    %p76 = scmp.eq.s32.totalorder %s14, 0
    %p77 = por %p75, %p76
    %p78 = scmp.ne.s32.totalorder %s66, %s67
    %p79 = scmp.eq.s32.totalorder %s15, 1
    %p80 = por %p78, %p79
    %p82 = scmp.ne.s32.totalorder %s67, %s81
    %p83 = scmp.eq.s32.totalorder %s15, 0
    %p84 = por %p82, %p83
    %s85 = ssub.s32 %s9, %s16
    %p86 = scmp.eq.s32.totalorder %s85, 0
    %s88 = sadd.s32 %s87, 1
    %s89 = scalar_select %p86, %s87, %s88
    %p92 = pneg %p86
    %p93 = scmp.eq.s32.totalorder %s9, 1
    %p94 = por %p92, %p93
    %p95 = scmp.ne.s32.totalorder %s87, %s90
    %p96 = scmp.eq.s32.totalorder %s9, 0
    %p97 = por %p95, %p96
    %p98 = scmp.ne.s32.totalorder %s87, %s90
    %p99 = scmp.eq.s32.totalorder %s14, 1
    %p100 = por %p98, %p99
    %p101 = scmp.ne.s32.totalorder %s90, %s91
    %p102 = scmp.eq.s32.totalorder %s14, 0
    %p103 = por %p101, %p102
    %p104 = scmp.ne.s32.totalorder %s90, %s91
    %p105 = scmp.eq.s32.totalorder %s15, 1
    %p106 = por %p104, %p105
    %p108 = scmp.ne.s32.totalorder %s91, %s107
    %p109 = scmp.eq.s32.totalorder %s15, 0
    %p110 = por %p108, %p109
    %p111 = scmp.le.s32.totalorder 1, %s9
    %p112 = scmp.lt.s32.totalorder %s9, 3
    %p113 = pnand %p111, %p112
    %p114 = pneg %p113
    // Predicated region
    $region9: #{_lambda_.21} parent=5 // pred_check
      _
    $region10: #{_lambda_.21} parent=5 // pred_check_branch
      %116 = sbr.rel (%p113) target = $region12
    $region11: #{_lambda_.21} parent=5 // pred_region
      %s117 = ssub.s32 %s9, 1
      // Predicated region
      $region13: #{_lambda_.21} parent=11 // pred_check
        %p118 = pneg %p56
      $region14: #{_lambda_.21} parent=11 // pred_check_branch
        %120 = sbr.rel (%p118) target = $region16
      $region15: #{_lambda_.21} parent=11 // pred_region
        _
      $region16: #{_lambda_.21} parent=11 // pred_fallthru
        _
      // Predicated region
      $region17: #{_lambda_.21} parent=11 // pred_check
        %p121 = pneg %p77
      $region18: #{_lambda_.21} parent=11 // pred_check_branch
        %123 = sbr.rel (%p121) target = $region20
      $region19: #{_lambda_.21} parent=11 // pred_region
        _
      $region20: #{_lambda_.21} parent=11 // pred_fallthru
        _
    $region12: #{_lambda_.21} parent=5 // pred_fallthru
      _
    %p124 = scmp.lt.s32.totalorder %s9, 2
    // Predicated region
    $region21: #{_lambda_.21} parent=5 // pred_check
      %p125 = pneg %p124
    $region22: #{_lambda_.21} parent=5 // pred_check_branch
      %127 = sbr.rel (%p125) target = $region24
    $region23: #{_lambda_.21} parent=5 // pred_region
      // Predicated region
      $region25: #{_lambda_.21} parent=23 // pred_check
        %p128 = pneg %p29
      $region26: #{_lambda_.21} parent=23 // pred_check_branch
        %130 = sbr.rel (%p128) target = $region28
      $region27: #{_lambda_.21} parent=23 // pred_region
        %p131 = scmp.lt.s32.totalorder %s9, 1
        %s132 = scalar_select %p131, %s9, 1
        %s133 = smul.addr %s132, 4
        %s134 = scalar_lea.vmem %s0, %s133
      $region28: #{_lambda_.21} parent=23 // pred_fallthru
        _
    $region24: #{_lambda_.21} parent=5 // pred_fallthru
      _
    %p135 = scmp.le.s32.totalorder 1, %s9
    %p136 = scmp.lt.s32.totalorder %s9, 3
    %p137 = pnand %p135, %p136
    %p138 = pneg %p137
    // Predicated region
    $region29: #{_lambda_.21} parent=5 // pred_check
      _
    $region30: #{_lambda_.21} parent=5 // pred_check_branch
      %140 = sbr.rel (%p137) target = $region32
    $region31: #{_lambda_.21} parent=5 // pred_region
      %s141 = ssub.s32 %s9, 1
      %p142 = scmp.lt.s32.totalorder %s14, 1
      %s143 = scalar_select %p142, %s14, 1
      %s144 = smul.addr %s143, 4
      %s145 = scalar_lea.vmem %s0, %s144
      %p146 = pneg %p35
      %p147 = pneg %p32
      %p148 = pneg %p56
      %p149 = pneg %p53
      %p150 = pneg %p77
      %p151 = pneg %p74
      %p152 = pneg %p103
      %p153 = pneg %p100
      %p154 = scmp.lt.s32.totalorder %s14, 1
      %s155 = scalar_select %p154, %s14, 1
      %s156 = smul.addr %s155, 4
      %s157 = scalar_lea.vmem %s3, %s156
      %p158 = scmp.lt.s32.totalorder %s14, 1
      %s159 = scalar_select %p158, %s14, 1
      %s160 = smul.addr %s159, 4
      %s161 = scalar_lea.vmem %s0, %s160
      %p162 = scmp.lt.s32.totalorder %s14, 1
      %s163 = scalar_select %p162, %s14, 1
      %s164 = smul.addr %s163, 4
      %s165 = scalar_lea.vmem %s3, %s164
      %v167 = vld [vmem:[%s161] sm:$0x3]
      %v168 = vld [vmem:[%s1] sm:$0xf]
      %v169 = vld [vmem:[%s1 + $0x4] sm:$0xf]
      %v170 = vld [vmem:[%s1 + $0x8] sm:$0xf]
      %v171 = vld [vmem:[%s1 + $0xc] sm:$0xf]
      %v172 = vld [vmem:[%s1 + $0x10] sm:$0xf]
      %v173 = vld [vmem:[%s1 + $0x14] sm:$0xf]
      %v174 = vld [vmem:[%s1 + $0x18] sm:$0xf]
      %v175 = vld [vmem:[%s1 + $0x1c] sm:$0xf]
      %v176 = vld [vmem:[%s1 + $0x20] sm:$0xf]
      %v177 = vld [vmem:[%s1 + $0x24] sm:$0xf]
      %v178 = vld [vmem:[%s1 + $0x28] sm:$0xf]
      %v179 = vld [vmem:[%s1 + $0x2c] sm:$0xf]
      %v180 = vld [vmem:[%s1 + $0x30] sm:$0xf]
      %v181 = vld [vmem:[%s1 + $0x34] sm:$0xf]
      %v182 = vld [vmem:[%s1 + $0x38] sm:$0xf]
      %v183 = vld [vmem:[%s1 + $0x3c] sm:$0xf]
      %v184 = vld [vmem:[%s161] sm:$0x7]
      %s185 = scalar_lea.vmem %s1, 64
      %v186 = vld [vmem:[%s185] sm:$0xf]
      %v187 = vld [vmem:[%s185 + $0x4] sm:$0xf]
      %v188 = vld [vmem:[%s185 + $0x8] sm:$0xf]
      %v189 = vld [vmem:[%s185 + $0xc] sm:$0xf]
      %v190 = vld [vmem:[%s185 + $0x10] sm:$0xf]
      %v191 = vld [vmem:[%s185 + $0x14] sm:$0xf]
      %v192 = vld [vmem:[%s185 + $0x18] sm:$0xf]
      %v193 = vld [vmem:[%s185 + $0x1c] sm:$0xf]
      %v194 = vld [vmem:[%s185 + $0x20] sm:$0xf]
      %v195 = vld [vmem:[%s185 + $0x24] sm:$0xf]
      %v196 = vld [vmem:[%s185 + $0x28] sm:$0xf]
      %v197 = vld [vmem:[%s185 + $0x2c] sm:$0xf]
      %v198 = vld [vmem:[%s185 + $0x30] sm:$0xf]
      %v199 = vld [vmem:[%s185 + $0x34] sm:$0xf]
      %v200 = vld [vmem:[%s185 + $0x38] sm:$0xf]
      %v201 = vld [vmem:[%s185 + $0x3c] sm:$0xf]
      %v203 = vunpack.c.l.b16 %v184
      %v204 = vpack.c.b16 %v203, %v203
      %v206 = vshrl.u32 %v204, 16
      %v208 = vshll.u32 %v204, 16
      %v210 = vrot.slane %v208, 1
      %v211 = vor.u32 %v206, %v210
      %v229 = vunpack.c.l.b16 %v186
      %v230 = vunpack.c.l.b16 %v187
      %v231 = vunpack.c.l.b16 %v188
      %v232 = vunpack.c.l.b16 %v189
      %v233 = vunpack.c.l.b16 %v190
      %v234 = vunpack.c.l.b16 %v191
      %v235 = vunpack.c.l.b16 %v192
      %v236 = vunpack.c.l.b16 %v193
      %v237 = vunpack.c.l.b16 %v194
      %v238 = vunpack.c.l.b16 %v195
      %v239 = vunpack.c.l.b16 %v196
      %v240 = vunpack.c.l.b16 %v197
      %v241 = vunpack.c.l.b16 %v198
      %v242 = vunpack.c.l.b16 %v199
      %v243 = vunpack.c.l.b16 %v200
      %v244 = vunpack.c.l.b16 %v201
      %v245 = vpack.c.b16 %v230, %v229
      %v246 = vpack.c.b16 %v232, %v231
      %v247 = vpack.c.b16 %v234, %v233
      %v248 = vpack.c.b16 %v236, %v235
      %v249 = vpack.c.b16 %v238, %v237
      %v250 = vpack.c.b16 %v240, %v239
      %v251 = vpack.c.b16 %v242, %v241
      %v252 = vpack.c.b16 %v244, %v243
      %261 = vmatprep.subr.bf16.mxu0 0
      %262 = vmatpush1.bf16.msra.mxu0 %v252
      %263 = vmatprep.subr.bf16.mxu0 0
      %264 = vmatpush1.bf16.msra.mxu0 %v251
      %265 = vmatprep.subr.bf16.mxu0 0
      %266 = vmatpush1.bf16.msra.mxu0 %v250
      %267 = vmatprep.subr.bf16.mxu0 0
      %268 = vmatpush1.bf16.msra.mxu0 %v249
      %269 = vmatprep.subr.bf16.mxu0 0
      %270 = vmatpush1.bf16.msra.mxu0 %v248
      %271 = vmatprep.subr.bf16.mxu0 0
      %272 = vmatpush1.bf16.msra.mxu0 %v247
      %273 = vmatprep.subr.bf16.mxu0 0
      %274 = vmatpush1.bf16.msra.mxu0 %v246
      %275 = vmatprep.subr.bf16.mxu0 0
      %276 = vmatpush1.bf16.msra.mxu0 %v245
      %277 = vmatprep.subr.bf16.mxu0 0
      %278 = vmatpush2.bf16.msra.mxu0 0
      %279 = vmatprep.subr.bf16.mxu0 0
      %280 = vmatpush2.bf16.msra.mxu0 0
      %281 = vmatprep.subr.bf16.mxu0 0
      %282 = vmatpush2.bf16.msra.mxu0 0
      %283 = vmatprep.subr.bf16.mxu0 0
      %284 = vmatpush2.bf16.msra.mxu0 0
      %285 = vmatprep.subr.bf16.mxu0 0
      %286 = vmatpush2.bf16.msra.mxu0 0
      %287 = vmatprep.subr.bf16.mxu0 0
      %288 = vmatpush2.bf16.msra.mxu0 0
      %289 = vmatprep.subr.bf16.mxu0 0
      %290 = vmatpush2.bf16.msra.mxu0 0
      %291 = vmatprep.subr.bf16.mxu0 0
      %292 = vmatpush2.bf16.msra.mxu0 0
      %293 = vmatprep.mubr.bf16.mxu0 0
      %294 = vmatmul.mubr.bf16.gmra.mxu0 %v211
      %v295 = vpop.f32.mrf.mxu0
      %v296 = vadd.f32 0.0, %v295
      %v297 = vpop.f32.mrf.mxu0
      %v298 = vpop.f32.mrf.mxu0
      %v299 = vpop.f32.mrf.mxu0
      %300 = vdwg.mxu0
      %v317 = vunpack.c.l.b16 %v168
      %v318 = vunpack.c.l.b16 %v169
      %v319 = vunpack.c.l.b16 %v170
      %v320 = vunpack.c.l.b16 %v171
      %v321 = vunpack.c.l.b16 %v172
      %v322 = vunpack.c.l.b16 %v173
      %v323 = vunpack.c.l.b16 %v174
      %v324 = vunpack.c.l.b16 %v175
      %v325 = vunpack.c.l.b16 %v176
      %v326 = vunpack.c.l.b16 %v177
      %v327 = vunpack.c.l.b16 %v178
      %v328 = vunpack.c.l.b16 %v179
      %v329 = vunpack.c.l.b16 %v180
      %v330 = vunpack.c.l.b16 %v181
      %v331 = vunpack.c.l.b16 %v182
      %v332 = vunpack.c.l.b16 %v183
      %v333 = vpack.c.b16 %v318, %v317
      %v334 = vpack.c.b16 %v320, %v319
      %v335 = vpack.c.b16 %v322, %v321
      %v336 = vpack.c.b16 %v324, %v323
      %v337 = vpack.c.b16 %v326, %v325
      %v338 = vpack.c.b16 %v328, %v327
      %v339 = vpack.c.b16 %v330, %v329
      %v340 = vpack.c.b16 %v332, %v331
      %349 = vmatprep.subr.bf16.mxu0 0
      %350 = vmatpush1.bf16.msra.mxu0 %v340
      %351 = vmatprep.subr.bf16.mxu0 0
      %352 = vmatpush1.bf16.msra.mxu0 %v339
      %353 = vmatprep.subr.bf16.mxu0 0
      %354 = vmatpush1.bf16.msra.mxu0 %v338
      %355 = vmatprep.subr.bf16.mxu0 0
      %356 = vmatpush1.bf16.msra.mxu0 %v337
      %357 = vmatprep.subr.bf16.mxu0 0
      %358 = vmatpush1.bf16.msra.mxu0 %v336
      %359 = vmatprep.subr.bf16.mxu0 0
      %360 = vmatpush1.bf16.msra.mxu0 %v335
      %361 = vmatprep.subr.bf16.mxu0 0
      %362 = vmatpush1.bf16.msra.mxu0 %v334
      %363 = vmatprep.subr.bf16.mxu0 0
      %364 = vmatpush1.bf16.msra.mxu0 %v333
      %365 = vmatprep.subr.bf16.mxu0 0
      %366 = vmatpush2.bf16.msra.mxu0 0
      %367 = vmatprep.subr.bf16.mxu0 0
      %368 = vmatpush2.bf16.msra.mxu0 0
      %369 = vmatprep.subr.bf16.mxu0 0
      %370 = vmatpush2.bf16.msra.mxu0 0
      %371 = vmatprep.subr.bf16.mxu0 0
      %372 = vmatpush2.bf16.msra.mxu0 0
      %373 = vmatprep.subr.bf16.mxu0 0
      %374 = vmatpush2.bf16.msra.mxu0 0
      %375 = vmatprep.subr.bf16.mxu0 0
      %376 = vmatpush2.bf16.msra.mxu0 0
      %377 = vmatprep.subr.bf16.mxu0 0
      %378 = vmatpush2.bf16.msra.mxu0 0
      %379 = vmatprep.subr.bf16.mxu0 0
      %380 = vmatpush2.bf16.msra.mxu0 0
      %381 = vmatprep.mubr.bf16.mxu0 0
      %382 = vmatmul.mubr.bf16.gmra.mxu0 %v167
      %v383 = vpop.f32.mrf.mxu0
      %v384 = vadd.f32 %v296, %v383
      %v385 = vpop.f32.mrf.mxu0
      %v386 = vpop.f32.mrf.mxu0
      %v387 = vpop.f32.mrf.mxu0
      %388 = vdwg.mxu0
      %v389 = vld [vmem:[%s161] sm:$0x6]
      %s390 = scalar_lea.vmem %s1, 128
      %v391 = vld [vmem:[%s390] sm:$0xf]
      %v392 = vld [vmem:[%s390 + $0x4] sm:$0xf]
      %v393 = vld [vmem:[%s390 + $0x8] sm:$0xf]
      %v394 = vld [vmem:[%s390 + $0xc] sm:$0xf]
      %v395 = vld [vmem:[%s390 + $0x10] sm:$0xf]
      %v396 = vld [vmem:[%s390 + $0x14] sm:$0xf]
      %v397 = vld [vmem:[%s390 + $0x18] sm:$0xf]
      %v398 = vld [vmem:[%s390 + $0x1c] sm:$0xf]
      %v399 = vld [vmem:[%s390 + $0x20] sm:$0xf]
      %v400 = vld [vmem:[%s390 + $0x24] sm:$0xf]
      %v401 = vld [vmem:[%s390 + $0x28] sm:$0xf]
      %v402 = vld [vmem:[%s390 + $0x2c] sm:$0xf]
      %v403 = vld [vmem:[%s390 + $0x30] sm:$0xf]
      %v404 = vld [vmem:[%s390 + $0x34] sm:$0xf]
      %v405 = vld [vmem:[%s390 + $0x38] sm:$0xf]
      %v406 = vld [vmem:[%s390 + $0x3c] sm:$0xf]
      %v408 = vunpack.c.l.b16 %v389
      %v409 = vpack.c.b16 %v408, %v408
      %v410 = vrot.slane %v409, 1
      %v428 = vunpack.c.l.b16 %v391
      %v429 = vunpack.c.l.b16 %v392
      %v430 = vunpack.c.l.b16 %v393
      %v431 = vunpack.c.l.b16 %v394
      %v432 = vunpack.c.l.b16 %v395
      %v433 = vunpack.c.l.b16 %v396
      %v434 = vunpack.c.l.b16 %v397
      %v435 = vunpack.c.l.b16 %v398
      %v436 = vunpack.c.l.b16 %v399
      %v437 = vunpack.c.l.b16 %v400
      %v438 = vunpack.c.l.b16 %v401
      %v439 = vunpack.c.l.b16 %v402
      %v440 = vunpack.c.l.b16 %v403
      %v441 = vunpack.c.l.b16 %v404
      %v442 = vunpack.c.l.b16 %v405
      %v443 = vunpack.c.l.b16 %v406
      %v444 = vpack.c.b16 %v429, %v428
      %v445 = vpack.c.b16 %v431, %v430
      %v446 = vpack.c.b16 %v433, %v432
      %v447 = vpack.c.b16 %v435, %v434
      %v448 = vpack.c.b16 %v437, %v436
      %v449 = vpack.c.b16 %v439, %v438
      %v450 = vpack.c.b16 %v441, %v440
      %v451 = vpack.c.b16 %v443, %v442
      %460 = vmatprep.subr.bf16.mxu0 0
      %461 = vmatpush1.bf16.msra.mxu0 %v451
      %462 = vmatprep.subr.bf16.mxu0 0
      %463 = vmatpush1.bf16.msra.mxu0 %v450
      %464 = vmatprep.subr.bf16.mxu0 0
      %465 = vmatpush1.bf16.msra.mxu0 %v449
      %466 = vmatprep.subr.bf16.mxu0 0
      %467 = vmatpush1.bf16.msra.mxu0 %v448
      %468 = vmatprep.subr.bf16.mxu0 0
      %469 = vmatpush1.bf16.msra.mxu0 %v447
      %470 = vmatprep.subr.bf16.mxu0 0
      %471 = vmatpush1.bf16.msra.mxu0 %v446
      %472 = vmatprep.subr.bf16.mxu0 0
      %473 = vmatpush1.bf16.msra.mxu0 %v445
      %474 = vmatprep.subr.bf16.mxu0 0
      %475 = vmatpush1.bf16.msra.mxu0 %v444
      %476 = vmatprep.subr.bf16.mxu0 0
      %477 = vmatpush2.bf16.msra.mxu0 0
      %478 = vmatprep.subr.bf16.mxu0 0
      %479 = vmatpush2.bf16.msra.mxu0 0
      %480 = vmatprep.subr.bf16.mxu0 0
      %481 = vmatpush2.bf16.msra.mxu0 0
      %482 = vmatprep.subr.bf16.mxu0 0
      %483 = vmatpush2.bf16.msra.mxu0 0
      %484 = vmatprep.subr.bf16.mxu0 0
      %485 = vmatpush2.bf16.msra.mxu0 0
      %486 = vmatprep.subr.bf16.mxu0 0
      %487 = vmatpush2.bf16.msra.mxu0 0
      %488 = vmatprep.subr.bf16.mxu0 0
      %489 = vmatpush2.bf16.msra.mxu0 0
      %490 = vmatprep.subr.bf16.mxu0 0
      %491 = vmatpush2.bf16.msra.mxu0 0
      %492 = vmatprep.mubr.bf16.mxu0 0
      %493 = vmatmul.mubr.bf16.gmra.mxu0 %v410
      %v494 = vpop.f32.mrf.mxu0
      %v495 = vadd.f32 0.0, %v494
      %v496 = vpop.f32.mrf.mxu0
      %v497 = vpop.f32.mrf.mxu0
      %v498 = vpop.f32.mrf.mxu0
      %499 = vdwg.mxu0
      %v500 = vadd.f32 %v384, %v495
      %v501 = vld [vmem:[%s2] sm:$0x1]
      %v503 = vlaneseq
      %v504 = vshrl.u32 %v503, 7
      %v505 = vsub.s32 0, %v504
      %v506 = vrot.slane %v501, %v505
      %v508 = vadd.f32 %v500, %v506
      %509 = vst [vmem:[%s165] sm:$0xf] %v508
      %p510 = scmp.lt.s32.totalorder %s14, 1
      %s511 = scalar_select %p510, %s14, 1
      %s512 = smul.addr %s511, 4
      %s513 = scalar_lea.vmem %s3, %s512
      // Predicated region
      $region33: #{_lambda_.21} parent=31 // pred_check
        %p514 = pneg %p100
      $region34: #{_lambda_.21} parent=31 // pred_check_branch
        %516 = sbr.rel (%p514) target = $region36
      $region35: #{_lambda_.21} parent=31 // pred_region
        _
      $region36: #{_lambda_.21} parent=31 // pred_fallthru
        _
    $region32: #{_lambda_.21} parent=5 // pred_fallthru
      _
    %p517 = scmp.le.s32.totalorder 2, %s9
    // Predicated region
    $region37: #{_lambda_.21} parent=5 // pred_check
      %p518 = pneg %p517
    $region38: #{_lambda_.21} parent=5 // pred_check_branch
      %520 = sbr.rel (%p518) target = $region40
    $region39: #{_lambda_.21} parent=5 // pred_region
      %s521 = ssub.s32 %s9, 2
      // Predicated region
      $region41: #{_lambda_.21} parent=39 // pred_check
        %p522 = pneg %p106
      $region42: #{_lambda_.21} parent=39 // pred_check_branch
        %524 = sbr.rel (%p522) target = $region44
      $region43: #{_lambda_.21} parent=39 // pred_region
        %p525 = scmp.lt.s32.totalorder %s15, 1
        %s526 = scalar_select %p525, %s15, 1
        %s527 = smul.addr %s526, 4
        %s528 = scalar_lea.vmem %s3, %s527
      $region44: #{_lambda_.21} parent=39 // pred_fallthru
        _
    $region40: #{_lambda_.21} parent=5 // pred_fallthru
      _
  $region6: #{_lambda_.21} parent=0 // loop_footer
    %s13 = sadd.s32 1, %s9
  $region7: #{_lambda_.21} parent=0 // loop_footer_branch
    %8 = sbr.rel target = $region3
  $region8: #{_lambda_.21} parent=0 // loop_exit
    _

// kernel: _lambda_.22
$region0: #{_lambda_.22}
  #allocation0 [shape = 'u32[]', space=smem, size = 0x4, offset = 0x4, fixed_abs, tag = 'smem constant byte address 0x4 - core index']
  #allocation1 [shape = 'u32[144,128]{1,0:T(1,128)}', space=vmem, size = 0x12000, scoped, tag = 'internal scratch']
  #allocation2 [shape = 'f32[1,1]{1,0:T(1,128)}', space=smem, size = 0x200, scoped, tag = 'scratch operand']
  %s0 = inlined_call_operand.vmem [shape: f32[8,128], index: 0, kind: input, shape index: {}]
  %s1 = inlined_call_operand.vmem [shape: f32[128,128], index: 1, kind: input, shape index: {}]
  %s2 = inlined_call_operand.vmem [shape: f32[128,128], index: 2, kind: input, shape index: {}]
  %s3 = inlined_call_operand.vmem [shape: f32[1,128], index: 3, kind: input, shape index: {}]
  %s4 = inlined_call_operand.vmem [shape: bf16[8,128], index: 4, kind: output, shape index: {0}]
  %s5 = inlined_call_operand.hbm [shape: f32[1,1], index: 5, kind: output, shape index: {1}]
  %6 = xla_tuple %s4, %s5
  %s7 = sld [smem:[#allocation0]]
  $region38: #{_lambda_.22} parent=0
    _
  %s9 = ssub.s32 1, %s7
  %s10 = scalar_select 0, %s9, %s7
  $region1: #{_lambda_.22} parent=0
    #allocation3 [shape = 'u8[512]{0}', space=smem, size = 0x200, scoped, tag = 'output window, operand 1, single buffered']
    #allocation4 [shape = 's32[1]{0}', space=sflag, size = 0x4, scoped, tag = 'scoped memory for _lambda_.22']
    %11 = vsyncpa [#allocation4], 0
    // Predicated region
    $region2: #{_lambda_.22} parent=1 // pred_check
      _
    $region3: #{_lambda_.22} parent=1 // pred_check_branch
      %13 = sbr.rel (0) target = $region5
    $region4: #{_lambda_.22} parent=1 // pred_region
      _
    $region5: #{_lambda_.22} parent=1 // pred_fallthru
      _
    // Predicated region
    $region6: #{_lambda_.22} parent=1 // pred_check
      _
    $region7: #{_lambda_.22} parent=1 // pred_check_branch
      %15 = sbr.rel (0) target = $region9
    $region8: #{_lambda_.22} parent=1 // pred_region
      _
    $region9: #{_lambda_.22} parent=1 // pred_fallthru
      _
    // Predicated region
    $region10: #{_lambda_.22} parent=1 // pred_check
      _
    $region11: #{_lambda_.22} parent=1 // pred_check_branch
      %17 = sbr.rel (0) target = $region13
    $region12: #{_lambda_.22} parent=1 // pred_region
      _
    $region13: #{_lambda_.22} parent=1 // pred_fallthru
      _
    // Predicated region
    $region14: #{_lambda_.22} parent=1 // pred_check
      _
    $region15: #{_lambda_.22} parent=1 // pred_check_branch
      %19 = sbr.rel (0) target = $region17
    $region16: #{_lambda_.22} parent=1 // pred_region
      _
    $region17: #{_lambda_.22} parent=1 // pred_fallthru
      _
    %p20 = scmp.eq.s32.totalorder 0, 0
    // Predicated region
    $region18: #{_lambda_.22} parent=1 // pred_check
      %p21 = pneg %p20
    $region19: #{_lambda_.22} parent=1 // pred_check_branch
      %23 = sbr.rel (%p21) target = $region21
    $region20: #{_lambda_.22} parent=1 // pred_region
      %s24 = scalar_lea.smem [#allocation2], 0
      %25 = sst [smem:[%s24]] 0.0
    $region21: #{_lambda_.22} parent=1 // pred_fallthru
      _
    %v26 = vld [vmem:[%s0] sm:$0xff]
    %v27 = vld [vmem:[%s3] sm:$0x1]
    %v28 = vld [vmem:[%s2] sm:$0xff]
    %v29 = vld [vmem:[%s2 + $0x8] sm:$0xff]
    %v30 = vld [vmem:[%s2 + $0x10] sm:$0xff]
    %v31 = vld [vmem:[%s2 + $0x18] sm:$0xff]
    %v32 = vld [vmem:[%s2 + $0x20] sm:$0xff]
    %v33 = vld [vmem:[%s2 + $0x28] sm:$0xff]
    %v34 = vld [vmem:[%s2 + $0x30] sm:$0xff]
    %v35 = vld [vmem:[%s2 + $0x38] sm:$0xff]
    %v36 = vld [vmem:[%s2 + $0x40] sm:$0xff]
    %v37 = vld [vmem:[%s2 + $0x48] sm:$0xff]
    %v38 = vld [vmem:[%s2 + $0x50] sm:$0xff]
    %v39 = vld [vmem:[%s2 + $0x58] sm:$0xff]
    %v40 = vld [vmem:[%s2 + $0x60] sm:$0xff]
    %v41 = vld [vmem:[%s2 + $0x68] sm:$0xff]
    %v42 = vld [vmem:[%s2 + $0x70] sm:$0xff]
    %v43 = vld [vmem:[%s2 + $0x78] sm:$0xff]
    %44 = vmatprep.subr.mxu0 0.0
    %45 = vmatpush1.msra.mxu0 %v43
    %46 = vmatprep.subr.mxu0 0.0
    %47 = vmatpush1.msra.mxu0 %v42
    %48 = vmatprep.subr.mxu0 0.0
    %49 = vmatpush1.msra.mxu0 %v41
    %50 = vmatprep.subr.mxu0 0.0
    %51 = vmatpush1.msra.mxu0 %v40
    %52 = vmatprep.subr.mxu0 0.0
    %53 = vmatpush1.msra.mxu0 %v39
    %54 = vmatprep.subr.mxu0 0.0
    %55 = vmatpush1.msra.mxu0 %v38
    %56 = vmatprep.subr.mxu0 0.0
    %57 = vmatpush1.msra.mxu0 %v37
    %58 = vmatprep.subr.mxu0 0.0
    %59 = vmatpush1.msra.mxu0 %v36
    %60 = vmatprep.subr.mxu0 0.0
    %61 = vmatpush1.msra.mxu0 %v35
    %62 = vmatprep.subr.mxu0 0.0
    %63 = vmatpush1.msra.mxu0 %v34
    %64 = vmatprep.subr.mxu0 0.0
    %65 = vmatpush1.msra.mxu0 %v33
    %66 = vmatprep.subr.mxu0 0.0
    %67 = vmatpush1.msra.mxu0 %v32
    %68 = vmatprep.subr.mxu0 0.0
    %69 = vmatpush1.msra.mxu0 %v31
    %70 = vmatprep.subr.mxu0 0.0
    %71 = vmatpush1.msra.mxu0 %v30
    %72 = vmatprep.subr.mxu0 0.0
    %73 = vmatpush1.msra.mxu0 %v29
    %74 = vmatprep.subr.mxu0 0.0
    %75 = vmatpush1.msra.mxu0 %v28
    %76 = vmatprep.subr.mxu0 0.0
    %77 = vmatpush2.msra.mxu0 0.0
    %78 = vmatprep.subr.mxu0 0.0
    %79 = vmatpush2.msra.mxu0 0.0
    %80 = vmatprep.subr.mxu0 0.0
    %81 = vmatpush2.msra.mxu0 0.0
    %82 = vmatprep.subr.mxu0 0.0
    %83 = vmatpush2.msra.mxu0 0.0
    %84 = vmatprep.subr.mxu0 0.0
    %85 = vmatpush2.msra.mxu0 0.0
    %86 = vmatprep.subr.mxu0 0.0
    %87 = vmatpush2.msra.mxu0 0.0
    %88 = vmatprep.subr.mxu0 0.0
    %89 = vmatpush2.msra.mxu0 0.0
    %90 = vmatprep.subr.mxu0 0.0
    %91 = vmatpush2.msra.mxu0 0.0
    %92 = vmatprep.subr.mxu0 0.0
    %93 = vmatpush2.msra.mxu0 0.0
    %94 = vmatprep.subr.mxu0 0.0
    %95 = vmatpush2.msra.mxu0 0.0
    %96 = vmatprep.subr.mxu0 0.0
    %97 = vmatpush2.msra.mxu0 0.0
    %98 = vmatprep.subr.mxu0 0.0
    %99 = vmatpush2.msra.mxu0 0.0
    %100 = vmatprep.subr.mxu0 0.0
    %101 = vmatpush2.msra.mxu0 0.0
    %102 = vmatprep.subr.mxu0 0.0
    %103 = vmatpush2.msra.mxu0 0.0
    %104 = vmatprep.subr.mxu0 0.0
    %105 = vmatpush2.msra.mxu0 0.0
    %106 = vmatprep.subr.mxu0 0.0
    %107 = vmatpush2.msra.mxu0 0.0
    %108 = vmatprep.mubr.f32.mxu0 0.0
    %109 = vmatmul.mubr.f32.gmra.mxu0 %v26
    %v110 = vpop.f32.mrf.mxu0
    %v111 = vadd.f32 0.0, %v110
    %v112 = vpop.f32.mrf.mxu0
    %113 = vdwg.mxu0
    %v114 = vmul.f32 %v111, 2.0
    %v116 = vlaneseq
    %v117 = vshrl.u32 %v116, 7
    %v118 = vsub.s32 0, %v117
    %v119 = vrot.slane %v27, %v118
    %v121 = vsub.f32 %v119, %v114
    %122 = vmin.index.xlane.f32.xlu0 %v121
    %v123 = vpop.xlane.xlu0 %122
    %v124 = vlaneseq
    %v125 = vand.u32 %v124, 127
    %vm126 = vcmp.eq.s32.totalorder %v123, %v125
    %v127 = vsel %vm126, 1, 0
    %v128 = vcvt.s32.f32 %v127
    %v129 = vld [vmem:[%s1] sm:$0xff]
    %v130 = vld [vmem:[%s1 + $0x8] sm:$0xff]
    %v131 = vld [vmem:[%s1 + $0x10] sm:$0xff]
    %v132 = vld [vmem:[%s1 + $0x18] sm:$0xff]
    %v133 = vld [vmem:[%s1 + $0x20] sm:$0xff]
    %v134 = vld [vmem:[%s1 + $0x28] sm:$0xff]
    %v135 = vld [vmem:[%s1 + $0x30] sm:$0xff]
    %v136 = vld [vmem:[%s1 + $0x38] sm:$0xff]
    %v137 = vld [vmem:[%s1 + $0x40] sm:$0xff]
    %v138 = vld [vmem:[%s1 + $0x48] sm:$0xff]
    %v139 = vld [vmem:[%s1 + $0x50] sm:$0xff]
    %v140 = vld [vmem:[%s1 + $0x58] sm:$0xff]
    %v141 = vld [vmem:[%s1 + $0x60] sm:$0xff]
    %v142 = vld [vmem:[%s1 + $0x68] sm:$0xff]
    %v143 = vld [vmem:[%s1 + $0x70] sm:$0xff]
    %v144 = vld [vmem:[%s1 + $0x78] sm:$0xff]
    %145 = vmatprep.subr.mxu0 0.0
    %146 = vmatpush1.msra.mxu0 %v144
    %147 = vmatprep.subr.mxu0 0.0
    %148 = vmatpush1.msra.mxu0 %v143
    %149 = vmatprep.subr.mxu0 0.0
    %150 = vmatpush1.msra.mxu0 %v142
    %151 = vmatprep.subr.mxu0 0.0
    %152 = vmatpush1.msra.mxu0 %v141
    %153 = vmatprep.subr.mxu0 0.0
    %154 = vmatpush1.msra.mxu0 %v140
    %155 = vmatprep.subr.mxu0 0.0
    %156 = vmatpush1.msra.mxu0 %v139
    %157 = vmatprep.subr.mxu0 0.0
    %158 = vmatpush1.msra.mxu0 %v138
    %159 = vmatprep.subr.mxu0 0.0
    %160 = vmatpush1.msra.mxu0 %v137
    %161 = vmatprep.subr.mxu0 0.0
    %162 = vmatpush1.msra.mxu0 %v136
    %163 = vmatprep.subr.mxu0 0.0
    %164 = vmatpush1.msra.mxu0 %v135
    %165 = vmatprep.subr.mxu0 0.0
    %166 = vmatpush1.msra.mxu0 %v134
    %167 = vmatprep.subr.mxu0 0.0
    %168 = vmatpush1.msra.mxu0 %v133
    %169 = vmatprep.subr.mxu0 0.0
    %170 = vmatpush1.msra.mxu0 %v132
    %171 = vmatprep.subr.mxu0 0.0
    %172 = vmatpush1.msra.mxu0 %v131
    %173 = vmatprep.subr.mxu0 0.0
    %174 = vmatpush1.msra.mxu0 %v130
    %175 = vmatprep.subr.mxu0 0.0
    %176 = vmatpush1.msra.mxu0 %v129
    %177 = vmatprep.subr.mxu0 0.0
    %178 = vmatpush2.msra.mxu0 0.0
    %179 = vmatprep.subr.mxu0 0.0
    %180 = vmatpush2.msra.mxu0 0.0
    %181 = vmatprep.subr.mxu0 0.0
    %182 = vmatpush2.msra.mxu0 0.0
    %183 = vmatprep.subr.mxu0 0.0
    %184 = vmatpush2.msra.mxu0 0.0
    %185 = vmatprep.subr.mxu0 0.0
    %186 = vmatpush2.msra.mxu0 0.0
    %187 = vmatprep.subr.mxu0 0.0
    %188 = vmatpush2.msra.mxu0 0.0
    %189 = vmatprep.subr.mxu0 0.0
    %190 = vmatpush2.msra.mxu0 0.0
    %191 = vmatprep.subr.mxu0 0.0
    %192 = vmatpush2.msra.mxu0 0.0
    %193 = vmatprep.subr.mxu0 0.0
    %194 = vmatpush2.msra.mxu0 0.0
    %195 = vmatprep.subr.mxu0 0.0
    %196 = vmatpush2.msra.mxu0 0.0
    %197 = vmatprep.subr.mxu0 0.0
    %198 = vmatpush2.msra.mxu0 0.0
    %199 = vmatprep.subr.mxu0 0.0
    %200 = vmatpush2.msra.mxu0 0.0
    %201 = vmatprep.subr.mxu0 0.0
    %202 = vmatpush2.msra.mxu0 0.0
    %203 = vmatprep.subr.mxu0 0.0
    %204 = vmatpush2.msra.mxu0 0.0
    %205 = vmatprep.subr.mxu0 0.0
    %206 = vmatpush2.msra.mxu0 0.0
    %207 = vmatprep.subr.mxu0 0.0
    %208 = vmatpush2.msra.mxu0 0.0
    %209 = vmatprep.mubr.f32.mxu0 0.0
    %210 = vmatmul.mubr.f32.gmra.mxu0 %v128
    %v211 = vpop.f32.mrf.mxu0
    %v212 = vadd.f32 0.0, %v211
    %v213 = vpop.f32.mrf.mxu0
    %214 = vdwg.mxu0
    %v215 = vpack.c.bf16 %v212, %v212
    %216 = vst [vmem:[%s4] sm:$0xf] %v215
    %s217 = smul.u32 0, 8
    %v218 = vlaneseq
    %v219 = vshrl.u32 %v218, 7
    %v220 = vstv %s217
    %v221 = vadd.s32 %v220, %v219
    %vm222 = vcmp.lt.s32.totalorder %v221, 8
    %v223 = vsel %vm222, 1, 0
    %v224 = vcvt.s32.f32 %v223
    %v225 = vsub.f32 %v26, %v212
    %v226 = vmul.f32 %v225, %v224
    %s227 = sld [smem:[#allocation2]]
    %v228 = vmul.f32 %v226, %v226
    %229 = vadd.xlane.f32.xlu0 %v228
    %v230 = vpop.xlane.xlu0 %229
    %v231 = vrot.slane %v230, 4
    %v232 = vadd.f32 %v230, %v231
    %v233 = vrot.slane %v232, 2
    %v234 = vadd.f32 %v232, %v233
    %v235 = vrot.slane %v234, 1
    %v236 = vadd.f32 %v234, %v235
    %s237 = vtos %v236
    %s238 = sadd.f32 %s227, %s237
    %s239 = scalar_lea.smem [#allocation2], 0
    %240 = sst [smem:[%s239]] %s238
    %s241 = sld [smem:[#allocation2]]
    %s242 = scalar_lea.smem [#allocation3], 0
    %243 = sst [smem:[%s242]] %s241
    // Predicated region
    $region22: #{_lambda_.22} parent=1 // pred_check
      _
    $region23: #{_lambda_.22} parent=1 // pred_check_branch
      %245 = sbr.rel (0) target = $region25
    $region24: #{_lambda_.22} parent=1 // pred_region
      _
    $region25: #{_lambda_.22} parent=1 // pred_fallthru
      _
    // Predicated region
    $region26: #{_lambda_.22} parent=1 // pred_check
      _
    $region27: #{_lambda_.22} parent=1 // pred_check_branch
      %247 = sbr.rel (0) target = $region29
    $region28: #{_lambda_.22} parent=1 // pred_region
      %s249 = ssub.s32 16, 16
      %250 = vsyncadd [#allocation4], %s249
      %253 = dma.smem_to_hbm [#allocation3], 16, %s5, [#allocation4]
    $region29: #{_lambda_.22} parent=1 // pred_fallthru
      _
    // Predicated region
    $region30: #{_lambda_.22} parent=1 // pred_check
      _
    $region31: #{_lambda_.22} parent=1 // pred_check_branch
      %255 = sbr.rel (0) target = $region33
    $region32: #{_lambda_.22} parent=1 // pred_region
      _
    $region33: #{_lambda_.22} parent=1 // pred_fallthru
      _
    // Predicated region
    $region34: #{_lambda_.22} parent=1 // pred_check
      _
    $region35: #{_lambda_.22} parent=1 // pred_check_branch
      %257 = sbr.rel (0) target = $region37
    $region36: #{_lambda_.22} parent=1 // pred_region
      %258 = dma.done [#allocation4], 16
    $region37: #{_lambda_.22} parent=1 // pred_fallthru
      _
    %259 = sfence
    %260 = vsyncpa [#allocation4], 1

// kernel: _lambda_.23
$region0: #{_lambda_.23}
  #allocation0 [shape = 'u32[]', space=smem, size = 0x4, offset = 0x4, fixed_abs, tag = 'smem constant byte address 0x4 - core index']
  #allocation1 [shape = 'u32[144,128]{1,0:T(1,128)}', space=vmem, size = 0x12000, scoped, tag = 'internal scratch']
  %s0 = inlined_call_operand.vmem [shape: bf16[2,6,128], index: 0, kind: input, shape index: {}]
  %s1 = inlined_call_operand.vmem [shape: bf16[3,128,128], index: 1, kind: input, shape index: {}]
  %s2 = inlined_call_operand.vmem [shape: f32[1,128], index: 2, kind: input, shape index: {}]
  %s3 = inlined_call_operand.vmem [shape: bf16[2,4,128], index: 3, kind: output, shape index: {}]
  %s4 = sld [smem:[#allocation0]]
  $region45: #{_lambda_.23} parent=0
    _
  %s6 = ssub.s32 1, %s4
  %s7 = scalar_select 0, %s6, %s4
  loop: start=0, step=1, limit=4
  $region2: #{_lambda_.23} parent=0 // loop_pre_header
    _
  $region3: #{_lambda_.23} parent=0 // loop_header
    %s9 = sphi 0, %s13
    %p10 = scmp.ge.s32.totalorder %s9, 4
    %s19 = sphi 0, %s21
    %s22 = sphi 0, %s19
    %s23 = sphi 0, %s22
    %s39 = sphi 0, %s23
    %s43 = sphi 0, %s43
    %s45 = sphi 0, %s43
    %s46 = sphi 0, %s45
    %s60 = sphi 0, %s46
    %s64 = sphi 0, %s64
    %s66 = sphi 0, %s64
    %s67 = sphi 0, %s66
    %s81 = sphi 0, %s67
    %s87 = sphi 0, %s89
    %s90 = sphi 0, %s87
    %s91 = sphi 0, %s90
    %s107 = sphi 0, %s91
  $region4: #{_lambda_.23} parent=0 // loop_header_branch
    %12 = sbr.rel (%p10) target = $region8
  $region5: #{_lambda_.23} parent=0 // loop_body
    %s14 = ssub.s32 %s9, 1
    %s15 = ssub.s32 %s9, 2
    %s16 = sadd.s32 %s9, 1
    %s17 = ssub.s32 %s9, %s16
    %p18 = scmp.eq.s32.totalorder %s17, 0
    %s20 = sadd.s32 %s19, 1
    %s21 = scalar_select %p18, %s19, %s20
    %p24 = pneg %p18
    %p25 = scmp.eq.s32.totalorder %s9, 1
    %p26 = por %p24, %p25
    %p27 = scmp.ne.s32.totalorder %s19, %s22
    %p28 = scmp.eq.s32.totalorder %s9, 0
    %p29 = por %p27, %p28
    %p30 = scmp.ne.s32.totalorder %s19, %s22
    %p31 = scmp.eq.s32.totalorder %s14, 1
    %p32 = por %p30, %p31
    %p33 = scmp.ne.s32.totalorder %s22, %s23
    %p34 = scmp.eq.s32.totalorder %s14, 0
    %p35 = por %p33, %p34
    %p36 = scmp.ne.s32.totalorder %s22, %s23
    %p37 = scmp.eq.s32.totalorder %s15, 1
    %p38 = por %p36, %p37
    %p40 = scmp.ne.s32.totalorder %s23, %s39
    %p41 = scmp.eq.s32.totalorder %s15, 0
    %p42 = por %p40, %p41
    %s44 = sadd.s32 %s43, 1
    %p47 = scmp.eq.s32.totalorder %s9, 1
    %p48 = scmp.ne.s32.totalorder %s43, %s45
    %p49 = scmp.eq.s32.totalorder %s9, 0
    %p50 = por %p48, %p49
    %p51 = scmp.ne.s32.totalorder %s43, %s45
    %p52 = scmp.eq.s32.totalorder %s14, 1
    %p53 = por %p51, %p52
    %p54 = scmp.ne.s32.totalorder %s45, %s46
    %p55 = scmp.eq.s32.totalorder %s14, 0
    %p56 = por %p54, %p55
    %p57 = scmp.ne.s32.totalorder %s45, %s46
    %p58 = scmp.eq.s32.totalorder %s15, 1
    %p59 = por %p57, %p58
    %p61 = scmp.ne.s32.totalorder %s46, %s60
    %p62 = scmp.eq.s32.totalorder %s15, 0
    %p63 = por %p61, %p62
    %s65 = sadd.s32 %s64, 1
    %p68 = scmp.eq.s32.totalorder %s9, 1
    %p69 = scmp.ne.s32.totalorder %s64, %s66
    %p70 = scmp.eq.s32.totalorder %s9, 0
    %p71 = por %p69, %p70
    %p72 = scmp.ne.s32.totalorder %s64, %s66
    %p73 = scmp.eq.s32.totalorder %s14, 1
    %p74 = por %p72, %p73
    %p75 = scmp.ne.s32.totalorder %s66, %s67
    %p76 = scmp.eq.s32.totalorder %s14, 0
    %p77 = por %p75, %p76
    %p78 = scmp.ne.s32.totalorder %s66, %s67
    %p79 = scmp.eq.s32.totalorder %s15, 1
    %p80 = por %p78, %p79
    %p82 = scmp.ne.s32.totalorder %s67, %s81
    %p83 = scmp.eq.s32.totalorder %s15, 0
    %p84 = por %p82, %p83
    %s85 = ssub.s32 %s9, %s16
    %p86 = scmp.eq.s32.totalorder %s85, 0
    %s88 = sadd.s32 %s87, 1
    %s89 = scalar_select %p86, %s87, %s88
    %p92 = pneg %p86
    %p93 = scmp.eq.s32.totalorder %s9, 1
    %p94 = por %p92, %p93
    %p95 = scmp.ne.s32.totalorder %s87, %s90
    %p96 = scmp.eq.s32.totalorder %s9, 0
    %p97 = por %p95, %p96
    %p98 = scmp.ne.s32.totalorder %s87, %s90
    %p99 = scmp.eq.s32.totalorder %s14, 1
    %p100 = por %p98, %p99
    %p101 = scmp.ne.s32.totalorder %s90, %s91
    %p102 = scmp.eq.s32.totalorder %s14, 0
    %p103 = por %p101, %p102
    %p104 = scmp.ne.s32.totalorder %s90, %s91
    %p105 = scmp.eq.s32.totalorder %s15, 1
    %p106 = por %p104, %p105
    %p108 = scmp.ne.s32.totalorder %s91, %s107
    %p109 = scmp.eq.s32.totalorder %s15, 0
    %p110 = por %p108, %p109
    %p111 = scmp.le.s32.totalorder 1, %s9
    %p112 = scmp.lt.s32.totalorder %s9, 3
    %p113 = pnand %p111, %p112
    %p114 = pneg %p113
    // Predicated region
    $region9: #{_lambda_.23} parent=5 // pred_check
      _
    $region10: #{_lambda_.23} parent=5 // pred_check_branch
      %116 = sbr.rel (%p113) target = $region12
    $region11: #{_lambda_.23} parent=5 // pred_region
      %s117 = ssub.s32 %s9, 1
      // Predicated region
      $region13: #{_lambda_.23} parent=11 // pred_check
        %p118 = pneg %p56
      $region14: #{_lambda_.23} parent=11 // pred_check_branch
        %120 = sbr.rel (%p118) target = $region16
      $region15: #{_lambda_.23} parent=11 // pred_region
        _
      $region16: #{_lambda_.23} parent=11 // pred_fallthru
        _
      // Predicated region
      $region17: #{_lambda_.23} parent=11 // pred_check
        %p121 = pneg %p77
      $region18: #{_lambda_.23} parent=11 // pred_check_branch
        %123 = sbr.rel (%p121) target = $region20
      $region19: #{_lambda_.23} parent=11 // pred_region
        _
      $region20: #{_lambda_.23} parent=11 // pred_fallthru
        _
    $region12: #{_lambda_.23} parent=5 // pred_fallthru
      _
    %p124 = scmp.lt.s32.totalorder %s9, 2
    // Predicated region
    $region21: #{_lambda_.23} parent=5 // pred_check
      %p125 = pneg %p124
    $region22: #{_lambda_.23} parent=5 // pred_check_branch
      %127 = sbr.rel (%p125) target = $region24
    $region23: #{_lambda_.23} parent=5 // pred_region
      // Predicated region
      $region25: #{_lambda_.23} parent=23 // pred_check
        %p128 = pneg %p29
      $region26: #{_lambda_.23} parent=23 // pred_check_branch
        %130 = sbr.rel (%p128) target = $region28
      $region27: #{_lambda_.23} parent=23 // pred_region
        %p131 = scmp.lt.s32.totalorder %s9, 1
        %s132 = scalar_select %p131, %s9, 1
        %s133 = smul.addr %s132, 4
        %s134 = scalar_lea.vmem %s0, %s133
      $region28: #{_lambda_.23} parent=23 // pred_fallthru
        _
    $region24: #{_lambda_.23} parent=5 // pred_fallthru
      _
    %p135 = scmp.le.s32.totalorder 1, %s9
    %p136 = scmp.lt.s32.totalorder %s9, 3
    %p137 = pnand %p135, %p136
    %p138 = pneg %p137
    // Predicated region
    $region29: #{_lambda_.23} parent=5 // pred_check
      _
    $region30: #{_lambda_.23} parent=5 // pred_check_branch
      %140 = sbr.rel (%p137) target = $region32
    $region31: #{_lambda_.23} parent=5 // pred_region
      %s141 = ssub.s32 %s9, 1
      %p142 = scmp.lt.s32.totalorder %s14, 1
      %s143 = scalar_select %p142, %s14, 1
      %s144 = smul.addr %s143, 4
      %s145 = scalar_lea.vmem %s0, %s144
      %p146 = pneg %p35
      %p147 = pneg %p32
      %p148 = pneg %p56
      %p149 = pneg %p53
      %p150 = pneg %p77
      %p151 = pneg %p74
      %p152 = pneg %p103
      %p153 = pneg %p100
      %p154 = scmp.lt.s32.totalorder %s14, 1
      %s155 = scalar_select %p154, %s14, 1
      %s156 = smul.addr %s155, 2
      %s157 = scalar_lea.vmem %s3, %s156
      %p158 = scmp.lt.s32.totalorder %s14, 1
      %s159 = scalar_select %p158, %s14, 1
      %s160 = smul.addr %s159, 4
      %s161 = scalar_lea.vmem %s0, %s160
      %p162 = scmp.lt.s32.totalorder %s14, 1
      %s163 = scalar_select %p162, %s14, 1
      %s164 = smul.addr %s163, 2
      %s165 = scalar_lea.vmem %s3, %s164
      %v167 = vld [vmem:[%s161] sm:$0x3]
      %v168 = vld [vmem:[%s1] sm:$0xf]
      %v169 = vld [vmem:[%s1 + $0x4] sm:$0xf]
      %v170 = vld [vmem:[%s1 + $0x8] sm:$0xf]
      %v171 = vld [vmem:[%s1 + $0xc] sm:$0xf]
      %v172 = vld [vmem:[%s1 + $0x10] sm:$0xf]
      %v173 = vld [vmem:[%s1 + $0x14] sm:$0xf]
      %v174 = vld [vmem:[%s1 + $0x18] sm:$0xf]
      %v175 = vld [vmem:[%s1 + $0x1c] sm:$0xf]
      %v176 = vld [vmem:[%s1 + $0x20] sm:$0xf]
      %v177 = vld [vmem:[%s1 + $0x24] sm:$0xf]
      %v178 = vld [vmem:[%s1 + $0x28] sm:$0xf]
      %v179 = vld [vmem:[%s1 + $0x2c] sm:$0xf]
      %v180 = vld [vmem:[%s1 + $0x30] sm:$0xf]
      %v181 = vld [vmem:[%s1 + $0x34] sm:$0xf]
      %v182 = vld [vmem:[%s1 + $0x38] sm:$0xf]
      %v183 = vld [vmem:[%s1 + $0x3c] sm:$0xf]
      %v184 = vld [vmem:[%s161] sm:$0x7]
      %s185 = scalar_lea.vmem %s1, 64
      %v186 = vld [vmem:[%s185] sm:$0xf]
      %v187 = vld [vmem:[%s185 + $0x4] sm:$0xf]
      %v188 = vld [vmem:[%s185 + $0x8] sm:$0xf]
      %v189 = vld [vmem:[%s185 + $0xc] sm:$0xf]
      %v190 = vld [vmem:[%s185 + $0x10] sm:$0xf]
      %v191 = vld [vmem:[%s185 + $0x14] sm:$0xf]
      %v192 = vld [vmem:[%s185 + $0x18] sm:$0xf]
      %v193 = vld [vmem:[%s185 + $0x1c] sm:$0xf]
      %v194 = vld [vmem:[%s185 + $0x20] sm:$0xf]
      %v195 = vld [vmem:[%s185 + $0x24] sm:$0xf]
      %v196 = vld [vmem:[%s185 + $0x28] sm:$0xf]
      %v197 = vld [vmem:[%s185 + $0x2c] sm:$0xf]
      %v198 = vld [vmem:[%s185 + $0x30] sm:$0xf]
      %v199 = vld [vmem:[%s185 + $0x34] sm:$0xf]
      %v200 = vld [vmem:[%s185 + $0x38] sm:$0xf]
      %v201 = vld [vmem:[%s185 + $0x3c] sm:$0xf]
      %v203 = vunpack.c.l.b16 %v184
      %v204 = vpack.c.b16 %v203, %v203
      %v206 = vshrl.u32 %v204, 16
      %v208 = vshll.u32 %v204, 16
      %v210 = vrot.slane %v208, 1
      %v211 = vor.u32 %v206, %v210
      %v229 = vunpack.c.l.b16 %v186
      %v230 = vunpack.c.l.b16 %v187
      %v231 = vunpack.c.l.b16 %v188
      %v232 = vunpack.c.l.b16 %v189
      %v233 = vunpack.c.l.b16 %v190
      %v234 = vunpack.c.l.b16 %v191
      %v235 = vunpack.c.l.b16 %v192
      %v236 = vunpack.c.l.b16 %v193
      %v237 = vunpack.c.l.b16 %v194
      %v238 = vunpack.c.l.b16 %v195
      %v239 = vunpack.c.l.b16 %v196
      %v240 = vunpack.c.l.b16 %v197
      %v241 = vunpack.c.l.b16 %v198
      %v242 = vunpack.c.l.b16 %v199
      %v243 = vunpack.c.l.b16 %v200
      %v244 = vunpack.c.l.b16 %v201
      %v245 = vpack.c.b16 %v230, %v229
      %v246 = vpack.c.b16 %v232, %v231
      %v247 = vpack.c.b16 %v234, %v233
      %v248 = vpack.c.b16 %v236, %v235
      %v249 = vpack.c.b16 %v238, %v237
      %v250 = vpack.c.b16 %v240, %v239
      %v251 = vpack.c.b16 %v242, %v241
      %v252 = vpack.c.b16 %v244, %v243
      %261 = vmatprep.subr.bf16.mxu0 0
      %262 = vmatpush1.bf16.msra.mxu0 %v252
      %263 = vmatprep.subr.bf16.mxu0 0
      %264 = vmatpush1.bf16.msra.mxu0 %v251
      %265 = vmatprep.subr.bf16.mxu0 0
      %266 = vmatpush1.bf16.msra.mxu0 %v250
      %267 = vmatprep.subr.bf16.mxu0 0
      %268 = vmatpush1.bf16.msra.mxu0 %v249
      %269 = vmatprep.subr.bf16.mxu0 0
      %270 = vmatpush1.bf16.msra.mxu0 %v248
      %271 = vmatprep.subr.bf16.mxu0 0
      %272 = vmatpush1.bf16.msra.mxu0 %v247
      %273 = vmatprep.subr.bf16.mxu0 0
      %274 = vmatpush1.bf16.msra.mxu0 %v246
      %275 = vmatprep.subr.bf16.mxu0 0
      %276 = vmatpush1.bf16.msra.mxu0 %v245
      %277 = vmatprep.subr.bf16.mxu0 0
      %278 = vmatpush2.bf16.msra.mxu0 0
      %279 = vmatprep.subr.bf16.mxu0 0
      %280 = vmatpush2.bf16.msra.mxu0 0
      %281 = vmatprep.subr.bf16.mxu0 0
      %282 = vmatpush2.bf16.msra.mxu0 0
      %283 = vmatprep.subr.bf16.mxu0 0
      %284 = vmatpush2.bf16.msra.mxu0 0
      %285 = vmatprep.subr.bf16.mxu0 0
      %286 = vmatpush2.bf16.msra.mxu0 0
      %287 = vmatprep.subr.bf16.mxu0 0
      %288 = vmatpush2.bf16.msra.mxu0 0
      %289 = vmatprep.subr.bf16.mxu0 0
      %290 = vmatpush2.bf16.msra.mxu0 0
      %291 = vmatprep.subr.bf16.mxu0 0
      %292 = vmatpush2.bf16.msra.mxu0 0
      %293 = vmatprep.mubr.bf16.mxu0 0
      %294 = vmatmul.mubr.bf16.gmra.mxu0 %v211
      %v295 = vpop.f32.mrf.mxu0
      %v296 = vadd.f32 0.0, %v295
      %v297 = vpop.f32.mrf.mxu0
      %v298 = vpop.f32.mrf.mxu0
      %v299 = vpop.f32.mrf.mxu0
      %300 = vdwg.mxu0
      %v317 = vunpack.c.l.b16 %v168
      %v318 = vunpack.c.l.b16 %v169
      %v319 = vunpack.c.l.b16 %v170
      %v320 = vunpack.c.l.b16 %v171
      %v321 = vunpack.c.l.b16 %v172
      %v322 = vunpack.c.l.b16 %v173
      %v323 = vunpack.c.l.b16 %v174
      %v324 = vunpack.c.l.b16 %v175
      %v325 = vunpack.c.l.b16 %v176
      %v326 = vunpack.c.l.b16 %v177
      %v327 = vunpack.c.l.b16 %v178
      %v328 = vunpack.c.l.b16 %v179
      %v329 = vunpack.c.l.b16 %v180
      %v330 = vunpack.c.l.b16 %v181
      %v331 = vunpack.c.l.b16 %v182
      %v332 = vunpack.c.l.b16 %v183
      %v333 = vpack.c.b16 %v318, %v317
      %v334 = vpack.c.b16 %v320, %v319
      %v335 = vpack.c.b16 %v322, %v321
      %v336 = vpack.c.b16 %v324, %v323
      %v337 = vpack.c.b16 %v326, %v325
      %v338 = vpack.c.b16 %v328, %v327
      %v339 = vpack.c.b16 %v330, %v329
      %v340 = vpack.c.b16 %v332, %v331
      %349 = vmatprep.subr.bf16.mxu0 0
      %350 = vmatpush1.bf16.msra.mxu0 %v340
      %351 = vmatprep.subr.bf16.mxu0 0
      %352 = vmatpush1.bf16.msra.mxu0 %v339
      %353 = vmatprep.subr.bf16.mxu0 0
      %354 = vmatpush1.bf16.msra.mxu0 %v338
      %355 = vmatprep.subr.bf16.mxu0 0
      %356 = vmatpush1.bf16.msra.mxu0 %v337
      %357 = vmatprep.subr.bf16.mxu0 0
      %358 = vmatpush1.bf16.msra.mxu0 %v336
      %359 = vmatprep.subr.bf16.mxu0 0
      %360 = vmatpush1.bf16.msra.mxu0 %v335
      %361 = vmatprep.subr.bf16.mxu0 0
      %362 = vmatpush1.bf16.msra.mxu0 %v334
      %363 = vmatprep.subr.bf16.mxu0 0
      %364 = vmatpush1.bf16.msra.mxu0 %v333
      %365 = vmatprep.subr.bf16.mxu0 0
      %366 = vmatpush2.bf16.msra.mxu0 0
      %367 = vmatprep.subr.bf16.mxu0 0
      %368 = vmatpush2.bf16.msra.mxu0 0
      %369 = vmatprep.subr.bf16.mxu0 0
      %370 = vmatpush2.bf16.msra.mxu0 0
      %371 = vmatprep.subr.bf16.mxu0 0
      %372 = vmatpush2.bf16.msra.mxu0 0
      %373 = vmatprep.subr.bf16.mxu0 0
      %374 = vmatpush2.bf16.msra.mxu0 0
      %375 = vmatprep.subr.bf16.mxu0 0
      %376 = vmatpush2.bf16.msra.mxu0 0
      %377 = vmatprep.subr.bf16.mxu0 0
      %378 = vmatpush2.bf16.msra.mxu0 0
      %379 = vmatprep.subr.bf16.mxu0 0
      %380 = vmatpush2.bf16.msra.mxu0 0
      %381 = vmatprep.mubr.bf16.mxu0 0
      %382 = vmatmul.mubr.bf16.gmra.mxu0 %v167
      %v383 = vpop.f32.mrf.mxu0
      %v384 = vadd.f32 %v296, %v383
      %v385 = vpop.f32.mrf.mxu0
      %v386 = vpop.f32.mrf.mxu0
      %v387 = vpop.f32.mrf.mxu0
      %388 = vdwg.mxu0
      %v389 = vld [vmem:[%s161] sm:$0x6]
      %s390 = scalar_lea.vmem %s1, 128
      %v391 = vld [vmem:[%s390] sm:$0xf]
      %v392 = vld [vmem:[%s390 + $0x4] sm:$0xf]
      %v393 = vld [vmem:[%s390 + $0x8] sm:$0xf]
      %v394 = vld [vmem:[%s390 + $0xc] sm:$0xf]
      %v395 = vld [vmem:[%s390 + $0x10] sm:$0xf]
      %v396 = vld [vmem:[%s390 + $0x14] sm:$0xf]
      %v397 = vld [vmem:[%s390 + $0x18] sm:$0xf]
      %v398 = vld [vmem:[%s390 + $0x1c] sm:$0xf]
      %v399 = vld [vmem:[%s390 + $0x20] sm:$0xf]
      %v400 = vld [vmem:[%s390 + $0x24] sm:$0xf]
      %v401 = vld [vmem:[%s390 + $0x28] sm:$0xf]
      %v402 = vld [vmem:[%s390 + $0x2c] sm:$0xf]
      %v403 = vld [vmem:[%s390 + $0x30] sm:$0xf]
      %v404 = vld [vmem:[%s390 + $0x34] sm:$0xf]
      %v405 = vld [vmem:[%s390 + $0x38] sm:$0xf]
      %v406 = vld [vmem:[%s390 + $0x3c] sm:$0xf]
      %v408 = vunpack.c.l.b16 %v389
      %v409 = vpack.c.b16 %v408, %v408
      %v410 = vrot.slane %v409, 1
      %v428 = vunpack.c.l.b16 %v391
      %v429 = vunpack.c.l.b16 %v392
      %v430 = vunpack.c.l.b16 %v393
      %v431 = vunpack.c.l.b16 %v394
      %v432 = vunpack.c.l.b16 %v395
      %v433 = vunpack.c.l.b16 %v396
      %v434 = vunpack.c.l.b16 %v397
      %v435 = vunpack.c.l.b16 %v398
      %v436 = vunpack.c.l.b16 %v399
      %v437 = vunpack.c.l.b16 %v400
      %v438 = vunpack.c.l.b16 %v401
      %v439 = vunpack.c.l.b16 %v402
      %v440 = vunpack.c.l.b16 %v403
      %v441 = vunpack.c.l.b16 %v404
      %v442 = vunpack.c.l.b16 %v405
      %v443 = vunpack.c.l.b16 %v406
      %v444 = vpack.c.b16 %v429, %v428
      %v445 = vpack.c.b16 %v431, %v430
      %v446 = vpack.c.b16 %v433, %v432
      %v447 = vpack.c.b16 %v435, %v434
      %v448 = vpack.c.b16 %v437, %v436
      %v449 = vpack.c.b16 %v439, %v438
      %v450 = vpack.c.b16 %v441, %v440
      %v451 = vpack.c.b16 %v443, %v442
      %460 = vmatprep.subr.bf16.mxu0 0
      %461 = vmatpush1.bf16.msra.mxu0 %v451
      %462 = vmatprep.subr.bf16.mxu0 0
      %463 = vmatpush1.bf16.msra.mxu0 %v450
      %464 = vmatprep.subr.bf16.mxu0 0
      %465 = vmatpush1.bf16.msra.mxu0 %v449
      %466 = vmatprep.subr.bf16.mxu0 0
      %467 = vmatpush1.bf16.msra.mxu0 %v448
      %468 = vmatprep.subr.bf16.mxu0 0
      %469 = vmatpush1.bf16.msra.mxu0 %v447
      %470 = vmatprep.subr.bf16.mxu0 0
      %471 = vmatpush1.bf16.msra.mxu0 %v446
      %472 = vmatprep.subr.bf16.mxu0 0
      %473 = vmatpush1.bf16.msra.mxu0 %v445
      %474 = vmatprep.subr.bf16.mxu0 0
      %475 = vmatpush1.bf16.msra.mxu0 %v444
      %476 = vmatprep.subr.bf16.mxu0 0
      %477 = vmatpush2.bf16.msra.mxu0 0
      %478 = vmatprep.subr.bf16.mxu0 0
      %479 = vmatpush2.bf16.msra.mxu0 0
      %480 = vmatprep.subr.bf16.mxu0 0
      %481 = vmatpush2.bf16.msra.mxu0 0
      %482 = vmatprep.subr.bf16.mxu0 0
      %483 = vmatpush2.bf16.msra.mxu0 0
      %484 = vmatprep.subr.bf16.mxu0 0
      %485 = vmatpush2.bf16.msra.mxu0 0
      %486 = vmatprep.subr.bf16.mxu0 0
      %487 = vmatpush2.bf16.msra.mxu0 0
      %488 = vmatprep.subr.bf16.mxu0 0
      %489 = vmatpush2.bf16.msra.mxu0 0
      %490 = vmatprep.subr.bf16.mxu0 0
      %491 = vmatpush2.bf16.msra.mxu0 0
      %492 = vmatprep.mubr.bf16.mxu0 0
      %493 = vmatmul.mubr.bf16.gmra.mxu0 %v410
      %v494 = vpop.f32.mrf.mxu0
      %v495 = vadd.f32 0.0, %v494
      %v496 = vpop.f32.mrf.mxu0
      %v497 = vpop.f32.mrf.mxu0
      %v498 = vpop.f32.mrf.mxu0
      %499 = vdwg.mxu0
      %v500 = vadd.f32 %v384, %v495
      %v501 = vld [vmem:[%s2] sm:$0x1]
      %v503 = vlaneseq
      %v504 = vshrl.u32 %v503, 7
      %v505 = vsub.s32 0, %v504
      %v506 = vrot.slane %v501, %v505
      %v508 = vadd.f32 %v500, %v506
      %v509 = vmax.f32 %v508, 0.0
      %v510 = vpack.c.bf16 %v509, %v509
      %511 = vst [vmem:[%s165] sm:$0x3] %v510
      %p512 = scmp.lt.s32.totalorder %s14, 1
      %s513 = scalar_select %p512, %s14, 1
      %s514 = smul.addr %s513, 2
      %s515 = scalar_lea.vmem %s3, %s514
      // Predicated region
      $region33: #{_lambda_.23} parent=31 // pred_check
        %p516 = pneg %p100
      $region34: #{_lambda_.23} parent=31 // pred_check_branch
        %518 = sbr.rel (%p516) target = $region36
      $region35: #{_lambda_.23} parent=31 // pred_region
        _
      $region36: #{_lambda_.23} parent=31 // pred_fallthru
        _
    $region32: #{_lambda_.23} parent=5 // pred_fallthru
      _
    %p519 = scmp.le.s32.totalorder 2, %s9
    // Predicated region
    $region37: #{_lambda_.23} parent=5 // pred_check
      %p520 = pneg %p519
    $region38: #{_lambda_.23} parent=5 // pred_check_branch
      %522 = sbr.rel (%p520) target = $region40
    $region39: #{_lambda_.23} parent=5 // pred_region
      %s523 = ssub.s32 %s9, 2
      // Predicated region
      $region41: #{_lambda_.23} parent=39 // pred_check
        %p524 = pneg %p106
      $region42: #{_lambda_.23} parent=39 // pred_check_branch
        %526 = sbr.rel (%p524) target = $region44
      $region43: #{_lambda_.23} parent=39 // pred_region
        %p527 = scmp.lt.s32.totalorder %s15, 1
        %s528 = scalar_select %p527, %s15, 1
        %s529 = smul.addr %s528, 2
        %s530 = scalar_lea.vmem %s3, %s529
      $region44: #{_lambda_.23} parent=39 // pred_fallthru
        _
    $region40: #{_lambda_.23} parent=5 // pred_fallthru
      _
  $region6: #{_lambda_.23} parent=0 // loop_footer
    %s13 = sadd.s32 1, %s9
  $region7: #{_lambda_.23} parent=0 // loop_footer_branch
    %8 = sbr.rel target = $region3
  $region8: #{_lambda_.23} parent=0 // loop_exit
    _

// kernel: _lambda_.24
$region0: #{_lambda_.24}
  #allocation0 [shape = 'u32[]', space=smem, size = 0x4, offset = 0x4, fixed_abs, tag = 'smem constant byte address 0x4 - core index']
  #allocation1 [shape = 'u32[144,128]{1,0:T(1,128)}', space=vmem, size = 0x12000, scoped, tag = 'internal scratch']
  %s0 = inlined_call_operand.vmem [shape: bf16[2,6,128], index: 0, kind: input, shape index: {}]
  %s1 = inlined_call_operand.vmem [shape: bf16[3,128,256], index: 1, kind: input, shape index: {}]
  %s2 = inlined_call_operand.vmem [shape: f32[1,256], index: 2, kind: input, shape index: {}]
  %s3 = inlined_call_operand.vmem [shape: bf16[2,4,256], index: 3, kind: output, shape index: {}]
  %s4 = sld [smem:[#allocation0]]
  $region45: #{_lambda_.24} parent=0
    _
  %s6 = ssub.s32 1, %s4
  %s7 = scalar_select 0, %s6, %s4
  loop: start=0, step=1, limit=4
  $region2: #{_lambda_.24} parent=0 // loop_pre_header
    _
  $region3: #{_lambda_.24} parent=0 // loop_header
    %s9 = sphi 0, %s13
    %p10 = scmp.ge.s32.totalorder %s9, 4
    %s19 = sphi 0, %s21
    %s22 = sphi 0, %s19
    %s23 = sphi 0, %s22
    %s39 = sphi 0, %s23
    %s43 = sphi 0, %s43
    %s45 = sphi 0, %s43
    %s46 = sphi 0, %s45
    %s60 = sphi 0, %s46
    %s64 = sphi 0, %s64
    %s66 = sphi 0, %s64
    %s67 = sphi 0, %s66
    %s81 = sphi 0, %s67
    %s87 = sphi 0, %s89
    %s90 = sphi 0, %s87
    %s91 = sphi 0, %s90
    %s107 = sphi 0, %s91
  $region4: #{_lambda_.24} parent=0 // loop_header_branch
    %12 = sbr.rel (%p10) target = $region8
  $region5: #{_lambda_.24} parent=0 // loop_body
    %s14 = ssub.s32 %s9, 1
    %s15 = ssub.s32 %s9, 2
    %s16 = sadd.s32 %s9, 1
    %s17 = ssub.s32 %s9, %s16
    %p18 = scmp.eq.s32.totalorder %s17, 0
    %s20 = sadd.s32 %s19, 1
    %s21 = scalar_select %p18, %s19, %s20
    %p24 = pneg %p18
    %p25 = scmp.eq.s32.totalorder %s9, 1
    %p26 = por %p24, %p25
    %p27 = scmp.ne.s32.totalorder %s19, %s22
    %p28 = scmp.eq.s32.totalorder %s9, 0
    %p29 = por %p27, %p28
    %p30 = scmp.ne.s32.totalorder %s19, %s22
    %p31 = scmp.eq.s32.totalorder %s14, 1
    %p32 = por %p30, %p31
    %p33 = scmp.ne.s32.totalorder %s22, %s23
    %p34 = scmp.eq.s32.totalorder %s14, 0
    %p35 = por %p33, %p34
    %p36 = scmp.ne.s32.totalorder %s22, %s23
    %p37 = scmp.eq.s32.totalorder %s15, 1
    %p38 = por %p36, %p37
    %p40 = scmp.ne.s32.totalorder %s23, %s39
    %p41 = scmp.eq.s32.totalorder %s15, 0
    %p42 = por %p40, %p41
    %s44 = sadd.s32 %s43, 1
    %p47 = scmp.eq.s32.totalorder %s9, 1
    %p48 = scmp.ne.s32.totalorder %s43, %s45
    %p49 = scmp.eq.s32.totalorder %s9, 0
    %p50 = por %p48, %p49
    %p51 = scmp.ne.s32.totalorder %s43, %s45
    %p52 = scmp.eq.s32.totalorder %s14, 1
    %p53 = por %p51, %p52
    %p54 = scmp.ne.s32.totalorder %s45, %s46
    %p55 = scmp.eq.s32.totalorder %s14, 0
    %p56 = por %p54, %p55
    %p57 = scmp.ne.s32.totalorder %s45, %s46
    %p58 = scmp.eq.s32.totalorder %s15, 1
    %p59 = por %p57, %p58
    %p61 = scmp.ne.s32.totalorder %s46, %s60
    %p62 = scmp.eq.s32.totalorder %s15, 0
    %p63 = por %p61, %p62
    %s65 = sadd.s32 %s64, 1
    %p68 = scmp.eq.s32.totalorder %s9, 1
    %p69 = scmp.ne.s32.totalorder %s64, %s66
    %p70 = scmp.eq.s32.totalorder %s9, 0
    %p71 = por %p69, %p70
    %p72 = scmp.ne.s32.totalorder %s64, %s66
    %p73 = scmp.eq.s32.totalorder %s14, 1
    %p74 = por %p72, %p73
    %p75 = scmp.ne.s32.totalorder %s66, %s67
    %p76 = scmp.eq.s32.totalorder %s14, 0
    %p77 = por %p75, %p76
    %p78 = scmp.ne.s32.totalorder %s66, %s67
    %p79 = scmp.eq.s32.totalorder %s15, 1
    %p80 = por %p78, %p79
    %p82 = scmp.ne.s32.totalorder %s67, %s81
    %p83 = scmp.eq.s32.totalorder %s15, 0
    %p84 = por %p82, %p83
    %s85 = ssub.s32 %s9, %s16
    %p86 = scmp.eq.s32.totalorder %s85, 0
    %s88 = sadd.s32 %s87, 1
    %s89 = scalar_select %p86, %s87, %s88
    %p92 = pneg %p86
    %p93 = scmp.eq.s32.totalorder %s9, 1
    %p94 = por %p92, %p93
    %p95 = scmp.ne.s32.totalorder %s87, %s90
    %p96 = scmp.eq.s32.totalorder %s9, 0
    %p97 = por %p95, %p96
    %p98 = scmp.ne.s32.totalorder %s87, %s90
    %p99 = scmp.eq.s32.totalorder %s14, 1
    %p100 = por %p98, %p99
    %p101 = scmp.ne.s32.totalorder %s90, %s91
    %p102 = scmp.eq.s32.totalorder %s14, 0
    %p103 = por %p101, %p102
    %p104 = scmp.ne.s32.totalorder %s90, %s91
    %p105 = scmp.eq.s32.totalorder %s15, 1
    %p106 = por %p104, %p105
    %p108 = scmp.ne.s32.totalorder %s91, %s107
    %p109 = scmp.eq.s32.totalorder %s15, 0
    %p110 = por %p108, %p109
    %p111 = scmp.le.s32.totalorder 1, %s9
    %p112 = scmp.lt.s32.totalorder %s9, 3
    %p113 = pnand %p111, %p112
    %p114 = pneg %p113
    // Predicated region
    $region9: #{_lambda_.24} parent=5 // pred_check
      _
    $region10: #{_lambda_.24} parent=5 // pred_check_branch
      %116 = sbr.rel (%p113) target = $region12
    $region11: #{_lambda_.24} parent=5 // pred_region
      %s117 = ssub.s32 %s9, 1
      // Predicated region
      $region13: #{_lambda_.24} parent=11 // pred_check
        %p118 = pneg %p56
      $region14: #{_lambda_.24} parent=11 // pred_check_branch
        %120 = sbr.rel (%p118) target = $region16
      $region15: #{_lambda_.24} parent=11 // pred_region
        _
      $region16: #{_lambda_.24} parent=11 // pred_fallthru
        _
      // Predicated region
      $region17: #{_lambda_.24} parent=11 // pred_check
        %p121 = pneg %p77
      $region18: #{_lambda_.24} parent=11 // pred_check_branch
        %123 = sbr.rel (%p121) target = $region20
      $region19: #{_lambda_.24} parent=11 // pred_region
        _
      $region20: #{_lambda_.24} parent=11 // pred_fallthru
        _
    $region12: #{_lambda_.24} parent=5 // pred_fallthru
      _
    %p124 = scmp.lt.s32.totalorder %s9, 2
    // Predicated region
    $region21: #{_lambda_.24} parent=5 // pred_check
      %p125 = pneg %p124
    $region22: #{_lambda_.24} parent=5 // pred_check_branch
      %127 = sbr.rel (%p125) target = $region24
    $region23: #{_lambda_.24} parent=5 // pred_region
      // Predicated region
      $region25: #{_lambda_.24} parent=23 // pred_check
        %p128 = pneg %p29
      $region26: #{_lambda_.24} parent=23 // pred_check_branch
        %130 = sbr.rel (%p128) target = $region28
      $region27: #{_lambda_.24} parent=23 // pred_region
        %p131 = scmp.lt.s32.totalorder %s9, 1
        %s132 = scalar_select %p131, %s9, 1
        %s133 = smul.addr %s132, 4
        %s134 = scalar_lea.vmem %s0, %s133
      $region28: #{_lambda_.24} parent=23 // pred_fallthru
        _
    $region24: #{_lambda_.24} parent=5 // pred_fallthru
      _
    %p135 = scmp.le.s32.totalorder 1, %s9
    %p136 = scmp.lt.s32.totalorder %s9, 3
    %p137 = pnand %p135, %p136
    %p138 = pneg %p137
    // Predicated region
    $region29: #{_lambda_.24} parent=5 // pred_check
      _
    $region30: #{_lambda_.24} parent=5 // pred_check_branch
      %140 = sbr.rel (%p137) target = $region32
    $region31: #{_lambda_.24} parent=5 // pred_region
      %s141 = ssub.s32 %s9, 1
      %p142 = scmp.lt.s32.totalorder %s14, 1
      %s143 = scalar_select %p142, %s14, 1
      %s144 = smul.addr %s143, 4
      %s145 = scalar_lea.vmem %s0, %s144
      %p146 = pneg %p35
      %p147 = pneg %p32
      %p148 = pneg %p56
      %p149 = pneg %p53
      %p150 = pneg %p77
      %p151 = pneg %p74
      %p152 = pneg %p103
      %p153 = pneg %p100
      %p154 = scmp.lt.s32.totalorder %s14, 1
      %s155 = scalar_select %p154, %s14, 1
      %s156 = smul.addr %s155, 2
      %s157 = smul.addr %s156, 2
      %s158 = scalar_lea.vmem %s3, %s157
      %p159 = scmp.lt.s32.totalorder %s14, 1
      %s160 = scalar_select %p159, %s14, 1
      %s161 = smul.addr %s160, 4
      %s162 = scalar_lea.vmem %s0, %s161
      %p163 = scmp.lt.s32.totalorder %s14, 1
      %s164 = scalar_select %p163, %s14, 1
      %s165 = smul.addr %s164, 2
      %s166 = smul.addr %s165, 2
      %s167 = scalar_lea.vmem %s3, %s166
      %v169 = vld [vmem:[%s162] sm:$0x3]
      %v170 = vld [vmem:[%s1] sm:$0xff]
      %v171 = vld [vmem:[%s1 + $0x8] sm:$0xff]
      %v172 = vld [vmem:[%s1 + $0x10] sm:$0xff]
      %v173 = vld [vmem:[%s1 + $0x18] sm:$0xff]
      %v174 = vld [vmem:[%s1 + $0x20] sm:$0xff]
      %v175 = vld [vmem:[%s1 + $0x28] sm:$0xff]
      %v176 = vld [vmem:[%s1 + $0x30] sm:$0xff]
      %v177 = vld [vmem:[%s1 + $0x38] sm:$0xff]
      %v178 = vld [vmem:[%s1 + $0x40] sm:$0xff]
      %v179 = vld [vmem:[%s1 + $0x48] sm:$0xff]
      %v180 = vld [vmem:[%s1 + $0x50] sm:$0xff]
      %v181 = vld [vmem:[%s1 + $0x58] sm:$0xff]
      %v182 = vld [vmem:[%s1 + $0x60] sm:$0xff]
      %v183 = vld [vmem:[%s1 + $0x68] sm:$0xff]
      %v184 = vld [vmem:[%s1 + $0x70] sm:$0xff]
      %v185 = vld [vmem:[%s1 + $0x78] sm:$0xff]
      %v186 = vld [vmem:[%s162] sm:$0x7]
      %s187 = scalar_lea.vmem %s1, 128
      %v188 = vld [vmem:[%s187] sm:$0xff]
      %v189 = vld [vmem:[%s187 + $0x8] sm:$0xff]
      %v190 = vld [vmem:[%s187 + $0x10] sm:$0xff]
      %v191 = vld [vmem:[%s187 + $0x18] sm:$0xff]
      %v192 = vld [vmem:[%s187 + $0x20] sm:$0xff]
      %v193 = vld [vmem:[%s187 + $0x28] sm:$0xff]
      %v194 = vld [vmem:[%s187 + $0x30] sm:$0xff]
      %v195 = vld [vmem:[%s187 + $0x38] sm:$0xff]
      %v196 = vld [vmem:[%s187 + $0x40] sm:$0xff]
      %v197 = vld [vmem:[%s187 + $0x48] sm:$0xff]
      %v198 = vld [vmem:[%s187 + $0x50] sm:$0xff]
      %v199 = vld [vmem:[%s187 + $0x58] sm:$0xff]
      %v200 = vld [vmem:[%s187 + $0x60] sm:$0xff]
      %v201 = vld [vmem:[%s187 + $0x68] sm:$0xff]
      %v202 = vld [vmem:[%s187 + $0x70] sm:$0xff]
      %v203 = vld [vmem:[%s187 + $0x78] sm:$0xff]
      %v205 = vunpack.c.l.b16 %v186
      %v206 = vpack.c.b16 %v205, %v205
      %v208 = vshrl.u32 %v206, 16
      %v210 = vshll.u32 %v206, 16
      %v212 = vrot.slane %v210, 1
      %v213 = vor.u32 %v208, %v212
      %v231 = vunpack.c.l.b16 %v188
      %v232 = vunpack.c.h.b16 %v188
      %v233 = vunpack.c.l.b16 %v189
      %v234 = vunpack.c.h.b16 %v189
      %v235 = vunpack.c.l.b16 %v190
      %v236 = vunpack.c.h.b16 %v190
      %v237 = vunpack.c.l.b16 %v191
      %v238 = vunpack.c.h.b16 %v191
      %v239 = vunpack.c.l.b16 %v192
      %v240 = vunpack.c.h.b16 %v192
      %v241 = vunpack.c.l.b16 %v193
      %v242 = vunpack.c.h.b16 %v193
      %v243 = vunpack.c.l.b16 %v194
      %v244 = vunpack.c.h.b16 %v194
      %v245 = vunpack.c.l.b16 %v195
      %v246 = vunpack.c.h.b16 %v195
      %v247 = vunpack.c.l.b16 %v196
      %v248 = vunpack.c.h.b16 %v196
      %v249 = vunpack.c.l.b16 %v197
      %v250 = vunpack.c.h.b16 %v197
      %v251 = vunpack.c.l.b16 %v198
      %v252 = vunpack.c.h.b16 %v198
      %v253 = vunpack.c.l.b16 %v199
      %v254 = vunpack.c.h.b16 %v199
      %v255 = vunpack.c.l.b16 %v200
      %v256 = vunpack.c.h.b16 %v200
      %v257 = vunpack.c.l.b16 %v201
      %v258 = vunpack.c.h.b16 %v201
      %v259 = vunpack.c.l.b16 %v202
      %v260 = vunpack.c.h.b16 %v202
      %v261 = vunpack.c.l.b16 %v203
      %v262 = vunpack.c.h.b16 %v203
      %v263 = vpack.c.b16 %v233, %v231
      %v264 = vpack.c.b16 %v234, %v232
      %v265 = vpack.c.b16 %v237, %v235
      %v266 = vpack.c.b16 %v238, %v236
      %v267 = vpack.c.b16 %v241, %v239
      %v268 = vpack.c.b16 %v242, %v240
      %v269 = vpack.c.b16 %v245, %v243
      %v270 = vpack.c.b16 %v246, %v244
      %v271 = vpack.c.b16 %v249, %v247
      %v272 = vpack.c.b16 %v250, %v248
      %v273 = vpack.c.b16 %v253, %v251
      %v274 = vpack.c.b16 %v254, %v252
      %v275 = vpack.c.b16 %v257, %v255
      %v276 = vpack.c.b16 %v258, %v256
      %v277 = vpack.c.b16 %v261, %v259
      %v278 = vpack.c.b16 %v262, %v260
      %295 = vmatprep.subr.bf16.mxu0 %v278
      %296 = vmatpush1.bf16.msra.mxu0 %v277
      %297 = vmatprep.subr.bf16.mxu0 %v276
      %298 = vmatpush1.bf16.msra.mxu0 %v275
      %299 = vmatprep.subr.bf16.mxu0 %v274
      %300 = vmatpush1.bf16.msra.mxu0 %v273
      %301 = vmatprep.subr.bf16.mxu0 %v272
      %302 = vmatpush1.bf16.msra.mxu0 %v271
      %303 = vmatprep.subr.bf16.mxu0 %v270
      %304 = vmatpush1.bf16.msra.mxu0 %v269
      %305 = vmatprep.subr.bf16.mxu0 %v268
      %306 = vmatpush1.bf16.msra.mxu0 %v267
      %307 = vmatprep.subr.bf16.mxu0 %v266
      %308 = vmatpush1.bf16.msra.mxu0 %v265
      %309 = vmatprep.subr.bf16.mxu0 %v264
      %310 = vmatpush1.bf16.msra.mxu0 %v263
      %311 = vmatprep.subr.bf16.mxu0 0
      %312 = vmatpush2.bf16.msra.mxu0 0
      %313 = vmatprep.subr.bf16.mxu0 0
      %314 = vmatpush2.bf16.msra.mxu0 0
      %315 = vmatprep.subr.bf16.mxu0 0
      %316 = vmatpush2.bf16.msra.mxu0 0
      %317 = vmatprep.subr.bf16.mxu0 0
      %318 = vmatpush2.bf16.msra.mxu0 0
      %319 = vmatprep.subr.bf16.mxu0 0
      %320 = vmatpush2.bf16.msra.mxu0 0
      %321 = vmatprep.subr.bf16.mxu0 0
      %322 = vmatpush2.bf16.msra.mxu0 0
      %323 = vmatprep.subr.bf16.mxu0 0
      %324 = vmatpush2.bf16.msra.mxu0 0
      %325 = vmatprep.subr.bf16.mxu0 0
      %326 = vmatpush2.bf16.msra.mxu0 0
      %327 = vmatprep.mubr.bf16.mxu0 0
      %328 = vmatmul.mubr.bf16.gmra.mxu0 %v213
      %v329 = vpop.f32.mrf.mxu0
      %v330 = vadd.f32 0.0, %v329
      %v331 = vpop.f32.mrf.mxu0
      %v332 = vadd.f32 0.0, %v331
      %v333 = vpop.f32.mrf.mxu0
      %v334 = vpop.f32.mrf.mxu0
      %335 = vdwg.mxu0
      %v352 = vunpack.c.l.b16 %v170
      %v353 = vunpack.c.h.b16 %v170
      %v354 = vunpack.c.l.b16 %v171
      %v355 = vunpack.c.h.b16 %v171
      %v356 = vunpack.c.l.b16 %v172
      %v357 = vunpack.c.h.b16 %v172
      %v358 = vunpack.c.l.b16 %v173
      %v359 = vunpack.c.h.b16 %v173
      %v360 = vunpack.c.l.b16 %v174
      %v361 = vunpack.c.h.b16 %v174
      %v362 = vunpack.c.l.b16 %v175
      %v363 = vunpack.c.h.b16 %v175
      %v364 = vunpack.c.l.b16 %v176
      %v365 = vunpack.c.h.b16 %v176
      %v366 = vunpack.c.l.b16 %v177
      %v367 = vunpack.c.h.b16 %v177
      %v368 = vunpack.c.l.b16 %v178
      %v369 = vunpack.c.h.b16 %v178
      %v370 = vunpack.c.l.b16 %v179
      %v371 = vunpack.c.h.b16 %v179
      %v372 = vunpack.c.l.b16 %v180
      %v373 = vunpack.c.h.b16 %v180
      %v374 = vunpack.c.l.b16 %v181
      %v375 = vunpack.c.h.b16 %v181
      %v376 = vunpack.c.l.b16 %v182
      %v377 = vunpack.c.h.b16 %v182
      %v378 = vunpack.c.l.b16 %v183
      %v379 = vunpack.c.h.b16 %v183
      %v380 = vunpack.c.l.b16 %v184
      %v381 = vunpack.c.h.b16 %v184
      %v382 = vunpack.c.l.b16 %v185
      %v383 = vunpack.c.h.b16 %v185
      %v384 = vpack.c.b16 %v354, %v352
      %v385 = vpack.c.b16 %v355, %v353
      %v386 = vpack.c.b16 %v358, %v356
      %v387 = vpack.c.b16 %v359, %v357
      %v388 = vpack.c.b16 %v362, %v360
      %v389 = vpack.c.b16 %v363, %v361
      %v390 = vpack.c.b16 %v366, %v364
      %v391 = vpack.c.b16 %v367, %v365
      %v392 = vpack.c.b16 %v370, %v368
      %v393 = vpack.c.b16 %v371, %v369
      %v394 = vpack.c.b16 %v374, %v372
      %v395 = vpack.c.b16 %v375, %v373
      %v396 = vpack.c.b16 %v378, %v376
      %v397 = vpack.c.b16 %v379, %v377
      %v398 = vpack.c.b16 %v382, %v380
      %v399 = vpack.c.b16 %v383, %v381
      %416 = vmatprep.subr.bf16.mxu0 %v399
      %417 = vmatpush1.bf16.msra.mxu0 %v398
      %418 = vmatprep.subr.bf16.mxu0 %v397
      %419 = vmatpush1.bf16.msra.mxu0 %v396
      %420 = vmatprep.subr.bf16.mxu0 %v395
      %421 = vmatpush1.bf16.msra.mxu0 %v394
      %422 = vmatprep.subr.bf16.mxu0 %v393
      %423 = vmatpush1.bf16.msra.mxu0 %v392
      %424 = vmatprep.subr.bf16.mxu0 %v391
      %425 = vmatpush1.bf16.msra.mxu0 %v390
      %426 = vmatprep.subr.bf16.mxu0 %v389
      %427 = vmatpush1.bf16.msra.mxu0 %v388
      %428 = vmatprep.subr.bf16.mxu0 %v387
      %429 = vmatpush1.bf16.msra.mxu0 %v386
      %430 = vmatprep.subr.bf16.mxu0 %v385
      %431 = vmatpush1.bf16.msra.mxu0 %v384
      %432 = vmatprep.subr.bf16.mxu0 0
      %433 = vmatpush2.bf16.msra.mxu0 0
      %434 = vmatprep.subr.bf16.mxu0 0
      %435 = vmatpush2.bf16.msra.mxu0 0
      %436 = vmatprep.subr.bf16.mxu0 0
      %437 = vmatpush2.bf16.msra.mxu0 0
      %438 = vmatprep.subr.bf16.mxu0 0
      %439 = vmatpush2.bf16.msra.mxu0 0
      %440 = vmatprep.subr.bf16.mxu0 0
      %441 = vmatpush2.bf16.msra.mxu0 0
      %442 = vmatprep.subr.bf16.mxu0 0
      %443 = vmatpush2.bf16.msra.mxu0 0
      %444 = vmatprep.subr.bf16.mxu0 0
      %445 = vmatpush2.bf16.msra.mxu0 0
      %446 = vmatprep.subr.bf16.mxu0 0
      %447 = vmatpush2.bf16.msra.mxu0 0
      %448 = vmatprep.mubr.bf16.mxu0 0
      %449 = vmatmul.mubr.bf16.gmra.mxu0 %v169
      %v450 = vpop.f32.mrf.mxu0
      %v451 = vadd.f32 %v330, %v450
      %v452 = vpop.f32.mrf.mxu0
      %v453 = vadd.f32 %v332, %v452
      %v454 = vpop.f32.mrf.mxu0
      %v455 = vpop.f32.mrf.mxu0
      %456 = vdwg.mxu0
      %v457 = vld [vmem:[%s162] sm:$0x6]
      %s458 = scalar_lea.vmem %s1, 256
      %v459 = vld [vmem:[%s458] sm:$0xff]
      %v460 = vld [vmem:[%s458 + $0x8] sm:$0xff]
      %v461 = vld [vmem:[%s458 + $0x10] sm:$0xff]
      %v462 = vld [vmem:[%s458 + $0x18] sm:$0xff]
      %v463 = vld [vmem:[%s458 + $0x20] sm:$0xff]
      %v464 = vld [vmem:[%s458 + $0x28] sm:$0xff]
      %v465 = vld [vmem:[%s458 + $0x30] sm:$0xff]
      %v466 = vld [vmem:[%s458 + $0x38] sm:$0xff]
      %v467 = vld [vmem:[%s458 + $0x40] sm:$0xff]
      %v468 = vld [vmem:[%s458 + $0x48] sm:$0xff]
      %v469 = vld [vmem:[%s458 + $0x50] sm:$0xff]
      %v470 = vld [vmem:[%s458 + $0x58] sm:$0xff]
      %v471 = vld [vmem:[%s458 + $0x60] sm:$0xff]
      %v472 = vld [vmem:[%s458 + $0x68] sm:$0xff]
      %v473 = vld [vmem:[%s458 + $0x70] sm:$0xff]
      %v474 = vld [vmem:[%s458 + $0x78] sm:$0xff]
      %v476 = vunpack.c.l.b16 %v457
      %v477 = vpack.c.b16 %v476, %v476
      %v478 = vrot.slane %v477, 1
      %v496 = vunpack.c.l.b16 %v459
      %v497 = vunpack.c.h.b16 %v459
      %v498 = vunpack.c.l.b16 %v460
      %v499 = vunpack.c.h.b16 %v460
      %v500 = vunpack.c.l.b16 %v461
      %v501 = vunpack.c.h.b16 %v461
      %v502 = vunpack.c.l.b16 %v462
      %v503 = vunpack.c.h.b16 %v462
      %v504 = vunpack.c.l.b16 %v463
      %v505 = vunpack.c.h.b16 %v463
      %v506 = vunpack.c.l.b16 %v464
      %v507 = vunpack.c.h.b16 %v464
      %v508 = vunpack.c.l.b16 %v465
      %v509 = vunpack.c.h.b16 %v465
      %v510 = vunpack.c.l.b16 %v466
      %v511 = vunpack.c.h.b16 %v466
      %v512 = vunpack.c.l.b16 %v467
      %v513 = vunpack.c.h.b16 %v467
      %v514 = vunpack.c.l.b16 %v468
      %v515 = vunpack.c.h.b16 %v468
      %v516 = vunpack.c.l.b16 %v469
      %v517 = vunpack.c.h.b16 %v469
      %v518 = vunpack.c.l.b16 %v470
      %v519 = vunpack.c.h.b16 %v470
      %v520 = vunpack.c.l.b16 %v471
      %v521 = vunpack.c.h.b16 %v471
      %v522 = vunpack.c.l.b16 %v472
      %v523 = vunpack.c.h.b16 %v472
      %v524 = vunpack.c.l.b16 %v473
      %v525 = vunpack.c.h.b16 %v473
      %v526 = vunpack.c.l.b16 %v474
      %v527 = vunpack.c.h.b16 %v474
      %v528 = vpack.c.b16 %v498, %v496
      %v529 = vpack.c.b16 %v499, %v497
      %v530 = vpack.c.b16 %v502, %v500
      %v531 = vpack.c.b16 %v503, %v501
      %v532 = vpack.c.b16 %v506, %v504
      %v533 = vpack.c.b16 %v507, %v505
      %v534 = vpack.c.b16 %v510, %v508
      %v535 = vpack.c.b16 %v511, %v509
      %v536 = vpack.c.b16 %v514, %v512
      %v537 = vpack.c.b16 %v515, %v513
      %v538 = vpack.c.b16 %v518, %v516
      %v539 = vpack.c.b16 %v519, %v517
      %v540 = vpack.c.b16 %v522, %v520
      %v541 = vpack.c.b16 %v523, %v521
      %v542 = vpack.c.b16 %v526, %v524
      %v543 = vpack.c.b16 %v527, %v525
      %560 = vmatprep.subr.bf16.mxu0 %v543
      %561 = vmatpush1.bf16.msra.mxu0 %v542
      %562 = vmatprep.subr.bf16.mxu0 %v541
      %563 = vmatpush1.bf16.msra.mxu0 %v540
      %564 = vmatprep.subr.bf16.mxu0 %v539
      %565 = vmatpush1.bf16.msra.mxu0 %v538
      %566 = vmatprep.subr.bf16.mxu0 %v537
      %567 = vmatpush1.bf16.msra.mxu0 %v536
      %568 = vmatprep.subr.bf16.mxu0 %v535
      %569 = vmatpush1.bf16.msra.mxu0 %v534
      %570 = vmatprep.subr.bf16.mxu0 %v533
      %571 = vmatpush1.bf16.msra.mxu0 %v532
      %572 = vmatprep.subr.bf16.mxu0 %v531
      %573 = vmatpush1.bf16.msra.mxu0 %v530
      %574 = vmatprep.subr.bf16.mxu0 %v529
      %575 = vmatpush1.bf16.msra.mxu0 %v528
      %576 = vmatprep.subr.bf16.mxu0 0
      %577 = vmatpush2.bf16.msra.mxu0 0
      %578 = vmatprep.subr.bf16.mxu0 0
      %579 = vmatpush2.bf16.msra.mxu0 0
      %580 = vmatprep.subr.bf16.mxu0 0
      %581 = vmatpush2.bf16.msra.mxu0 0
      %582 = vmatprep.subr.bf16.mxu0 0
      %583 = vmatpush2.bf16.msra.mxu0 0
      %584 = vmatprep.subr.bf16.mxu0 0
      %585 = vmatpush2.bf16.msra.mxu0 0
      %586 = vmatprep.subr.bf16.mxu0 0
      %587 = vmatpush2.bf16.msra.mxu0 0
      %588 = vmatprep.subr.bf16.mxu0 0
      %589 = vmatpush2.bf16.msra.mxu0 0
      %590 = vmatprep.subr.bf16.mxu0 0
      %591 = vmatpush2.bf16.msra.mxu0 0
      %592 = vmatprep.mubr.bf16.mxu0 0
      %593 = vmatmul.mubr.bf16.gmra.mxu0 %v478
      %v594 = vpop.f32.mrf.mxu0
      %v595 = vadd.f32 0.0, %v594
      %v596 = vpop.f32.mrf.mxu0
      %v597 = vadd.f32 0.0, %v596
      %v598 = vpop.f32.mrf.mxu0
      %v599 = vpop.f32.mrf.mxu0
      %600 = vdwg.mxu0
      %v601 = vadd.f32 %v451, %v595
      %v602 = vadd.f32 %v453, %v597
      %v603 = vld [vmem:[%s2] sm:$0x3]
      %v605 = vlaneseq
      %v606 = vshrl.u32 %v605, 7
      %v607 = vsub.s32 0, %v606
      %v608 = vrot.slane %v603, %v607
      %v609 = vlaneseq
      %v610 = vshrl.u32 %v609, 7
      %v611 = vsub.s32 1, %v610
      %v612 = vrot.slane %v603, %v611
      %v615 = vadd.f32 %v601, %v608
      %v616 = vadd.f32 %v602, %v612
      %v617 = vmax.f32 %v615, 0.0
      %v618 = vmax.f32 %v616, 0.0
      %v619 = vpack.c.bf16 %v617, %v617
      %v620 = vpack.c.bf16 %v618, %v618
      %v623 = vcombine.low %v619, %v620
      %v625 = vunpack.c.l.s4 1983009808
      %v626 = vunpack.c.0.s8 %v625
      %v627 = vlaneseq
      %v628 = vshrl.u32 %v627, 7
      %v629 = vsub.s32 %v626, %v628
      %v630 = vrot.slane %v623, %v629
      %632 = vst [vmem:[%s167] sm:$0xf] %v630
      %p633 = scmp.lt.s32.totalorder %s14, 1
      %s634 = scalar_select %p633, %s14, 1
      %s635 = smul.addr %s634, 2
      %s636 = smul.addr %s635, 2
      %s637 = scalar_lea.vmem %s3, %s636
      // Predicated region
      $region33: #{_lambda_.24} parent=31 // pred_check
        %p638 = pneg %p100
      $region34: #{_lambda_.24} parent=31 // pred_check_branch
        %640 = sbr.rel (%p638) target = $region36
      $region35: #{_lambda_.24} parent=31 // pred_region
        _
      $region36: #{_lambda_.24} parent=31 // pred_fallthru
        _
    $region32: #{_lambda_.24} parent=5 // pred_fallthru
      _
    %p641 = scmp.le.s32.totalorder 2, %s9
    // Predicated region
    $region37: #{_lambda_.24} parent=5 // pred_check
      %p642 = pneg %p641
    $region38: #{_lambda_.24} parent=5 // pred_check_branch
      %644 = sbr.rel (%p642) target = $region40
    $region39: #{_lambda_.24} parent=5 // pred_region
      %s645 = ssub.s32 %s9, 2
      // Predicated region
      $region41: #{_lambda_.24} parent=39 // pred_check
        %p646 = pneg %p106
      $region42: #{_lambda_.24} parent=39 // pred_check_branch
        %648 = sbr.rel (%p646) target = $region44
      $region43: #{_lambda_.24} parent=39 // pred_region
        %p649 = scmp.lt.s32.totalorder %s15, 1
        %s650 = scalar_select %p649, %s15, 1
        %s651 = smul.addr %s650, 2
        %s652 = smul.addr %s651, 2
        %s653 = scalar_lea.vmem %s3, %s652
      $region44: #{_lambda_.24} parent=39 // pred_fallthru
        _
    $region40: #{_lambda_.24} parent=5 // pred_fallthru
      _
  $region6: #{_lambda_.24} parent=0 // loop_footer
    %s13 = sadd.s32 1, %s9
  $region7: #{_lambda_.24} parent=0 // loop_footer_branch
    %8 = sbr.rel target = $region3
  $region8: #{_lambda_.24} parent=0 // loop_exit
    _

// kernel: _lambda_.25
$region0: #{_lambda_.25}
  #allocation0 [shape = 'u32[]', space=smem, size = 0x4, offset = 0x4, fixed_abs, tag = 'smem constant byte address 0x4 - core index']
  #allocation1 [shape = 'u32[144,128]{1,0:T(1,128)}', space=vmem, size = 0x12000, scoped, tag = 'internal scratch']
  %s0 = inlined_call_operand.vmem [shape: bf16[2,10,128], index: 0, kind: input, shape index: {}]
  %s1 = inlined_call_operand.vmem [shape: bf16[3,128,256], index: 1, kind: input, shape index: {}]
  %s2 = inlined_call_operand.vmem [shape: f32[1,256], index: 2, kind: input, shape index: {}]
  %s3 = inlined_call_operand.vmem [shape: bf16[2,8,256], index: 3, kind: output, shape index: {}]
  %s4 = sld [smem:[#allocation0]]
  $region45: #{_lambda_.25} parent=0
    _
  %s6 = ssub.s32 1, %s4
  %s7 = scalar_select 0, %s6, %s4
  loop: start=0, step=1, limit=4
  $region2: #{_lambda_.25} parent=0 // loop_pre_header
    _
  $region3: #{_lambda_.25} parent=0 // loop_header
    %s9 = sphi 0, %s13
    %p10 = scmp.ge.s32.totalorder %s9, 4
    %s19 = sphi 0, %s21
    %s22 = sphi 0, %s19
    %s23 = sphi 0, %s22
    %s39 = sphi 0, %s23
    %s43 = sphi 0, %s43
    %s45 = sphi 0, %s43
    %s46 = sphi 0, %s45
    %s60 = sphi 0, %s46
    %s64 = sphi 0, %s64
    %s66 = sphi 0, %s64
    %s67 = sphi 0, %s66
    %s81 = sphi 0, %s67
    %s87 = sphi 0, %s89
    %s90 = sphi 0, %s87
    %s91 = sphi 0, %s90
    %s107 = sphi 0, %s91
  $region4: #{_lambda_.25} parent=0 // loop_header_branch
    %12 = sbr.rel (%p10) target = $region8
  $region5: #{_lambda_.25} parent=0 // loop_body
    %s14 = ssub.s32 %s9, 1
    %s15 = ssub.s32 %s9, 2
    %s16 = sadd.s32 %s9, 1
    %s17 = ssub.s32 %s9, %s16
    %p18 = scmp.eq.s32.totalorder %s17, 0
    %s20 = sadd.s32 %s19, 1
    %s21 = scalar_select %p18, %s19, %s20
    %p24 = pneg %p18
    %p25 = scmp.eq.s32.totalorder %s9, 1
    %p26 = por %p24, %p25
    %p27 = scmp.ne.s32.totalorder %s19, %s22
    %p28 = scmp.eq.s32.totalorder %s9, 0
    %p29 = por %p27, %p28
    %p30 = scmp.ne.s32.totalorder %s19, %s22
    %p31 = scmp.eq.s32.totalorder %s14, 1
    %p32 = por %p30, %p31
    %p33 = scmp.ne.s32.totalorder %s22, %s23
    %p34 = scmp.eq.s32.totalorder %s14, 0
    %p35 = por %p33, %p34
    %p36 = scmp.ne.s32.totalorder %s22, %s23
    %p37 = scmp.eq.s32.totalorder %s15, 1
    %p38 = por %p36, %p37
    %p40 = scmp.ne.s32.totalorder %s23, %s39
    %p41 = scmp.eq.s32.totalorder %s15, 0
    %p42 = por %p40, %p41
    %s44 = sadd.s32 %s43, 1
    %p47 = scmp.eq.s32.totalorder %s9, 1
    %p48 = scmp.ne.s32.totalorder %s43, %s45
    %p49 = scmp.eq.s32.totalorder %s9, 0
    %p50 = por %p48, %p49
    %p51 = scmp.ne.s32.totalorder %s43, %s45
    %p52 = scmp.eq.s32.totalorder %s14, 1
    %p53 = por %p51, %p52
    %p54 = scmp.ne.s32.totalorder %s45, %s46
    %p55 = scmp.eq.s32.totalorder %s14, 0
    %p56 = por %p54, %p55
    %p57 = scmp.ne.s32.totalorder %s45, %s46
    %p58 = scmp.eq.s32.totalorder %s15, 1
    %p59 = por %p57, %p58
    %p61 = scmp.ne.s32.totalorder %s46, %s60
    %p62 = scmp.eq.s32.totalorder %s15, 0
    %p63 = por %p61, %p62
    %s65 = sadd.s32 %s64, 1
    %p68 = scmp.eq.s32.totalorder %s9, 1
    %p69 = scmp.ne.s32.totalorder %s64, %s66
    %p70 = scmp.eq.s32.totalorder %s9, 0
    %p71 = por %p69, %p70
    %p72 = scmp.ne.s32.totalorder %s64, %s66
    %p73 = scmp.eq.s32.totalorder %s14, 1
    %p74 = por %p72, %p73
    %p75 = scmp.ne.s32.totalorder %s66, %s67
    %p76 = scmp.eq.s32.totalorder %s14, 0
    %p77 = por %p75, %p76
    %p78 = scmp.ne.s32.totalorder %s66, %s67
    %p79 = scmp.eq.s32.totalorder %s15, 1
    %p80 = por %p78, %p79
    %p82 = scmp.ne.s32.totalorder %s67, %s81
    %p83 = scmp.eq.s32.totalorder %s15, 0
    %p84 = por %p82, %p83
    %s85 = ssub.s32 %s9, %s16
    %p86 = scmp.eq.s32.totalorder %s85, 0
    %s88 = sadd.s32 %s87, 1
    %s89 = scalar_select %p86, %s87, %s88
    %p92 = pneg %p86
    %p93 = scmp.eq.s32.totalorder %s9, 1
    %p94 = por %p92, %p93
    %p95 = scmp.ne.s32.totalorder %s87, %s90
    %p96 = scmp.eq.s32.totalorder %s9, 0
    %p97 = por %p95, %p96
    %p98 = scmp.ne.s32.totalorder %s87, %s90
    %p99 = scmp.eq.s32.totalorder %s14, 1
    %p100 = por %p98, %p99
    %p101 = scmp.ne.s32.totalorder %s90, %s91
    %p102 = scmp.eq.s32.totalorder %s14, 0
    %p103 = por %p101, %p102
    %p104 = scmp.ne.s32.totalorder %s90, %s91
    %p105 = scmp.eq.s32.totalorder %s15, 1
    %p106 = por %p104, %p105
    %p108 = scmp.ne.s32.totalorder %s91, %s107
    %p109 = scmp.eq.s32.totalorder %s15, 0
    %p110 = por %p108, %p109
    %p111 = scmp.le.s32.totalorder 1, %s9
    %p112 = scmp.lt.s32.totalorder %s9, 3
    %p113 = pnand %p111, %p112
    %p114 = pneg %p113
    // Predicated region
    $region9: #{_lambda_.25} parent=5 // pred_check
      _
    $region10: #{_lambda_.25} parent=5 // pred_check_branch
      %116 = sbr.rel (%p113) target = $region12
    $region11: #{_lambda_.25} parent=5 // pred_region
      %s117 = ssub.s32 %s9, 1
      // Predicated region
      $region13: #{_lambda_.25} parent=11 // pred_check
        %p118 = pneg %p56
      $region14: #{_lambda_.25} parent=11 // pred_check_branch
        %120 = sbr.rel (%p118) target = $region16
      $region15: #{_lambda_.25} parent=11 // pred_region
        _
      $region16: #{_lambda_.25} parent=11 // pred_fallthru
        _
      // Predicated region
      $region17: #{_lambda_.25} parent=11 // pred_check
        %p121 = pneg %p77
      $region18: #{_lambda_.25} parent=11 // pred_check_branch
        %123 = sbr.rel (%p121) target = $region20
      $region19: #{_lambda_.25} parent=11 // pred_region
        _
      $region20: #{_lambda_.25} parent=11 // pred_fallthru
        _
    $region12: #{_lambda_.25} parent=5 // pred_fallthru
      _
    %p124 = scmp.lt.s32.totalorder %s9, 2
    // Predicated region
    $region21: #{_lambda_.25} parent=5 // pred_check
      %p125 = pneg %p124
    $region22: #{_lambda_.25} parent=5 // pred_check_branch
      %127 = sbr.rel (%p125) target = $region24
    $region23: #{_lambda_.25} parent=5 // pred_region
      // Predicated region
      $region25: #{_lambda_.25} parent=23 // pred_check
        %p128 = pneg %p29
      $region26: #{_lambda_.25} parent=23 // pred_check_branch
        %130 = sbr.rel (%p128) target = $region28
      $region27: #{_lambda_.25} parent=23 // pred_region
        %p131 = scmp.lt.s32.totalorder %s9, 1
        %s132 = scalar_select %p131, %s9, 1
        %s133 = smul.addr %s132, 2
        %s134 = smul.addr %s133, 4
        %s135 = scalar_lea.vmem %s0, %s134
      $region28: #{_lambda_.25} parent=23 // pred_fallthru
        _
    $region24: #{_lambda_.25} parent=5 // pred_fallthru
      _
    %p136 = scmp.le.s32.totalorder 1, %s9
    %p137 = scmp.lt.s32.totalorder %s9, 3
    %p138 = pnand %p136, %p137
    %p139 = pneg %p138
    // Predicated region
    $region29: #{_lambda_.25} parent=5 // pred_check
      _
    $region30: #{_lambda_.25} parent=5 // pred_check_branch
      %141 = sbr.rel (%p138) target = $region32
    $region31: #{_lambda_.25} parent=5 // pred_region
      %s142 = ssub.s32 %s9, 1
      %p143 = scmp.lt.s32.totalorder %s14, 1
      %s144 = scalar_select %p143, %s14, 1
      %s145 = smul.addr %s144, 2
      %s146 = smul.addr %s145, 4
      %s147 = scalar_lea.vmem %s0, %s146
      %p148 = pneg %p35
      %p149 = pneg %p32
      %p150 = pneg %p56
      %p151 = pneg %p53
      %p152 = pneg %p77
      %p153 = pneg %p74
      %p154 = pneg %p103
      %p155 = pneg %p100
      %p156 = scmp.lt.s32.totalorder %s14, 1
      %s157 = scalar_select %p156, %s14, 1
      %s158 = smul.addr %s157, 2
      %s159 = smul.addr %s158, 4
      %s160 = scalar_lea.vmem %s3, %s159
      %p161 = scmp.lt.s32.totalorder %s14, 1
      %s162 = scalar_select %p161, %s14, 1
      %s163 = smul.addr %s162, 2
      %s164 = smul.addr %s163, 4
      %s165 = scalar_lea.vmem %s0, %s164
      %p166 = scmp.lt.s32.totalorder %s14, 1
      %s167 = scalar_select %p166, %s14, 1
      %s168 = smul.addr %s167, 2
      %s169 = smul.addr %s168, 4
      %s170 = scalar_lea.vmem %s3, %s169
      %v172 = vld [vmem:[%s165] sm:$0xf]
      %v173 = vld [vmem:[%s1] sm:$0xff]
      %v174 = vld [vmem:[%s1 + $0x8] sm:$0xff]
      %v175 = vld [vmem:[%s1 + $0x10] sm:$0xff]
      %v176 = vld [vmem:[%s1 + $0x18] sm:$0xff]
      %v177 = vld [vmem:[%s1 + $0x20] sm:$0xff]
      %v178 = vld [vmem:[%s1 + $0x28] sm:$0xff]
      %v179 = vld [vmem:[%s1 + $0x30] sm:$0xff]
      %v180 = vld [vmem:[%s1 + $0x38] sm:$0xff]
      %v181 = vld [vmem:[%s1 + $0x40] sm:$0xff]
      %v182 = vld [vmem:[%s1 + $0x48] sm:$0xff]
      %v183 = vld [vmem:[%s1 + $0x50] sm:$0xff]
      %v184 = vld [vmem:[%s1 + $0x58] sm:$0xff]
      %v185 = vld [vmem:[%s1 + $0x60] sm:$0xff]
      %v186 = vld [vmem:[%s1 + $0x68] sm:$0xff]
      %v187 = vld [vmem:[%s1 + $0x70] sm:$0xff]
      %v188 = vld [vmem:[%s1 + $0x78] sm:$0xff]
      %v189 = vld [vmem:[%s165 + $0x4] sm:$0x1]
      %s190 = scalar_lea.vmem %s1, 128
      %v191 = vld [vmem:[%s190] sm:$0xff]
      %v192 = vld [vmem:[%s190 + $0x8] sm:$0xff]
      %v193 = vld [vmem:[%s190 + $0x10] sm:$0xff]
      %v194 = vld [vmem:[%s190 + $0x18] sm:$0xff]
      %v195 = vld [vmem:[%s190 + $0x20] sm:$0xff]
      %v196 = vld [vmem:[%s190 + $0x28] sm:$0xff]
      %v197 = vld [vmem:[%s190 + $0x30] sm:$0xff]
      %v198 = vld [vmem:[%s190 + $0x38] sm:$0xff]
      %v199 = vld [vmem:[%s190 + $0x40] sm:$0xff]
      %v200 = vld [vmem:[%s190 + $0x48] sm:$0xff]
      %v201 = vld [vmem:[%s190 + $0x50] sm:$0xff]
      %v202 = vld [vmem:[%s190 + $0x58] sm:$0xff]
      %v203 = vld [vmem:[%s190 + $0x60] sm:$0xff]
      %v204 = vld [vmem:[%s190 + $0x68] sm:$0xff]
      %v205 = vld [vmem:[%s190 + $0x70] sm:$0xff]
      %v206 = vld [vmem:[%s190 + $0x78] sm:$0xff]
      %v209 = vunpack.c.l.b16 %v172
      %v210 = vunpack.c.l.b16 %v189
      %v211 = vpack.c.b16 %v210, %v209
      %v213 = vshrl.u32 %v211, 16
      %v215 = vshll.u32 %v211, 16
      %v217 = vrot.slane %v215, 1
      %v218 = vor.u32 %v213, %v217
      %v236 = vunpack.c.l.b16 %v191
      %v237 = vunpack.c.h.b16 %v191
      %v238 = vunpack.c.l.b16 %v192
      %v239 = vunpack.c.h.b16 %v192
      %v240 = vunpack.c.l.b16 %v193
      %v241 = vunpack.c.h.b16 %v193
      %v242 = vunpack.c.l.b16 %v194
      %v243 = vunpack.c.h.b16 %v194
      %v244 = vunpack.c.l.b16 %v195
      %v245 = vunpack.c.h.b16 %v195
      %v246 = vunpack.c.l.b16 %v196
      %v247 = vunpack.c.h.b16 %v196
      %v248 = vunpack.c.l.b16 %v197
      %v249 = vunpack.c.h.b16 %v197
      %v250 = vunpack.c.l.b16 %v198
      %v251 = vunpack.c.h.b16 %v198
      %v252 = vunpack.c.l.b16 %v199
      %v253 = vunpack.c.h.b16 %v199
      %v254 = vunpack.c.l.b16 %v200
      %v255 = vunpack.c.h.b16 %v200
      %v256 = vunpack.c.l.b16 %v201
      %v257 = vunpack.c.h.b16 %v201
      %v258 = vunpack.c.l.b16 %v202
      %v259 = vunpack.c.h.b16 %v202
      %v260 = vunpack.c.l.b16 %v203
      %v261 = vunpack.c.h.b16 %v203
      %v262 = vunpack.c.l.b16 %v204
      %v263 = vunpack.c.h.b16 %v204
      %v264 = vunpack.c.l.b16 %v205
      %v265 = vunpack.c.h.b16 %v205
      %v266 = vunpack.c.l.b16 %v206
      %v267 = vunpack.c.h.b16 %v206
      %v268 = vpack.c.b16 %v238, %v236
      %v269 = vpack.c.b16 %v239, %v237
      %v270 = vpack.c.b16 %v242, %v240
      %v271 = vpack.c.b16 %v243, %v241
      %v272 = vpack.c.b16 %v246, %v244
      %v273 = vpack.c.b16 %v247, %v245
      %v274 = vpack.c.b16 %v250, %v248
      %v275 = vpack.c.b16 %v251, %v249
      %v276 = vpack.c.b16 %v254, %v252
      %v277 = vpack.c.b16 %v255, %v253
      %v278 = vpack.c.b16 %v258, %v256
      %v279 = vpack.c.b16 %v259, %v257
      %v280 = vpack.c.b16 %v262, %v260
      %v281 = vpack.c.b16 %v263, %v261
      %v282 = vpack.c.b16 %v266, %v264
      %v283 = vpack.c.b16 %v267, %v265
      %300 = vmatprep.subr.bf16.mxu0 %v283
      %301 = vmatpush1.bf16.msra.mxu0 %v282
      %302 = vmatprep.subr.bf16.mxu0 %v281
      %303 = vmatpush1.bf16.msra.mxu0 %v280
      %304 = vmatprep.subr.bf16.mxu0 %v279
      %305 = vmatpush1.bf16.msra.mxu0 %v278
      %306 = vmatprep.subr.bf16.mxu0 %v277
      %307 = vmatpush1.bf16.msra.mxu0 %v276
      %308 = vmatprep.subr.bf16.mxu0 %v275
      %309 = vmatpush1.bf16.msra.mxu0 %v274
      %310 = vmatprep.subr.bf16.mxu0 %v273
      %311 = vmatpush1.bf16.msra.mxu0 %v272
      %312 = vmatprep.subr.bf16.mxu0 %v271
      %313 = vmatpush1.bf16.msra.mxu0 %v270
      %314 = vmatprep.subr.bf16.mxu0 %v269
      %315 = vmatpush1.bf16.msra.mxu0 %v268
      %316 = vmatprep.subr.bf16.mxu0 0
      %317 = vmatpush2.bf16.msra.mxu0 0
      %318 = vmatprep.subr.bf16.mxu0 0
      %319 = vmatpush2.bf16.msra.mxu0 0
      %320 = vmatprep.subr.bf16.mxu0 0
      %321 = vmatpush2.bf16.msra.mxu0 0
      %322 = vmatprep.subr.bf16.mxu0 0
      %323 = vmatpush2.bf16.msra.mxu0 0
      %324 = vmatprep.subr.bf16.mxu0 0
      %325 = vmatpush2.bf16.msra.mxu0 0
      %326 = vmatprep.subr.bf16.mxu0 0
      %327 = vmatpush2.bf16.msra.mxu0 0
      %328 = vmatprep.subr.bf16.mxu0 0
      %329 = vmatpush2.bf16.msra.mxu0 0
      %330 = vmatprep.subr.bf16.mxu0 0
      %331 = vmatpush2.bf16.msra.mxu0 0
      %332 = vmatprep.mubr.bf16.mxu0 0
      %333 = vmatmul.mubr.bf16.gmra.mxu0 %v218
      %v334 = vpop.f32.mrf.mxu0
      %v335 = vadd.f32 0.0, %v334
      %v336 = vpop.f32.mrf.mxu0
      %v337 = vadd.f32 0.0, %v336
      %v338 = vpop.f32.mrf.mxu0
      %v339 = vpop.f32.mrf.mxu0
      %340 = vdwg.mxu0
      %v357 = vunpack.c.l.b16 %v173
      %v358 = vunpack.c.h.b16 %v173
      %v359 = vunpack.c.l.b16 %v174
      %v360 = vunpack.c.h.b16 %v174
      %v361 = vunpack.c.l.b16 %v175
      %v362 = vunpack.c.h.b16 %v175
      %v363 = vunpack.c.l.b16 %v176
      %v364 = vunpack.c.h.b16 %v176
      %v365 = vunpack.c.l.b16 %v177
      %v366 = vunpack.c.h.b16 %v177
      %v367 = vunpack.c.l.b16 %v178
      %v368 = vunpack.c.h.b16 %v178
      %v369 = vunpack.c.l.b16 %v179
      %v370 = vunpack.c.h.b16 %v179
      %v371 = vunpack.c.l.b16 %v180
      %v372 = vunpack.c.h.b16 %v180
      %v373 = vunpack.c.l.b16 %v181
      %v374 = vunpack.c.h.b16 %v181
      %v375 = vunpack.c.l.b16 %v182
      %v376 = vunpack.c.h.b16 %v182
      %v377 = vunpack.c.l.b16 %v183
      %v378 = vunpack.c.h.b16 %v183
      %v379 = vunpack.c.l.b16 %v184
      %v380 = vunpack.c.h.b16 %v184
      %v381 = vunpack.c.l.b16 %v185
      %v382 = vunpack.c.h.b16 %v185
      %v383 = vunpack.c.l.b16 %v186
      %v384 = vunpack.c.h.b16 %v186
      %v385 = vunpack.c.l.b16 %v187
      %v386 = vunpack.c.h.b16 %v187
      %v387 = vunpack.c.l.b16 %v188
      %v388 = vunpack.c.h.b16 %v188
      %v389 = vpack.c.b16 %v359, %v357
      %v390 = vpack.c.b16 %v360, %v358
      %v391 = vpack.c.b16 %v363, %v361
      %v392 = vpack.c.b16 %v364, %v362
      %v393 = vpack.c.b16 %v367, %v365
      %v394 = vpack.c.b16 %v368, %v366
      %v395 = vpack.c.b16 %v371, %v369
      %v396 = vpack.c.b16 %v372, %v370
      %v397 = vpack.c.b16 %v375, %v373
      %v398 = vpack.c.b16 %v376, %v374
      %v399 = vpack.c.b16 %v379, %v377
      %v400 = vpack.c.b16 %v380, %v378
      %v401 = vpack.c.b16 %v383, %v381
      %v402 = vpack.c.b16 %v384, %v382
      %v403 = vpack.c.b16 %v387, %v385
      %v404 = vpack.c.b16 %v388, %v386
      %421 = vmatprep.subr.bf16.mxu0 %v404
      %422 = vmatpush1.bf16.msra.mxu0 %v403
      %423 = vmatprep.subr.bf16.mxu0 %v402
      %424 = vmatpush1.bf16.msra.mxu0 %v401
      %425 = vmatprep.subr.bf16.mxu0 %v400
      %426 = vmatpush1.bf16.msra.mxu0 %v399
      %427 = vmatprep.subr.bf16.mxu0 %v398
      %428 = vmatpush1.bf16.msra.mxu0 %v397
      %429 = vmatprep.subr.bf16.mxu0 %v396
      %430 = vmatpush1.bf16.msra.mxu0 %v395
      %431 = vmatprep.subr.bf16.mxu0 %v394
      %432 = vmatpush1.bf16.msra.mxu0 %v393
      %433 = vmatprep.subr.bf16.mxu0 %v392
      %434 = vmatpush1.bf16.msra.mxu0 %v391
      %435 = vmatprep.subr.bf16.mxu0 %v390
      %436 = vmatpush1.bf16.msra.mxu0 %v389
      %437 = vmatprep.subr.bf16.mxu0 0
      %438 = vmatpush2.bf16.msra.mxu0 0
      %439 = vmatprep.subr.bf16.mxu0 0
      %440 = vmatpush2.bf16.msra.mxu0 0
      %441 = vmatprep.subr.bf16.mxu0 0
      %442 = vmatpush2.bf16.msra.mxu0 0
      %443 = vmatprep.subr.bf16.mxu0 0
      %444 = vmatpush2.bf16.msra.mxu0 0
      %445 = vmatprep.subr.bf16.mxu0 0
      %446 = vmatpush2.bf16.msra.mxu0 0
      %447 = vmatprep.subr.bf16.mxu0 0
      %448 = vmatpush2.bf16.msra.mxu0 0
      %449 = vmatprep.subr.bf16.mxu0 0
      %450 = vmatpush2.bf16.msra.mxu0 0
      %451 = vmatprep.subr.bf16.mxu0 0
      %452 = vmatpush2.bf16.msra.mxu0 0
      %453 = vmatprep.mubr.bf16.mxu0 0
      %454 = vmatmul.mubr.bf16.gmra.mxu0 %v172
      %v455 = vpop.f32.mrf.mxu0
      %v456 = vadd.f32 %v335, %v455
      %v457 = vpop.f32.mrf.mxu0
      %v458 = vadd.f32 %v337, %v457
      %v459 = vpop.f32.mrf.mxu0
      %v460 = vpop.f32.mrf.mxu0
      %461 = vdwg.mxu0
      %v462 = vld [vmem:[%s165] sm:$0xe]
      %s463 = scalar_lea.vmem %s1, 256
      %v464 = vld [vmem:[%s463] sm:$0xff]
      %v465 = vld [vmem:[%s463 + $0x8] sm:$0xff]
      %v466 = vld [vmem:[%s463 + $0x10] sm:$0xff]
      %v467 = vld [vmem:[%s463 + $0x18] sm:$0xff]
      %v468 = vld [vmem:[%s463 + $0x20] sm:$0xff]
      %v469 = vld [vmem:[%s463 + $0x28] sm:$0xff]
      %v470 = vld [vmem:[%s463 + $0x30] sm:$0xff]
      %v471 = vld [vmem:[%s463 + $0x38] sm:$0xff]
      %v472 = vld [vmem:[%s463 + $0x40] sm:$0xff]
      %v473 = vld [vmem:[%s463 + $0x48] sm:$0xff]
      %v474 = vld [vmem:[%s463 + $0x50] sm:$0xff]
      %v475 = vld [vmem:[%s463 + $0x58] sm:$0xff]
      %v476 = vld [vmem:[%s463 + $0x60] sm:$0xff]
      %v477 = vld [vmem:[%s463 + $0x68] sm:$0xff]
      %v478 = vld [vmem:[%s463 + $0x70] sm:$0xff]
      %v479 = vld [vmem:[%s463 + $0x78] sm:$0xff]
      %v481 = vunpack.c.l.b16 %v462
      %v482 = vpack.c.b16 %v210, %v481
      %v483 = vrot.slane %v482, 1
      %v501 = vunpack.c.l.b16 %v464
      %v502 = vunpack.c.h.b16 %v464
      %v503 = vunpack.c.l.b16 %v465
      %v504 = vunpack.c.h.b16 %v465
      %v505 = vunpack.c.l.b16 %v466
      %v506 = vunpack.c.h.b16 %v466
      %v507 = vunpack.c.l.b16 %v467
      %v508 = vunpack.c.h.b16 %v467
      %v509 = vunpack.c.l.b16 %v468
      %v510 = vunpack.c.h.b16 %v468
      %v511 = vunpack.c.l.b16 %v469
      %v512 = vunpack.c.h.b16 %v469
      %v513 = vunpack.c.l.b16 %v470
      %v514 = vunpack.c.h.b16 %v470
      %v515 = vunpack.c.l.b16 %v471
      %v516 = vunpack.c.h.b16 %v471
      %v517 = vunpack.c.l.b16 %v472
      %v518 = vunpack.c.h.b16 %v472
      %v519 = vunpack.c.l.b16 %v473
      %v520 = vunpack.c.h.b16 %v473
      %v521 = vunpack.c.l.b16 %v474
      %v522 = vunpack.c.h.b16 %v474
      %v523 = vunpack.c.l.b16 %v475
      %v524 = vunpack.c.h.b16 %v475
      %v525 = vunpack.c.l.b16 %v476
      %v526 = vunpack.c.h.b16 %v476
      %v527 = vunpack.c.l.b16 %v477
      %v528 = vunpack.c.h.b16 %v477
      %v529 = vunpack.c.l.b16 %v478
      %v530 = vunpack.c.h.b16 %v478
      %v531 = vunpack.c.l.b16 %v479
      %v532 = vunpack.c.h.b16 %v479
      %v533 = vpack.c.b16 %v503, %v501
      %v534 = vpack.c.b16 %v504, %v502
      %v535 = vpack.c.b16 %v507, %v505
      %v536 = vpack.c.b16 %v508, %v506
      %v537 = vpack.c.b16 %v511, %v509
      %v538 = vpack.c.b16 %v512, %v510
      %v539 = vpack.c.b16 %v515, %v513
      %v540 = vpack.c.b16 %v516, %v514
      %v541 = vpack.c.b16 %v519, %v517
      %v542 = vpack.c.b16 %v520, %v518
      %v543 = vpack.c.b16 %v523, %v521
      %v544 = vpack.c.b16 %v524, %v522
      %v545 = vpack.c.b16 %v527, %v525
      %v546 = vpack.c.b16 %v528, %v526
      %v547 = vpack.c.b16 %v531, %v529
      %v548 = vpack.c.b16 %v532, %v530
      %565 = vmatprep.subr.bf16.mxu0 %v548
      %566 = vmatpush1.bf16.msra.mxu0 %v547
      %567 = vmatprep.subr.bf16.mxu0 %v546
      %568 = vmatpush1.bf16.msra.mxu0 %v545
      %569 = vmatprep.subr.bf16.mxu0 %v544
      %570 = vmatpush1.bf16.msra.mxu0 %v543
      %571 = vmatprep.subr.bf16.mxu0 %v542
      %572 = vmatpush1.bf16.msra.mxu0 %v541
      %573 = vmatprep.subr.bf16.mxu0 %v540
      %574 = vmatpush1.bf16.msra.mxu0 %v539
      %575 = vmatprep.subr.bf16.mxu0 %v538
      %576 = vmatpush1.bf16.msra.mxu0 %v537
      %577 = vmatprep.subr.bf16.mxu0 %v536
      %578 = vmatpush1.bf16.msra.mxu0 %v535
      %579 = vmatprep.subr.bf16.mxu0 %v534
      %580 = vmatpush1.bf16.msra.mxu0 %v533
      %581 = vmatprep.subr.bf16.mxu0 0
      %582 = vmatpush2.bf16.msra.mxu0 0
      %583 = vmatprep.subr.bf16.mxu0 0
      %584 = vmatpush2.bf16.msra.mxu0 0
      %585 = vmatprep.subr.bf16.mxu0 0
      %586 = vmatpush2.bf16.msra.mxu0 0
      %587 = vmatprep.subr.bf16.mxu0 0
      %588 = vmatpush2.bf16.msra.mxu0 0
      %589 = vmatprep.subr.bf16.mxu0 0
      %590 = vmatpush2.bf16.msra.mxu0 0
      %591 = vmatprep.subr.bf16.mxu0 0
      %592 = vmatpush2.bf16.msra.mxu0 0
      %593 = vmatprep.subr.bf16.mxu0 0
      %594 = vmatpush2.bf16.msra.mxu0 0
      %595 = vmatprep.subr.bf16.mxu0 0
      %596 = vmatpush2.bf16.msra.mxu0 0
      %597 = vmatprep.mubr.bf16.mxu0 0
      %598 = vmatmul.mubr.bf16.gmra.mxu0 %v483
      %v599 = vpop.f32.mrf.mxu0
      %v600 = vadd.f32 0.0, %v599
      %v601 = vpop.f32.mrf.mxu0
      %v602 = vadd.f32 0.0, %v601
      %v603 = vpop.f32.mrf.mxu0
      %v604 = vpop.f32.mrf.mxu0
      %605 = vdwg.mxu0
      %v606 = vadd.f32 %v456, %v600
      %v607 = vadd.f32 %v458, %v602
      %v608 = vld [vmem:[%s2] sm:$0x3]
      %v610 = vlaneseq
      %v611 = vshrl.u32 %v610, 7
      %v612 = vsub.s32 0, %v611
      %v613 = vrot.slane %v608, %v612
      %v614 = vlaneseq
      %v615 = vshrl.u32 %v614, 7
      %v616 = vsub.s32 1, %v615
      %v617 = vrot.slane %v608, %v616
      %v620 = vadd.f32 %v606, %v613
      %v621 = vadd.f32 %v607, %v617
      %v622 = vmax.f32 %v620, 0.0
      %v623 = vmax.f32 %v621, 0.0
      %v624 = vpack.c.bf16 %v622, %v622
      %v625 = vpack.c.bf16 %v623, %v623
      %v628 = vunpack.c.l.b16 %v624
      %v629 = vunpack.c.l.b16 %v625
      %v630 = vpack.c.b16 %v629, %v628
      %632 = vst [vmem:[%s170] sm:$0xff] %v630
      %p633 = scmp.lt.s32.totalorder %s14, 1
      %s634 = scalar_select %p633, %s14, 1
      %s635 = smul.addr %s634, 2
      %s636 = smul.addr %s635, 4
      %s637 = scalar_lea.vmem %s3, %s636
      // Predicated region
      $region33: #{_lambda_.25} parent=31 // pred_check
        %p638 = pneg %p100
      $region34: #{_lambda_.25} parent=31 // pred_check_branch
        %640 = sbr.rel (%p638) target = $region36
      $region35: #{_lambda_.25} parent=31 // pred_region
        _
      $region36: #{_lambda_.25} parent=31 // pred_fallthru
        _
    $region32: #{_lambda_.25} parent=5 // pred_fallthru
      _
    %p641 = scmp.le.s32.totalorder 2, %s9
    // Predicated region
    $region37: #{_lambda_.25} parent=5 // pred_check
      %p642 = pneg %p641
    $region38: #{_lambda_.25} parent=5 // pred_check_branch
      %644 = sbr.rel (%p642) target = $region40
    $region39: #{_lambda_.25} parent=5 // pred_region
      %s645 = ssub.s32 %s9, 2
      // Predicated region
      $region41: #{_lambda_.25} parent=39 // pred_check
        %p646 = pneg %p106
      $region42: #{_lambda_.25} parent=39 // pred_check_branch
        %648 = sbr.rel (%p646) target = $region44
      $region43: #{_lambda_.25} parent=39 // pred_region
        %p649 = scmp.lt.s32.totalorder %s15, 1
        %s650 = scalar_select %p649, %s15, 1
        %s651 = smul.addr %s650, 2
        %s652 = smul.addr %s651, 4
        %s653 = scalar_lea.vmem %s3, %s652
      $region44: #{_lambda_.25} parent=39 // pred_fallthru
        _
    $region40: #{_lambda_.25} parent=5 // pred_fallthru
      _
  $region6: #{_lambda_.25} parent=0 // loop_footer
    %s13 = sadd.s32 1, %s9
  $region7: #{_lambda_.25} parent=0 // loop_footer_branch
    %8 = sbr.rel target = $region3
  $region8: #{_lambda_.25} parent=0 // loop_exit
    _

// kernel: _lambda_.27
$region0: #{_lambda_.27}
  #allocation0 [shape = 'u32[]', space=smem, size = 0x4, offset = 0x4, fixed_abs, tag = 'smem constant byte address 0x4 - core index']
  #allocation1 [shape = 'u32[144,128]{1,0:T(1,128)}', space=vmem, size = 0x12000, scoped, tag = 'internal scratch']
  #allocation2 [shape = 'f32[1,1]{1,0:T(1,128)}', space=smem, size = 0x200, scoped, tag = 'scratch operand']
  %s0 = inlined_call_operand.vmem [shape: f32[32,128], index: 0, kind: input, shape index: {}]
  %s1 = inlined_call_operand.vmem [shape: f32[32,128], index: 1, kind: input, shape index: {}]
  %s2 = inlined_call_operand.hbm [shape: f32[1,1], index: 2, kind: output, shape index: {}]
  %s3 = sld [smem:[#allocation0]]
  $region22: #{_lambda_.27} parent=0
    _
  %s5 = ssub.s32 1, %s3
  %s6 = scalar_select 0, %s5, %s3
  $region1: #{_lambda_.27} parent=0
    #allocation3 [shape = 'u8[512]{0}', space=smem, size = 0x200, scoped, tag = 'output window, operand 0, single buffered']
    #allocation4 [shape = 's32[1]{0}', space=sflag, size = 0x4, scoped, tag = 'scoped memory for _lambda_.27']
    %7 = vsyncpa [#allocation4], 0
    // Predicated region
    $region2: #{_lambda_.27} parent=1 // pred_check
      _
    $region3: #{_lambda_.27} parent=1 // pred_check_branch
      %9 = sbr.rel (0) target = $region5
    $region4: #{_lambda_.27} parent=1 // pred_region
      _
    $region5: #{_lambda_.27} parent=1 // pred_fallthru
      _
    // Predicated region
    $region6: #{_lambda_.27} parent=1 // pred_check
      _
    $region7: #{_lambda_.27} parent=1 // pred_check_branch
      %11 = sbr.rel (0) target = $region9
    $region8: #{_lambda_.27} parent=1 // pred_region
      _
    $region9: #{_lambda_.27} parent=1 // pred_fallthru
      _
    %p12 = scmp.eq.s32.totalorder 0, 0
    // Predicated region
    $region10: #{_lambda_.27} parent=1 // pred_check
      %p13 = pneg %p12
    $region11: #{_lambda_.27} parent=1 // pred_check_branch
      %15 = sbr.rel (%p13) target = $region13
    $region12: #{_lambda_.27} parent=1 // pred_region
      %s16 = scalar_lea.smem [#allocation2], 0
      %17 = sst [smem:[%s16]] 0.0
    $region13: #{_lambda_.27} parent=1 // pred_fallthru
      _
    %v18 = vld [vmem:[%s0] sm:$0xff]
    %v19 = vld [vmem:[%s0 + $0x8] sm:$0xff]
    %v20 = vld [vmem:[%s0 + $0x10] sm:$0xff]
    %v21 = vld [vmem:[%s0 + $0x18] sm:$0xff]
    %v22 = vld [vmem:[%s1] sm:$0xff]
    %v23 = vld [vmem:[%s1 + $0x8] sm:$0xff]
    %v24 = vld [vmem:[%s1 + $0x10] sm:$0xff]
    %v25 = vld [vmem:[%s1 + $0x18] sm:$0xff]
    %v26 = vsub.f32 %v18, %v22
    %v27 = vsub.f32 %v19, %v23
    %v28 = vsub.f32 %v20, %v24
    %v29 = vsub.f32 %v21, %v25
    %s30 = smul.u32 0, 32
    %v31 = vlaneseq
    %v32 = vshrl.u32 %v31, 7
    %v33 = vadd.s32 %v32, 8
    %v34 = vadd.s32 %v32, 16
    %v35 = vadd.s32 %v32, 24
    %v36 = vstv %s30
    %v37 = vadd.s32 %v36, %v32
    %v38 = vadd.s32 %v36, %v33
    %v39 = vadd.s32 %v36, %v34
    %v40 = vadd.s32 %v36, %v35
    %vm41 = vcmp.lt.s32.totalorder %v37, 32
    %vm42 = vcmp.lt.s32.totalorder %v38, 32
    %vm43 = vcmp.lt.s32.totalorder %v39, 32
    %vm44 = vcmp.lt.s32.totalorder %v40, 32
    %v45 = vsel %vm41, 1, 0
    %v46 = vsel %vm42, 1, 0
    %v47 = vsel %vm43, 1, 0
    %v48 = vsel %vm44, 1, 0
    %v49 = vcvt.s32.f32 %v45
    %v50 = vcvt.s32.f32 %v46
    %v51 = vcvt.s32.f32 %v47
    %v52 = vcvt.s32.f32 %v48
    %v53 = vmul.f32 %v26, %v49
    %v54 = vmul.f32 %v27, %v50
    %v55 = vmul.f32 %v28, %v51
    %v56 = vmul.f32 %v29, %v52
    %s57 = sld [smem:[#allocation2]]
    %v58 = vmul.f32 %v53, %v53
    %v59 = vmul.f32 %v54, %v54
    %v60 = vmul.f32 %v55, %v55
    %v61 = vmul.f32 %v56, %v56
    %v62 = vadd.f32 %v58, %v59
    %v63 = vadd.f32 %v62, %v60
    %v64 = vadd.f32 %v63, %v61
    %65 = vadd.xlane.f32.xlu0 %v64
    %v66 = vpop.xlane.xlu0 %65
    %v67 = vrot.slane %v66, 4
    %v68 = vadd.f32 %v66, %v67
    %v69 = vrot.slane %v68, 2
    %v70 = vadd.f32 %v68, %v69
    %v71 = vrot.slane %v70, 1
    %v72 = vadd.f32 %v70, %v71
    %s73 = vtos %v72
    %s74 = sadd.f32 %s57, %s73
    %s75 = scalar_lea.smem [#allocation2], 0
    %76 = sst [smem:[%s75]] %s74
    %s77 = sld [smem:[#allocation2]]
    %s78 = scalar_lea.smem [#allocation3], 0
    %79 = sst [smem:[%s78]] %s77
    // Predicated region
    $region14: #{_lambda_.27} parent=1 // pred_check
      _
    $region15: #{_lambda_.27} parent=1 // pred_check_branch
      %81 = sbr.rel (0) target = $region17
    $region16: #{_lambda_.27} parent=1 // pred_region
      %s83 = ssub.s32 16, 16
      %84 = vsyncadd [#allocation4], %s83
      %87 = dma.smem_to_hbm [#allocation3], 16, %s2, [#allocation4]
    $region17: #{_lambda_.27} parent=1 // pred_fallthru
      _
    // Predicated region
    $region18: #{_lambda_.27} parent=1 // pred_check
      _
    $region19: #{_lambda_.27} parent=1 // pred_check_branch
      %89 = sbr.rel (0) target = $region21
    $region20: #{_lambda_.27} parent=1 // pred_region
      %90 = dma.done [#allocation4], 16
    $region21: #{_lambda_.27} parent=1 // pred_fallthru
      _
    %91 = sfence
    %92 = vsyncpa [#allocation4], 1

// kernel: _lambda_.26
$region0: #{_lambda_.26}
  #allocation0 [shape = 'u32[]', space=smem, size = 0x4, offset = 0x4, fixed_abs, tag = 'smem constant byte address 0x4 - core index']
  #allocation1 [shape = 'u32[144,128]{1,0:T(1,128)}', space=vmem, size = 0x12000, scoped, tag = 'internal scratch']
  %s0 = inlined_call_operand.vmem [shape: bf16[2,18,128], index: 0, kind: input, shape index: {}]
  %s1 = inlined_call_operand.vmem [shape: bf16[3,128,128], index: 1, kind: input, shape index: {}]
  %s2 = inlined_call_operand.vmem [shape: f32[1,128], index: 2, kind: input, shape index: {}]
  %s3 = inlined_call_operand.vmem [shape: f32[2,16,128], index: 3, kind: output, shape index: {}]
  %s4 = sld [smem:[#allocation0]]
  $region45: #{_lambda_.26} parent=0
    _
  %s6 = ssub.s32 1, %s4
  %s7 = scalar_select 0, %s6, %s4
  loop: start=0, step=1, limit=4
  $region2: #{_lambda_.26} parent=0 // loop_pre_header
    _
  $region3: #{_lambda_.26} parent=0 // loop_header
    %s9 = sphi 0, %s13
    %p10 = scmp.ge.s32.totalorder %s9, 4
    %s19 = sphi 0, %s21
    %s22 = sphi 0, %s19
    %s23 = sphi 0, %s22
    %s39 = sphi 0, %s23
    %s43 = sphi 0, %s43
    %s45 = sphi 0, %s43
    %s46 = sphi 0, %s45
    %s60 = sphi 0, %s46
    %s64 = sphi 0, %s64
    %s66 = sphi 0, %s64
    %s67 = sphi 0, %s66
    %s81 = sphi 0, %s67
    %s87 = sphi 0, %s89
    %s90 = sphi 0, %s87
    %s91 = sphi 0, %s90
    %s107 = sphi 0, %s91
  $region4: #{_lambda_.26} parent=0 // loop_header_branch
    %12 = sbr.rel (%p10) target = $region8
  $region5: #{_lambda_.26} parent=0 // loop_body
    %s14 = ssub.s32 %s9, 1
    %s15 = ssub.s32 %s9, 2
    %s16 = sadd.s32 %s9, 1
    %s17 = ssub.s32 %s9, %s16
    %p18 = scmp.eq.s32.totalorder %s17, 0
    %s20 = sadd.s32 %s19, 1
    %s21 = scalar_select %p18, %s19, %s20
    %p24 = pneg %p18
    %p25 = scmp.eq.s32.totalorder %s9, 1
    %p26 = por %p24, %p25
    %p27 = scmp.ne.s32.totalorder %s19, %s22
    %p28 = scmp.eq.s32.totalorder %s9, 0
    %p29 = por %p27, %p28
    %p30 = scmp.ne.s32.totalorder %s19, %s22
    %p31 = scmp.eq.s32.totalorder %s14, 1
    %p32 = por %p30, %p31
    %p33 = scmp.ne.s32.totalorder %s22, %s23
    %p34 = scmp.eq.s32.totalorder %s14, 0
    %p35 = por %p33, %p34
    %p36 = scmp.ne.s32.totalorder %s22, %s23
    %p37 = scmp.eq.s32.totalorder %s15, 1
    %p38 = por %p36, %p37
    %p40 = scmp.ne.s32.totalorder %s23, %s39
    %p41 = scmp.eq.s32.totalorder %s15, 0
    %p42 = por %p40, %p41
    %s44 = sadd.s32 %s43, 1
    %p47 = scmp.eq.s32.totalorder %s9, 1
    %p48 = scmp.ne.s32.totalorder %s43, %s45
    %p49 = scmp.eq.s32.totalorder %s9, 0
    %p50 = por %p48, %p49
    %p51 = scmp.ne.s32.totalorder %s43, %s45
    %p52 = scmp.eq.s32.totalorder %s14, 1
    %p53 = por %p51, %p52
    %p54 = scmp.ne.s32.totalorder %s45, %s46
    %p55 = scmp.eq.s32.totalorder %s14, 0
    %p56 = por %p54, %p55
    %p57 = scmp.ne.s32.totalorder %s45, %s46
    %p58 = scmp.eq.s32.totalorder %s15, 1
    %p59 = por %p57, %p58
    %p61 = scmp.ne.s32.totalorder %s46, %s60
    %p62 = scmp.eq.s32.totalorder %s15, 0
    %p63 = por %p61, %p62
    %s65 = sadd.s32 %s64, 1
    %p68 = scmp.eq.s32.totalorder %s9, 1
    %p69 = scmp.ne.s32.totalorder %s64, %s66
    %p70 = scmp.eq.s32.totalorder %s9, 0
    %p71 = por %p69, %p70
    %p72 = scmp.ne.s32.totalorder %s64, %s66
    %p73 = scmp.eq.s32.totalorder %s14, 1
    %p74 = por %p72, %p73
    %p75 = scmp.ne.s32.totalorder %s66, %s67
    %p76 = scmp.eq.s32.totalorder %s14, 0
    %p77 = por %p75, %p76
    %p78 = scmp.ne.s32.totalorder %s66, %s67
    %p79 = scmp.eq.s32.totalorder %s15, 1
    %p80 = por %p78, %p79
    %p82 = scmp.ne.s32.totalorder %s67, %s81
    %p83 = scmp.eq.s32.totalorder %s15, 0
    %p84 = por %p82, %p83
    %s85 = ssub.s32 %s9, %s16
    %p86 = scmp.eq.s32.totalorder %s85, 0
    %s88 = sadd.s32 %s87, 1
    %s89 = scalar_select %p86, %s87, %s88
    %p92 = pneg %p86
    %p93 = scmp.eq.s32.totalorder %s9, 1
    %p94 = por %p92, %p93
    %p95 = scmp.ne.s32.totalorder %s87, %s90
    %p96 = scmp.eq.s32.totalorder %s9, 0
    %p97 = por %p95, %p96
    %p98 = scmp.ne.s32.totalorder %s87, %s90
    %p99 = scmp.eq.s32.totalorder %s14, 1
    %p100 = por %p98, %p99
    %p101 = scmp.ne.s32.totalorder %s90, %s91
    %p102 = scmp.eq.s32.totalorder %s14, 0
    %p103 = por %p101, %p102
    %p104 = scmp.ne.s32.totalorder %s90, %s91
    %p105 = scmp.eq.s32.totalorder %s15, 1
    %p106 = por %p104, %p105
    %p108 = scmp.ne.s32.totalorder %s91, %s107
    %p109 = scmp.eq.s32.totalorder %s15, 0
    %p110 = por %p108, %p109
    %p111 = scmp.le.s32.totalorder 1, %s9
    %p112 = scmp.lt.s32.totalorder %s9, 3
    %p113 = pnand %p111, %p112
    %p114 = pneg %p113
    // Predicated region
    $region9: #{_lambda_.26} parent=5 // pred_check
      _
    $region10: #{_lambda_.26} parent=5 // pred_check_branch
      %116 = sbr.rel (%p113) target = $region12
    $region11: #{_lambda_.26} parent=5 // pred_region
      %s117 = ssub.s32 %s9, 1
      // Predicated region
      $region13: #{_lambda_.26} parent=11 // pred_check
        %p118 = pneg %p56
      $region14: #{_lambda_.26} parent=11 // pred_check_branch
        %120 = sbr.rel (%p118) target = $region16
      $region15: #{_lambda_.26} parent=11 // pred_region
        _
      $region16: #{_lambda_.26} parent=11 // pred_fallthru
        _
      // Predicated region
      $region17: #{_lambda_.26} parent=11 // pred_check
        %p121 = pneg %p77
      $region18: #{_lambda_.26} parent=11 // pred_check_branch
        %123 = sbr.rel (%p121) target = $region20
      $region19: #{_lambda_.26} parent=11 // pred_region
        _
      $region20: #{_lambda_.26} parent=11 // pred_fallthru
        _
    $region12: #{_lambda_.26} parent=5 // pred_fallthru
      _
    %p124 = scmp.lt.s32.totalorder %s9, 2
    // Predicated region
    $region21: #{_lambda_.26} parent=5 // pred_check
      %p125 = pneg %p124
    $region22: #{_lambda_.26} parent=5 // pred_check_branch
      %127 = sbr.rel (%p125) target = $region24
    $region23: #{_lambda_.26} parent=5 // pred_region
      // Predicated region
      $region25: #{_lambda_.26} parent=23 // pred_check
        %p128 = pneg %p29
      $region26: #{_lambda_.26} parent=23 // pred_check_branch
        %130 = sbr.rel (%p128) target = $region28
      $region27: #{_lambda_.26} parent=23 // pred_region
        %p131 = scmp.lt.s32.totalorder %s9, 1
        %s132 = scalar_select %p131, %s9, 1
        %s133 = smul.addr %s132, 3
        %s134 = smul.addr %s133, 4
        %s135 = scalar_lea.vmem %s0, %s134
      $region28: #{_lambda_.26} parent=23 // pred_fallthru
        _
    $region24: #{_lambda_.26} parent=5 // pred_fallthru
      _
    %p136 = scmp.le.s32.totalorder 1, %s9
    %p137 = scmp.lt.s32.totalorder %s9, 3
    %p138 = pnand %p136, %p137
    %p139 = pneg %p138
    // Predicated region
    $region29: #{_lambda_.26} parent=5 // pred_check
      _
    $region30: #{_lambda_.26} parent=5 // pred_check_branch
      %141 = sbr.rel (%p138) target = $region32
    $region31: #{_lambda_.26} parent=5 // pred_region
      %s142 = ssub.s32 %s9, 1
      %p143 = scmp.lt.s32.totalorder %s14, 1
      %s144 = scalar_select %p143, %s14, 1
      %s145 = smul.addr %s144, 3
      %s146 = smul.addr %s145, 4
      %s147 = scalar_lea.vmem %s0, %s146
      %p148 = pneg %p35
      %p149 = pneg %p32
      %p150 = pneg %p56
      %p151 = pneg %p53
      %p152 = pneg %p77
      %p153 = pneg %p74
      %p154 = pneg %p103
      %p155 = pneg %p100
      %p156 = scmp.lt.s32.totalorder %s14, 1
      %s157 = scalar_select %p156, %s14, 1
      %s158 = smul.addr %s157, 2
      %s159 = smul.addr %s158, 8
      %s160 = scalar_lea.vmem %s3, %s159
      %p161 = scmp.lt.s32.totalorder %s14, 1
      %s162 = scalar_select %p161, %s14, 1
      %s163 = smul.addr %s162, 3
      %s164 = smul.addr %s163, 4
      %s165 = scalar_lea.vmem %s0, %s164
      %p166 = scmp.lt.s32.totalorder %s14, 1
      %s167 = scalar_select %p166, %s14, 1
      %s168 = smul.addr %s167, 2
      %s169 = smul.addr %s168, 8
      %s170 = scalar_lea.vmem %s3, %s169
      %v172 = vld [vmem:[%s165] sm:$0xf]
      %v173 = vld [vmem:[%s165 + $0x4] sm:$0xf]
      %v174 = vld [vmem:[%s1] sm:$0xf]
      %v175 = vld [vmem:[%s1 + $0x4] sm:$0xf]
      %v176 = vld [vmem:[%s1 + $0x8] sm:$0xf]
      %v177 = vld [vmem:[%s1 + $0xc] sm:$0xf]
      %v178 = vld [vmem:[%s1 + $0x10] sm:$0xf]
      %v179 = vld [vmem:[%s1 + $0x14] sm:$0xf]
      %v180 = vld [vmem:[%s1 + $0x18] sm:$0xf]
      %v181 = vld [vmem:[%s1 + $0x1c] sm:$0xf]
      %v182 = vld [vmem:[%s1 + $0x20] sm:$0xf]
      %v183 = vld [vmem:[%s1 + $0x24] sm:$0xf]
      %v184 = vld [vmem:[%s1 + $0x28] sm:$0xf]
      %v185 = vld [vmem:[%s1 + $0x2c] sm:$0xf]
      %v186 = vld [vmem:[%s1 + $0x30] sm:$0xf]
      %v187 = vld [vmem:[%s1 + $0x34] sm:$0xf]
      %v188 = vld [vmem:[%s1 + $0x38] sm:$0xf]
      %v189 = vld [vmem:[%s1 + $0x3c] sm:$0xf]
      %v190 = vld [vmem:[%s165 + $0x8] sm:$0x1]
      %s191 = scalar_lea.vmem %s1, 64
      %v192 = vld [vmem:[%s191] sm:$0xf]
      %v193 = vld [vmem:[%s191 + $0x4] sm:$0xf]
      %v194 = vld [vmem:[%s191 + $0x8] sm:$0xf]
      %v195 = vld [vmem:[%s191 + $0xc] sm:$0xf]
      %v196 = vld [vmem:[%s191 + $0x10] sm:$0xf]
      %v197 = vld [vmem:[%s191 + $0x14] sm:$0xf]
      %v198 = vld [vmem:[%s191 + $0x18] sm:$0xf]
      %v199 = vld [vmem:[%s191 + $0x1c] sm:$0xf]
      %v200 = vld [vmem:[%s191 + $0x20] sm:$0xf]
      %v201 = vld [vmem:[%s191 + $0x24] sm:$0xf]
      %v202 = vld [vmem:[%s191 + $0x28] sm:$0xf]
      %v203 = vld [vmem:[%s191 + $0x2c] sm:$0xf]
      %v204 = vld [vmem:[%s191 + $0x30] sm:$0xf]
      %v205 = vld [vmem:[%s191 + $0x34] sm:$0xf]
      %v206 = vld [vmem:[%s191 + $0x38] sm:$0xf]
      %v207 = vld [vmem:[%s191 + $0x3c] sm:$0xf]
      %v211 = vunpack.c.l.b16 %v172
      %v212 = vunpack.c.l.b16 %v173
      %v213 = vunpack.c.l.b16 %v190
      %v214 = vpack.c.b16 %v212, %v211
      %v215 = vpack.c.b16 %v213, %v213
      %vm216 = vsmask.f32 7424
      %v218 = vshrl.u32 %v214, 16
      %v220 = vshll.u32 %v214, 16
      %v222 = vrot.slane %v220, 1
      %v223 = vor.u32 %v218, %v222
      %v225 = vshll.u32 %v215, 16
      %v227 = vrot.slane %v225, 1
      %v228 = vsel %vm216, %v223, %v227
      %v246 = vunpack.c.l.b16 %v192
      %v247 = vunpack.c.l.b16 %v193
      %v248 = vunpack.c.l.b16 %v194
      %v249 = vunpack.c.l.b16 %v195
      %v250 = vunpack.c.l.b16 %v196
      %v251 = vunpack.c.l.b16 %v197
      %v252 = vunpack.c.l.b16 %v198
      %v253 = vunpack.c.l.b16 %v199
      %v254 = vunpack.c.l.b16 %v200
      %v255 = vunpack.c.l.b16 %v201
      %v256 = vunpack.c.l.b16 %v202
      %v257 = vunpack.c.l.b16 %v203
      %v258 = vunpack.c.l.b16 %v204
      %v259 = vunpack.c.l.b16 %v205
      %v260 = vunpack.c.l.b16 %v206
      %v261 = vunpack.c.l.b16 %v207
      %v262 = vpack.c.b16 %v247, %v246
      %v263 = vpack.c.b16 %v249, %v248
      %v264 = vpack.c.b16 %v251, %v250
      %v265 = vpack.c.b16 %v253, %v252
      %v266 = vpack.c.b16 %v255, %v254
      %v267 = vpack.c.b16 %v257, %v256
      %v268 = vpack.c.b16 %v259, %v258
      %v269 = vpack.c.b16 %v261, %v260
      %278 = vmatprep.subr.bf16.mxu0 0
      %279 = vmatpush1.bf16.msra.mxu0 %v269
      %280 = vmatprep.subr.bf16.mxu0 0
      %281 = vmatpush1.bf16.msra.mxu0 %v268
      %282 = vmatprep.subr.bf16.mxu0 0
      %283 = vmatpush1.bf16.msra.mxu0 %v267
      %284 = vmatprep.subr.bf16.mxu0 0
      %285 = vmatpush1.bf16.msra.mxu0 %v266
      %286 = vmatprep.subr.bf16.mxu0 0
      %287 = vmatpush1.bf16.msra.mxu0 %v265
      %288 = vmatprep.subr.bf16.mxu0 0
      %289 = vmatpush1.bf16.msra.mxu0 %v264
      %290 = vmatprep.subr.bf16.mxu0 0
      %291 = vmatpush1.bf16.msra.mxu0 %v263
      %292 = vmatprep.subr.bf16.mxu0 0
      %293 = vmatpush1.bf16.msra.mxu0 %v262
      %294 = vmatprep.subr.bf16.mxu0 0
      %295 = vmatpush2.bf16.msra.mxu0 0
      %296 = vmatprep.subr.bf16.mxu0 0
      %297 = vmatpush2.bf16.msra.mxu0 0
      %298 = vmatprep.subr.bf16.mxu0 0
      %299 = vmatpush2.bf16.msra.mxu0 0
      %300 = vmatprep.subr.bf16.mxu0 0
      %301 = vmatpush2.bf16.msra.mxu0 0
      %302 = vmatprep.subr.bf16.mxu0 0
      %303 = vmatpush2.bf16.msra.mxu0 0
      %304 = vmatprep.subr.bf16.mxu0 0
      %305 = vmatpush2.bf16.msra.mxu0 0
      %306 = vmatprep.subr.bf16.mxu0 0
      %307 = vmatpush2.bf16.msra.mxu0 0
      %308 = vmatprep.subr.bf16.mxu0 0
      %309 = vmatpush2.bf16.msra.mxu0 0
      %310 = vmatprep.mubr.bf16.mxu0 0
      %311 = vmatmul.mubr.bf16.gmra.mxu0 %v228
      %v312 = vpop.f32.mrf.mxu0
      %v313 = vadd.f32 0.0, %v312
      %v314 = vpop.f32.mrf.mxu0
      %v315 = vpop.f32.mrf.mxu0
      %v316 = vadd.f32 0.0, %v315
      %v317 = vpop.f32.mrf.mxu0
      %318 = vdwg.mxu0
      %v336 = vunpack.c.l.b16 %v174
      %v337 = vunpack.c.l.b16 %v175
      %v338 = vunpack.c.l.b16 %v176
      %v339 = vunpack.c.l.b16 %v177
      %v340 = vunpack.c.l.b16 %v178
      %v341 = vunpack.c.l.b16 %v179
      %v342 = vunpack.c.l.b16 %v180
      %v343 = vunpack.c.l.b16 %v181
      %v344 = vunpack.c.l.b16 %v182
      %v345 = vunpack.c.l.b16 %v183
      %v346 = vunpack.c.l.b16 %v184
      %v347 = vunpack.c.l.b16 %v185
      %v348 = vunpack.c.l.b16 %v186
      %v349 = vunpack.c.l.b16 %v187
      %v350 = vunpack.c.l.b16 %v188
      %v351 = vunpack.c.l.b16 %v189
      %v352 = vpack.c.b16 %v337, %v336
      %v353 = vpack.c.b16 %v339, %v338
      %v354 = vpack.c.b16 %v341, %v340
      %v355 = vpack.c.b16 %v343, %v342
      %v356 = vpack.c.b16 %v345, %v344
      %v357 = vpack.c.b16 %v347, %v346
      %v358 = vpack.c.b16 %v349, %v348
      %v359 = vpack.c.b16 %v351, %v350
      %368 = vmatprep.subr.bf16.mxu0 0
      %369 = vmatpush1.bf16.msra.mxu0 %v359
      %370 = vmatprep.subr.bf16.mxu0 0
      %371 = vmatpush1.bf16.msra.mxu0 %v358
      %372 = vmatprep.subr.bf16.mxu0 0
      %373 = vmatpush1.bf16.msra.mxu0 %v357
      %374 = vmatprep.subr.bf16.mxu0 0
      %375 = vmatpush1.bf16.msra.mxu0 %v356
      %376 = vmatprep.subr.bf16.mxu0 0
      %377 = vmatpush1.bf16.msra.mxu0 %v355
      %378 = vmatprep.subr.bf16.mxu0 0
      %379 = vmatpush1.bf16.msra.mxu0 %v354
      %380 = vmatprep.subr.bf16.mxu0 0
      %381 = vmatpush1.bf16.msra.mxu0 %v353
      %382 = vmatprep.subr.bf16.mxu0 0
      %383 = vmatpush1.bf16.msra.mxu0 %v352
      %384 = vmatprep.subr.bf16.mxu0 0
      %385 = vmatpush2.bf16.msra.mxu0 0
      %386 = vmatprep.subr.bf16.mxu0 0
      %387 = vmatpush2.bf16.msra.mxu0 0
      %388 = vmatprep.subr.bf16.mxu0 0
      %389 = vmatpush2.bf16.msra.mxu0 0
      %390 = vmatprep.subr.bf16.mxu0 0
      %391 = vmatpush2.bf16.msra.mxu0 0
      %392 = vmatprep.subr.bf16.mxu0 0
      %393 = vmatpush2.bf16.msra.mxu0 0
      %394 = vmatprep.subr.bf16.mxu0 0
      %395 = vmatpush2.bf16.msra.mxu0 0
      %396 = vmatprep.subr.bf16.mxu0 0
      %397 = vmatpush2.bf16.msra.mxu0 0
      %398 = vmatprep.subr.bf16.mxu0 0
      %399 = vmatpush2.bf16.msra.mxu0 0
      %400 = vmatprep.mubr.bf16.mxu0 0
      %401 = vmatmul.mubr.bf16.gmra.mxu0 %v214
      %v402 = vpop.f32.mrf.mxu0
      %v403 = vadd.f32 %v313, %v402
      %v404 = vpop.f32.mrf.mxu0
      %v405 = vpop.f32.mrf.mxu0
      %v406 = vadd.f32 %v316, %v405
      %v407 = vpop.f32.mrf.mxu0
      %408 = vdwg.mxu0
      %v409 = vld [vmem:[%s165] sm:$0xe]
      %s410 = scalar_lea.vmem %s1, 128
      %v411 = vld [vmem:[%s410] sm:$0xf]
      %v412 = vld [vmem:[%s410 + $0x4] sm:$0xf]
      %v413 = vld [vmem:[%s410 + $0x8] sm:$0xf]
      %v414 = vld [vmem:[%s410 + $0xc] sm:$0xf]
      %v415 = vld [vmem:[%s410 + $0x10] sm:$0xf]
      %v416 = vld [vmem:[%s410 + $0x14] sm:$0xf]
      %v417 = vld [vmem:[%s410 + $0x18] sm:$0xf]
      %v418 = vld [vmem:[%s410 + $0x1c] sm:$0xf]
      %v419 = vld [vmem:[%s410 + $0x20] sm:$0xf]
      %v420 = vld [vmem:[%s410 + $0x24] sm:$0xf]
      %v421 = vld [vmem:[%s410 + $0x28] sm:$0xf]
      %v422 = vld [vmem:[%s410 + $0x2c] sm:$0xf]
      %v423 = vld [vmem:[%s410 + $0x30] sm:$0xf]
      %v424 = vld [vmem:[%s410 + $0x34] sm:$0xf]
      %v425 = vld [vmem:[%s410 + $0x38] sm:$0xf]
      %v426 = vld [vmem:[%s410 + $0x3c] sm:$0xf]
      %v428 = vunpack.c.l.b16 %v409
      %v429 = vpack.c.b16 %v212, %v428
      %vm430 = vcmask 1046528
      %v431 = vrot.slane %v429, 1
      %v432 = vrot.slane %v215, 1
      %v433 = vsel %vm430, %v431, %v432
      %v451 = vunpack.c.l.b16 %v411
      %v452 = vunpack.c.l.b16 %v412
      %v453 = vunpack.c.l.b16 %v413
      %v454 = vunpack.c.l.b16 %v414
      %v455 = vunpack.c.l.b16 %v415
      %v456 = vunpack.c.l.b16 %v416
      %v457 = vunpack.c.l.b16 %v417
      %v458 = vunpack.c.l.b16 %v418
      %v459 = vunpack.c.l.b16 %v419
      %v460 = vunpack.c.l.b16 %v420
      %v461 = vunpack.c.l.b16 %v421
      %v462 = vunpack.c.l.b16 %v422
      %v463 = vunpack.c.l.b16 %v423
      %v464 = vunpack.c.l.b16 %v424
      %v465 = vunpack.c.l.b16 %v425
      %v466 = vunpack.c.l.b16 %v426
      %v467 = vpack.c.b16 %v452, %v451
      %v468 = vpack.c.b16 %v454, %v453
      %v469 = vpack.c.b16 %v456, %v455
      %v470 = vpack.c.b16 %v458, %v457
      %v471 = vpack.c.b16 %v460, %v459
      %v472 = vpack.c.b16 %v462, %v461
      %v473 = vpack.c.b16 %v464, %v463
      %v474 = vpack.c.b16 %v466, %v465
      %483 = vmatprep.subr.bf16.mxu0 0
      %484 = vmatpush1.bf16.msra.mxu0 %v474
      %485 = vmatprep.subr.bf16.mxu0 0
      %486 = vmatpush1.bf16.msra.mxu0 %v473
      %487 = vmatprep.subr.bf16.mxu0 0
      %488 = vmatpush1.bf16.msra.mxu0 %v472
      %489 = vmatprep.subr.bf16.mxu0 0
      %490 = vmatpush1.bf16.msra.mxu0 %v471
      %491 = vmatprep.subr.bf16.mxu0 0
      %492 = vmatpush1.bf16.msra.mxu0 %v470
      %493 = vmatprep.subr.bf16.mxu0 0
      %494 = vmatpush1.bf16.msra.mxu0 %v469
      %495 = vmatprep.subr.bf16.mxu0 0
      %496 = vmatpush1.bf16.msra.mxu0 %v468
      %497 = vmatprep.subr.bf16.mxu0 0
      %498 = vmatpush1.bf16.msra.mxu0 %v467
      %499 = vmatprep.subr.bf16.mxu0 0
      %500 = vmatpush2.bf16.msra.mxu0 0
      %501 = vmatprep.subr.bf16.mxu0 0
      %502 = vmatpush2.bf16.msra.mxu0 0
      %503 = vmatprep.subr.bf16.mxu0 0
      %504 = vmatpush2.bf16.msra.mxu0 0
      %505 = vmatprep.subr.bf16.mxu0 0
      %506 = vmatpush2.bf16.msra.mxu0 0
      %507 = vmatprep.subr.bf16.mxu0 0
      %508 = vmatpush2.bf16.msra.mxu0 0
      %509 = vmatprep.subr.bf16.mxu0 0
      %510 = vmatpush2.bf16.msra.mxu0 0
      %511 = vmatprep.subr.bf16.mxu0 0
      %512 = vmatpush2.bf16.msra.mxu0 0
      %513 = vmatprep.subr.bf16.mxu0 0
      %514 = vmatpush2.bf16.msra.mxu0 0
      %515 = vmatprep.mubr.bf16.mxu0 0
      %516 = vmatmul.mubr.bf16.gmra.mxu0 %v433
      %v517 = vpop.f32.mrf.mxu0
      %v518 = vadd.f32 0.0, %v517
      %v519 = vpop.f32.mrf.mxu0
      %v520 = vpop.f32.mrf.mxu0
      %v521 = vadd.f32 0.0, %v520
      %v522 = vpop.f32.mrf.mxu0
      %523 = vdwg.mxu0
      %v524 = vadd.f32 %v403, %v518
      %v525 = vadd.f32 %v406, %v521
      %v526 = vld [vmem:[%s2] sm:$0x1]
      %v528 = vlaneseq
      %v529 = vshrl.u32 %v528, 7
      %v530 = vsub.s32 0, %v529
      %v531 = vrot.slane %v526, %v530
      %v533 = vadd.f32 %v524, %v531
      %v534 = vadd.f32 %v525, %v531
      %535 = vst [vmem:[%s170] sm:$0xff] %v533
      %536 = vst [vmem:[%s170 + $0x8] sm:$0xff] %v534
      %p537 = scmp.lt.s32.totalorder %s14, 1
      %s538 = scalar_select %p537, %s14, 1
      %s539 = smul.addr %s538, 2
      %s540 = smul.addr %s539, 8
      %s541 = scalar_lea.vmem %s3, %s540
      // Predicated region
      $region33: #{_lambda_.26} parent=31 // pred_check
        %p542 = pneg %p100
      $region34: #{_lambda_.26} parent=31 // pred_check_branch
        %544 = sbr.rel (%p542) target = $region36
      $region35: #{_lambda_.26} parent=31 // pred_region
        _
      $region36: #{_lambda_.26} parent=31 // pred_fallthru
        _
    $region32: #{_lambda_.26} parent=5 // pred_fallthru
      _
    %p545 = scmp.le.s32.totalorder 2, %s9
    // Predicated region
    $region37: #{_lambda_.26} parent=5 // pred_check
      %p546 = pneg %p545
    $region38: #{_lambda_.26} parent=5 // pred_check_branch
      %548 = sbr.rel (%p546) target = $region40
    $region39: #{_lambda_.26} parent=5 // pred_region
      %s549 = ssub.s32 %s9, 2
      // Predicated region
      $region41: #{_lambda_.26} parent=39 // pred_check
        %p550 = pneg %p106
      $region42: #{_lambda_.26} parent=39 // pred_check_branch
        %552 = sbr.rel (%p550) target = $region44
      $region43: #{_lambda_.26} parent=39 // pred_region
        %p553 = scmp.lt.s32.totalorder %s15, 1
        %s554 = scalar_select %p553, %s15, 1
        %s555 = smul.addr %s554, 2
        %s556 = smul.addr %s555, 8
        %s557 = scalar_lea.vmem %s3, %s556
      $region44: #{_lambda_.26} parent=39 // pred_fallthru
        _
    $region40: #{_lambda_.26} parent=5 // pred_fallthru
      _
  $region6: #{_lambda_.26} parent=0 // loop_footer
    %s13 = sadd.s32 1, %s9
  $region7: #{_lambda_.26} parent=0 // loop_footer_branch
    %8 = sbr.rel target = $region3
  $region8: #{_lambda_.26} parent=0 // loop_exit
    _

// kernel: _lambda_.30
$region0: #{_lambda_.30}
  #allocation0 [shape = 'u32[]', space=smem, size = 0x4, offset = 0x4, fixed_abs, tag = 'smem constant byte address 0x4 - core index']
  #allocation1 [shape = 'u32[144,128]{1,0:T(1,128)}', space=vmem, size = 0x12000, scoped, tag = 'internal scratch']
  %s0 = inlined_call_operand.vmem [shape: bf16[2,10,128], index: 0, kind: input, shape index: {}]
  %s1 = inlined_call_operand.vmem [shape: bf16[3,128,128], index: 1, kind: input, shape index: {}]
  %s2 = inlined_call_operand.vmem [shape: f32[1,128], index: 2, kind: input, shape index: {}]
  %s3 = inlined_call_operand.vmem [shape: f32[2,8,128], index: 3, kind: output, shape index: {}]
  %s4 = sld [smem:[#allocation0]]
  $region45: #{_lambda_.30} parent=0
    _
  %s6 = ssub.s32 1, %s4
  %s7 = scalar_select 0, %s6, %s4
  loop: start=0, step=1, limit=4
  $region2: #{_lambda_.30} parent=0 // loop_pre_header
    _
  $region3: #{_lambda_.30} parent=0 // loop_header
    %s9 = sphi 0, %s13
    %p10 = scmp.ge.s32.totalorder %s9, 4
    %s19 = sphi 0, %s21
    %s22 = sphi 0, %s19
    %s23 = sphi 0, %s22
    %s39 = sphi 0, %s23
    %s43 = sphi 0, %s43
    %s45 = sphi 0, %s43
    %s46 = sphi 0, %s45
    %s60 = sphi 0, %s46
    %s64 = sphi 0, %s64
    %s66 = sphi 0, %s64
    %s67 = sphi 0, %s66
    %s81 = sphi 0, %s67
    %s87 = sphi 0, %s89
    %s90 = sphi 0, %s87
    %s91 = sphi 0, %s90
    %s107 = sphi 0, %s91
  $region4: #{_lambda_.30} parent=0 // loop_header_branch
    %12 = sbr.rel (%p10) target = $region8
  $region5: #{_lambda_.30} parent=0 // loop_body
    %s14 = ssub.s32 %s9, 1
    %s15 = ssub.s32 %s9, 2
    %s16 = sadd.s32 %s9, 1
    %s17 = ssub.s32 %s9, %s16
    %p18 = scmp.eq.s32.totalorder %s17, 0
    %s20 = sadd.s32 %s19, 1
    %s21 = scalar_select %p18, %s19, %s20
    %p24 = pneg %p18
    %p25 = scmp.eq.s32.totalorder %s9, 1
    %p26 = por %p24, %p25
    %p27 = scmp.ne.s32.totalorder %s19, %s22
    %p28 = scmp.eq.s32.totalorder %s9, 0
    %p29 = por %p27, %p28
    %p30 = scmp.ne.s32.totalorder %s19, %s22
    %p31 = scmp.eq.s32.totalorder %s14, 1
    %p32 = por %p30, %p31
    %p33 = scmp.ne.s32.totalorder %s22, %s23
    %p34 = scmp.eq.s32.totalorder %s14, 0
    %p35 = por %p33, %p34
    %p36 = scmp.ne.s32.totalorder %s22, %s23
    %p37 = scmp.eq.s32.totalorder %s15, 1
    %p38 = por %p36, %p37
    %p40 = scmp.ne.s32.totalorder %s23, %s39
    %p41 = scmp.eq.s32.totalorder %s15, 0
    %p42 = por %p40, %p41
    %s44 = sadd.s32 %s43, 1
    %p47 = scmp.eq.s32.totalorder %s9, 1
    %p48 = scmp.ne.s32.totalorder %s43, %s45
    %p49 = scmp.eq.s32.totalorder %s9, 0
    %p50 = por %p48, %p49
    %p51 = scmp.ne.s32.totalorder %s43, %s45
    %p52 = scmp.eq.s32.totalorder %s14, 1
    %p53 = por %p51, %p52
    %p54 = scmp.ne.s32.totalorder %s45, %s46
    %p55 = scmp.eq.s32.totalorder %s14, 0
    %p56 = por %p54, %p55
    %p57 = scmp.ne.s32.totalorder %s45, %s46
    %p58 = scmp.eq.s32.totalorder %s15, 1
    %p59 = por %p57, %p58
    %p61 = scmp.ne.s32.totalorder %s46, %s60
    %p62 = scmp.eq.s32.totalorder %s15, 0
    %p63 = por %p61, %p62
    %s65 = sadd.s32 %s64, 1
    %p68 = scmp.eq.s32.totalorder %s9, 1
    %p69 = scmp.ne.s32.totalorder %s64, %s66
    %p70 = scmp.eq.s32.totalorder %s9, 0
    %p71 = por %p69, %p70
    %p72 = scmp.ne.s32.totalorder %s64, %s66
    %p73 = scmp.eq.s32.totalorder %s14, 1
    %p74 = por %p72, %p73
    %p75 = scmp.ne.s32.totalorder %s66, %s67
    %p76 = scmp.eq.s32.totalorder %s14, 0
    %p77 = por %p75, %p76
    %p78 = scmp.ne.s32.totalorder %s66, %s67
    %p79 = scmp.eq.s32.totalorder %s15, 1
    %p80 = por %p78, %p79
    %p82 = scmp.ne.s32.totalorder %s67, %s81
    %p83 = scmp.eq.s32.totalorder %s15, 0
    %p84 = por %p82, %p83
    %s85 = ssub.s32 %s9, %s16
    %p86 = scmp.eq.s32.totalorder %s85, 0
    %s88 = sadd.s32 %s87, 1
    %s89 = scalar_select %p86, %s87, %s88
    %p92 = pneg %p86
    %p93 = scmp.eq.s32.totalorder %s9, 1
    %p94 = por %p92, %p93
    %p95 = scmp.ne.s32.totalorder %s87, %s90
    %p96 = scmp.eq.s32.totalorder %s9, 0
    %p97 = por %p95, %p96
    %p98 = scmp.ne.s32.totalorder %s87, %s90
    %p99 = scmp.eq.s32.totalorder %s14, 1
    %p100 = por %p98, %p99
    %p101 = scmp.ne.s32.totalorder %s90, %s91
    %p102 = scmp.eq.s32.totalorder %s14, 0
    %p103 = por %p101, %p102
    %p104 = scmp.ne.s32.totalorder %s90, %s91
    %p105 = scmp.eq.s32.totalorder %s15, 1
    %p106 = por %p104, %p105
    %p108 = scmp.ne.s32.totalorder %s91, %s107
    %p109 = scmp.eq.s32.totalorder %s15, 0
    %p110 = por %p108, %p109
    %p111 = scmp.le.s32.totalorder 1, %s9
    %p112 = scmp.lt.s32.totalorder %s9, 3
    %p113 = pnand %p111, %p112
    %p114 = pneg %p113
    // Predicated region
    $region9: #{_lambda_.30} parent=5 // pred_check
      _
    $region10: #{_lambda_.30} parent=5 // pred_check_branch
      %116 = sbr.rel (%p113) target = $region12
    $region11: #{_lambda_.30} parent=5 // pred_region
      %s117 = ssub.s32 %s9, 1
      // Predicated region
      $region13: #{_lambda_.30} parent=11 // pred_check
        %p118 = pneg %p56
      $region14: #{_lambda_.30} parent=11 // pred_check_branch
        %120 = sbr.rel (%p118) target = $region16
      $region15: #{_lambda_.30} parent=11 // pred_region
        _
      $region16: #{_lambda_.30} parent=11 // pred_fallthru
        _
      // Predicated region
      $region17: #{_lambda_.30} parent=11 // pred_check
        %p121 = pneg %p77
      $region18: #{_lambda_.30} parent=11 // pred_check_branch
        %123 = sbr.rel (%p121) target = $region20
      $region19: #{_lambda_.30} parent=11 // pred_region
        _
      $region20: #{_lambda_.30} parent=11 // pred_fallthru
        _
    $region12: #{_lambda_.30} parent=5 // pred_fallthru
      _
    %p124 = scmp.lt.s32.totalorder %s9, 2
    // Predicated region
    $region21: #{_lambda_.30} parent=5 // pred_check
      %p125 = pneg %p124
    $region22: #{_lambda_.30} parent=5 // pred_check_branch
      %127 = sbr.rel (%p125) target = $region24
    $region23: #{_lambda_.30} parent=5 // pred_region
      // Predicated region
      $region25: #{_lambda_.30} parent=23 // pred_check
        %p128 = pneg %p29
      $region26: #{_lambda_.30} parent=23 // pred_check_branch
        %130 = sbr.rel (%p128) target = $region28
      $region27: #{_lambda_.30} parent=23 // pred_region
        %p131 = scmp.lt.s32.totalorder %s9, 1
        %s132 = scalar_select %p131, %s9, 1
        %s133 = smul.addr %s132, 2
        %s134 = smul.addr %s133, 4
        %s135 = scalar_lea.vmem %s0, %s134
      $region28: #{_lambda_.30} parent=23 // pred_fallthru
        _
    $region24: #{_lambda_.30} parent=5 // pred_fallthru
      _
    %p136 = scmp.le.s32.totalorder 1, %s9
    %p137 = scmp.lt.s32.totalorder %s9, 3
    %p138 = pnand %p136, %p137
    %p139 = pneg %p138
    // Predicated region
    $region29: #{_lambda_.30} parent=5 // pred_check
      _
    $region30: #{_lambda_.30} parent=5 // pred_check_branch
      %141 = sbr.rel (%p138) target = $region32
    $region31: #{_lambda_.30} parent=5 // pred_region
      %s142 = ssub.s32 %s9, 1
      %p143 = scmp.lt.s32.totalorder %s14, 1
      %s144 = scalar_select %p143, %s14, 1
      %s145 = smul.addr %s144, 2
      %s146 = smul.addr %s145, 4
      %s147 = scalar_lea.vmem %s0, %s146
      %p148 = pneg %p35
      %p149 = pneg %p32
      %p150 = pneg %p56
      %p151 = pneg %p53
      %p152 = pneg %p77
      %p153 = pneg %p74
      %p154 = pneg %p103
      %p155 = pneg %p100
      %p156 = scmp.lt.s32.totalorder %s14, 1
      %s157 = scalar_select %p156, %s14, 1
      %s158 = smul.addr %s157, 8
      %s159 = scalar_lea.vmem %s3, %s158
      %p160 = scmp.lt.s32.totalorder %s14, 1
      %s161 = scalar_select %p160, %s14, 1
      %s162 = smul.addr %s161, 2
      %s163 = smul.addr %s162, 4
      %s164 = scalar_lea.vmem %s0, %s163
      %p165 = scmp.lt.s32.totalorder %s14, 1
      %s166 = scalar_select %p165, %s14, 1
      %s167 = smul.addr %s166, 8
      %s168 = scalar_lea.vmem %s3, %s167
      %v170 = vld [vmem:[%s164] sm:$0xf]
      %v171 = vld [vmem:[%s1] sm:$0xf]
      %v172 = vld [vmem:[%s1 + $0x4] sm:$0xf]
      %v173 = vld [vmem:[%s1 + $0x8] sm:$0xf]
      %v174 = vld [vmem:[%s1 + $0xc] sm:$0xf]
      %v175 = vld [vmem:[%s1 + $0x10] sm:$0xf]
      %v176 = vld [vmem:[%s1 + $0x14] sm:$0xf]
      %v177 = vld [vmem:[%s1 + $0x18] sm:$0xf]
      %v178 = vld [vmem:[%s1 + $0x1c] sm:$0xf]
      %v179 = vld [vmem:[%s1 + $0x20] sm:$0xf]
      %v180 = vld [vmem:[%s1 + $0x24] sm:$0xf]
      %v181 = vld [vmem:[%s1 + $0x28] sm:$0xf]
      %v182 = vld [vmem:[%s1 + $0x2c] sm:$0xf]
      %v183 = vld [vmem:[%s1 + $0x30] sm:$0xf]
      %v184 = vld [vmem:[%s1 + $0x34] sm:$0xf]
      %v185 = vld [vmem:[%s1 + $0x38] sm:$0xf]
      %v186 = vld [vmem:[%s1 + $0x3c] sm:$0xf]
      %v187 = vld [vmem:[%s164 + $0x4] sm:$0x1]
      %s188 = scalar_lea.vmem %s1, 64
      %v189 = vld [vmem:[%s188] sm:$0xf]
      %v190 = vld [vmem:[%s188 + $0x4] sm:$0xf]
      %v191 = vld [vmem:[%s188 + $0x8] sm:$0xf]
      %v192 = vld [vmem:[%s188 + $0xc] sm:$0xf]
      %v193 = vld [vmem:[%s188 + $0x10] sm:$0xf]
      %v194 = vld [vmem:[%s188 + $0x14] sm:$0xf]
      %v195 = vld [vmem:[%s188 + $0x18] sm:$0xf]
      %v196 = vld [vmem:[%s188 + $0x1c] sm:$0xf]
      %v197 = vld [vmem:[%s188 + $0x20] sm:$0xf]
      %v198 = vld [vmem:[%s188 + $0x24] sm:$0xf]
      %v199 = vld [vmem:[%s188 + $0x28] sm:$0xf]
      %v200 = vld [vmem:[%s188 + $0x2c] sm:$0xf]
      %v201 = vld [vmem:[%s188 + $0x30] sm:$0xf]
      %v202 = vld [vmem:[%s188 + $0x34] sm:$0xf]
      %v203 = vld [vmem:[%s188 + $0x38] sm:$0xf]
      %v204 = vld [vmem:[%s188 + $0x3c] sm:$0xf]
      %v207 = vunpack.c.l.b16 %v170
      %v208 = vunpack.c.l.b16 %v187
      %v209 = vpack.c.b16 %v208, %v207
      %v211 = vshrl.u32 %v209, 16
      %v213 = vshll.u32 %v209, 16
      %v215 = vrot.slane %v213, 1
      %v216 = vor.u32 %v211, %v215
      %v234 = vunpack.c.l.b16 %v189
      %v235 = vunpack.c.l.b16 %v190
      %v236 = vunpack.c.l.b16 %v191
      %v237 = vunpack.c.l.b16 %v192
      %v238 = vunpack.c.l.b16 %v193
      %v239 = vunpack.c.l.b16 %v194
      %v240 = vunpack.c.l.b16 %v195
      %v241 = vunpack.c.l.b16 %v196
      %v242 = vunpack.c.l.b16 %v197
      %v243 = vunpack.c.l.b16 %v198
      %v244 = vunpack.c.l.b16 %v199
      %v245 = vunpack.c.l.b16 %v200
      %v246 = vunpack.c.l.b16 %v201
      %v247 = vunpack.c.l.b16 %v202
      %v248 = vunpack.c.l.b16 %v203
      %v249 = vunpack.c.l.b16 %v204
      %v250 = vpack.c.b16 %v235, %v234
      %v251 = vpack.c.b16 %v237, %v236
      %v252 = vpack.c.b16 %v239, %v238
      %v253 = vpack.c.b16 %v241, %v240
      %v254 = vpack.c.b16 %v243, %v242
      %v255 = vpack.c.b16 %v245, %v244
      %v256 = vpack.c.b16 %v247, %v246
      %v257 = vpack.c.b16 %v249, %v248
      %266 = vmatprep.subr.bf16.mxu0 0
      %267 = vmatpush1.bf16.msra.mxu0 %v257
      %268 = vmatprep.subr.bf16.mxu0 0
      %269 = vmatpush1.bf16.msra.mxu0 %v256
      %270 = vmatprep.subr.bf16.mxu0 0
      %271 = vmatpush1.bf16.msra.mxu0 %v255
      %272 = vmatprep.subr.bf16.mxu0 0
      %273 = vmatpush1.bf16.msra.mxu0 %v254
      %274 = vmatprep.subr.bf16.mxu0 0
      %275 = vmatpush1.bf16.msra.mxu0 %v253
      %276 = vmatprep.subr.bf16.mxu0 0
      %277 = vmatpush1.bf16.msra.mxu0 %v252
      %278 = vmatprep.subr.bf16.mxu0 0
      %279 = vmatpush1.bf16.msra.mxu0 %v251
      %280 = vmatprep.subr.bf16.mxu0 0
      %281 = vmatpush1.bf16.msra.mxu0 %v250
      %282 = vmatprep.subr.bf16.mxu0 0
      %283 = vmatpush2.bf16.msra.mxu0 0
      %284 = vmatprep.subr.bf16.mxu0 0
      %285 = vmatpush2.bf16.msra.mxu0 0
      %286 = vmatprep.subr.bf16.mxu0 0
      %287 = vmatpush2.bf16.msra.mxu0 0
      %288 = vmatprep.subr.bf16.mxu0 0
      %289 = vmatpush2.bf16.msra.mxu0 0
      %290 = vmatprep.subr.bf16.mxu0 0
      %291 = vmatpush2.bf16.msra.mxu0 0
      %292 = vmatprep.subr.bf16.mxu0 0
      %293 = vmatpush2.bf16.msra.mxu0 0
      %294 = vmatprep.subr.bf16.mxu0 0
      %295 = vmatpush2.bf16.msra.mxu0 0
      %296 = vmatprep.subr.bf16.mxu0 0
      %297 = vmatpush2.bf16.msra.mxu0 0
      %298 = vmatprep.mubr.bf16.mxu0 0
      %299 = vmatmul.mubr.bf16.gmra.mxu0 %v216
      %v300 = vpop.f32.mrf.mxu0
      %v301 = vadd.f32 0.0, %v300
      %v302 = vpop.f32.mrf.mxu0
      %v303 = vpop.f32.mrf.mxu0
      %v304 = vpop.f32.mrf.mxu0
      %305 = vdwg.mxu0
      %v322 = vunpack.c.l.b16 %v171
      %v323 = vunpack.c.l.b16 %v172
      %v324 = vunpack.c.l.b16 %v173
      %v325 = vunpack.c.l.b16 %v174
      %v326 = vunpack.c.l.b16 %v175
      %v327 = vunpack.c.l.b16 %v176
      %v328 = vunpack.c.l.b16 %v177
      %v329 = vunpack.c.l.b16 %v178
      %v330 = vunpack.c.l.b16 %v179
      %v331 = vunpack.c.l.b16 %v180
      %v332 = vunpack.c.l.b16 %v181
      %v333 = vunpack.c.l.b16 %v182
      %v334 = vunpack.c.l.b16 %v183
      %v335 = vunpack.c.l.b16 %v184
      %v336 = vunpack.c.l.b16 %v185
      %v337 = vunpack.c.l.b16 %v186
      %v338 = vpack.c.b16 %v323, %v322
      %v339 = vpack.c.b16 %v325, %v324
      %v340 = vpack.c.b16 %v327, %v326
      %v341 = vpack.c.b16 %v329, %v328
      %v342 = vpack.c.b16 %v331, %v330
      %v343 = vpack.c.b16 %v333, %v332
      %v344 = vpack.c.b16 %v335, %v334
      %v345 = vpack.c.b16 %v337, %v336
      %354 = vmatprep.subr.bf16.mxu0 0
      %355 = vmatpush1.bf16.msra.mxu0 %v345
      %356 = vmatprep.subr.bf16.mxu0 0
      %357 = vmatpush1.bf16.msra.mxu0 %v344
      %358 = vmatprep.subr.bf16.mxu0 0
      %359 = vmatpush1.bf16.msra.mxu0 %v343
      %360 = vmatprep.subr.bf16.mxu0 0
      %361 = vmatpush1.bf16.msra.mxu0 %v342
      %362 = vmatprep.subr.bf16.mxu0 0
      %363 = vmatpush1.bf16.msra.mxu0 %v341
      %364 = vmatprep.subr.bf16.mxu0 0
      %365 = vmatpush1.bf16.msra.mxu0 %v340
      %366 = vmatprep.subr.bf16.mxu0 0
      %367 = vmatpush1.bf16.msra.mxu0 %v339
      %368 = vmatprep.subr.bf16.mxu0 0
      %369 = vmatpush1.bf16.msra.mxu0 %v338
      %370 = vmatprep.subr.bf16.mxu0 0
      %371 = vmatpush2.bf16.msra.mxu0 0
      %372 = vmatprep.subr.bf16.mxu0 0
      %373 = vmatpush2.bf16.msra.mxu0 0
      %374 = vmatprep.subr.bf16.mxu0 0
      %375 = vmatpush2.bf16.msra.mxu0 0
      %376 = vmatprep.subr.bf16.mxu0 0
      %377 = vmatpush2.bf16.msra.mxu0 0
      %378 = vmatprep.subr.bf16.mxu0 0
      %379 = vmatpush2.bf16.msra.mxu0 0
      %380 = vmatprep.subr.bf16.mxu0 0
      %381 = vmatpush2.bf16.msra.mxu0 0
      %382 = vmatprep.subr.bf16.mxu0 0
      %383 = vmatpush2.bf16.msra.mxu0 0
      %384 = vmatprep.subr.bf16.mxu0 0
      %385 = vmatpush2.bf16.msra.mxu0 0
      %386 = vmatprep.mubr.bf16.mxu0 0
      %387 = vmatmul.mubr.bf16.gmra.mxu0 %v170
      %v388 = vpop.f32.mrf.mxu0
      %v389 = vadd.f32 %v301, %v388
      %v390 = vpop.f32.mrf.mxu0
      %v391 = vpop.f32.mrf.mxu0
      %v392 = vpop.f32.mrf.mxu0
      %393 = vdwg.mxu0
      %v394 = vld [vmem:[%s164] sm:$0xe]
      %s395 = scalar_lea.vmem %s1, 128
      %v396 = vld [vmem:[%s395] sm:$0xf]
      %v397 = vld [vmem:[%s395 + $0x4] sm:$0xf]
      %v398 = vld [vmem:[%s395 + $0x8] sm:$0xf]
      %v399 = vld [vmem:[%s395 + $0xc] sm:$0xf]
      %v400 = vld [vmem:[%s395 + $0x10] sm:$0xf]
      %v401 = vld [vmem:[%s395 + $0x14] sm:$0xf]
      %v402 = vld [vmem:[%s395 + $0x18] sm:$0xf]
      %v403 = vld [vmem:[%s395 + $0x1c] sm:$0xf]
      %v404 = vld [vmem:[%s395 + $0x20] sm:$0xf]
      %v405 = vld [vmem:[%s395 + $0x24] sm:$0xf]
      %v406 = vld [vmem:[%s395 + $0x28] sm:$0xf]
      %v407 = vld [vmem:[%s395 + $0x2c] sm:$0xf]
      %v408 = vld [vmem:[%s395 + $0x30] sm:$0xf]
      %v409 = vld [vmem:[%s395 + $0x34] sm:$0xf]
      %v410 = vld [vmem:[%s395 + $0x38] sm:$0xf]
      %v411 = vld [vmem:[%s395 + $0x3c] sm:$0xf]
      %v413 = vunpack.c.l.b16 %v394
      %v414 = vpack.c.b16 %v208, %v413
      %v415 = vrot.slane %v414, 1
      %v433 = vunpack.c.l.b16 %v396
      %v434 = vunpack.c.l.b16 %v397
      %v435 = vunpack.c.l.b16 %v398
      %v436 = vunpack.c.l.b16 %v399
      %v437 = vunpack.c.l.b16 %v400
      %v438 = vunpack.c.l.b16 %v401
      %v439 = vunpack.c.l.b16 %v402
      %v440 = vunpack.c.l.b16 %v403
      %v441 = vunpack.c.l.b16 %v404
      %v442 = vunpack.c.l.b16 %v405
      %v443 = vunpack.c.l.b16 %v406
      %v444 = vunpack.c.l.b16 %v407
      %v445 = vunpack.c.l.b16 %v408
      %v446 = vunpack.c.l.b16 %v409
      %v447 = vunpack.c.l.b16 %v410
      %v448 = vunpack.c.l.b16 %v411
      %v449 = vpack.c.b16 %v434, %v433
      %v450 = vpack.c.b16 %v436, %v435
      %v451 = vpack.c.b16 %v438, %v437
      %v452 = vpack.c.b16 %v440, %v439
      %v453 = vpack.c.b16 %v442, %v441
      %v454 = vpack.c.b16 %v444, %v443
      %v455 = vpack.c.b16 %v446, %v445
      %v456 = vpack.c.b16 %v448, %v447
      %465 = vmatprep.subr.bf16.mxu0 0
      %466 = vmatpush1.bf16.msra.mxu0 %v456
      %467 = vmatprep.subr.bf16.mxu0 0
      %468 = vmatpush1.bf16.msra.mxu0 %v455
      %469 = vmatprep.subr.bf16.mxu0 0
      %470 = vmatpush1.bf16.msra.mxu0 %v454
      %471 = vmatprep.subr.bf16.mxu0 0
      %472 = vmatpush1.bf16.msra.mxu0 %v453
      %473 = vmatprep.subr.bf16.mxu0 0
      %474 = vmatpush1.bf16.msra.mxu0 %v452
      %475 = vmatprep.subr.bf16.mxu0 0
      %476 = vmatpush1.bf16.msra.mxu0 %v451
      %477 = vmatprep.subr.bf16.mxu0 0
      %478 = vmatpush1.bf16.msra.mxu0 %v450
      %479 = vmatprep.subr.bf16.mxu0 0
      %480 = vmatpush1.bf16.msra.mxu0 %v449
      %481 = vmatprep.subr.bf16.mxu0 0
      %482 = vmatpush2.bf16.msra.mxu0 0
      %483 = vmatprep.subr.bf16.mxu0 0
      %484 = vmatpush2.bf16.msra.mxu0 0
      %485 = vmatprep.subr.bf16.mxu0 0
      %486 = vmatpush2.bf16.msra.mxu0 0
      %487 = vmatprep.subr.bf16.mxu0 0
      %488 = vmatpush2.bf16.msra.mxu0 0
      %489 = vmatprep.subr.bf16.mxu0 0
      %490 = vmatpush2.bf16.msra.mxu0 0
      %491 = vmatprep.subr.bf16.mxu0 0
      %492 = vmatpush2.bf16.msra.mxu0 0
      %493 = vmatprep.subr.bf16.mxu0 0
      %494 = vmatpush2.bf16.msra.mxu0 0
      %495 = vmatprep.subr.bf16.mxu0 0
      %496 = vmatpush2.bf16.msra.mxu0 0
      %497 = vmatprep.mubr.bf16.mxu0 0
      %498 = vmatmul.mubr.bf16.gmra.mxu0 %v415
      %v499 = vpop.f32.mrf.mxu0
      %v500 = vadd.f32 0.0, %v499
      %v501 = vpop.f32.mrf.mxu0
      %v502 = vpop.f32.mrf.mxu0
      %v503 = vpop.f32.mrf.mxu0
      %504 = vdwg.mxu0
      %v505 = vadd.f32 %v389, %v500
      %v506 = vld [vmem:[%s2] sm:$0x1]
      %v508 = vlaneseq
      %v509 = vshrl.u32 %v508, 7
      %v510 = vsub.s32 0, %v509
      %v511 = vrot.slane %v506, %v510
      %v513 = vadd.f32 %v505, %v511
      %514 = vst [vmem:[%s168] sm:$0xff] %v513
      %p515 = scmp.lt.s32.totalorder %s14, 1
      %s516 = scalar_select %p515, %s14, 1
      %s517 = smul.addr %s516, 8
      %s518 = scalar_lea.vmem %s3, %s517
      // Predicated region
      $region33: #{_lambda_.30} parent=31 // pred_check
        %p519 = pneg %p100
      $region34: #{_lambda_.30} parent=31 // pred_check_branch
        %521 = sbr.rel (%p519) target = $region36
      $region35: #{_lambda_.30} parent=31 // pred_region
        _
      $region36: #{_lambda_.30} parent=31 // pred_fallthru
        _
    $region32: #{_lambda_.30} parent=5 // pred_fallthru
      _
    %p522 = scmp.le.s32.totalorder 2, %s9
    // Predicated region
    $region37: #{_lambda_.30} parent=5 // pred_check
      %p523 = pneg %p522
    $region38: #{_lambda_.30} parent=5 // pred_check_branch
      %525 = sbr.rel (%p523) target = $region40
    $region39: #{_lambda_.30} parent=5 // pred_region
      %s526 = ssub.s32 %s9, 2
      // Predicated region
      $region41: #{_lambda_.30} parent=39 // pred_check
        %p527 = pneg %p106
      $region42: #{_lambda_.30} parent=39 // pred_check_branch
        %529 = sbr.rel (%p527) target = $region44
      $region43: #{_lambda_.30} parent=39 // pred_region
        %p530 = scmp.lt.s32.totalorder %s15, 1
        %s531 = scalar_select %p530, %s15, 1
        %s532 = smul.addr %s531, 8
        %s533 = scalar_lea.vmem %s3, %s532
      $region44: #{_lambda_.30} parent=39 // pred_fallthru
        _
    $region40: #{_lambda_.30} parent=5 // pred_fallthru
      _
  $region6: #{_lambda_.30} parent=0 // loop_footer
    %s13 = sadd.s32 1, %s9
  $region7: #{_lambda_.30} parent=0 // loop_footer_branch
    %8 = sbr.rel target = $region3
  $region8: #{_lambda_.30} parent=0 // loop_exit
    _

// kernel: _lambda_.31
$region0: #{_lambda_.31}
  #allocation0 [shape = 'u32[]', space=smem, size = 0x4, offset = 0x4, fixed_abs, tag = 'smem constant byte address 0x4 - core index']
  #allocation1 [shape = 'u32[144,128]{1,0:T(1,128)}', space=vmem, size = 0x12000, scoped, tag = 'internal scratch']
  #allocation2 [shape = 'f32[1,1]{1,0:T(1,128)}', space=smem, size = 0x200, scoped, tag = 'scratch operand']
  %s0 = inlined_call_operand.vmem [shape: f32[16,128], index: 0, kind: input, shape index: {}]
  %s1 = inlined_call_operand.vmem [shape: f32[128,128], index: 1, kind: input, shape index: {}]
  %s2 = inlined_call_operand.vmem [shape: f32[128,128], index: 2, kind: input, shape index: {}]
  %s3 = inlined_call_operand.vmem [shape: f32[1,128], index: 3, kind: input, shape index: {}]
  %s4 = inlined_call_operand.vmem [shape: bf16[16,128], index: 4, kind: output, shape index: {0}]
  %s5 = inlined_call_operand.hbm [shape: f32[1,1], index: 5, kind: output, shape index: {1}]
  %6 = xla_tuple %s4, %s5
  %s7 = sld [smem:[#allocation0]]
  $region38: #{_lambda_.31} parent=0
    _
  %s9 = ssub.s32 1, %s7
  %s10 = scalar_select 0, %s9, %s7
  $region1: #{_lambda_.31} parent=0
    #allocation3 [shape = 'u8[512]{0}', space=smem, size = 0x200, scoped, tag = 'output window, operand 1, single buffered']
    #allocation4 [shape = 's32[1]{0}', space=sflag, size = 0x4, scoped, tag = 'scoped memory for _lambda_.31']
    %11 = vsyncpa [#allocation4], 0
    // Predicated region
    $region2: #{_lambda_.31} parent=1 // pred_check
      _
    $region3: #{_lambda_.31} parent=1 // pred_check_branch
      %13 = sbr.rel (0) target = $region5
    $region4: #{_lambda_.31} parent=1 // pred_region
      _
    $region5: #{_lambda_.31} parent=1 // pred_fallthru
      _
    // Predicated region
    $region6: #{_lambda_.31} parent=1 // pred_check
      _
    $region7: #{_lambda_.31} parent=1 // pred_check_branch
      %15 = sbr.rel (0) target = $region9
    $region8: #{_lambda_.31} parent=1 // pred_region
      _
    $region9: #{_lambda_.31} parent=1 // pred_fallthru
      _
    // Predicated region
    $region10: #{_lambda_.31} parent=1 // pred_check
      _
    $region11: #{_lambda_.31} parent=1 // pred_check_branch
      %17 = sbr.rel (0) target = $region13
    $region12: #{_lambda_.31} parent=1 // pred_region
      _
    $region13: #{_lambda_.31} parent=1 // pred_fallthru
      _
    // Predicated region
    $region14: #{_lambda_.31} parent=1 // pred_check
      _
    $region15: #{_lambda_.31} parent=1 // pred_check_branch
      %19 = sbr.rel (0) target = $region17
    $region16: #{_lambda_.31} parent=1 // pred_region
      _
    $region17: #{_lambda_.31} parent=1 // pred_fallthru
      _
    %p20 = scmp.eq.s32.totalorder 0, 0
    // Predicated region
    $region18: #{_lambda_.31} parent=1 // pred_check
      %p21 = pneg %p20
    $region19: #{_lambda_.31} parent=1 // pred_check_branch
      %23 = sbr.rel (%p21) target = $region21
    $region20: #{_lambda_.31} parent=1 // pred_region
      %s24 = scalar_lea.smem [#allocation2], 0
      %25 = sst [smem:[%s24]] 0.0
    $region21: #{_lambda_.31} parent=1 // pred_fallthru
      _
    %v26 = vld [vmem:[%s0] sm:$0xff]
    %v27 = vld [vmem:[%s0 + $0x8] sm:$0xff]
    %v28 = vld [vmem:[%s3] sm:$0x1]
    %v29 = vld [vmem:[%s2] sm:$0xff]
    %v30 = vld [vmem:[%s2 + $0x8] sm:$0xff]
    %v31 = vld [vmem:[%s2 + $0x10] sm:$0xff]
    %v32 = vld [vmem:[%s2 + $0x18] sm:$0xff]
    %v33 = vld [vmem:[%s2 + $0x20] sm:$0xff]
    %v34 = vld [vmem:[%s2 + $0x28] sm:$0xff]
    %v35 = vld [vmem:[%s2 + $0x30] sm:$0xff]
    %v36 = vld [vmem:[%s2 + $0x38] sm:$0xff]
    %v37 = vld [vmem:[%s2 + $0x40] sm:$0xff]
    %v38 = vld [vmem:[%s2 + $0x48] sm:$0xff]
    %v39 = vld [vmem:[%s2 + $0x50] sm:$0xff]
    %v40 = vld [vmem:[%s2 + $0x58] sm:$0xff]
    %v41 = vld [vmem:[%s2 + $0x60] sm:$0xff]
    %v42 = vld [vmem:[%s2 + $0x68] sm:$0xff]
    %v43 = vld [vmem:[%s2 + $0x70] sm:$0xff]
    %v44 = vld [vmem:[%s2 + $0x78] sm:$0xff]
    %45 = vmatprep.subr.mxu0 0.0
    %46 = vmatpush1.msra.mxu0 %v44
    %47 = vmatprep.subr.mxu0 0.0
    %48 = vmatpush1.msra.mxu0 %v43
    %49 = vmatprep.subr.mxu0 0.0
    %50 = vmatpush1.msra.mxu0 %v42
    %51 = vmatprep.subr.mxu0 0.0
    %52 = vmatpush1.msra.mxu0 %v41
    %53 = vmatprep.subr.mxu0 0.0
    %54 = vmatpush1.msra.mxu0 %v40
    %55 = vmatprep.subr.mxu0 0.0
    %56 = vmatpush1.msra.mxu0 %v39
    %57 = vmatprep.subr.mxu0 0.0
    %58 = vmatpush1.msra.mxu0 %v38
    %59 = vmatprep.subr.mxu0 0.0
    %60 = vmatpush1.msra.mxu0 %v37
    %61 = vmatprep.subr.mxu0 0.0
    %62 = vmatpush1.msra.mxu0 %v36
    %63 = vmatprep.subr.mxu0 0.0
    %64 = vmatpush1.msra.mxu0 %v35
    %65 = vmatprep.subr.mxu0 0.0
    %66 = vmatpush1.msra.mxu0 %v34
    %67 = vmatprep.subr.mxu0 0.0
    %68 = vmatpush1.msra.mxu0 %v33
    %69 = vmatprep.subr.mxu0 0.0
    %70 = vmatpush1.msra.mxu0 %v32
    %71 = vmatprep.subr.mxu0 0.0
    %72 = vmatpush1.msra.mxu0 %v31
    %73 = vmatprep.subr.mxu0 0.0
    %74 = vmatpush1.msra.mxu0 %v30
    %75 = vmatprep.subr.mxu0 0.0
    %76 = vmatpush1.msra.mxu0 %v29
    %77 = vmatprep.subr.mxu0 0.0
    %78 = vmatpush2.msra.mxu0 0.0
    %79 = vmatprep.subr.mxu0 0.0
    %80 = vmatpush2.msra.mxu0 0.0
    %81 = vmatprep.subr.mxu0 0.0
    %82 = vmatpush2.msra.mxu0 0.0
    %83 = vmatprep.subr.mxu0 0.0
    %84 = vmatpush2.msra.mxu0 0.0
    %85 = vmatprep.subr.mxu0 0.0
    %86 = vmatpush2.msra.mxu0 0.0
    %87 = vmatprep.subr.mxu0 0.0
    %88 = vmatpush2.msra.mxu0 0.0
    %89 = vmatprep.subr.mxu0 0.0
    %90 = vmatpush2.msra.mxu0 0.0
    %91 = vmatprep.subr.mxu0 0.0
    %92 = vmatpush2.msra.mxu0 0.0
    %93 = vmatprep.subr.mxu0 0.0
    %94 = vmatpush2.msra.mxu0 0.0
    %95 = vmatprep.subr.mxu0 0.0
    %96 = vmatpush2.msra.mxu0 0.0
    %97 = vmatprep.subr.mxu0 0.0
    %98 = vmatpush2.msra.mxu0 0.0
    %99 = vmatprep.subr.mxu0 0.0
    %100 = vmatpush2.msra.mxu0 0.0
    %101 = vmatprep.subr.mxu0 0.0
    %102 = vmatpush2.msra.mxu0 0.0
    %103 = vmatprep.subr.mxu0 0.0
    %104 = vmatpush2.msra.mxu0 0.0
    %105 = vmatprep.subr.mxu0 0.0
    %106 = vmatpush2.msra.mxu0 0.0
    %107 = vmatprep.subr.mxu0 0.0
    %108 = vmatpush2.msra.mxu0 0.0
    %109 = vmatprep.mubr.f32.mxu0 0.0
    %110 = vmatmul.mubr.f32.gmra.mxu0 %v26
    %v111 = vpop.f32.mrf.mxu0
    %v112 = vadd.f32 0.0, %v111
    %v113 = vpop.f32.mrf.mxu0
    %114 = vmatprep.mubr.f32.mxu0 0.0
    %115 = vmatmul.mubr.f32.gmra.mxu0 %v27
    %v116 = vpop.f32.mrf.mxu0
    %v117 = vadd.f32 0.0, %v116
    %v118 = vpop.f32.mrf.mxu0
    %119 = vdwg.mxu0
    %v120 = vmul.f32 %v112, 2.0
    %v121 = vmul.f32 %v117, 2.0
    %v123 = vlaneseq
    %v124 = vshrl.u32 %v123, 7
    %v125 = vsub.s32 0, %v124
    %v126 = vrot.slane %v28, %v125
    %v128 = vsub.f32 %v126, %v120
    %v129 = vsub.f32 %v126, %v121
    %130 = vmin.index.xlane.f32.xlu0 %v128
    %v131 = vpop.xlane.xlu0 %130
    %132 = vmin.index.xlane.f32.xlu0 %v129
    %v133 = vpop.xlane.xlu0 %132
    %v134 = vlaneseq
    %v135 = vand.u32 %v134, 127
    %vm136 = vcmp.eq.s32.totalorder %v131, %v135
    %vm137 = vcmp.eq.s32.totalorder %v133, %v135
    %v138 = vsel %vm136, 1, 0
    %v139 = vsel %vm137, 1, 0
    %v140 = vcvt.s32.f32 %v138
    %v141 = vcvt.s32.f32 %v139
    %v142 = vld [vmem:[%s1] sm:$0xff]
    %v143 = vld [vmem:[%s1 + $0x8] sm:$0xff]
    %v144 = vld [vmem:[%s1 + $0x10] sm:$0xff]
    %v145 = vld [vmem:[%s1 + $0x18] sm:$0xff]
    %v146 = vld [vmem:[%s1 + $0x20] sm:$0xff]
    %v147 = vld [vmem:[%s1 + $0x28] sm:$0xff]
    %v148 = vld [vmem:[%s1 + $0x30] sm:$0xff]
    %v149 = vld [vmem:[%s1 + $0x38] sm:$0xff]
    %v150 = vld [vmem:[%s1 + $0x40] sm:$0xff]
    %v151 = vld [vmem:[%s1 + $0x48] sm:$0xff]
    %v152 = vld [vmem:[%s1 + $0x50] sm:$0xff]
    %v153 = vld [vmem:[%s1 + $0x58] sm:$0xff]
    %v154 = vld [vmem:[%s1 + $0x60] sm:$0xff]
    %v155 = vld [vmem:[%s1 + $0x68] sm:$0xff]
    %v156 = vld [vmem:[%s1 + $0x70] sm:$0xff]
    %v157 = vld [vmem:[%s1 + $0x78] sm:$0xff]
    %158 = vmatprep.subr.mxu0 0.0
    %159 = vmatpush1.msra.mxu0 %v157
    %160 = vmatprep.subr.mxu0 0.0
    %161 = vmatpush1.msra.mxu0 %v156
    %162 = vmatprep.subr.mxu0 0.0
    %163 = vmatpush1.msra.mxu0 %v155
    %164 = vmatprep.subr.mxu0 0.0
    %165 = vmatpush1.msra.mxu0 %v154
    %166 = vmatprep.subr.mxu0 0.0
    %167 = vmatpush1.msra.mxu0 %v153
    %168 = vmatprep.subr.mxu0 0.0
    %169 = vmatpush1.msra.mxu0 %v152
    %170 = vmatprep.subr.mxu0 0.0
    %171 = vmatpush1.msra.mxu0 %v151
    %172 = vmatprep.subr.mxu0 0.0
    %173 = vmatpush1.msra.mxu0 %v150
    %174 = vmatprep.subr.mxu0 0.0
    %175 = vmatpush1.msra.mxu0 %v149
    %176 = vmatprep.subr.mxu0 0.0
    %177 = vmatpush1.msra.mxu0 %v148
    %178 = vmatprep.subr.mxu0 0.0
    %179 = vmatpush1.msra.mxu0 %v147
    %180 = vmatprep.subr.mxu0 0.0
    %181 = vmatpush1.msra.mxu0 %v146
    %182 = vmatprep.subr.mxu0 0.0
    %183 = vmatpush1.msra.mxu0 %v145
    %184 = vmatprep.subr.mxu0 0.0
    %185 = vmatpush1.msra.mxu0 %v144
    %186 = vmatprep.subr.mxu0 0.0
    %187 = vmatpush1.msra.mxu0 %v143
    %188 = vmatprep.subr.mxu0 0.0
    %189 = vmatpush1.msra.mxu0 %v142
    %190 = vmatprep.subr.mxu0 0.0
    %191 = vmatpush2.msra.mxu0 0.0
    %192 = vmatprep.subr.mxu0 0.0
    %193 = vmatpush2.msra.mxu0 0.0
    %194 = vmatprep.subr.mxu0 0.0
    %195 = vmatpush2.msra.mxu0 0.0
    %196 = vmatprep.subr.mxu0 0.0
    %197 = vmatpush2.msra.mxu0 0.0
    %198 = vmatprep.subr.mxu0 0.0
    %199 = vmatpush2.msra.mxu0 0.0
    %200 = vmatprep.subr.mxu0 0.0
    %201 = vmatpush2.msra.mxu0 0.0
    %202 = vmatprep.subr.mxu0 0.0
    %203 = vmatpush2.msra.mxu0 0.0
    %204 = vmatprep.subr.mxu0 0.0
    %205 = vmatpush2.msra.mxu0 0.0
    %206 = vmatprep.subr.mxu0 0.0
    %207 = vmatpush2.msra.mxu0 0.0
    %208 = vmatprep.subr.mxu0 0.0
    %209 = vmatpush2.msra.mxu0 0.0
    %210 = vmatprep.subr.mxu0 0.0
    %211 = vmatpush2.msra.mxu0 0.0
    %212 = vmatprep.subr.mxu0 0.0
    %213 = vmatpush2.msra.mxu0 0.0
    %214 = vmatprep.subr.mxu0 0.0
    %215 = vmatpush2.msra.mxu0 0.0
    %216 = vmatprep.subr.mxu0 0.0
    %217 = vmatpush2.msra.mxu0 0.0
    %218 = vmatprep.subr.mxu0 0.0
    %219 = vmatpush2.msra.mxu0 0.0
    %220 = vmatprep.subr.mxu0 0.0
    %221 = vmatpush2.msra.mxu0 0.0
    %222 = vmatprep.mubr.f32.mxu0 0.0
    %223 = vmatmul.mubr.f32.gmra.mxu0 %v140
    %v224 = vpop.f32.mrf.mxu0
    %v225 = vadd.f32 0.0, %v224
    %v226 = vpop.f32.mrf.mxu0
    %227 = vmatprep.mubr.f32.mxu0 0.0
    %228 = vmatmul.mubr.f32.gmra.mxu0 %v141
    %v229 = vpop.f32.mrf.mxu0
    %v230 = vadd.f32 0.0, %v229
    %v231 = vpop.f32.mrf.mxu0
    %232 = vdwg.mxu0
    %v233 = vpack.c.bf16 %v230, %v225
    %v235 = vunpack.c.l.b16 %v233
    %v236 = vunpack.c.h.b16 %v233
    %v237 = vpack.c.b16 %v235, %v235
    %v238 = vpack.c.b16 %v236, %v236
    %241 = vst [vmem:[%s4] sm:$0xf] %v237
    %242 = vst [vmem:[%s4 + $0x4] sm:$0xf] %v238
    %s243 = smul.u32 0, 16
    %v244 = vlaneseq
    %v245 = vshrl.u32 %v244, 7
    %v246 = vadd.s32 %v245, 8
    %v247 = vstv %s243
    %v248 = vadd.s32 %v247, %v245
    %v249 = vadd.s32 %v247, %v246
    %vm250 = vcmp.lt.s32.totalorder %v248, 16
    %vm251 = vcmp.lt.s32.totalorder %v249, 16
    %v252 = vsel %vm250, 1, 0
    %v253 = vsel %vm251, 1, 0
    %v254 = vcvt.s32.f32 %v252
    %v255 = vcvt.s32.f32 %v253
    %v256 = vsub.f32 %v26, %v225
    %v257 = vsub.f32 %v27, %v230
    %v258 = vmul.f32 %v256, %v254
    %v259 = vmul.f32 %v257, %v255
    %s260 = sld [smem:[#allocation2]]
    %v261 = vmul.f32 %v258, %v258
    %v262 = vmul.f32 %v259, %v259
    %v263 = vadd.f32 %v261, %v262
    %264 = vadd.xlane.f32.xlu0 %v263
    %v265 = vpop.xlane.xlu0 %264
    %v266 = vrot.slane %v265, 4
    %v267 = vadd.f32 %v265, %v266
    %v268 = vrot.slane %v267, 2
    %v269 = vadd.f32 %v267, %v268
    %v270 = vrot.slane %v269, 1
    %v271 = vadd.f32 %v269, %v270
    %s272 = vtos %v271
    %s273 = sadd.f32 %s260, %s272
    %s274 = scalar_lea.smem [#allocation2], 0
    %275 = sst [smem:[%s274]] %s273
    %s276 = sld [smem:[#allocation2]]
    %s277 = scalar_lea.smem [#allocation3], 0
    %278 = sst [smem:[%s277]] %s276
    // Predicated region
    $region22: #{_lambda_.31} parent=1 // pred_check
      _
    $region23: #{_lambda_.31} parent=1 // pred_check_branch
      %280 = sbr.rel (0) target = $region25
    $region24: #{_lambda_.31} parent=1 // pred_region
      _
    $region25: #{_lambda_.31} parent=1 // pred_fallthru
      _
    // Predicated region
    $region26: #{_lambda_.31} parent=1 // pred_check
      _
    $region27: #{_lambda_.31} parent=1 // pred_check_branch
      %282 = sbr.rel (0) target = $region29
    $region28: #{_lambda_.31} parent=1 // pred_region
      %s284 = ssub.s32 16, 16
      %285 = vsyncadd [#allocation4], %s284
      %288 = dma.smem_to_hbm [#allocation3], 16, %s5, [#allocation4]
    $region29: #{_lambda_.31} parent=1 // pred_fallthru
      _
    // Predicated region
    $region30: #{_lambda_.31} parent=1 // pred_check
      _
    $region31: #{_lambda_.31} parent=1 // pred_check_branch
      %290 = sbr.rel (0) target = $region33
    $region32: #{_lambda_.31} parent=1 // pred_region
      _
    $region33: #{_lambda_.31} parent=1 // pred_fallthru
      _
    // Predicated region
    $region34: #{_lambda_.31} parent=1 // pred_check
      _
    $region35: #{_lambda_.31} parent=1 // pred_check_branch
      %292 = sbr.rel (0) target = $region37
    $region36: #{_lambda_.31} parent=1 // pred_region
      %293 = dma.done [#allocation4], 16
    $region37: #{_lambda_.31} parent=1 // pred_fallthru
      _
    %294 = sfence
    %295 = vsyncpa [#allocation4], 1

// kernel: _lambda_.32
$region0: #{_lambda_.32}
  #allocation0 [shape = 'u32[]', space=smem, size = 0x4, offset = 0x4, fixed_abs, tag = 'smem constant byte address 0x4 - core index']
  #allocation1 [shape = 'u32[144,128]{1,0:T(1,128)}', space=vmem, size = 0x12000, scoped, tag = 'internal scratch']
  %s0 = inlined_call_operand.vmem [shape: bf16[2,10,128], index: 0, kind: input, shape index: {}]
  %s1 = inlined_call_operand.vmem [shape: bf16[3,128,128], index: 1, kind: input, shape index: {}]
  %s2 = inlined_call_operand.vmem [shape: f32[1,128], index: 2, kind: input, shape index: {}]
  %s3 = inlined_call_operand.vmem [shape: bf16[2,8,128], index: 3, kind: output, shape index: {}]
  %s4 = sld [smem:[#allocation0]]
  $region45: #{_lambda_.32} parent=0
    _
  %s6 = ssub.s32 1, %s4
  %s7 = scalar_select 0, %s6, %s4
  loop: start=0, step=1, limit=4
  $region2: #{_lambda_.32} parent=0 // loop_pre_header
    _
  $region3: #{_lambda_.32} parent=0 // loop_header
    %s9 = sphi 0, %s13
    %p10 = scmp.ge.s32.totalorder %s9, 4
    %s19 = sphi 0, %s21
    %s22 = sphi 0, %s19
    %s23 = sphi 0, %s22
    %s39 = sphi 0, %s23
    %s43 = sphi 0, %s43
    %s45 = sphi 0, %s43
    %s46 = sphi 0, %s45
    %s60 = sphi 0, %s46
    %s64 = sphi 0, %s64
    %s66 = sphi 0, %s64
    %s67 = sphi 0, %s66
    %s81 = sphi 0, %s67
    %s87 = sphi 0, %s89
    %s90 = sphi 0, %s87
    %s91 = sphi 0, %s90
    %s107 = sphi 0, %s91
  $region4: #{_lambda_.32} parent=0 // loop_header_branch
    %12 = sbr.rel (%p10) target = $region8
  $region5: #{_lambda_.32} parent=0 // loop_body
    %s14 = ssub.s32 %s9, 1
    %s15 = ssub.s32 %s9, 2
    %s16 = sadd.s32 %s9, 1
    %s17 = ssub.s32 %s9, %s16
    %p18 = scmp.eq.s32.totalorder %s17, 0
    %s20 = sadd.s32 %s19, 1
    %s21 = scalar_select %p18, %s19, %s20
    %p24 = pneg %p18
    %p25 = scmp.eq.s32.totalorder %s9, 1
    %p26 = por %p24, %p25
    %p27 = scmp.ne.s32.totalorder %s19, %s22
    %p28 = scmp.eq.s32.totalorder %s9, 0
    %p29 = por %p27, %p28
    %p30 = scmp.ne.s32.totalorder %s19, %s22
    %p31 = scmp.eq.s32.totalorder %s14, 1
    %p32 = por %p30, %p31
    %p33 = scmp.ne.s32.totalorder %s22, %s23
    %p34 = scmp.eq.s32.totalorder %s14, 0
    %p35 = por %p33, %p34
    %p36 = scmp.ne.s32.totalorder %s22, %s23
    %p37 = scmp.eq.s32.totalorder %s15, 1
    %p38 = por %p36, %p37
    %p40 = scmp.ne.s32.totalorder %s23, %s39
    %p41 = scmp.eq.s32.totalorder %s15, 0
    %p42 = por %p40, %p41
    %s44 = sadd.s32 %s43, 1
    %p47 = scmp.eq.s32.totalorder %s9, 1
    %p48 = scmp.ne.s32.totalorder %s43, %s45
    %p49 = scmp.eq.s32.totalorder %s9, 0
    %p50 = por %p48, %p49
    %p51 = scmp.ne.s32.totalorder %s43, %s45
    %p52 = scmp.eq.s32.totalorder %s14, 1
    %p53 = por %p51, %p52
    %p54 = scmp.ne.s32.totalorder %s45, %s46
    %p55 = scmp.eq.s32.totalorder %s14, 0
    %p56 = por %p54, %p55
    %p57 = scmp.ne.s32.totalorder %s45, %s46
    %p58 = scmp.eq.s32.totalorder %s15, 1
    %p59 = por %p57, %p58
    %p61 = scmp.ne.s32.totalorder %s46, %s60
    %p62 = scmp.eq.s32.totalorder %s15, 0
    %p63 = por %p61, %p62
    %s65 = sadd.s32 %s64, 1
    %p68 = scmp.eq.s32.totalorder %s9, 1
    %p69 = scmp.ne.s32.totalorder %s64, %s66
    %p70 = scmp.eq.s32.totalorder %s9, 0
    %p71 = por %p69, %p70
    %p72 = scmp.ne.s32.totalorder %s64, %s66
    %p73 = scmp.eq.s32.totalorder %s14, 1
    %p74 = por %p72, %p73
    %p75 = scmp.ne.s32.totalorder %s66, %s67
    %p76 = scmp.eq.s32.totalorder %s14, 0
    %p77 = por %p75, %p76
    %p78 = scmp.ne.s32.totalorder %s66, %s67
    %p79 = scmp.eq.s32.totalorder %s15, 1
    %p80 = por %p78, %p79
    %p82 = scmp.ne.s32.totalorder %s67, %s81
    %p83 = scmp.eq.s32.totalorder %s15, 0
    %p84 = por %p82, %p83
    %s85 = ssub.s32 %s9, %s16
    %p86 = scmp.eq.s32.totalorder %s85, 0
    %s88 = sadd.s32 %s87, 1
    %s89 = scalar_select %p86, %s87, %s88
    %p92 = pneg %p86
    %p93 = scmp.eq.s32.totalorder %s9, 1
    %p94 = por %p92, %p93
    %p95 = scmp.ne.s32.totalorder %s87, %s90
    %p96 = scmp.eq.s32.totalorder %s9, 0
    %p97 = por %p95, %p96
    %p98 = scmp.ne.s32.totalorder %s87, %s90
    %p99 = scmp.eq.s32.totalorder %s14, 1
    %p100 = por %p98, %p99
    %p101 = scmp.ne.s32.totalorder %s90, %s91
    %p102 = scmp.eq.s32.totalorder %s14, 0
    %p103 = por %p101, %p102
    %p104 = scmp.ne.s32.totalorder %s90, %s91
    %p105 = scmp.eq.s32.totalorder %s15, 1
    %p106 = por %p104, %p105
    %p108 = scmp.ne.s32.totalorder %s91, %s107
    %p109 = scmp.eq.s32.totalorder %s15, 0
    %p110 = por %p108, %p109
    %p111 = scmp.le.s32.totalorder 1, %s9
    %p112 = scmp.lt.s32.totalorder %s9, 3
    %p113 = pnand %p111, %p112
    %p114 = pneg %p113
    // Predicated region
    $region9: #{_lambda_.32} parent=5 // pred_check
      _
    $region10: #{_lambda_.32} parent=5 // pred_check_branch
      %116 = sbr.rel (%p113) target = $region12
    $region11: #{_lambda_.32} parent=5 // pred_region
      %s117 = ssub.s32 %s9, 1
      // Predicated region
      $region13: #{_lambda_.32} parent=11 // pred_check
        %p118 = pneg %p56
      $region14: #{_lambda_.32} parent=11 // pred_check_branch
        %120 = sbr.rel (%p118) target = $region16
      $region15: #{_lambda_.32} parent=11 // pred_region
        _
      $region16: #{_lambda_.32} parent=11 // pred_fallthru
        _
      // Predicated region
      $region17: #{_lambda_.32} parent=11 // pred_check
        %p121 = pneg %p77
      $region18: #{_lambda_.32} parent=11 // pred_check_branch
        %123 = sbr.rel (%p121) target = $region20
      $region19: #{_lambda_.32} parent=11 // pred_region
        _
      $region20: #{_lambda_.32} parent=11 // pred_fallthru
        _
    $region12: #{_lambda_.32} parent=5 // pred_fallthru
      _
    %p124 = scmp.lt.s32.totalorder %s9, 2
    // Predicated region
    $region21: #{_lambda_.32} parent=5 // pred_check
      %p125 = pneg %p124
    $region22: #{_lambda_.32} parent=5 // pred_check_branch
      %127 = sbr.rel (%p125) target = $region24
    $region23: #{_lambda_.32} parent=5 // pred_region
      // Predicated region
      $region25: #{_lambda_.32} parent=23 // pred_check
        %p128 = pneg %p29
      $region26: #{_lambda_.32} parent=23 // pred_check_branch
        %130 = sbr.rel (%p128) target = $region28
      $region27: #{_lambda_.32} parent=23 // pred_region
        %p131 = scmp.lt.s32.totalorder %s9, 1
        %s132 = scalar_select %p131, %s9, 1
        %s133 = smul.addr %s132, 2
        %s134 = smul.addr %s133, 4
        %s135 = scalar_lea.vmem %s0, %s134
      $region28: #{_lambda_.32} parent=23 // pred_fallthru
        _
    $region24: #{_lambda_.32} parent=5 // pred_fallthru
      _
    %p136 = scmp.le.s32.totalorder 1, %s9
    %p137 = scmp.lt.s32.totalorder %s9, 3
    %p138 = pnand %p136, %p137
    %p139 = pneg %p138
    // Predicated region
    $region29: #{_lambda_.32} parent=5 // pred_check
      _
    $region30: #{_lambda_.32} parent=5 // pred_check_branch
      %141 = sbr.rel (%p138) target = $region32
    $region31: #{_lambda_.32} parent=5 // pred_region
      %s142 = ssub.s32 %s9, 1
      %p143 = scmp.lt.s32.totalorder %s14, 1
      %s144 = scalar_select %p143, %s14, 1
      %s145 = smul.addr %s144, 2
      %s146 = smul.addr %s145, 4
      %s147 = scalar_lea.vmem %s0, %s146
      %p148 = pneg %p35
      %p149 = pneg %p32
      %p150 = pneg %p56
      %p151 = pneg %p53
      %p152 = pneg %p77
      %p153 = pneg %p74
      %p154 = pneg %p103
      %p155 = pneg %p100
      %p156 = scmp.lt.s32.totalorder %s14, 1
      %s157 = scalar_select %p156, %s14, 1
      %s158 = smul.addr %s157, 4
      %s159 = scalar_lea.vmem %s3, %s158
      %p160 = scmp.lt.s32.totalorder %s14, 1
      %s161 = scalar_select %p160, %s14, 1
      %s162 = smul.addr %s161, 2
      %s163 = smul.addr %s162, 4
      %s164 = scalar_lea.vmem %s0, %s163
      %p165 = scmp.lt.s32.totalorder %s14, 1
      %s166 = scalar_select %p165, %s14, 1
      %s167 = smul.addr %s166, 4
      %s168 = scalar_lea.vmem %s3, %s167
      %v170 = vld [vmem:[%s164] sm:$0xf]
      %v171 = vld [vmem:[%s1] sm:$0xf]
      %v172 = vld [vmem:[%s1 + $0x4] sm:$0xf]
      %v173 = vld [vmem:[%s1 + $0x8] sm:$0xf]
      %v174 = vld [vmem:[%s1 + $0xc] sm:$0xf]
      %v175 = vld [vmem:[%s1 + $0x10] sm:$0xf]
      %v176 = vld [vmem:[%s1 + $0x14] sm:$0xf]
      %v177 = vld [vmem:[%s1 + $0x18] sm:$0xf]
      %v178 = vld [vmem:[%s1 + $0x1c] sm:$0xf]
      %v179 = vld [vmem:[%s1 + $0x20] sm:$0xf]
      %v180 = vld [vmem:[%s1 + $0x24] sm:$0xf]
      %v181 = vld [vmem:[%s1 + $0x28] sm:$0xf]
      %v182 = vld [vmem:[%s1 + $0x2c] sm:$0xf]
      %v183 = vld [vmem:[%s1 + $0x30] sm:$0xf]
      %v184 = vld [vmem:[%s1 + $0x34] sm:$0xf]
      %v185 = vld [vmem:[%s1 + $0x38] sm:$0xf]
      %v186 = vld [vmem:[%s1 + $0x3c] sm:$0xf]
      %v187 = vld [vmem:[%s164 + $0x4] sm:$0x1]
      %s188 = scalar_lea.vmem %s1, 64
      %v189 = vld [vmem:[%s188] sm:$0xf]
      %v190 = vld [vmem:[%s188 + $0x4] sm:$0xf]
      %v191 = vld [vmem:[%s188 + $0x8] sm:$0xf]
      %v192 = vld [vmem:[%s188 + $0xc] sm:$0xf]
      %v193 = vld [vmem:[%s188 + $0x10] sm:$0xf]
      %v194 = vld [vmem:[%s188 + $0x14] sm:$0xf]
      %v195 = vld [vmem:[%s188 + $0x18] sm:$0xf]
      %v196 = vld [vmem:[%s188 + $0x1c] sm:$0xf]
      %v197 = vld [vmem:[%s188 + $0x20] sm:$0xf]
      %v198 = vld [vmem:[%s188 + $0x24] sm:$0xf]
      %v199 = vld [vmem:[%s188 + $0x28] sm:$0xf]
      %v200 = vld [vmem:[%s188 + $0x2c] sm:$0xf]
      %v201 = vld [vmem:[%s188 + $0x30] sm:$0xf]
      %v202 = vld [vmem:[%s188 + $0x34] sm:$0xf]
      %v203 = vld [vmem:[%s188 + $0x38] sm:$0xf]
      %v204 = vld [vmem:[%s188 + $0x3c] sm:$0xf]
      %v207 = vunpack.c.l.b16 %v170
      %v208 = vunpack.c.l.b16 %v187
      %v209 = vpack.c.b16 %v208, %v207
      %v211 = vshrl.u32 %v209, 16
      %v213 = vshll.u32 %v209, 16
      %v215 = vrot.slane %v213, 1
      %v216 = vor.u32 %v211, %v215
      %v234 = vunpack.c.l.b16 %v189
      %v235 = vunpack.c.l.b16 %v190
      %v236 = vunpack.c.l.b16 %v191
      %v237 = vunpack.c.l.b16 %v192
      %v238 = vunpack.c.l.b16 %v193
      %v239 = vunpack.c.l.b16 %v194
      %v240 = vunpack.c.l.b16 %v195
      %v241 = vunpack.c.l.b16 %v196
      %v242 = vunpack.c.l.b16 %v197
      %v243 = vunpack.c.l.b16 %v198
      %v244 = vunpack.c.l.b16 %v199
      %v245 = vunpack.c.l.b16 %v200
      %v246 = vunpack.c.l.b16 %v201
      %v247 = vunpack.c.l.b16 %v202
      %v248 = vunpack.c.l.b16 %v203
      %v249 = vunpack.c.l.b16 %v204
      %v250 = vpack.c.b16 %v235, %v234
      %v251 = vpack.c.b16 %v237, %v236
      %v252 = vpack.c.b16 %v239, %v238
      %v253 = vpack.c.b16 %v241, %v240
      %v254 = vpack.c.b16 %v243, %v242
      %v255 = vpack.c.b16 %v245, %v244
      %v256 = vpack.c.b16 %v247, %v246
      %v257 = vpack.c.b16 %v249, %v248
      %266 = vmatprep.subr.bf16.mxu0 0
      %267 = vmatpush1.bf16.msra.mxu0 %v257
      %268 = vmatprep.subr.bf16.mxu0 0
      %269 = vmatpush1.bf16.msra.mxu0 %v256
      %270 = vmatprep.subr.bf16.mxu0 0
      %271 = vmatpush1.bf16.msra.mxu0 %v255
      %272 = vmatprep.subr.bf16.mxu0 0
      %273 = vmatpush1.bf16.msra.mxu0 %v254
      %274 = vmatprep.subr.bf16.mxu0 0
      %275 = vmatpush1.bf16.msra.mxu0 %v253
      %276 = vmatprep.subr.bf16.mxu0 0
      %277 = vmatpush1.bf16.msra.mxu0 %v252
      %278 = vmatprep.subr.bf16.mxu0 0
      %279 = vmatpush1.bf16.msra.mxu0 %v251
      %280 = vmatprep.subr.bf16.mxu0 0
      %281 = vmatpush1.bf16.msra.mxu0 %v250
      %282 = vmatprep.subr.bf16.mxu0 0
      %283 = vmatpush2.bf16.msra.mxu0 0
      %284 = vmatprep.subr.bf16.mxu0 0
      %285 = vmatpush2.bf16.msra.mxu0 0
      %286 = vmatprep.subr.bf16.mxu0 0
      %287 = vmatpush2.bf16.msra.mxu0 0
      %288 = vmatprep.subr.bf16.mxu0 0
      %289 = vmatpush2.bf16.msra.mxu0 0
      %290 = vmatprep.subr.bf16.mxu0 0
      %291 = vmatpush2.bf16.msra.mxu0 0
      %292 = vmatprep.subr.bf16.mxu0 0
      %293 = vmatpush2.bf16.msra.mxu0 0
      %294 = vmatprep.subr.bf16.mxu0 0
      %295 = vmatpush2.bf16.msra.mxu0 0
      %296 = vmatprep.subr.bf16.mxu0 0
      %297 = vmatpush2.bf16.msra.mxu0 0
      %298 = vmatprep.mubr.bf16.mxu0 0
      %299 = vmatmul.mubr.bf16.gmra.mxu0 %v216
      %v300 = vpop.f32.mrf.mxu0
      %v301 = vadd.f32 0.0, %v300
      %v302 = vpop.f32.mrf.mxu0
      %v303 = vpop.f32.mrf.mxu0
      %v304 = vpop.f32.mrf.mxu0
      %305 = vdwg.mxu0
      %v322 = vunpack.c.l.b16 %v171
      %v323 = vunpack.c.l.b16 %v172
      %v324 = vunpack.c.l.b16 %v173
      %v325 = vunpack.c.l.b16 %v174
      %v326 = vunpack.c.l.b16 %v175
      %v327 = vunpack.c.l.b16 %v176
      %v328 = vunpack.c.l.b16 %v177
      %v329 = vunpack.c.l.b16 %v178
      %v330 = vunpack.c.l.b16 %v179
      %v331 = vunpack.c.l.b16 %v180
      %v332 = vunpack.c.l.b16 %v181
      %v333 = vunpack.c.l.b16 %v182
      %v334 = vunpack.c.l.b16 %v183
      %v335 = vunpack.c.l.b16 %v184
      %v336 = vunpack.c.l.b16 %v185
      %v337 = vunpack.c.l.b16 %v186
      %v338 = vpack.c.b16 %v323, %v322
      %v339 = vpack.c.b16 %v325, %v324
      %v340 = vpack.c.b16 %v327, %v326
      %v341 = vpack.c.b16 %v329, %v328
      %v342 = vpack.c.b16 %v331, %v330
      %v343 = vpack.c.b16 %v333, %v332
      %v344 = vpack.c.b16 %v335, %v334
      %v345 = vpack.c.b16 %v337, %v336
      %354 = vmatprep.subr.bf16.mxu0 0
      %355 = vmatpush1.bf16.msra.mxu0 %v345
      %356 = vmatprep.subr.bf16.mxu0 0
      %357 = vmatpush1.bf16.msra.mxu0 %v344
      %358 = vmatprep.subr.bf16.mxu0 0
      %359 = vmatpush1.bf16.msra.mxu0 %v343
      %360 = vmatprep.subr.bf16.mxu0 0
      %361 = vmatpush1.bf16.msra.mxu0 %v342
      %362 = vmatprep.subr.bf16.mxu0 0
      %363 = vmatpush1.bf16.msra.mxu0 %v341
      %364 = vmatprep.subr.bf16.mxu0 0
      %365 = vmatpush1.bf16.msra.mxu0 %v340
      %366 = vmatprep.subr.bf16.mxu0 0
      %367 = vmatpush1.bf16.msra.mxu0 %v339
      %368 = vmatprep.subr.bf16.mxu0 0
      %369 = vmatpush1.bf16.msra.mxu0 %v338
      %370 = vmatprep.subr.bf16.mxu0 0
      %371 = vmatpush2.bf16.msra.mxu0 0
      %372 = vmatprep.subr.bf16.mxu0 0
      %373 = vmatpush2.bf16.msra.mxu0 0
      %374 = vmatprep.subr.bf16.mxu0 0
      %375 = vmatpush2.bf16.msra.mxu0 0
      %376 = vmatprep.subr.bf16.mxu0 0
      %377 = vmatpush2.bf16.msra.mxu0 0
      %378 = vmatprep.subr.bf16.mxu0 0
      %379 = vmatpush2.bf16.msra.mxu0 0
      %380 = vmatprep.subr.bf16.mxu0 0
      %381 = vmatpush2.bf16.msra.mxu0 0
      %382 = vmatprep.subr.bf16.mxu0 0
      %383 = vmatpush2.bf16.msra.mxu0 0
      %384 = vmatprep.subr.bf16.mxu0 0
      %385 = vmatpush2.bf16.msra.mxu0 0
      %386 = vmatprep.mubr.bf16.mxu0 0
      %387 = vmatmul.mubr.bf16.gmra.mxu0 %v170
      %v388 = vpop.f32.mrf.mxu0
      %v389 = vadd.f32 %v301, %v388
      %v390 = vpop.f32.mrf.mxu0
      %v391 = vpop.f32.mrf.mxu0
      %v392 = vpop.f32.mrf.mxu0
      %393 = vdwg.mxu0
      %v394 = vld [vmem:[%s164] sm:$0xe]
      %s395 = scalar_lea.vmem %s1, 128
      %v396 = vld [vmem:[%s395] sm:$0xf]
      %v397 = vld [vmem:[%s395 + $0x4] sm:$0xf]
      %v398 = vld [vmem:[%s395 + $0x8] sm:$0xf]
      %v399 = vld [vmem:[%s395 + $0xc] sm:$0xf]
      %v400 = vld [vmem:[%s395 + $0x10] sm:$0xf]
      %v401 = vld [vmem:[%s395 + $0x14] sm:$0xf]
      %v402 = vld [vmem:[%s395 + $0x18] sm:$0xf]
      %v403 = vld [vmem:[%s395 + $0x1c] sm:$0xf]
      %v404 = vld [vmem:[%s395 + $0x20] sm:$0xf]
      %v405 = vld [vmem:[%s395 + $0x24] sm:$0xf]
      %v406 = vld [vmem:[%s395 + $0x28] sm:$0xf]
      %v407 = vld [vmem:[%s395 + $0x2c] sm:$0xf]
      %v408 = vld [vmem:[%s395 + $0x30] sm:$0xf]
      %v409 = vld [vmem:[%s395 + $0x34] sm:$0xf]
      %v410 = vld [vmem:[%s395 + $0x38] sm:$0xf]
      %v411 = vld [vmem:[%s395 + $0x3c] sm:$0xf]
      %v413 = vunpack.c.l.b16 %v394
      %v414 = vpack.c.b16 %v208, %v413
      %v415 = vrot.slane %v414, 1
      %v433 = vunpack.c.l.b16 %v396
      %v434 = vunpack.c.l.b16 %v397
      %v435 = vunpack.c.l.b16 %v398
      %v436 = vunpack.c.l.b16 %v399
      %v437 = vunpack.c.l.b16 %v400
      %v438 = vunpack.c.l.b16 %v401
      %v439 = vunpack.c.l.b16 %v402
      %v440 = vunpack.c.l.b16 %v403
      %v441 = vunpack.c.l.b16 %v404
      %v442 = vunpack.c.l.b16 %v405
      %v443 = vunpack.c.l.b16 %v406
      %v444 = vunpack.c.l.b16 %v407
      %v445 = vunpack.c.l.b16 %v408
      %v446 = vunpack.c.l.b16 %v409
      %v447 = vunpack.c.l.b16 %v410
      %v448 = vunpack.c.l.b16 %v411
      %v449 = vpack.c.b16 %v434, %v433
      %v450 = vpack.c.b16 %v436, %v435
      %v451 = vpack.c.b16 %v438, %v437
      %v452 = vpack.c.b16 %v440, %v439
      %v453 = vpack.c.b16 %v442, %v441
      %v454 = vpack.c.b16 %v444, %v443
      %v455 = vpack.c.b16 %v446, %v445
      %v456 = vpack.c.b16 %v448, %v447
      %465 = vmatprep.subr.bf16.mxu0 0
      %466 = vmatpush1.bf16.msra.mxu0 %v456
      %467 = vmatprep.subr.bf16.mxu0 0
      %468 = vmatpush1.bf16.msra.mxu0 %v455
      %469 = vmatprep.subr.bf16.mxu0 0
      %470 = vmatpush1.bf16.msra.mxu0 %v454
      %471 = vmatprep.subr.bf16.mxu0 0
      %472 = vmatpush1.bf16.msra.mxu0 %v453
      %473 = vmatprep.subr.bf16.mxu0 0
      %474 = vmatpush1.bf16.msra.mxu0 %v452
      %475 = vmatprep.subr.bf16.mxu0 0
      %476 = vmatpush1.bf16.msra.mxu0 %v451
      %477 = vmatprep.subr.bf16.mxu0 0
      %478 = vmatpush1.bf16.msra.mxu0 %v450
      %479 = vmatprep.subr.bf16.mxu0 0
      %480 = vmatpush1.bf16.msra.mxu0 %v449
      %481 = vmatprep.subr.bf16.mxu0 0
      %482 = vmatpush2.bf16.msra.mxu0 0
      %483 = vmatprep.subr.bf16.mxu0 0
      %484 = vmatpush2.bf16.msra.mxu0 0
      %485 = vmatprep.subr.bf16.mxu0 0
      %486 = vmatpush2.bf16.msra.mxu0 0
      %487 = vmatprep.subr.bf16.mxu0 0
      %488 = vmatpush2.bf16.msra.mxu0 0
      %489 = vmatprep.subr.bf16.mxu0 0
      %490 = vmatpush2.bf16.msra.mxu0 0
      %491 = vmatprep.subr.bf16.mxu0 0
      %492 = vmatpush2.bf16.msra.mxu0 0
      %493 = vmatprep.subr.bf16.mxu0 0
      %494 = vmatpush2.bf16.msra.mxu0 0
      %495 = vmatprep.subr.bf16.mxu0 0
      %496 = vmatpush2.bf16.msra.mxu0 0
      %497 = vmatprep.mubr.bf16.mxu0 0
      %498 = vmatmul.mubr.bf16.gmra.mxu0 %v415
      %v499 = vpop.f32.mrf.mxu0
      %v500 = vadd.f32 0.0, %v499
      %v501 = vpop.f32.mrf.mxu0
      %v502 = vpop.f32.mrf.mxu0
      %v503 = vpop.f32.mrf.mxu0
      %504 = vdwg.mxu0
      %v505 = vadd.f32 %v389, %v500
      %v506 = vld [vmem:[%s2] sm:$0x1]
      %v508 = vlaneseq
      %v509 = vshrl.u32 %v508, 7
      %v510 = vsub.s32 0, %v509
      %v511 = vrot.slane %v506, %v510
      %v513 = vadd.f32 %v505, %v511
      %v514 = vmax.f32 %v513, 0.0
      %v515 = vpack.c.bf16 %v514, %v514
      %516 = vst [vmem:[%s168] sm:$0xf] %v515
      %p517 = scmp.lt.s32.totalorder %s14, 1
      %s518 = scalar_select %p517, %s14, 1
      %s519 = smul.addr %s518, 4
      %s520 = scalar_lea.vmem %s3, %s519
      // Predicated region
      $region33: #{_lambda_.32} parent=31 // pred_check
        %p521 = pneg %p100
      $region34: #{_lambda_.32} parent=31 // pred_check_branch
        %523 = sbr.rel (%p521) target = $region36
      $region35: #{_lambda_.32} parent=31 // pred_region
        _
      $region36: #{_lambda_.32} parent=31 // pred_fallthru
        _
    $region32: #{_lambda_.32} parent=5 // pred_fallthru
      _
    %p524 = scmp.le.s32.totalorder 2, %s9
    // Predicated region
    $region37: #{_lambda_.32} parent=5 // pred_check
      %p525 = pneg %p524
    $region38: #{_lambda_.32} parent=5 // pred_check_branch
      %527 = sbr.rel (%p525) target = $region40
    $region39: #{_lambda_.32} parent=5 // pred_region
      %s528 = ssub.s32 %s9, 2
      // Predicated region
      $region41: #{_lambda_.32} parent=39 // pred_check
        %p529 = pneg %p106
      $region42: #{_lambda_.32} parent=39 // pred_check_branch
        %531 = sbr.rel (%p529) target = $region44
      $region43: #{_lambda_.32} parent=39 // pred_region
        %p532 = scmp.lt.s32.totalorder %s15, 1
        %s533 = scalar_select %p532, %s15, 1
        %s534 = smul.addr %s533, 4
        %s535 = scalar_lea.vmem %s3, %s534
      $region44: #{_lambda_.32} parent=39 // pred_fallthru
        _
    $region40: #{_lambda_.32} parent=5 // pred_fallthru
      _
  $region6: #{_lambda_.32} parent=0 // loop_footer
    %s13 = sadd.s32 1, %s9
  $region7: #{_lambda_.32} parent=0 // loop_footer_branch
    %8 = sbr.rel target = $region3
  $region8: #{_lambda_.32} parent=0 // loop_exit
    _

</llo_original>
